<compile_context>
chip_gen: v7x
topology: tpu7x:2x2x1
jax: 0.10.0
libtpu: 0.0.40
codegen_flags: <defaults>
</compile_context>

<pallas_src>
import jax
import jax.numpy as jnp
from jax.experimental import pallas as pl
from jax.experimental.pallas import tpu as pltpu


# ---------------------------------------------------------------------------
# Static shape helpers (mirror CNNModel._get_conv_output_size)
# ---------------------------------------------------------------------------
def _conv_sizes(input_dim):
    l1 = input_dim - 2          # conv1 (k=3, valid)
    p1 = l1 // 2                # maxpool1 (k=2, s=2, floor)
    l2 = p1 - 2                 # conv2 (k=3, valid)
    p2 = l2 // 2                # maxpool2 (k=2, s=2, floor)
    return l1, p1, l2, p2


# ---------------------------------------------------------------------------
# Fused forward kernel (one 128-row batch tile per grid step)
# ---------------------------------------------------------------------------
def _cnn_forward_kernel(x_ref, w1_ref, b1_ref, wa_ref, wb_ref, b2_ref,
                        wfc_ref, bfc_ref, wout_ref, bout_ref, o_ref):
    f32, bf16 = jnp.float32, jnp.bfloat16

    qp = x_ref.shape[0] // 4           # shipped positions per phase (= Q + 1)
    tb = x_ref.shape[1]                # batch tile (batch on lanes of input)
    p2 = wfc_ref.shape[0]              # pool2 output positions
    q = p2 + 1                         # pool1 positions needed per parity
    cc = w1_ref.shape[1]               # 128 = 2 * C1 (lane-packed conv1 chans)
    half = cc // 2                     # 64
    c2 = b2_ref.shape[1] // 2          # 32

    x_all = x_ref[...]                                     # (4*Qp, TB) f32
    ph0 = x_all[0 * qp:1 * qp, :]                          # x[4t]
    ph1 = x_all[1 * qp:2 * qp, :]                          # x[4t+1]
    ph2 = x_all[2 * qp:3 * qp, :]                          # x[4t+2]
    ph3 = x_all[3 * qp:4 * qp, :]                          # x[4t+3]

    # ---- conv1 + ReLU + pool1 (VPU), lane-packed ---------------------------
    # lanes [0:64]   -> even pool1 phase p1[2t]   = max(h1[4t],   h1[4t+1])
    # lanes [64:128] -> odd  pool1 phase p1[2t+1] = max(h1[4t+2], h1[4t+3])
    def pack(lo, hi):                  # two (Q, TB) -> (Q, TB, 128)
        lo_b = jnp.broadcast_to(lo[:, :, None], (q, tb, half))
        hi_b = jnp.broadcast_to(hi[:, :, None], (q, tb, half))
        return jnp.concatenate([lo_b, hi_b], axis=-1)

    xa = pack(ph0[0:q, :], ph2[0:q, :])          # [x[4t]   | x[4t+2]]
    xb = pack(ph1[0:q, :], ph3[0:q, :])          # [x[4t+1] | x[4t+3]]
    xc = pack(ph2[0:q, :], ph0[1:q + 1, :])      # [x[4t+2] | x[4t+4]]
    xd = pack(ph3[0:q, :], ph1[1:q + 1, :])      # [x[4t+3] | x[4t+5]]

    w1 = w1_ref[...]                             # (3, 128) lane-duplicated taps
    w1_0 = w1[0:1, :][None, :, :]                # (1, 1, 128)
    w1_1 = w1[1:2, :][None, :, :]
    w1_2 = w1[2:3, :][None, :, :]
    b1 = b1_ref[...][None, :, :]                 # (1, 1, 128)

    h1e = jnp.maximum(xa * w1_0 + xb * w1_1 + xc * w1_2 + b1, 0.0)
    h1o = jnp.maximum(xb * w1_0 + xc * w1_1 + xd * w1_2 + b1, 0.0)
    p1p = jnp.maximum(h1e, h1o)                  # (Q, TB, 128) = [p1_even|p1_odd]

    # ---- conv2 + ReLU + pool2 (MXU, batched over pooled positions s) -------
    # conv2[2s]   = E[s]@W2_0 + O[s]@W2_1 + E[s+1]@W2_2 + b2
    # conv2[2s+1] = O[s]@W2_0 + E[s+1]@W2_1 + O[s+1]@W2_2 + b2
    # wa/wb are (128, 64) block weights: output columns [0:32] even, [32:64] odd.
    pa = p1p[0:p2].astype(bf16)                  # (P2, TB, 128): [E[s]   | O[s]]
    pb = p1p[1:p2 + 1].astype(bf16)              # (P2, TB, 128): [E[s+1] | O[s+1]]
    wa = jnp.broadcast_to(wa_ref[...][None], (p2,) + wa_ref.shape)
    wb = jnp.broadcast_to(wb_ref[...][None], (p2,) + wb_ref.shape)
    g = (jnp.einsum('sbk,skn->sbn', pa, wa, preferred_element_type=f32) +
         jnp.einsum('sbk,skn->sbn', pb, wb, preferred_element_type=f32))
    g = jnp.maximum(g + b2_ref[...][None, :, :], 0.0)         # (P2, TB, 64)
    pool2 = jnp.maximum(g[:, :, 0:c2], g[:, :, c2:2 * c2])    # (P2, TB, 32)

    # ---- FC (+ ReLU): one batched MXU matmul over s, then a cheap reduce ---
    zc = jnp.einsum('sbc,sch->sbh', pool2.astype(bf16), wfc_ref[...],
                    preferred_element_type=f32)               # (P2, TB, 64)
    z = jnp.maximum(zc.sum(axis=0) + bfc_ref[...], 0.0)       # (TB, 64)
    # Dropout(p=0.5): inference mode -> identity.

    # ---- output head + sigmoid ---------------------------------------------
    logits = jnp.dot(z, wout_ref[...], preferred_element_type=f32) + bout_ref[...]
    o_ref[...] = (1.0 / (1.0 + jnp.exp(-logits))).astype(o_ref.dtype)


# ---------------------------------------------------------------------------
# Wrapper: layout plumbing + pallas_call
# ---------------------------------------------------------------------------
def cnn_forward(x, params, *, tb=128):
    """CNNModel.forward (num_classes=1, eval mode): x (B, input_dim) -> (B, 1)."""
    b, l = x.shape
    _, _, _, p2 = _conv_sizes(l)
    assert p2 >= 1, "input_dim too small for the conv/pool stack"
    q = p2 + 1            # pool1 positions needed per parity
    qp = q + 1            # per-phase columns shipped (x[4t+4], x[4t+5] needed)
    assert l >= 4 * p2 + 6, "phase-slice arithmetic requires L >= 4*P2 + 6"

    c1 = params["w1"].shape[0]        # 64
    c2 = params["w2"].shape[0]        # 32
    h = params["fc_w"].shape[0]       # 64
    assert params["fc_w"].shape[1] == c2 * p2

    f32, bf16 = jnp.float32, jnp.bfloat16
    xf = x.astype(f32)

    # Phase split (time mod 4) packed into ONE array -> one input DMA / step.
    def phase(k):
        ph = xf[:, k::4]
        ph = jnp.pad(ph, ((0, 0), (0, max(0, qp - ph.shape[1]))))
        return ph[:, :qp]                                    # (B, Qp)

    xph = jnp.concatenate([phase(0), phase(1), phase(2), phase(3)], axis=1)
    bp = ((b + tb - 1) // tb) * tb                           # pad batch to tile
    xph = jnp.pad(xph, ((0, bp - b), (0, 0))).T              # (4*Qp, BP)

    # Weights rearranged once into the kernel's packed, channels-last layouts.
    w1 = params["w1"][:, 0, :].T                             # (3, 64): tap, chan
    w1p = jnp.concatenate([w1, w1], axis=1).astype(f32)      # (3, 128)
    b1p = jnp.concatenate([params["b1"], params["b1"]])[None, :].astype(f32)

    w2t = [params["w2"][:, :, k].T.astype(f32) for k in range(3)]   # (64, 32)
    zero = jnp.zeros((c1, c2), f32)
    wa = jnp.concatenate([jnp.concatenate([w2t[0], zero], axis=1),
                          jnp.concatenate([w2t[1], w2t[0]], axis=1)],
                         axis=0).astype(bf16)                # (128, 64)
    wb = jnp.concatenate([jnp.concatenate([w2t[2], w2t[1]], axis=1),
                          jnp.concatenate([zero, w2t[2]], axis=1)],
                         axis=0).astype(bf16)                # (128, 64)
    b2p = jnp.concatenate([params["b2"], params["b2"]])[None, :].astype(f32)

    # torch flatten order is channel-major: feature index = c*P2 + s.
    wfc3 = jnp.transpose(params["fc_w"].reshape(h, c2, p2), (2, 1, 0)).astype(bf16)
    bfc = params["fc_b"][None, :].astype(f32)                # (1, 64)
    wout = params["out_w"].T.astype(f32)                     # (64, 1)
    bout = params["out_b"][None, :].astype(f32)              # (1, 1)

    def full(a):
        nd = a.ndim
        return pl.BlockSpec(a.shape, lambda i, _nd=nd: (0,) * _nd)

    out = pl.pallas_call(
        _cnn_forward_kernel,
        out_shape=jax.ShapeDtypeStruct((bp, 1), f32),
        grid=(bp // tb,),
        in_specs=[
            pl.BlockSpec((4 * qp, tb), lambda i: (0, i)),    # one input DMA / step
            full(w1p), full(b1p), full(wa), full(wb), full(b2p),
            full(wfc3), full(bfc), full(wout), full(bout),
        ],
        out_specs=pl.BlockSpec((tb, 1), lambda i: (i, 0)),
        compiler_params=pltpu.CompilerParams(
            dimension_semantics=("parallel",),
            vmem_limit_bytes=32 * 1024 * 1024),
    )(xph, w1p, b1p, wa, wb, b2p, wfc3, bfc, wout, bout)
    return out[:b]


# ---------------------------------------------------------------------------
# Parameters + pure-JAX reference (PyTorch semantics, eval mode)
# ---------------------------------------------------------------------------
def init_params(key, input_dim):
    _, _, _, p2 = _conv_sizes(input_dim)
    f = 32 * p2
    ks = jax.random.split(key, 8)

    def u(k, shape, fan_in):
        bound = 1.0 / (fan_in ** 0.5)
        return jax.random.uniform(k, shape, jnp.float32, -bound, bound)

    return {
        "w1": u(ks[0], (64, 1, 3), 3), "b1": u(ks[1], (64,), 3),
        "w2": u(ks[2], (32, 64, 3), 64 * 3), "b2": u(ks[3], (32,), 64 * 3),
        "fc_w": u(ks[4], (64, f), f), "fc_b": u(ks[5], (64,), f),
        "out_w": u(ks[6], (1, 64), 64), "out_b": u(ks[7], (1,), 64),
    }


def reference_forward(x, params):
    hp = jax.lax.Precision.HIGHEST

    def conv1d(x_ncw, w, bias):                      # valid cross-correlation
        k = w.shape[2]
        lout = x_ncw.shape[2] - k + 1
        cols = jnp.stack([x_ncw[:, :, i:i + lout] for i in range(k)], axis=-1)
        return jnp.einsum("bclk,ock->bol", cols, w, precision=hp) + bias[None, :, None]

    def maxpool1d(x_ncw, k=2):
        lout = x_ncw.shape[2] // k
        xr = x_ncw[:, :, :lout * k].reshape(x_ncw.shape[0], x_ncw.shape[1], lout, k)
        return xr.max(axis=-1)

    hm = x[:, None, :]                                # (B, 1, L)
    hm = maxpool1d(jax.nn.relu(conv1d(hm, params["w1"], params["b1"])))
    hm = maxpool1d(jax.nn.relu(conv1d(hm, params["w2"], params["b2"])))
    flat = hm.reshape(hm.shape[0], -1)                # channel-major flatten (torch)
    z = jax.nn.relu(jnp.dot(flat, params["fc_w"].T, precision=hp) + params["fc_b"])
    logits = jnp.dot(z, params["out_w"].T, precision=hp) + params["out_b"]
    return jax.nn.sigmoid(logits)


if __name__ == "__main__":
    batch, input_dim = 200, 32          # -> bp=256: two even grid steps
    key = jax.random.PRNGKey(0)
    kx, kp = jax.random.split(key)
    x = jax.random.normal(kx, (batch, input_dim), dtype=jnp.float32)
    params = init_params(kp, input_dim)

    out = jax.block_until_ready(jax.jit(cnn_forward)(x, params))
    ref = reference_forward(x, params)
    assert out.shape == (batch, 1)
    err = float(jnp.max(jnp.abs(out - ref)))
    assert err < 3e-3, f"max abs error {err}"
    print("KERNEL_OK")
</pallas_src>

<mosaic_0001>
module attributes {stable_mosaic.version = 11 : i64} {
  func.func @_cnn_forward_kernel(%arg0: i32, %arg1: memref<32x128xf32, #tpu.memory_space<vmem>>, %arg2: memref<3x128xf32, #tpu.memory_space<vmem>>, %arg3: memref<1x128xf32, #tpu.memory_space<vmem>>, %arg4: memref<128x64xbf16, #tpu.memory_space<vmem>>, %arg5: memref<128x64xbf16, #tpu.memory_space<vmem>>, %arg6: memref<1x64xf32, #tpu.memory_space<vmem>>, %arg7: memref<6x32x64xbf16, #tpu.memory_space<vmem>>, %arg8: memref<1x64xf32, #tpu.memory_space<vmem>>, %arg9: memref<64x1xf32, #tpu.memory_space<vmem>>, %arg10: memref<1x1xf32, #tpu.memory_space<vmem>>, %arg11: memref<128x1xf32, #tpu.memory_space<vmem>>) attributes {dimension_semantics = [#tpu.dimension_semantics<parallel>], iteration_bounds = array<i64: 2>, scalar_prefetch = 0 : i64, scratch_operands = 0 : i64, tpu.core_type = #tpu.core_type<tc>, window_params = [{transform_indices = @transform_0, window_bounds = array<i64: 32, 128>}, {pipeline_mode = #tpu.pipeline_mode<synchronous>, transform_indices = @transform_1, window_bounds = array<i64: 3, 128>}, {pipeline_mode = #tpu.pipeline_mode<synchronous>, transform_indices = @transform_2, window_bounds = array<i64: 1, 128>}, {pipeline_mode = #tpu.pipeline_mode<synchronous>, transform_indices = @transform_3, window_bounds = array<i64: 128, 64>}, {pipeline_mode = #tpu.pipeline_mode<synchronous>, transform_indices = @transform_4, window_bounds = array<i64: 128, 64>}, {pipeline_mode = #tpu.pipeline_mode<synchronous>, transform_indices = @transform_5, window_bounds = array<i64: 1, 64>}, {pipeline_mode = #tpu.pipeline_mode<synchronous>, transform_indices = @transform_6, window_bounds = array<i64: 6, 32, 64>}, {pipeline_mode = #tpu.pipeline_mode<synchronous>, transform_indices = @transform_7, window_bounds = array<i64: 1, 64>}, {pipeline_mode = #tpu.pipeline_mode<synchronous>, transform_indices = @transform_8, window_bounds = array<i64: 64, 1>}, {pipeline_mode = #tpu.pipeline_mode<synchronous>, transform_indices = @transform_9, window_bounds = array<i64: 1, 1>}, {transform_indices = @transform_10, window_bounds = array<i64: 128, 1>}]} {
    %c0 = arith.constant 0 : index
    %c0_0 = arith.constant 0 : index
    %0 = vector.load %arg1[%c0, %c0_0] : memref<32x128xf32, #tpu.memory_space<vmem>>, vector<32x128xf32>
    %1 = vector.extract_strided_slice %0 {offsets = [0, 0], sizes = [8, 128], strides = [1, 1]} : vector<32x128xf32> to vector<8x128xf32>
    %2 = vector.extract_strided_slice %0 {offsets = [8, 0], sizes = [8, 128], strides = [1, 1]} : vector<32x128xf32> to vector<8x128xf32>
    %3 = vector.extract_strided_slice %0 {offsets = [16, 0], sizes = [8, 128], strides = [1, 1]} : vector<32x128xf32> to vector<8x128xf32>
    %4 = vector.extract_strided_slice %0 {offsets = [24, 0], sizes = [8, 128], strides = [1, 1]} : vector<32x128xf32> to vector<8x128xf32>
    %5 = vector.extract_strided_slice %1 {offsets = [0, 0], sizes = [7, 128], strides = [1, 1]} : vector<8x128xf32> to vector<7x128xf32>
    %6 = vector.extract_strided_slice %3 {offsets = [0, 0], sizes = [7, 128], strides = [1, 1]} : vector<8x128xf32> to vector<7x128xf32>
    %7 = vector.shape_cast %5 : vector<7x128xf32> to vector<7x128x1xf32>
    %8 = vector.shape_cast %7 : vector<7x128x1xf32> to vector<7x128x1xf32>
    %9 = vector.broadcast %8 : vector<7x128x1xf32> to vector<7x128x64xf32>
    %10 = vector.shape_cast %6 : vector<7x128xf32> to vector<7x128x1xf32>
    %11 = vector.shape_cast %10 : vector<7x128x1xf32> to vector<7x128x1xf32>
    %12 = vector.broadcast %11 : vector<7x128x1xf32> to vector<7x128x64xf32>
    %13 = tpu.concatenate %9, %12 in 2 : vector<7x128x64xf32>, vector<7x128x64xf32> -> vector<7x128x128xf32>
    %14 = vector.extract_strided_slice %2 {offsets = [0, 0], sizes = [7, 128], strides = [1, 1]} : vector<8x128xf32> to vector<7x128xf32>
    %15 = vector.extract_strided_slice %4 {offsets = [0, 0], sizes = [7, 128], strides = [1, 1]} : vector<8x128xf32> to vector<7x128xf32>
    %16 = vector.shape_cast %14 : vector<7x128xf32> to vector<7x128x1xf32>
    %17 = vector.shape_cast %16 : vector<7x128x1xf32> to vector<7x128x1xf32>
    %18 = vector.broadcast %17 : vector<7x128x1xf32> to vector<7x128x64xf32>
    %19 = vector.shape_cast %15 : vector<7x128xf32> to vector<7x128x1xf32>
    %20 = vector.shape_cast %19 : vector<7x128x1xf32> to vector<7x128x1xf32>
    %21 = vector.broadcast %20 : vector<7x128x1xf32> to vector<7x128x64xf32>
    %22 = tpu.concatenate %18, %21 in 2 : vector<7x128x64xf32>, vector<7x128x64xf32> -> vector<7x128x128xf32>
    %23 = vector.extract_strided_slice %3 {offsets = [0, 0], sizes = [7, 128], strides = [1, 1]} : vector<8x128xf32> to vector<7x128xf32>
    %24 = vector.extract_strided_slice %1 {offsets = [1, 0], sizes = [7, 128], strides = [1, 1]} : vector<8x128xf32> to vector<7x128xf32>
    %25 = vector.shape_cast %23 : vector<7x128xf32> to vector<7x128x1xf32>
    %26 = vector.shape_cast %25 : vector<7x128x1xf32> to vector<7x128x1xf32>
    %27 = vector.broadcast %26 : vector<7x128x1xf32> to vector<7x128x64xf32>
    %28 = vector.shape_cast %24 : vector<7x128xf32> to vector<7x128x1xf32>
    %29 = vector.shape_cast %28 : vector<7x128x1xf32> to vector<7x128x1xf32>
    %30 = vector.broadcast %29 : vector<7x128x1xf32> to vector<7x128x64xf32>
    %31 = tpu.concatenate %27, %30 in 2 : vector<7x128x64xf32>, vector<7x128x64xf32> -> vector<7x128x128xf32>
    %32 = vector.extract_strided_slice %4 {offsets = [0, 0], sizes = [7, 128], strides = [1, 1]} : vector<8x128xf32> to vector<7x128xf32>
    %33 = vector.extract_strided_slice %2 {offsets = [1, 0], sizes = [7, 128], strides = [1, 1]} : vector<8x128xf32> to vector<7x128xf32>
    %34 = vector.shape_cast %32 : vector<7x128xf32> to vector<7x128x1xf32>
    %35 = vector.shape_cast %34 : vector<7x128x1xf32> to vector<7x128x1xf32>
    %36 = vector.broadcast %35 : vector<7x128x1xf32> to vector<7x128x64xf32>
    %37 = vector.shape_cast %33 : vector<7x128xf32> to vector<7x128x1xf32>
    %38 = vector.shape_cast %37 : vector<7x128x1xf32> to vector<7x128x1xf32>
    %39 = vector.broadcast %38 : vector<7x128x1xf32> to vector<7x128x64xf32>
    %40 = tpu.concatenate %36, %39 in 2 : vector<7x128x64xf32>, vector<7x128x64xf32> -> vector<7x128x128xf32>
    %c0_1 = arith.constant 0 : index
    %c0_2 = arith.constant 0 : index
    %41 = vector.load %arg2[%c0_1, %c0_2] : memref<3x128xf32, #tpu.memory_space<vmem>>, vector<3x128xf32>
    %42 = vector.extract_strided_slice %41 {offsets = [0, 0], sizes = [1, 128], strides = [1, 1]} : vector<3x128xf32> to vector<1x128xf32>
    %43 = vector.shape_cast %42 : vector<1x128xf32> to vector<1x1x128xf32>
    %44 = vector.extract_strided_slice %41 {offsets = [1, 0], sizes = [1, 128], strides = [1, 1]} : vector<3x128xf32> to vector<1x128xf32>
    %45 = vector.shape_cast %44 : vector<1x128xf32> to vector<1x1x128xf32>
    %46 = vector.extract_strided_slice %41 {offsets = [2, 0], sizes = [1, 128], strides = [1, 1]} : vector<3x128xf32> to vector<1x128xf32>
    %47 = vector.shape_cast %46 : vector<1x128xf32> to vector<1x1x128xf32>
    %c0_3 = arith.constant 0 : index
    %c0_4 = arith.constant 0 : index
    %48 = vector.load %arg3[%c0_3, %c0_4] : memref<1x128xf32, #tpu.memory_space<vmem>>, vector<1x128xf32>
    %49 = vector.shape_cast %48 : vector<1x128xf32> to vector<1x1x128xf32>
    %50 = vector.broadcast %43 : vector<1x1x128xf32> to vector<7x128x128xf32>
    %51 = arith.mulf %13, %50 : vector<7x128x128xf32>
    %52 = vector.broadcast %45 : vector<1x1x128xf32> to vector<7x128x128xf32>
    %53 = arith.mulf %22, %52 : vector<7x128x128xf32>
    %54 = arith.addf %51, %53 : vector<7x128x128xf32>
    %55 = vector.broadcast %47 : vector<1x1x128xf32> to vector<7x128x128xf32>
    %56 = arith.mulf %31, %55 : vector<7x128x128xf32>
    %57 = arith.addf %54, %56 : vector<7x128x128xf32>
    %58 = vector.broadcast %49 : vector<1x1x128xf32> to vector<7x128x128xf32>
    %59 = arith.addf %57, %58 : vector<7x128x128xf32>
    %cst = arith.constant 0.000000e+00 : f32
    %60 = vector.broadcast %cst : f32 to vector<7x128x128xf32>
    %61 = arith.maximumf %59, %60 : vector<7x128x128xf32>
    %62 = vector.broadcast %43 : vector<1x1x128xf32> to vector<7x128x128xf32>
    %63 = arith.mulf %22, %62 : vector<7x128x128xf32>
    %64 = vector.broadcast %45 : vector<1x1x128xf32> to vector<7x128x128xf32>
    %65 = arith.mulf %31, %64 : vector<7x128x128xf32>
    %66 = arith.addf %63, %65 : vector<7x128x128xf32>
    %67 = vector.broadcast %47 : vector<1x1x128xf32> to vector<7x128x128xf32>
    %68 = arith.mulf %40, %67 : vector<7x128x128xf32>
    %69 = arith.addf %66, %68 : vector<7x128x128xf32>
    %70 = vector.broadcast %49 : vector<1x1x128xf32> to vector<7x128x128xf32>
    %71 = arith.addf %69, %70 : vector<7x128x128xf32>
    %cst_5 = arith.constant 0.000000e+00 : f32
    %72 = vector.broadcast %cst_5 : f32 to vector<7x128x128xf32>
    %73 = arith.maximumf %71, %72 : vector<7x128x128xf32>
    %74 = arith.maximumf %61, %73 : vector<7x128x128xf32>
    %75 = vector.extract_strided_slice %74 {offsets = [0, 0, 0], sizes = [6, 128, 128], strides = [1, 1, 1]} : vector<7x128x128xf32> to vector<6x128x128xf32>
    %76 = arith.truncf %75 : vector<6x128x128xf32> to vector<6x128x128xbf16>
    %77 = vector.extract_strided_slice %74 {offsets = [1, 0, 0], sizes = [6, 128, 128], strides = [1, 1, 1]} : vector<7x128x128xf32> to vector<6x128x128xf32>
    %78 = arith.truncf %77 : vector<6x128x128xf32> to vector<6x128x128xbf16>
    %c0_6 = arith.constant 0 : index
    %c0_7 = arith.constant 0 : index
    %79 = vector.load %arg4[%c0_6, %c0_7] : memref<128x64xbf16, #tpu.memory_space<vmem>>, vector<128x64xbf16>
    %80 = vector.shape_cast %79 : vector<128x64xbf16> to vector<1x128x64xbf16>
    %81 = vector.shape_cast %80 : vector<1x128x64xbf16> to vector<1x128x64xbf16>
    %82 = vector.broadcast %81 : vector<1x128x64xbf16> to vector<6x128x64xbf16>
    %c0_8 = arith.constant 0 : index
    %c0_9 = arith.constant 0 : index
    %83 = vector.load %arg5[%c0_8, %c0_9] : memref<128x64xbf16, #tpu.memory_space<vmem>>, vector<128x64xbf16>
    %84 = vector.shape_cast %83 : vector<128x64xbf16> to vector<1x128x64xbf16>
    %85 = vector.shape_cast %84 : vector<1x128x64xbf16> to vector<1x128x64xbf16>
    %86 = vector.broadcast %85 : vector<1x128x64xbf16> to vector<6x128x64xbf16>
    "tpu.trace_start"() <{level = 10 : i32, message = "sbk,skn->sbn"}> : () -> ()
    %cst_10 = arith.constant dense<0.000000e+00> : vector<6x128x64xf32>
    %87 = tpu.matmul %76, %82, %cst_10 {dimension_numbers = #tpu.dot_dimension_numbers<[2], [1], [1], [2], [0, 0, 0, 1, 1, 2], [0], [0]>} : vector<6x128x128xbf16>, vector<6x128x64xbf16>, vector<6x128x64xf32> -> vector<6x128x64xf32>
    %cst_11 = arith.constant dense<0.000000e+00> : vector<6x128x64xf32>
    %88 = tpu.matmul %78, %86, %cst_11 {dimension_numbers = #tpu.dot_dimension_numbers<[2], [1], [1], [2], [0, 0, 0, 1, 1, 2], [0], [0]>} : vector<6x128x128xbf16>, vector<6x128x64xbf16>, vector<6x128x64xf32> -> vector<6x128x64xf32>
    "tpu.trace_stop"() : () -> ()
    %89 = arith.addf %87, %88 : vector<6x128x64xf32>
    %c0_12 = arith.constant 0 : index
    %c0_13 = arith.constant 0 : index
    %90 = vector.load %arg6[%c0_12, %c0_13] : memref<1x64xf32, #tpu.memory_space<vmem>>, vector<1x64xf32>
    %91 = vector.shape_cast %90 : vector<1x64xf32> to vector<1x1x64xf32>
    %92 = vector.broadcast %91 : vector<1x1x64xf32> to vector<6x128x64xf32>
    %93 = arith.addf %89, %92 : vector<6x128x64xf32>
    %cst_14 = arith.constant 0.000000e+00 : f32
    %94 = vector.broadcast %cst_14 : f32 to vector<6x128x64xf32>
    %95 = arith.maximumf %93, %94 : vector<6x128x64xf32>
    %96 = vector.extract_strided_slice %95 {offsets = [0, 0, 0], sizes = [6, 128, 32], strides = [1, 1, 1]} : vector<6x128x64xf32> to vector<6x128x32xf32>
    %97 = vector.extract_strided_slice %95 {offsets = [0, 0, 32], sizes = [6, 128, 32], strides = [1, 1, 1]} : vector<6x128x64xf32> to vector<6x128x32xf32>
    %98 = arith.maximumf %96, %97 : vector<6x128x32xf32>
    %99 = arith.truncf %98 : vector<6x128x32xf32> to vector<6x128x32xbf16>
    %c0_15 = arith.constant 0 : index
    %c0_16 = arith.constant 0 : index
    %c0_17 = arith.constant 0 : index
    %100 = vector.load %arg7[%c0_15, %c0_16, %c0_17] : memref<6x32x64xbf16, #tpu.memory_space<vmem>>, vector<6x32x64xbf16>
    "tpu.trace_start"() <{level = 10 : i32, message = "sbc,sch->sbh"}> : () -> ()
    %cst_18 = arith.constant dense<0.000000e+00> : vector<6x128x64xf32>
    %101 = tpu.matmul %99, %100, %cst_18 {dimension_numbers = #tpu.dot_dimension_numbers<[2], [1], [1], [2], [0, 0, 0, 1, 1, 2], [0], [0]>} : vector<6x128x32xbf16>, vector<6x32x64xbf16>, vector<6x128x64xf32> -> vector<6x128x64xf32>
    "tpu.trace_stop"() : () -> ()
    %cst_19 = arith.constant dense<0.000000e+00> : vector<128x64xf32>
    %102 = vector.multi_reduction <add>, %101, %cst_19 [0] : vector<6x128x64xf32> to vector<128x64xf32>
    %c0_20 = arith.constant 0 : index
    %c0_21 = arith.constant 0 : index
    %103 = vector.load %arg8[%c0_20, %c0_21] : memref<1x64xf32, #tpu.memory_space<vmem>>, vector<1x64xf32>
    %104 = vector.broadcast %103 : vector<1x64xf32> to vector<128x64xf32>
    %105 = arith.addf %102, %104 : vector<128x64xf32>
    %cst_22 = arith.constant 0.000000e+00 : f32
    %106 = vector.broadcast %cst_22 : f32 to vector<128x64xf32>
    %107 = arith.maximumf %105, %106 : vector<128x64xf32>
    %c0_23 = arith.constant 0 : index
    %c0_24 = arith.constant 0 : index
    %108 = vector.load %arg9[%c0_23, %c0_24] : memref<64x1xf32, #tpu.memory_space<vmem>>, vector<64x1xf32>
    %cst_25 = arith.constant dense<0.000000e+00> : vector<128x1xf32>
    %109 = tpu.matmul %107, %108, %cst_25 {dimension_numbers = #tpu.dot_dimension_numbers<[1], [0], [0], [1], [0, 0, 1, 1], [], []>} : vector<128x64xf32>, vector<64x1xf32>, vector<128x1xf32> -> vector<128x1xf32>
    %c0_26 = arith.constant 0 : index
    %c0_27 = arith.constant 0 : index
    %110 = vector.load %arg10[%c0_26, %c0_27] : memref<1x1xf32, #tpu.memory_space<vmem>>, vector<1x1xf32>
    %111 = vector.broadcast %110 : vector<1x1xf32> to vector<128x1xf32>
    %112 = arith.addf %109, %111 : vector<128x1xf32>
    %cst_28 = arith.constant 0.000000e+00 : f32
    %113 = vector.broadcast %cst_28 : f32 to vector<128x1xf32>
    %114 = arith.subf %113, %112 : vector<128x1xf32>
    %115 = math.exp %114 : vector<128x1xf32>
    %cst_29 = arith.constant 1.000000e+00 : f32
    %116 = vector.broadcast %cst_29 : f32 to vector<128x1xf32>
    %117 = arith.addf %116, %115 : vector<128x1xf32>
    %cst_30 = arith.constant 1.000000e+00 : f32
    %118 = vector.broadcast %cst_30 : f32 to vector<128x1xf32>
    %119 = arith.divf %118, %117 : vector<128x1xf32>
    %c0_31 = arith.constant 0 : index
    %c0_32 = arith.constant 0 : index
    %120 = vector.load %arg11[%c0_31, %c0_32] : memref<128x1xf32, #tpu.memory_space<vmem>>, vector<128x1xf32>
    tpu.vector_store %arg11[%c0_31, %c0_32], %119 {strides = array<i32>} : memref<128x1xf32, #tpu.memory_space<vmem>>, vector<128x1xf32>,
    return
  }
  func.func @transform_0(%arg0: i32) -> (i32, i32) {
    %c0_i32 = arith.constant 0 : i32
    %c0_i32_0 = arith.constant 0 : i32
    return %c0_i32, %arg0 : i32, i32
  }
  func.func @transform_1(%arg0: i32) -> (i32, i32) {
    %c0_i32 = arith.constant 0 : i32
    %c0_i32_0 = arith.constant 0 : i32
    %c0_i32_1 = arith.constant 0 : i32
    return %c0_i32, %c0_i32_0 : i32, i32
  }
  func.func @transform_2(%arg0: i32) -> (i32, i32) {
    %c0_i32 = arith.constant 0 : i32
    %c0_i32_0 = arith.constant 0 : i32
    %c0_i32_1 = arith.constant 0 : i32
    return %c0_i32, %c0_i32_0 : i32, i32
  }
  func.func @transform_3(%arg0: i32) -> (i32, i32) {
    %c0_i32 = arith.constant 0 : i32
    %c0_i32_0 = arith.constant 0 : i32
    %c0_i32_1 = arith.constant 0 : i32
    return %c0_i32, %c0_i32_0 : i32, i32
  }
  func.func @transform_4(%arg0: i32) -> (i32, i32) {
    %c0_i32 = arith.constant 0 : i32
    %c0_i32_0 = arith.constant 0 : i32
    %c0_i32_1 = arith.constant 0 : i32
    return %c0_i32, %c0_i32_0 : i32, i32
  }
  func.func @transform_5(%arg0: i32) -> (i32, i32) {
    %c0_i32 = arith.constant 0 : i32
    %c0_i32_0 = arith.constant 0 : i32
    %c0_i32_1 = arith.constant 0 : i32
    return %c0_i32, %c0_i32_0 : i32, i32
  }
  func.func @transform_6(%arg0: i32) -> (i32, i32, i32) {
    %c0_i32 = arith.constant 0 : i32
    %c0_i32_0 = arith.constant 0 : i32
    %c0_i32_1 = arith.constant 0 : i32
    %c0_i32_2 = arith.constant 0 : i32
    return %c0_i32, %c0_i32_0, %c0_i32_1 : i32, i32, i32
  }
  func.func @transform_7(%arg0: i32) -> (i32, i32) {
    %c0_i32 = arith.constant 0 : i32
    %c0_i32_0 = arith.constant 0 : i32
    %c0_i32_1 = arith.constant 0 : i32
    return %c0_i32, %c0_i32_0 : i32, i32
  }
  func.func @transform_8(%arg0: i32) -> (i32, i32) {
    %c0_i32 = arith.constant 0 : i32
    %c0_i32_0 = arith.constant 0 : i32
    %c0_i32_1 = arith.constant 0 : i32
    return %c0_i32, %c0_i32_0 : i32, i32
  }
  func.func @transform_9(%arg0: i32) -> (i32, i32) {
    %c0_i32 = arith.constant 0 : i32
    %c0_i32_0 = arith.constant 0 : i32
    %c0_i32_1 = arith.constant 0 : i32
    return %c0_i32, %c0_i32_0 : i32, i32
  }
  func.func @transform_10(%arg0: i32) -> (i32, i32) {
    %c0_i32 = arith.constant 0 : i32
    %c0_i32_0 = arith.constant 0 : i32
    return %arg0, %c0_i32 : i32, i32
  }
}

</mosaic_0001>

<llo_original>
// kernel: cnn_forward.1
$region0: #{cnn_forward.1}
  #allocation0 [shape = 'u32[]', space=smem, size = 0x4, offset = 0x4, fixed_abs, tag = 'smem constant byte address 0x4 - core index']
  #allocation1 [shape = 'u32[144,128]{1,0:T(1,128)}', space=vmem, size = 0x12000, scoped, tag = 'internal scratch']
  #allocation2 [shape = 'f32[1,1]{1,0:T(1,128)S(1)}', space=vmem, size = 0x200, scoped, tag = 'scoped memory for cnn_forward.1']
  %s0 = inlined_call_operand.vmem [shape: f32[32,256], index: 0, kind: input, shape index: {}]
  %s1 = inlined_call_operand.vmem [shape: f32[3,128], index: 1, kind: input, shape index: {}]
  %s2 = inlined_call_operand.vmem [shape: f32[1,128], index: 2, kind: input, shape index: {}]
  %s3 = inlined_call_operand.vmem [shape: bf16[128,64], index: 3, kind: input, shape index: {}]
  %s4 = inlined_call_operand.vmem [shape: bf16[128,64], index: 4, kind: input, shape index: {}]
  %s5 = inlined_call_operand.vmem [shape: f32[1,64], index: 5, kind: input, shape index: {}]
  %s6 = inlined_call_operand.vmem [shape: bf16[6,32,64], index: 6, kind: input, shape index: {}]
  %s7 = inlined_call_operand.vmem [shape: f32[1,64], index: 7, kind: input, shape index: {}]
  %s8 = inlined_call_operand.vmem [shape: f32[64,1], index: 8, kind: input, shape index: {}]
  %s9 = inlined_call_operand.<no memory space> [shape: f32[1,1], index: 9, kind: input, shape index: {}]
  %s10 = inlined_call_operand.vmem [shape: f32[256,1], index: 10, kind: output, shape index: {}]
  %s11 = sld [smem:[#allocation0]]
  $region111: #{cnn_forward.1} parent=0
    _
  %s13 = ssub.s32 1, %s11
  %s14 = scalar_select 0, %s13, %s11
  %v15 = vstv %s9
  %16 = vst [vmem:[#allocation2] sm:$0x1] %v15
  $region1: #{cnn_forward.1} parent=0
    #allocation3 [shape = 'u8[32768]{0}', space=vmem, size = 0x8000, scoped, tag = 'input window, operand 0']
    loop: start=0, step=1, limit=4
    $region2: #{cnn_forward.1} parent=1 // loop_pre_header
      _
    $region3: #{cnn_forward.1} parent=1 // loop_header
      %s18 = sphi 0, %s22
      %p19 = scmp.ge.s32.totalorder %s18, 4
      %s28 = sphi 0, %s30
      %s31 = sphi 0, %s28
      %s32 = sphi 0, %s31
      %s48 = sphi 0, %s32
      %s52 = sphi 0, %s52
      %s54 = sphi 0, %s52
      %s55 = sphi 0, %s54
      %s69 = sphi 0, %s55
      %s73 = sphi 0, %s73
      %s75 = sphi 0, %s73
      %s76 = sphi 0, %s75
      %s90 = sphi 0, %s76
      %s94 = sphi 0, %s94
      %s96 = sphi 0, %s94
      %s97 = sphi 0, %s96
      %s111 = sphi 0, %s97
      %s115 = sphi 0, %s115
      %s117 = sphi 0, %s115
      %s118 = sphi 0, %s117
      %s132 = sphi 0, %s118
      %s136 = sphi 0, %s136
      %s138 = sphi 0, %s136
      %s139 = sphi 0, %s138
      %s153 = sphi 0, %s139
      %s157 = sphi 0, %s157
      %s159 = sphi 0, %s157
      %s160 = sphi 0, %s159
      %s174 = sphi 0, %s160
      %s178 = sphi 0, %s178
      %s180 = sphi 0, %s178
      %s181 = sphi 0, %s180
      %s195 = sphi 0, %s181
      %s199 = sphi 0, %s199
      %s201 = sphi 0, %s199
      %s202 = sphi 0, %s201
      %s216 = sphi 0, %s202
      %s220 = sphi 0, %s220
      %s222 = sphi 0, %s220
      %s223 = sphi 0, %s222
      %s237 = sphi 0, %s223
      %s243 = sphi 0, %s245
      %s246 = sphi 0, %s243
      %s247 = sphi 0, %s246
      %s263 = sphi 0, %s247
    $region4: #{cnn_forward.1} parent=1 // loop_header_branch
      %21 = sbr.rel (%p19) target = $region8
    $region5: #{cnn_forward.1} parent=1 // loop_body
      %s23 = ssub.s32 %s18, 1
      %s24 = ssub.s32 %s18, 2
      %s25 = sadd.s32 %s18, 1
      %s26 = ssub.s32 %s18, %s25
      %p27 = scmp.eq.s32.totalorder %s26, 0
      %s29 = sadd.s32 %s28, 1
      %s30 = scalar_select %p27, %s28, %s29
      %p33 = pneg %p27
      %p34 = scmp.eq.s32.totalorder %s18, 1
      %p35 = por %p33, %p34
      %p36 = scmp.ne.s32.totalorder %s28, %s31
      %p37 = scmp.eq.s32.totalorder %s18, 0
      %p38 = por %p36, %p37
      %p39 = scmp.ne.s32.totalorder %s28, %s31
      %p40 = scmp.eq.s32.totalorder %s23, 1
      %p41 = por %p39, %p40
      %p42 = scmp.ne.s32.totalorder %s31, %s32
      %p43 = scmp.eq.s32.totalorder %s23, 0
      %p44 = por %p42, %p43
      %p45 = scmp.ne.s32.totalorder %s31, %s32
      %p46 = scmp.eq.s32.totalorder %s24, 1
      %p47 = por %p45, %p46
      %p49 = scmp.ne.s32.totalorder %s32, %s48
      %p50 = scmp.eq.s32.totalorder %s24, 0
      %p51 = por %p49, %p50
      %s53 = sadd.s32 %s52, 1
      %p56 = scmp.eq.s32.totalorder %s18, 1
      %p57 = scmp.ne.s32.totalorder %s52, %s54
      %p58 = scmp.eq.s32.totalorder %s18, 0
      %p59 = por %p57, %p58
      %p60 = scmp.ne.s32.totalorder %s52, %s54
      %p61 = scmp.eq.s32.totalorder %s23, 1
      %p62 = por %p60, %p61
      %p63 = scmp.ne.s32.totalorder %s54, %s55
      %p64 = scmp.eq.s32.totalorder %s23, 0
      %p65 = por %p63, %p64
      %p66 = scmp.ne.s32.totalorder %s54, %s55
      %p67 = scmp.eq.s32.totalorder %s24, 1
      %p68 = por %p66, %p67
      %p70 = scmp.ne.s32.totalorder %s55, %s69
      %p71 = scmp.eq.s32.totalorder %s24, 0
      %p72 = por %p70, %p71
      %s74 = sadd.s32 %s73, 1
      %p77 = scmp.eq.s32.totalorder %s18, 1
      %p78 = scmp.ne.s32.totalorder %s73, %s75
      %p79 = scmp.eq.s32.totalorder %s18, 0
      %p80 = por %p78, %p79
      %p81 = scmp.ne.s32.totalorder %s73, %s75
      %p82 = scmp.eq.s32.totalorder %s23, 1
      %p83 = por %p81, %p82
      %p84 = scmp.ne.s32.totalorder %s75, %s76
      %p85 = scmp.eq.s32.totalorder %s23, 0
      %p86 = por %p84, %p85
      %p87 = scmp.ne.s32.totalorder %s75, %s76
      %p88 = scmp.eq.s32.totalorder %s24, 1
      %p89 = por %p87, %p88
      %p91 = scmp.ne.s32.totalorder %s76, %s90
      %p92 = scmp.eq.s32.totalorder %s24, 0
      %p93 = por %p91, %p92
      %s95 = sadd.s32 %s94, 1
      %p98 = scmp.eq.s32.totalorder %s18, 1
      %p99 = scmp.ne.s32.totalorder %s94, %s96
      %p100 = scmp.eq.s32.totalorder %s18, 0
      %p101 = por %p99, %p100
      %p102 = scmp.ne.s32.totalorder %s94, %s96
      %p103 = scmp.eq.s32.totalorder %s23, 1
      %p104 = por %p102, %p103
      %p105 = scmp.ne.s32.totalorder %s96, %s97
      %p106 = scmp.eq.s32.totalorder %s23, 0
      %p107 = por %p105, %p106
      %p108 = scmp.ne.s32.totalorder %s96, %s97
      %p109 = scmp.eq.s32.totalorder %s24, 1
      %p110 = por %p108, %p109
      %p112 = scmp.ne.s32.totalorder %s97, %s111
      %p113 = scmp.eq.s32.totalorder %s24, 0
      %p114 = por %p112, %p113
      %s116 = sadd.s32 %s115, 1
      %p119 = scmp.eq.s32.totalorder %s18, 1
      %p120 = scmp.ne.s32.totalorder %s115, %s117
      %p121 = scmp.eq.s32.totalorder %s18, 0
      %p122 = por %p120, %p121
      %p123 = scmp.ne.s32.totalorder %s115, %s117
      %p124 = scmp.eq.s32.totalorder %s23, 1
      %p125 = por %p123, %p124
      %p126 = scmp.ne.s32.totalorder %s117, %s118
      %p127 = scmp.eq.s32.totalorder %s23, 0
      %p128 = por %p126, %p127
      %p129 = scmp.ne.s32.totalorder %s117, %s118
      %p130 = scmp.eq.s32.totalorder %s24, 1
      %p131 = por %p129, %p130
      %p133 = scmp.ne.s32.totalorder %s118, %s132
      %p134 = scmp.eq.s32.totalorder %s24, 0
      %p135 = por %p133, %p134
      %s137 = sadd.s32 %s136, 1
      %p140 = scmp.eq.s32.totalorder %s18, 1
      %p141 = scmp.ne.s32.totalorder %s136, %s138
      %p142 = scmp.eq.s32.totalorder %s18, 0
      %p143 = por %p141, %p142
      %p144 = scmp.ne.s32.totalorder %s136, %s138
      %p145 = scmp.eq.s32.totalorder %s23, 1
      %p146 = por %p144, %p145
      %p147 = scmp.ne.s32.totalorder %s138, %s139
      %p148 = scmp.eq.s32.totalorder %s23, 0
      %p149 = por %p147, %p148
      %p150 = scmp.ne.s32.totalorder %s138, %s139
      %p151 = scmp.eq.s32.totalorder %s24, 1
      %p152 = por %p150, %p151
      %p154 = scmp.ne.s32.totalorder %s139, %s153
      %p155 = scmp.eq.s32.totalorder %s24, 0
      %p156 = por %p154, %p155
      %s158 = sadd.s32 %s157, 1
      %p161 = scmp.eq.s32.totalorder %s18, 1
      %p162 = scmp.ne.s32.totalorder %s157, %s159
      %p163 = scmp.eq.s32.totalorder %s18, 0
      %p164 = por %p162, %p163
      %p165 = scmp.ne.s32.totalorder %s157, %s159
      %p166 = scmp.eq.s32.totalorder %s23, 1
      %p167 = por %p165, %p166
      %p168 = scmp.ne.s32.totalorder %s159, %s160
      %p169 = scmp.eq.s32.totalorder %s23, 0
      %p170 = por %p168, %p169
      %p171 = scmp.ne.s32.totalorder %s159, %s160
      %p172 = scmp.eq.s32.totalorder %s24, 1
      %p173 = por %p171, %p172
      %p175 = scmp.ne.s32.totalorder %s160, %s174
      %p176 = scmp.eq.s32.totalorder %s24, 0
      %p177 = por %p175, %p176
      %s179 = sadd.s32 %s178, 1
      %p182 = scmp.eq.s32.totalorder %s18, 1
      %p183 = scmp.ne.s32.totalorder %s178, %s180
      %p184 = scmp.eq.s32.totalorder %s18, 0
      %p185 = por %p183, %p184
      %p186 = scmp.ne.s32.totalorder %s178, %s180
      %p187 = scmp.eq.s32.totalorder %s23, 1
      %p188 = por %p186, %p187
      %p189 = scmp.ne.s32.totalorder %s180, %s181
      %p190 = scmp.eq.s32.totalorder %s23, 0
      %p191 = por %p189, %p190
      %p192 = scmp.ne.s32.totalorder %s180, %s181
      %p193 = scmp.eq.s32.totalorder %s24, 1
      %p194 = por %p192, %p193
      %p196 = scmp.ne.s32.totalorder %s181, %s195
      %p197 = scmp.eq.s32.totalorder %s24, 0
      %p198 = por %p196, %p197
      %s200 = sadd.s32 %s199, 1
      %p203 = scmp.eq.s32.totalorder %s18, 1
      %p204 = scmp.ne.s32.totalorder %s199, %s201
      %p205 = scmp.eq.s32.totalorder %s18, 0
      %p206 = por %p204, %p205
      %p207 = scmp.ne.s32.totalorder %s199, %s201
      %p208 = scmp.eq.s32.totalorder %s23, 1
      %p209 = por %p207, %p208
      %p210 = scmp.ne.s32.totalorder %s201, %s202
      %p211 = scmp.eq.s32.totalorder %s23, 0
      %p212 = por %p210, %p211
      %p213 = scmp.ne.s32.totalorder %s201, %s202
      %p214 = scmp.eq.s32.totalorder %s24, 1
      %p215 = por %p213, %p214
      %p217 = scmp.ne.s32.totalorder %s202, %s216
      %p218 = scmp.eq.s32.totalorder %s24, 0
      %p219 = por %p217, %p218
      %s221 = sadd.s32 %s220, 1
      %p224 = scmp.eq.s32.totalorder %s18, 1
      %p225 = scmp.ne.s32.totalorder %s220, %s222
      %p226 = scmp.eq.s32.totalorder %s18, 0
      %p227 = por %p225, %p226
      %p228 = scmp.ne.s32.totalorder %s220, %s222
      %p229 = scmp.eq.s32.totalorder %s23, 1
      %p230 = por %p228, %p229
      %p231 = scmp.ne.s32.totalorder %s222, %s223
      %p232 = scmp.eq.s32.totalorder %s23, 0
      %p233 = por %p231, %p232
      %p234 = scmp.ne.s32.totalorder %s222, %s223
      %p235 = scmp.eq.s32.totalorder %s24, 1
      %p236 = por %p234, %p235
      %p238 = scmp.ne.s32.totalorder %s223, %s237
      %p239 = scmp.eq.s32.totalorder %s24, 0
      %p240 = por %p238, %p239
      %s241 = ssub.s32 %s18, %s25
      %p242 = scmp.eq.s32.totalorder %s241, 0
      %s244 = sadd.s32 %s243, 1
      %s245 = scalar_select %p242, %s243, %s244
      %p248 = pneg %p242
      %p249 = scmp.eq.s32.totalorder %s18, 1
      %p250 = por %p248, %p249
      %p251 = scmp.ne.s32.totalorder %s243, %s246
      %p252 = scmp.eq.s32.totalorder %s18, 0
      %p253 = por %p251, %p252
      %p254 = scmp.ne.s32.totalorder %s243, %s246
      %p255 = scmp.eq.s32.totalorder %s23, 1
      %p256 = por %p254, %p255
      %p257 = scmp.ne.s32.totalorder %s246, %s247
      %p258 = scmp.eq.s32.totalorder %s23, 0
      %p259 = por %p257, %p258
      %p260 = scmp.ne.s32.totalorder %s246, %s247
      %p261 = scmp.eq.s32.totalorder %s24, 1
      %p262 = por %p260, %p261
      %p264 = scmp.ne.s32.totalorder %s247, %s263
      %p265 = scmp.eq.s32.totalorder %s24, 0
      %p266 = por %p264, %p265
      %p267 = scmp.le.s32.totalorder 1, %s18
      %p268 = scmp.lt.s32.totalorder %s18, 3
      %p269 = pnand %p267, %p268
      %p270 = pneg %p269
      // Predicated region
      $region9: #{cnn_forward.1} parent=5 // pred_check
        _
      $region10: #{cnn_forward.1} parent=5 // pred_check_branch
        %272 = sbr.rel (%p269) target = $region12
      $region11: #{cnn_forward.1} parent=5 // pred_region
        %s273 = ssub.s32 %s18, 1
        // Predicated region
        $region13: #{cnn_forward.1} parent=11 // pred_check
          %p274 = pneg %p65
        $region14: #{cnn_forward.1} parent=11 // pred_check_branch
          %276 = sbr.rel (%p274) target = $region16
        $region15: #{cnn_forward.1} parent=11 // pred_region
          _
        $region16: #{cnn_forward.1} parent=11 // pred_fallthru
          _
        // Predicated region
        $region17: #{cnn_forward.1} parent=11 // pred_check
          %p277 = pneg %p86
        $region18: #{cnn_forward.1} parent=11 // pred_check_branch
          %279 = sbr.rel (%p277) target = $region20
        $region19: #{cnn_forward.1} parent=11 // pred_region
          _
        $region20: #{cnn_forward.1} parent=11 // pred_fallthru
          _
        // Predicated region
        $region21: #{cnn_forward.1} parent=11 // pred_check
          %p280 = pneg %p107
        $region22: #{cnn_forward.1} parent=11 // pred_check_branch
          %282 = sbr.rel (%p280) target = $region24
        $region23: #{cnn_forward.1} parent=11 // pred_region
          _
        $region24: #{cnn_forward.1} parent=11 // pred_fallthru
          _
        // Predicated region
        $region25: #{cnn_forward.1} parent=11 // pred_check
          %p283 = pneg %p128
        $region26: #{cnn_forward.1} parent=11 // pred_check_branch
          %285 = sbr.rel (%p283) target = $region28
        $region27: #{cnn_forward.1} parent=11 // pred_region
          _
        $region28: #{cnn_forward.1} parent=11 // pred_fallthru
          _
        // Predicated region
        $region29: #{cnn_forward.1} parent=11 // pred_check
          %p286 = pneg %p149
        $region30: #{cnn_forward.1} parent=11 // pred_check_branch
          %288 = sbr.rel (%p286) target = $region32
        $region31: #{cnn_forward.1} parent=11 // pred_region
          _
        $region32: #{cnn_forward.1} parent=11 // pred_fallthru
          _
        // Predicated region
        $region33: #{cnn_forward.1} parent=11 // pred_check
          %p289 = pneg %p170
        $region34: #{cnn_forward.1} parent=11 // pred_check_branch
          %291 = sbr.rel (%p289) target = $region36
        $region35: #{cnn_forward.1} parent=11 // pred_region
          _
        $region36: #{cnn_forward.1} parent=11 // pred_fallthru
          _
        // Predicated region
        $region37: #{cnn_forward.1} parent=11 // pred_check
          %p292 = pneg %p191
        $region38: #{cnn_forward.1} parent=11 // pred_check_branch
          %294 = sbr.rel (%p292) target = $region40
        $region39: #{cnn_forward.1} parent=11 // pred_region
          _
        $region40: #{cnn_forward.1} parent=11 // pred_fallthru
          _
        // Predicated region
        $region41: #{cnn_forward.1} parent=11 // pred_check
          %p295 = pneg %p212
        $region42: #{cnn_forward.1} parent=11 // pred_check_branch
          %297 = sbr.rel (%p295) target = $region44
        $region43: #{cnn_forward.1} parent=11 // pred_region
          _
        $region44: #{cnn_forward.1} parent=11 // pred_fallthru
          _
        // Predicated region
        $region45: #{cnn_forward.1} parent=11 // pred_check
          %p298 = pneg %p233
        $region46: #{cnn_forward.1} parent=11 // pred_check_branch
          %300 = sbr.rel (%p298) target = $region48
        $region47: #{cnn_forward.1} parent=11 // pred_region
          _
        $region48: #{cnn_forward.1} parent=11 // pred_fallthru
          _
      $region12: #{cnn_forward.1} parent=5 // pred_fallthru
        _
      %p301 = scmp.lt.s32.totalorder %s18, 2
      // Predicated region
      $region49: #{cnn_forward.1} parent=5 // pred_check
        %p302 = pneg %p301
      $region50: #{cnn_forward.1} parent=5 // pred_check_branch
        %304 = sbr.rel (%p302) target = $region52
      $region51: #{cnn_forward.1} parent=5 // pred_region
        // Predicated region
        $region53: #{cnn_forward.1} parent=51 // pred_check
          %p305 = pneg %p38
        $region54: #{cnn_forward.1} parent=51 // pred_check_branch
          %307 = sbr.rel (%p305) target = $region56
        $region55: #{cnn_forward.1} parent=51 // pred_region
          %s308 = sand.u32 %s28, 1
          %s309 = sand.u32 %s28, 1
          %s310 = smul.addr %s309, 32
          %s311 = scalar_lea.vmem [#allocation3], %s310
          %s312 = smul.addr %s18, 8
          %s313 = scalar_lea.vmem %s0, %s312
          // Predicated region
          $region57: #{cnn_forward.1} parent=55 // pred_check
            _
          $region58: #{cnn_forward.1} parent=55 // pred_check_branch
            %315 = sbr.rel (0) target = $region60
          $region59: #{cnn_forward.1} parent=55 // pred_region
            // Predicated region
            $region61: #{cnn_forward.1} parent=59 // pred_check
              _
            $region62: #{cnn_forward.1} parent=59 // pred_check_branch
              %317 = sbr.rel (0) target = $region64
            $region63: #{cnn_forward.1} parent=59 // pred_region
              // Predicated region
              $region76: #{cnn_forward.1} parent=63 // pred_check
                _
              $region77: #{cnn_forward.1} parent=63 // pred_check_branch
                %338 = sbr.rel (0) target = $region79
              $region78: #{cnn_forward.1} parent=63 // pred_region
                loop: start=0, step=1, limit=1
                $region80: #{cnn_forward.1} parent=78 // loop_pre_header
                  _
                $region81: #{cnn_forward.1} parent=78 // loop_header
                  %s340 = sphi 0, %s344
                  %p341 = scmp.ge.s32.totalorder %s340, 1
                  %s345 = sphi %s313, %s313
                  %s346 = sphi %s311, %s311
                $region82: #{cnn_forward.1} parent=78 // loop_header_branch
                  %343 = sbr.rel (%p341) target = $region86
                $region83: #{cnn_forward.1} parent=78 // loop_body
                  %v347 = vld [vmem:[%s345] sm:$0xff]
                  %348 = vst [vmem:[%s346] sm:$0xff] %v347
                  %v349 = vld [vmem:[%s345 + $0x10] sm:$0xff]
                  %350 = vst [vmem:[%s346 + $0x8] sm:$0xff] %v349
                  %v351 = vld [vmem:[%s345 + $0x20] sm:$0xff]
                  %352 = vst [vmem:[%s346 + $0x10] sm:$0xff] %v351
                  %v353 = vld [vmem:[%s345 + $0x30] sm:$0xff]
                  %354 = vst [vmem:[%s346 + $0x18] sm:$0xff] %v353
                $region84: #{cnn_forward.1} parent=78 // loop_footer
                  %s344 = sadd.s32 1, %s340
                $region85: #{cnn_forward.1} parent=78 // loop_footer_branch
                  %339 = sbr.rel target = $region81
                $region86: #{cnn_forward.1} parent=78 // loop_exit
                  _
              $region79: #{cnn_forward.1} parent=63 // pred_fallthru
                _
              // Predicated region
              $region87: #{cnn_forward.1} parent=63 // pred_check
                _
              $region88: #{cnn_forward.1} parent=63 // pred_check_branch
                %356 = sbr.rel target = $region90
              $region89: #{cnn_forward.1} parent=63 // pred_region
                _
              $region90: #{cnn_forward.1} parent=63 // pred_fallthru
                _
            $region64: #{cnn_forward.1} parent=59 // pred_fallthru
              _
            // Predicated region
            $region65: #{cnn_forward.1} parent=59 // pred_check
              _
            $region66: #{cnn_forward.1} parent=59 // pred_check_branch
              %319 = sbr.rel target = $region68
            $region67: #{cnn_forward.1} parent=59 // pred_region
              loop: start=0, step=1, limit=1
              $region69: #{cnn_forward.1} parent=67 // loop_pre_header
                _
              $region70: #{cnn_forward.1} parent=67 // loop_header
                %s322 = sphi 0, %s326
                %p323 = scmp.ge.s32.totalorder %s322, 1
                %s327 = sphi %s313, %s313
                %s328 = sphi %s311, %s311
              $region71: #{cnn_forward.1} parent=67 // loop_header_branch
                %325 = sbr.rel (%p323) target = $region75
              $region72: #{cnn_forward.1} parent=67 // loop_body
                %v329 = vld [vmem:[%s327] sm:$0xff]
                %330 = vst [vmem:[%s328] sm:$0xff] %v329
                %v331 = vld [vmem:[%s327 + $0x10] sm:$0xff]
                %332 = vst [vmem:[%s328 + $0x8] sm:$0xff] %v331
                %v333 = vld [vmem:[%s327 + $0x20] sm:$0xff]
                %334 = vst [vmem:[%s328 + $0x10] sm:$0xff] %v333
                %v335 = vld [vmem:[%s327 + $0x30] sm:$0xff]
                %336 = vst [vmem:[%s328 + $0x18] sm:$0xff] %v335
              $region73: #{cnn_forward.1} parent=67 // loop_footer
                %s326 = sadd.s32 1, %s322
              $region74: #{cnn_forward.1} parent=67 // loop_footer_branch
                %321 = sbr.rel target = $region70
              $region75: #{cnn_forward.1} parent=67 // loop_exit
                _
            $region68: #{cnn_forward.1} parent=59 // pred_fallthru
              _
          $region60: #{cnn_forward.1} parent=55 // pred_fallthru
            _
          %357 = vnop
        $region56: #{cnn_forward.1} parent=51 // pred_fallthru
          _
      $region52: #{cnn_forward.1} parent=5 // pred_fallthru
        _
      %p358 = scmp.le.s32.totalorder 1, %s18
      %p359 = scmp.lt.s32.totalorder %s18, 3
      %p360 = pnand %p358, %p359
      %p361 = pneg %p360
      // Predicated region
      $region91: #{cnn_forward.1} parent=5 // pred_check
        _
      $region92: #{cnn_forward.1} parent=5 // pred_check_branch
        %363 = sbr.rel (%p360) target = $region94
      $region93: #{cnn_forward.1} parent=5 // pred_region
        %s364 = ssub.s32 %s18, 1
        %s365 = sand.u32 %s31, 1
        %s366 = sand.u32 %s31, 1
        %s367 = smul.addr %s366, 32
        %s368 = scalar_lea.vmem [#allocation3], %s367
        // Predicated region
        $region95: #{cnn_forward.1} parent=93 // pred_check
          %p369 = pneg %p44
        $region96: #{cnn_forward.1} parent=93 // pred_check_branch
          %371 = sbr.rel (%p369) target = $region98
        $region97: #{cnn_forward.1} parent=93 // pred_region
          _
        $region98: #{cnn_forward.1} parent=93 // pred_fallthru
          _
        %s372 = sand.u32 %s31, 1
        %s373 = sand.u32 %s31, 1
        %s374 = smul.addr %s373, 32
        %s375 = scalar_lea.vmem [#allocation3], %s374
        %p376 = pneg %p44
        %p377 = pneg %p41
        %p378 = pneg %p65
        %p379 = pneg %p62
        %p380 = pneg %p86
        %p381 = pneg %p83
        %p382 = pneg %p107
        %p383 = pneg %p104
        %p384 = pneg %p128
        %p385 = pneg %p125
        %p386 = pneg %p149
        %p387 = pneg %p146
        %p388 = pneg %p170
        %p389 = pneg %p167
        %p390 = pneg %p191
        %p391 = pneg %p188
        %p392 = pneg %p212
        %p393 = pneg %p209
        %p394 = pneg %p233
        %p395 = pneg %p230
        %p396 = pneg %p259
        %p397 = pneg %p256
        %s398 = smul.u32 16, %s23
        %p399 = scmp.lt.s32.totalorder %s398, 31
        %s400 = scalar_select %p399, %s398, 31
        %s401 = smul.addr %s400, 8
        %s402 = scalar_lea.vmem %s10, %s401
        %s403 = smul.u32 16, %s23
        %p404 = scmp.lt.s32.totalorder %s403, 31
        %s405 = scalar_select %p404, %s403, 31
        %s406 = smul.addr %s405, 8
        %s407 = scalar_lea.vmem %s10, %s406
        %s408 = smul.u32 16, %s23
        %v410 = vld [vmem:[%s368] sm:$0xff]
        %v411 = vld [vmem:[%s368 + $0x8] sm:$0xff]
        %v412 = vld [vmem:[%s368 + $0x10] sm:$0xff]
        %v413 = vld [vmem:[%s368 + $0x18] sm:$0xff]
        %v414 = vlaneseq
        %v415 = vshrl.u32 %v414, 7
        %v416 = vsub.s32 0, %v415
        %v417 = vrot.slane %v410, %v416
        %419 = vbcast.lane.b32.xlu0 %v417, 256
        %v420 = vpop.permute.xlu0 %419
        %s422 = sor.u32 256, 8
        %423 = vbcast.lane.b32.xlu0 %v417, %s422
        %v424 = vpop.permute.xlu0 %423
        %s426 = sor.u32 256, 16
        %427 = vbcast.lane.b32.xlu0 %v417, %s426
        %v428 = vpop.permute.xlu0 %427
        %s430 = sor.u32 256, 24
        %431 = vbcast.lane.b32.xlu0 %v417, %s430
        %v432 = vpop.permute.xlu0 %431
        %s434 = sor.u32 256, 32
        %435 = vbcast.lane.b32.xlu0 %v417, %s434
        %v436 = vpop.permute.xlu0 %435
        %s438 = sor.u32 256, 40
        %439 = vbcast.lane.b32.xlu0 %v417, %s438
        %v440 = vpop.permute.xlu0 %439
        %s442 = sor.u32 256, 48
        %443 = vbcast.lane.b32.xlu0 %v417, %s442
        %v444 = vpop.permute.xlu0 %443
        %s446 = sor.u32 256, 56
        %447 = vbcast.lane.b32.xlu0 %v417, %s446
        %v448 = vpop.permute.xlu0 %447
        %s450 = sor.u32 256, 64
        %451 = vbcast.lane.b32.xlu0 %v417, %s450
        %v452 = vpop.permute.xlu0 %451
        %s454 = sor.u32 256, 72
        %455 = vbcast.lane.b32.xlu0 %v417, %s454
        %v456 = vpop.permute.xlu0 %455
        %s458 = sor.u32 256, 80
        %459 = vbcast.lane.b32.xlu0 %v417, %s458
        %v460 = vpop.permute.xlu0 %459
        %s462 = sor.u32 256, 88
        %463 = vbcast.lane.b32.xlu0 %v417, %s462
        %v464 = vpop.permute.xlu0 %463
        %s466 = sor.u32 256, 96
        %467 = vbcast.lane.b32.xlu0 %v417, %s466
        %v468 = vpop.permute.xlu0 %467
        %s470 = sor.u32 256, 104
        %471 = vbcast.lane.b32.xlu0 %v417, %s470
        %v472 = vpop.permute.xlu0 %471
        %s474 = sor.u32 256, 112
        %475 = vbcast.lane.b32.xlu0 %v417, %s474
        %v476 = vpop.permute.xlu0 %475
        %s478 = sor.u32 256, 120
        %479 = vbcast.lane.b32.xlu0 %v417, %s478
        %v480 = vpop.permute.xlu0 %479
        %v481 = vlaneseq
        %v482 = vshrl.u32 %v481, 7
        %v483 = vsub.s32 1, %v482
        %v484 = vrot.slane %v410, %v483
        %486 = vbcast.lane.b32.xlu0 %v484, 256
        %v487 = vpop.permute.xlu0 %486
        %s489 = sor.u32 256, 8
        %490 = vbcast.lane.b32.xlu0 %v484, %s489
        %v491 = vpop.permute.xlu0 %490
        %s493 = sor.u32 256, 16
        %494 = vbcast.lane.b32.xlu0 %v484, %s493
        %v495 = vpop.permute.xlu0 %494
        %s497 = sor.u32 256, 24
        %498 = vbcast.lane.b32.xlu0 %v484, %s497
        %v499 = vpop.permute.xlu0 %498
        %s501 = sor.u32 256, 32
        %502 = vbcast.lane.b32.xlu0 %v484, %s501
        %v503 = vpop.permute.xlu0 %502
        %s505 = sor.u32 256, 40
        %506 = vbcast.lane.b32.xlu0 %v484, %s505
        %v507 = vpop.permute.xlu0 %506
        %s509 = sor.u32 256, 48
        %510 = vbcast.lane.b32.xlu0 %v484, %s509
        %v511 = vpop.permute.xlu0 %510
        %s513 = sor.u32 256, 56
        %514 = vbcast.lane.b32.xlu0 %v484, %s513
        %v515 = vpop.permute.xlu0 %514
        %s517 = sor.u32 256, 64
        %518 = vbcast.lane.b32.xlu0 %v484, %s517
        %v519 = vpop.permute.xlu0 %518
        %s521 = sor.u32 256, 72
        %522 = vbcast.lane.b32.xlu0 %v484, %s521
        %v523 = vpop.permute.xlu0 %522
        %s525 = sor.u32 256, 80
        %526 = vbcast.lane.b32.xlu0 %v484, %s525
        %v527 = vpop.permute.xlu0 %526
        %s529 = sor.u32 256, 88
        %530 = vbcast.lane.b32.xlu0 %v484, %s529
        %v531 = vpop.permute.xlu0 %530
        %s533 = sor.u32 256, 96
        %534 = vbcast.lane.b32.xlu0 %v484, %s533
        %v535 = vpop.permute.xlu0 %534
        %s537 = sor.u32 256, 104
        %538 = vbcast.lane.b32.xlu0 %v484, %s537
        %v539 = vpop.permute.xlu0 %538
        %s541 = sor.u32 256, 112
        %542 = vbcast.lane.b32.xlu0 %v484, %s541
        %v543 = vpop.permute.xlu0 %542
        %s545 = sor.u32 256, 120
        %546 = vbcast.lane.b32.xlu0 %v484, %s545
        %v547 = vpop.permute.xlu0 %546
        %v548 = vlaneseq
        %v549 = vshrl.u32 %v548, 7
        %v550 = vsub.s32 2, %v549
        %v551 = vrot.slane %v410, %v550
        %553 = vbcast.lane.b32.xlu0 %v551, 256
        %v554 = vpop.permute.xlu0 %553
        %s556 = sor.u32 256, 8
        %557 = vbcast.lane.b32.xlu0 %v551, %s556
        %v558 = vpop.permute.xlu0 %557
        %s560 = sor.u32 256, 16
        %561 = vbcast.lane.b32.xlu0 %v551, %s560
        %v562 = vpop.permute.xlu0 %561
        %s564 = sor.u32 256, 24
        %565 = vbcast.lane.b32.xlu0 %v551, %s564
        %v566 = vpop.permute.xlu0 %565
        %s568 = sor.u32 256, 32
        %569 = vbcast.lane.b32.xlu0 %v551, %s568
        %v570 = vpop.permute.xlu0 %569
        %s572 = sor.u32 256, 40
        %573 = vbcast.lane.b32.xlu0 %v551, %s572
        %v574 = vpop.permute.xlu0 %573
        %s576 = sor.u32 256, 48
        %577 = vbcast.lane.b32.xlu0 %v551, %s576
        %v578 = vpop.permute.xlu0 %577
        %s580 = sor.u32 256, 56
        %581 = vbcast.lane.b32.xlu0 %v551, %s580
        %v582 = vpop.permute.xlu0 %581
        %s584 = sor.u32 256, 64
        %585 = vbcast.lane.b32.xlu0 %v551, %s584
        %v586 = vpop.permute.xlu0 %585
        %s588 = sor.u32 256, 72
        %589 = vbcast.lane.b32.xlu0 %v551, %s588
        %v590 = vpop.permute.xlu0 %589
        %s592 = sor.u32 256, 80
        %593 = vbcast.lane.b32.xlu0 %v551, %s592
        %v594 = vpop.permute.xlu0 %593
        %s596 = sor.u32 256, 88
        %597 = vbcast.lane.b32.xlu0 %v551, %s596
        %v598 = vpop.permute.xlu0 %597
        %s600 = sor.u32 256, 96
        %601 = vbcast.lane.b32.xlu0 %v551, %s600
        %v602 = vpop.permute.xlu0 %601
        %s604 = sor.u32 256, 104
        %605 = vbcast.lane.b32.xlu0 %v551, %s604
        %v606 = vpop.permute.xlu0 %605
        %s608 = sor.u32 256, 112
        %609 = vbcast.lane.b32.xlu0 %v551, %s608
        %v610 = vpop.permute.xlu0 %609
        %s612 = sor.u32 256, 120
        %613 = vbcast.lane.b32.xlu0 %v551, %s612
        %v614 = vpop.permute.xlu0 %613
        %v615 = vlaneseq
        %v616 = vshrl.u32 %v615, 7
        %v617 = vsub.s32 3, %v616
        %v618 = vrot.slane %v410, %v617
        %620 = vbcast.lane.b32.xlu0 %v618, 256
        %v621 = vpop.permute.xlu0 %620
        %s623 = sor.u32 256, 8
        %624 = vbcast.lane.b32.xlu0 %v618, %s623
        %v625 = vpop.permute.xlu0 %624
        %s627 = sor.u32 256, 16
        %628 = vbcast.lane.b32.xlu0 %v618, %s627
        %v629 = vpop.permute.xlu0 %628
        %s631 = sor.u32 256, 24
        %632 = vbcast.lane.b32.xlu0 %v618, %s631
        %v633 = vpop.permute.xlu0 %632
        %s635 = sor.u32 256, 32
        %636 = vbcast.lane.b32.xlu0 %v618, %s635
        %v637 = vpop.permute.xlu0 %636
        %s639 = sor.u32 256, 40
        %640 = vbcast.lane.b32.xlu0 %v618, %s639
        %v641 = vpop.permute.xlu0 %640
        %s643 = sor.u32 256, 48
        %644 = vbcast.lane.b32.xlu0 %v618, %s643
        %v645 = vpop.permute.xlu0 %644
        %s647 = sor.u32 256, 56
        %648 = vbcast.lane.b32.xlu0 %v618, %s647
        %v649 = vpop.permute.xlu0 %648
        %s651 = sor.u32 256, 64
        %652 = vbcast.lane.b32.xlu0 %v618, %s651
        %v653 = vpop.permute.xlu0 %652
        %s655 = sor.u32 256, 72
        %656 = vbcast.lane.b32.xlu0 %v618, %s655
        %v657 = vpop.permute.xlu0 %656
        %s659 = sor.u32 256, 80
        %660 = vbcast.lane.b32.xlu0 %v618, %s659
        %v661 = vpop.permute.xlu0 %660
        %s663 = sor.u32 256, 88
        %664 = vbcast.lane.b32.xlu0 %v618, %s663
        %v665 = vpop.permute.xlu0 %664
        %s667 = sor.u32 256, 96
        %668 = vbcast.lane.b32.xlu0 %v618, %s667
        %v669 = vpop.permute.xlu0 %668
        %s671 = sor.u32 256, 104
        %672 = vbcast.lane.b32.xlu0 %v618, %s671
        %v673 = vpop.permute.xlu0 %672
        %s675 = sor.u32 256, 112
        %676 = vbcast.lane.b32.xlu0 %v618, %s675
        %v677 = vpop.permute.xlu0 %676
        %s679 = sor.u32 256, 120
        %680 = vbcast.lane.b32.xlu0 %v618, %s679
        %v681 = vpop.permute.xlu0 %680
        %v682 = vlaneseq
        %v683 = vshrl.u32 %v682, 7
        %v684 = vsub.s32 4, %v683
        %v685 = vrot.slane %v410, %v684
        %687 = vbcast.lane.b32.xlu0 %v685, 256
        %v688 = vpop.permute.xlu0 %687
        %s690 = sor.u32 256, 8
        %691 = vbcast.lane.b32.xlu0 %v685, %s690
        %v692 = vpop.permute.xlu0 %691
        %s694 = sor.u32 256, 16
        %695 = vbcast.lane.b32.xlu0 %v685, %s694
        %v696 = vpop.permute.xlu0 %695
        %s698 = sor.u32 256, 24
        %699 = vbcast.lane.b32.xlu0 %v685, %s698
        %v700 = vpop.permute.xlu0 %699
        %s702 = sor.u32 256, 32
        %703 = vbcast.lane.b32.xlu0 %v685, %s702
        %v704 = vpop.permute.xlu0 %703
        %s706 = sor.u32 256, 40
        %707 = vbcast.lane.b32.xlu0 %v685, %s706
        %v708 = vpop.permute.xlu0 %707
        %s710 = sor.u32 256, 48
        %711 = vbcast.lane.b32.xlu0 %v685, %s710
        %v712 = vpop.permute.xlu0 %711
        %s714 = sor.u32 256, 56
        %715 = vbcast.lane.b32.xlu0 %v685, %s714
        %v716 = vpop.permute.xlu0 %715
        %s718 = sor.u32 256, 64
        %719 = vbcast.lane.b32.xlu0 %v685, %s718
        %v720 = vpop.permute.xlu0 %719
        %s722 = sor.u32 256, 72
        %723 = vbcast.lane.b32.xlu0 %v685, %s722
        %v724 = vpop.permute.xlu0 %723
        %s726 = sor.u32 256, 80
        %727 = vbcast.lane.b32.xlu0 %v685, %s726
        %v728 = vpop.permute.xlu0 %727
        %s730 = sor.u32 256, 88
        %731 = vbcast.lane.b32.xlu0 %v685, %s730
        %v732 = vpop.permute.xlu0 %731
        %s734 = sor.u32 256, 96
        %735 = vbcast.lane.b32.xlu0 %v685, %s734
        %v736 = vpop.permute.xlu0 %735
        %s738 = sor.u32 256, 104
        %739 = vbcast.lane.b32.xlu0 %v685, %s738
        %v740 = vpop.permute.xlu0 %739
        %s742 = sor.u32 256, 112
        %743 = vbcast.lane.b32.xlu0 %v685, %s742
        %v744 = vpop.permute.xlu0 %743
        %s746 = sor.u32 256, 120
        %747 = vbcast.lane.b32.xlu0 %v685, %s746
        %v748 = vpop.permute.xlu0 %747
        %v749 = vlaneseq
        %v750 = vshrl.u32 %v749, 7
        %v751 = vsub.s32 5, %v750
        %v752 = vrot.slane %v410, %v751
        %754 = vbcast.lane.b32.xlu0 %v752, 256
        %v755 = vpop.permute.xlu0 %754
        %s757 = sor.u32 256, 8
        %758 = vbcast.lane.b32.xlu0 %v752, %s757
        %v759 = vpop.permute.xlu0 %758
        %s761 = sor.u32 256, 16
        %762 = vbcast.lane.b32.xlu0 %v752, %s761
        %v763 = vpop.permute.xlu0 %762
        %s765 = sor.u32 256, 24
        %766 = vbcast.lane.b32.xlu0 %v752, %s765
        %v767 = vpop.permute.xlu0 %766
        %s769 = sor.u32 256, 32
        %770 = vbcast.lane.b32.xlu0 %v752, %s769
        %v771 = vpop.permute.xlu0 %770
        %s773 = sor.u32 256, 40
        %774 = vbcast.lane.b32.xlu0 %v752, %s773
        %v775 = vpop.permute.xlu0 %774
        %s777 = sor.u32 256, 48
        %778 = vbcast.lane.b32.xlu0 %v752, %s777
        %v779 = vpop.permute.xlu0 %778
        %s781 = sor.u32 256, 56
        %782 = vbcast.lane.b32.xlu0 %v752, %s781
        %v783 = vpop.permute.xlu0 %782
        %s785 = sor.u32 256, 64
        %786 = vbcast.lane.b32.xlu0 %v752, %s785
        %v787 = vpop.permute.xlu0 %786
        %s789 = sor.u32 256, 72
        %790 = vbcast.lane.b32.xlu0 %v752, %s789
        %v791 = vpop.permute.xlu0 %790
        %s793 = sor.u32 256, 80
        %794 = vbcast.lane.b32.xlu0 %v752, %s793
        %v795 = vpop.permute.xlu0 %794
        %s797 = sor.u32 256, 88
        %798 = vbcast.lane.b32.xlu0 %v752, %s797
        %v799 = vpop.permute.xlu0 %798
        %s801 = sor.u32 256, 96
        %802 = vbcast.lane.b32.xlu0 %v752, %s801
        %v803 = vpop.permute.xlu0 %802
        %s805 = sor.u32 256, 104
        %806 = vbcast.lane.b32.xlu0 %v752, %s805
        %v807 = vpop.permute.xlu0 %806
        %s809 = sor.u32 256, 112
        %810 = vbcast.lane.b32.xlu0 %v752, %s809
        %v811 = vpop.permute.xlu0 %810
        %s813 = sor.u32 256, 120
        %814 = vbcast.lane.b32.xlu0 %v752, %s813
        %v815 = vpop.permute.xlu0 %814
        %v816 = vlaneseq
        %v817 = vshrl.u32 %v816, 7
        %v818 = vsub.s32 6, %v817
        %v819 = vrot.slane %v410, %v818
        %821 = vbcast.lane.b32.xlu0 %v819, 256
        %v822 = vpop.permute.xlu0 %821
        %s824 = sor.u32 256, 8
        %825 = vbcast.lane.b32.xlu0 %v819, %s824
        %v826 = vpop.permute.xlu0 %825
        %s828 = sor.u32 256, 16
        %829 = vbcast.lane.b32.xlu0 %v819, %s828
        %v830 = vpop.permute.xlu0 %829
        %s832 = sor.u32 256, 24
        %833 = vbcast.lane.b32.xlu0 %v819, %s832
        %v834 = vpop.permute.xlu0 %833
        %s836 = sor.u32 256, 32
        %837 = vbcast.lane.b32.xlu0 %v819, %s836
        %v838 = vpop.permute.xlu0 %837
        %s840 = sor.u32 256, 40
        %841 = vbcast.lane.b32.xlu0 %v819, %s840
        %v842 = vpop.permute.xlu0 %841
        %s844 = sor.u32 256, 48
        %845 = vbcast.lane.b32.xlu0 %v819, %s844
        %v846 = vpop.permute.xlu0 %845
        %s848 = sor.u32 256, 56
        %849 = vbcast.lane.b32.xlu0 %v819, %s848
        %v850 = vpop.permute.xlu0 %849
        %s852 = sor.u32 256, 64
        %853 = vbcast.lane.b32.xlu0 %v819, %s852
        %v854 = vpop.permute.xlu0 %853
        %s856 = sor.u32 256, 72
        %857 = vbcast.lane.b32.xlu0 %v819, %s856
        %v858 = vpop.permute.xlu0 %857
        %s860 = sor.u32 256, 80
        %861 = vbcast.lane.b32.xlu0 %v819, %s860
        %v862 = vpop.permute.xlu0 %861
        %s864 = sor.u32 256, 88
        %865 = vbcast.lane.b32.xlu0 %v819, %s864
        %v866 = vpop.permute.xlu0 %865
        %s868 = sor.u32 256, 96
        %869 = vbcast.lane.b32.xlu0 %v819, %s868
        %v870 = vpop.permute.xlu0 %869
        %s872 = sor.u32 256, 104
        %873 = vbcast.lane.b32.xlu0 %v819, %s872
        %v874 = vpop.permute.xlu0 %873
        %s876 = sor.u32 256, 112
        %877 = vbcast.lane.b32.xlu0 %v819, %s876
        %v878 = vpop.permute.xlu0 %877
        %s880 = sor.u32 256, 120
        %881 = vbcast.lane.b32.xlu0 %v819, %s880
        %v882 = vpop.permute.xlu0 %881
        %v883 = vlaneseq
        %v884 = vshrl.u32 %v883, 7
        %v885 = vsub.s32 0, %v884
        %v886 = vrot.slane %v412, %v885
        %888 = vbcast.lane.b32.xlu0 %v886, 256
        %v889 = vpop.permute.xlu0 %888
        %s891 = sor.u32 256, 8
        %892 = vbcast.lane.b32.xlu0 %v886, %s891
        %v893 = vpop.permute.xlu0 %892
        %s895 = sor.u32 256, 16
        %896 = vbcast.lane.b32.xlu0 %v886, %s895
        %v897 = vpop.permute.xlu0 %896
        %s899 = sor.u32 256, 24
        %900 = vbcast.lane.b32.xlu0 %v886, %s899
        %v901 = vpop.permute.xlu0 %900
        %s903 = sor.u32 256, 32
        %904 = vbcast.lane.b32.xlu0 %v886, %s903
        %v905 = vpop.permute.xlu0 %904
        %s907 = sor.u32 256, 40
        %908 = vbcast.lane.b32.xlu0 %v886, %s907
        %v909 = vpop.permute.xlu0 %908
        %s911 = sor.u32 256, 48
        %912 = vbcast.lane.b32.xlu0 %v886, %s911
        %v913 = vpop.permute.xlu0 %912
        %s915 = sor.u32 256, 56
        %916 = vbcast.lane.b32.xlu0 %v886, %s915
        %v917 = vpop.permute.xlu0 %916
        %s919 = sor.u32 256, 64
        %920 = vbcast.lane.b32.xlu0 %v886, %s919
        %v921 = vpop.permute.xlu0 %920
        %s923 = sor.u32 256, 72
        %924 = vbcast.lane.b32.xlu0 %v886, %s923
        %v925 = vpop.permute.xlu0 %924
        %s927 = sor.u32 256, 80
        %928 = vbcast.lane.b32.xlu0 %v886, %s927
        %v929 = vpop.permute.xlu0 %928
        %s931 = sor.u32 256, 88
        %932 = vbcast.lane.b32.xlu0 %v886, %s931
        %v933 = vpop.permute.xlu0 %932
        %s935 = sor.u32 256, 96
        %936 = vbcast.lane.b32.xlu0 %v886, %s935
        %v937 = vpop.permute.xlu0 %936
        %s939 = sor.u32 256, 104
        %940 = vbcast.lane.b32.xlu0 %v886, %s939
        %v941 = vpop.permute.xlu0 %940
        %s943 = sor.u32 256, 112
        %944 = vbcast.lane.b32.xlu0 %v886, %s943
        %v945 = vpop.permute.xlu0 %944
        %s947 = sor.u32 256, 120
        %948 = vbcast.lane.b32.xlu0 %v886, %s947
        %v949 = vpop.permute.xlu0 %948
        %v950 = vlaneseq
        %v951 = vshrl.u32 %v950, 7
        %v952 = vsub.s32 1, %v951
        %v953 = vrot.slane %v412, %v952
        %955 = vbcast.lane.b32.xlu0 %v953, 256
        %v956 = vpop.permute.xlu0 %955
        %s958 = sor.u32 256, 8
        %959 = vbcast.lane.b32.xlu0 %v953, %s958
        %v960 = vpop.permute.xlu0 %959
        %s962 = sor.u32 256, 16
        %963 = vbcast.lane.b32.xlu0 %v953, %s962
        %v964 = vpop.permute.xlu0 %963
        %s966 = sor.u32 256, 24
        %967 = vbcast.lane.b32.xlu0 %v953, %s966
        %v968 = vpop.permute.xlu0 %967
        %s970 = sor.u32 256, 32
        %971 = vbcast.lane.b32.xlu0 %v953, %s970
        %v972 = vpop.permute.xlu0 %971
        %s974 = sor.u32 256, 40
        %975 = vbcast.lane.b32.xlu0 %v953, %s974
        %v976 = vpop.permute.xlu0 %975
        %s978 = sor.u32 256, 48
        %979 = vbcast.lane.b32.xlu0 %v953, %s978
        %v980 = vpop.permute.xlu0 %979
        %s982 = sor.u32 256, 56
        %983 = vbcast.lane.b32.xlu0 %v953, %s982
        %v984 = vpop.permute.xlu0 %983
        %s986 = sor.u32 256, 64
        %987 = vbcast.lane.b32.xlu0 %v953, %s986
        %v988 = vpop.permute.xlu0 %987
        %s990 = sor.u32 256, 72
        %991 = vbcast.lane.b32.xlu0 %v953, %s990
        %v992 = vpop.permute.xlu0 %991
        %s994 = sor.u32 256, 80
        %995 = vbcast.lane.b32.xlu0 %v953, %s994
        %v996 = vpop.permute.xlu0 %995
        %s998 = sor.u32 256, 88
        %999 = vbcast.lane.b32.xlu0 %v953, %s998
        %v1000 = vpop.permute.xlu0 %999
        %s1002 = sor.u32 256, 96
        %1003 = vbcast.lane.b32.xlu0 %v953, %s1002
        %v1004 = vpop.permute.xlu0 %1003
        %s1006 = sor.u32 256, 104
        %1007 = vbcast.lane.b32.xlu0 %v953, %s1006
        %v1008 = vpop.permute.xlu0 %1007
        %s1010 = sor.u32 256, 112
        %1011 = vbcast.lane.b32.xlu0 %v953, %s1010
        %v1012 = vpop.permute.xlu0 %1011
        %s1014 = sor.u32 256, 120
        %1015 = vbcast.lane.b32.xlu0 %v953, %s1014
        %v1016 = vpop.permute.xlu0 %1015
        %v1017 = vlaneseq
        %v1018 = vshrl.u32 %v1017, 7
        %v1019 = vsub.s32 2, %v1018
        %v1020 = vrot.slane %v412, %v1019
        %1022 = vbcast.lane.b32.xlu0 %v1020, 256
        %v1023 = vpop.permute.xlu0 %1022
        %s1025 = sor.u32 256, 8
        %1026 = vbcast.lane.b32.xlu0 %v1020, %s1025
        %v1027 = vpop.permute.xlu0 %1026
        %s1029 = sor.u32 256, 16
        %1030 = vbcast.lane.b32.xlu0 %v1020, %s1029
        %v1031 = vpop.permute.xlu0 %1030
        %s1033 = sor.u32 256, 24
        %1034 = vbcast.lane.b32.xlu0 %v1020, %s1033
        %v1035 = vpop.permute.xlu0 %1034
        %s1037 = sor.u32 256, 32
        %1038 = vbcast.lane.b32.xlu0 %v1020, %s1037
        %v1039 = vpop.permute.xlu0 %1038
        %s1041 = sor.u32 256, 40
        %1042 = vbcast.lane.b32.xlu0 %v1020, %s1041
        %v1043 = vpop.permute.xlu0 %1042
        %s1045 = sor.u32 256, 48
        %1046 = vbcast.lane.b32.xlu0 %v1020, %s1045
        %v1047 = vpop.permute.xlu0 %1046
        %s1049 = sor.u32 256, 56
        %1050 = vbcast.lane.b32.xlu0 %v1020, %s1049
        %v1051 = vpop.permute.xlu0 %1050
        %s1053 = sor.u32 256, 64
        %1054 = vbcast.lane.b32.xlu0 %v1020, %s1053
        %v1055 = vpop.permute.xlu0 %1054
        %s1057 = sor.u32 256, 72
        %1058 = vbcast.lane.b32.xlu0 %v1020, %s1057
        %v1059 = vpop.permute.xlu0 %1058
        %s1061 = sor.u32 256, 80
        %1062 = vbcast.lane.b32.xlu0 %v1020, %s1061
        %v1063 = vpop.permute.xlu0 %1062
        %s1065 = sor.u32 256, 88
        %1066 = vbcast.lane.b32.xlu0 %v1020, %s1065
        %v1067 = vpop.permute.xlu0 %1066
        %s1069 = sor.u32 256, 96
        %1070 = vbcast.lane.b32.xlu0 %v1020, %s1069
        %v1071 = vpop.permute.xlu0 %1070
        %s1073 = sor.u32 256, 104
        %1074 = vbcast.lane.b32.xlu0 %v1020, %s1073
        %v1075 = vpop.permute.xlu0 %1074
        %s1077 = sor.u32 256, 112
        %1078 = vbcast.lane.b32.xlu0 %v1020, %s1077
        %v1079 = vpop.permute.xlu0 %1078
        %s1081 = sor.u32 256, 120
        %1082 = vbcast.lane.b32.xlu0 %v1020, %s1081
        %v1083 = vpop.permute.xlu0 %1082
        %v1084 = vlaneseq
        %v1085 = vshrl.u32 %v1084, 7
        %v1086 = vsub.s32 3, %v1085
        %v1087 = vrot.slane %v412, %v1086
        %1089 = vbcast.lane.b32.xlu0 %v1087, 256
        %v1090 = vpop.permute.xlu0 %1089
        %s1092 = sor.u32 256, 8
        %1093 = vbcast.lane.b32.xlu0 %v1087, %s1092
        %v1094 = vpop.permute.xlu0 %1093
        %s1096 = sor.u32 256, 16
        %1097 = vbcast.lane.b32.xlu0 %v1087, %s1096
        %v1098 = vpop.permute.xlu0 %1097
        %s1100 = sor.u32 256, 24
        %1101 = vbcast.lane.b32.xlu0 %v1087, %s1100
        %v1102 = vpop.permute.xlu0 %1101
        %s1104 = sor.u32 256, 32
        %1105 = vbcast.lane.b32.xlu0 %v1087, %s1104
        %v1106 = vpop.permute.xlu0 %1105
        %s1108 = sor.u32 256, 40
        %1109 = vbcast.lane.b32.xlu0 %v1087, %s1108
        %v1110 = vpop.permute.xlu0 %1109
        %s1112 = sor.u32 256, 48
        %1113 = vbcast.lane.b32.xlu0 %v1087, %s1112
        %v1114 = vpop.permute.xlu0 %1113
        %s1116 = sor.u32 256, 56
        %1117 = vbcast.lane.b32.xlu0 %v1087, %s1116
        %v1118 = vpop.permute.xlu0 %1117
        %s1120 = sor.u32 256, 64
        %1121 = vbcast.lane.b32.xlu0 %v1087, %s1120
        %v1122 = vpop.permute.xlu0 %1121
        %s1124 = sor.u32 256, 72
        %1125 = vbcast.lane.b32.xlu0 %v1087, %s1124
        %v1126 = vpop.permute.xlu0 %1125
        %s1128 = sor.u32 256, 80
        %1129 = vbcast.lane.b32.xlu0 %v1087, %s1128
        %v1130 = vpop.permute.xlu0 %1129
        %s1132 = sor.u32 256, 88
        %1133 = vbcast.lane.b32.xlu0 %v1087, %s1132
        %v1134 = vpop.permute.xlu0 %1133
        %s1136 = sor.u32 256, 96
        %1137 = vbcast.lane.b32.xlu0 %v1087, %s1136
        %v1138 = vpop.permute.xlu0 %1137
        %s1140 = sor.u32 256, 104
        %1141 = vbcast.lane.b32.xlu0 %v1087, %s1140
        %v1142 = vpop.permute.xlu0 %1141
        %s1144 = sor.u32 256, 112
        %1145 = vbcast.lane.b32.xlu0 %v1087, %s1144
        %v1146 = vpop.permute.xlu0 %1145
        %s1148 = sor.u32 256, 120
        %1149 = vbcast.lane.b32.xlu0 %v1087, %s1148
        %v1150 = vpop.permute.xlu0 %1149
        %v1151 = vlaneseq
        %v1152 = vshrl.u32 %v1151, 7
        %v1153 = vsub.s32 4, %v1152
        %v1154 = vrot.slane %v412, %v1153
        %1156 = vbcast.lane.b32.xlu0 %v1154, 256
        %v1157 = vpop.permute.xlu0 %1156
        %s1159 = sor.u32 256, 8
        %1160 = vbcast.lane.b32.xlu0 %v1154, %s1159
        %v1161 = vpop.permute.xlu0 %1160
        %s1163 = sor.u32 256, 16
        %1164 = vbcast.lane.b32.xlu0 %v1154, %s1163
        %v1165 = vpop.permute.xlu0 %1164
        %s1167 = sor.u32 256, 24
        %1168 = vbcast.lane.b32.xlu0 %v1154, %s1167
        %v1169 = vpop.permute.xlu0 %1168
        %s1171 = sor.u32 256, 32
        %1172 = vbcast.lane.b32.xlu0 %v1154, %s1171
        %v1173 = vpop.permute.xlu0 %1172
        %s1175 = sor.u32 256, 40
        %1176 = vbcast.lane.b32.xlu0 %v1154, %s1175
        %v1177 = vpop.permute.xlu0 %1176
        %s1179 = sor.u32 256, 48
        %1180 = vbcast.lane.b32.xlu0 %v1154, %s1179
        %v1181 = vpop.permute.xlu0 %1180
        %s1183 = sor.u32 256, 56
        %1184 = vbcast.lane.b32.xlu0 %v1154, %s1183
        %v1185 = vpop.permute.xlu0 %1184
        %s1187 = sor.u32 256, 64
        %1188 = vbcast.lane.b32.xlu0 %v1154, %s1187
        %v1189 = vpop.permute.xlu0 %1188
        %s1191 = sor.u32 256, 72
        %1192 = vbcast.lane.b32.xlu0 %v1154, %s1191
        %v1193 = vpop.permute.xlu0 %1192
        %s1195 = sor.u32 256, 80
        %1196 = vbcast.lane.b32.xlu0 %v1154, %s1195
        %v1197 = vpop.permute.xlu0 %1196
        %s1199 = sor.u32 256, 88
        %1200 = vbcast.lane.b32.xlu0 %v1154, %s1199
        %v1201 = vpop.permute.xlu0 %1200
        %s1203 = sor.u32 256, 96
        %1204 = vbcast.lane.b32.xlu0 %v1154, %s1203
        %v1205 = vpop.permute.xlu0 %1204
        %s1207 = sor.u32 256, 104
        %1208 = vbcast.lane.b32.xlu0 %v1154, %s1207
        %v1209 = vpop.permute.xlu0 %1208
        %s1211 = sor.u32 256, 112
        %1212 = vbcast.lane.b32.xlu0 %v1154, %s1211
        %v1213 = vpop.permute.xlu0 %1212
        %s1215 = sor.u32 256, 120
        %1216 = vbcast.lane.b32.xlu0 %v1154, %s1215
        %v1217 = vpop.permute.xlu0 %1216
        %v1218 = vlaneseq
        %v1219 = vshrl.u32 %v1218, 7
        %v1220 = vsub.s32 5, %v1219
        %v1221 = vrot.slane %v412, %v1220
        %1223 = vbcast.lane.b32.xlu0 %v1221, 256
        %v1224 = vpop.permute.xlu0 %1223
        %s1226 = sor.u32 256, 8
        %1227 = vbcast.lane.b32.xlu0 %v1221, %s1226
        %v1228 = vpop.permute.xlu0 %1227
        %s1230 = sor.u32 256, 16
        %1231 = vbcast.lane.b32.xlu0 %v1221, %s1230
        %v1232 = vpop.permute.xlu0 %1231
        %s1234 = sor.u32 256, 24
        %1235 = vbcast.lane.b32.xlu0 %v1221, %s1234
        %v1236 = vpop.permute.xlu0 %1235
        %s1238 = sor.u32 256, 32
        %1239 = vbcast.lane.b32.xlu0 %v1221, %s1238
        %v1240 = vpop.permute.xlu0 %1239
        %s1242 = sor.u32 256, 40
        %1243 = vbcast.lane.b32.xlu0 %v1221, %s1242
        %v1244 = vpop.permute.xlu0 %1243
        %s1246 = sor.u32 256, 48
        %1247 = vbcast.lane.b32.xlu0 %v1221, %s1246
        %v1248 = vpop.permute.xlu0 %1247
        %s1250 = sor.u32 256, 56
        %1251 = vbcast.lane.b32.xlu0 %v1221, %s1250
        %v1252 = vpop.permute.xlu0 %1251
        %s1254 = sor.u32 256, 64
        %1255 = vbcast.lane.b32.xlu0 %v1221, %s1254
        %v1256 = vpop.permute.xlu0 %1255
        %s1258 = sor.u32 256, 72
        %1259 = vbcast.lane.b32.xlu0 %v1221, %s1258
        %v1260 = vpop.permute.xlu0 %1259
        %s1262 = sor.u32 256, 80
        %1263 = vbcast.lane.b32.xlu0 %v1221, %s1262
        %v1264 = vpop.permute.xlu0 %1263
        %s1266 = sor.u32 256, 88
        %1267 = vbcast.lane.b32.xlu0 %v1221, %s1266
        %v1268 = vpop.permute.xlu0 %1267
        %s1270 = sor.u32 256, 96
        %1271 = vbcast.lane.b32.xlu0 %v1221, %s1270
        %v1272 = vpop.permute.xlu0 %1271
        %s1274 = sor.u32 256, 104
        %1275 = vbcast.lane.b32.xlu0 %v1221, %s1274
        %v1276 = vpop.permute.xlu0 %1275
        %s1278 = sor.u32 256, 112
        %1279 = vbcast.lane.b32.xlu0 %v1221, %s1278
        %v1280 = vpop.permute.xlu0 %1279
        %s1282 = sor.u32 256, 120
        %1283 = vbcast.lane.b32.xlu0 %v1221, %s1282
        %v1284 = vpop.permute.xlu0 %1283
        %v1285 = vlaneseq
        %v1286 = vshrl.u32 %v1285, 7
        %v1287 = vsub.s32 6, %v1286
        %v1288 = vrot.slane %v412, %v1287
        %1290 = vbcast.lane.b32.xlu0 %v1288, 256
        %v1291 = vpop.permute.xlu0 %1290
        %s1293 = sor.u32 256, 8
        %1294 = vbcast.lane.b32.xlu0 %v1288, %s1293
        %v1295 = vpop.permute.xlu0 %1294
        %s1297 = sor.u32 256, 16
        %1298 = vbcast.lane.b32.xlu0 %v1288, %s1297
        %v1299 = vpop.permute.xlu0 %1298
        %s1301 = sor.u32 256, 24
        %1302 = vbcast.lane.b32.xlu0 %v1288, %s1301
        %v1303 = vpop.permute.xlu0 %1302
        %s1305 = sor.u32 256, 32
        %1306 = vbcast.lane.b32.xlu0 %v1288, %s1305
        %v1307 = vpop.permute.xlu0 %1306
        %s1309 = sor.u32 256, 40
        %1310 = vbcast.lane.b32.xlu0 %v1288, %s1309
        %v1311 = vpop.permute.xlu0 %1310
        %s1313 = sor.u32 256, 48
        %1314 = vbcast.lane.b32.xlu0 %v1288, %s1313
        %v1315 = vpop.permute.xlu0 %1314
        %s1317 = sor.u32 256, 56
        %1318 = vbcast.lane.b32.xlu0 %v1288, %s1317
        %v1319 = vpop.permute.xlu0 %1318
        %s1321 = sor.u32 256, 64
        %1322 = vbcast.lane.b32.xlu0 %v1288, %s1321
        %v1323 = vpop.permute.xlu0 %1322
        %s1325 = sor.u32 256, 72
        %1326 = vbcast.lane.b32.xlu0 %v1288, %s1325
        %v1327 = vpop.permute.xlu0 %1326
        %s1329 = sor.u32 256, 80
        %1330 = vbcast.lane.b32.xlu0 %v1288, %s1329
        %v1331 = vpop.permute.xlu0 %1330
        %s1333 = sor.u32 256, 88
        %1334 = vbcast.lane.b32.xlu0 %v1288, %s1333
        %v1335 = vpop.permute.xlu0 %1334
        %s1337 = sor.u32 256, 96
        %1338 = vbcast.lane.b32.xlu0 %v1288, %s1337
        %v1339 = vpop.permute.xlu0 %1338
        %s1341 = sor.u32 256, 104
        %1342 = vbcast.lane.b32.xlu0 %v1288, %s1341
        %v1343 = vpop.permute.xlu0 %1342
        %s1345 = sor.u32 256, 112
        %1346 = vbcast.lane.b32.xlu0 %v1288, %s1345
        %v1347 = vpop.permute.xlu0 %1346
        %s1349 = sor.u32 256, 120
        %1350 = vbcast.lane.b32.xlu0 %v1288, %s1349
        %v1351 = vpop.permute.xlu0 %1350
        %vm1352 = vcmask 523264
        %v1353 = vsel %vm1352, %v420, %v889
        %v1354 = vsel %vm1352, %v424, %v893
        %v1355 = vsel %vm1352, %v428, %v897
        %v1356 = vsel %vm1352, %v432, %v901
        %v1357 = vsel %vm1352, %v436, %v905
        %v1358 = vsel %vm1352, %v440, %v909
        %v1359 = vsel %vm1352, %v444, %v913
        %v1360 = vsel %vm1352, %v448, %v917
        %v1361 = vsel %vm1352, %v452, %v921
        %v1362 = vsel %vm1352, %v456, %v925
        %v1363 = vsel %vm1352, %v460, %v929
        %v1364 = vsel %vm1352, %v464, %v933
        %v1365 = vsel %vm1352, %v468, %v937
        %v1366 = vsel %vm1352, %v472, %v941
        %v1367 = vsel %vm1352, %v476, %v945
        %v1368 = vsel %vm1352, %v480, %v949
        %v1369 = vsel %vm1352, %v487, %v956
        %v1370 = vsel %vm1352, %v491, %v960
        %v1371 = vsel %vm1352, %v495, %v964
        %v1372 = vsel %vm1352, %v499, %v968
        %v1373 = vsel %vm1352, %v503, %v972
        %v1374 = vsel %vm1352, %v507, %v976
        %v1375 = vsel %vm1352, %v511, %v980
        %v1376 = vsel %vm1352, %v515, %v984
        %v1377 = vsel %vm1352, %v519, %v988
        %v1378 = vsel %vm1352, %v523, %v992
        %v1379 = vsel %vm1352, %v527, %v996
        %v1380 = vsel %vm1352, %v531, %v1000
        %v1381 = vsel %vm1352, %v535, %v1004
        %v1382 = vsel %vm1352, %v539, %v1008
        %v1383 = vsel %vm1352, %v543, %v1012
        %v1384 = vsel %vm1352, %v547, %v1016
        %v1385 = vsel %vm1352, %v554, %v1023
        %v1386 = vsel %vm1352, %v558, %v1027
        %v1387 = vsel %vm1352, %v562, %v1031
        %v1388 = vsel %vm1352, %v566, %v1035
        %v1389 = vsel %vm1352, %v570, %v1039
        %v1390 = vsel %vm1352, %v574, %v1043
        %v1391 = vsel %vm1352, %v578, %v1047
        %v1392 = vsel %vm1352, %v582, %v1051
        %v1393 = vsel %vm1352, %v586, %v1055
        %v1394 = vsel %vm1352, %v590, %v1059
        %v1395 = vsel %vm1352, %v594, %v1063
        %v1396 = vsel %vm1352, %v598, %v1067
        %v1397 = vsel %vm1352, %v602, %v1071
        %v1398 = vsel %vm1352, %v606, %v1075
        %v1399 = vsel %vm1352, %v610, %v1079
        %v1400 = vsel %vm1352, %v614, %v1083
        %v1401 = vsel %vm1352, %v621, %v1090
        %v1402 = vsel %vm1352, %v625, %v1094
        %v1403 = vsel %vm1352, %v629, %v1098
        %v1404 = vsel %vm1352, %v633, %v1102
        %v1405 = vsel %vm1352, %v637, %v1106
        %v1406 = vsel %vm1352, %v641, %v1110
        %v1407 = vsel %vm1352, %v645, %v1114
        %v1408 = vsel %vm1352, %v649, %v1118
        %v1409 = vsel %vm1352, %v653, %v1122
        %v1410 = vsel %vm1352, %v657, %v1126
        %v1411 = vsel %vm1352, %v661, %v1130
        %v1412 = vsel %vm1352, %v665, %v1134
        %v1413 = vsel %vm1352, %v669, %v1138
        %v1414 = vsel %vm1352, %v673, %v1142
        %v1415 = vsel %vm1352, %v677, %v1146
        %v1416 = vsel %vm1352, %v681, %v1150
        %v1417 = vsel %vm1352, %v688, %v1157
        %v1418 = vsel %vm1352, %v692, %v1161
        %v1419 = vsel %vm1352, %v696, %v1165
        %v1420 = vsel %vm1352, %v700, %v1169
        %v1421 = vsel %vm1352, %v704, %v1173
        %v1422 = vsel %vm1352, %v708, %v1177
        %v1423 = vsel %vm1352, %v712, %v1181
        %v1424 = vsel %vm1352, %v716, %v1185
        %v1425 = vsel %vm1352, %v720, %v1189
        %v1426 = vsel %vm1352, %v724, %v1193
        %v1427 = vsel %vm1352, %v728, %v1197
        %v1428 = vsel %vm1352, %v732, %v1201
        %v1429 = vsel %vm1352, %v736, %v1205
        %v1430 = vsel %vm1352, %v740, %v1209
        %v1431 = vsel %vm1352, %v744, %v1213
        %v1432 = vsel %vm1352, %v748, %v1217
        %v1433 = vsel %vm1352, %v755, %v1224
        %v1434 = vsel %vm1352, %v759, %v1228
        %v1435 = vsel %vm1352, %v763, %v1232
        %v1436 = vsel %vm1352, %v767, %v1236
        %v1437 = vsel %vm1352, %v771, %v1240
        %v1438 = vsel %vm1352, %v775, %v1244
        %v1439 = vsel %vm1352, %v779, %v1248
        %v1440 = vsel %vm1352, %v783, %v1252
        %v1441 = vsel %vm1352, %v787, %v1256
        %v1442 = vsel %vm1352, %v791, %v1260
        %v1443 = vsel %vm1352, %v795, %v1264
        %v1444 = vsel %vm1352, %v799, %v1268
        %v1445 = vsel %vm1352, %v803, %v1272
        %v1446 = vsel %vm1352, %v807, %v1276
        %v1447 = vsel %vm1352, %v811, %v1280
        %v1448 = vsel %vm1352, %v815, %v1284
        %v1449 = vsel %vm1352, %v822, %v1291
        %v1450 = vsel %vm1352, %v826, %v1295
        %v1451 = vsel %vm1352, %v830, %v1299
        %v1452 = vsel %vm1352, %v834, %v1303
        %v1453 = vsel %vm1352, %v838, %v1307
        %v1454 = vsel %vm1352, %v842, %v1311
        %v1455 = vsel %vm1352, %v846, %v1315
        %v1456 = vsel %vm1352, %v850, %v1319
        %v1457 = vsel %vm1352, %v854, %v1323
        %v1458 = vsel %vm1352, %v858, %v1327
        %v1459 = vsel %vm1352, %v862, %v1331
        %v1460 = vsel %vm1352, %v866, %v1335
        %v1461 = vsel %vm1352, %v870, %v1339
        %v1462 = vsel %vm1352, %v874, %v1343
        %v1463 = vsel %vm1352, %v878, %v1347
        %v1464 = vsel %vm1352, %v882, %v1351
        %v1465 = vlaneseq
        %v1466 = vshrl.u32 %v1465, 7
        %v1467 = vsub.s32 0, %v1466
        %v1468 = vrot.slane %v411, %v1467
        %1470 = vbcast.lane.b32.xlu0 %v1468, 256
        %v1471 = vpop.permute.xlu0 %1470
        %s1473 = sor.u32 256, 8
        %1474 = vbcast.lane.b32.xlu0 %v1468, %s1473
        %v1475 = vpop.permute.xlu0 %1474
        %s1477 = sor.u32 256, 16
        %1478 = vbcast.lane.b32.xlu0 %v1468, %s1477
        %v1479 = vpop.permute.xlu0 %1478
        %s1481 = sor.u32 256, 24
        %1482 = vbcast.lane.b32.xlu0 %v1468, %s1481
        %v1483 = vpop.permute.xlu0 %1482
        %s1485 = sor.u32 256, 32
        %1486 = vbcast.lane.b32.xlu0 %v1468, %s1485
        %v1487 = vpop.permute.xlu0 %1486
        %s1489 = sor.u32 256, 40
        %1490 = vbcast.lane.b32.xlu0 %v1468, %s1489
        %v1491 = vpop.permute.xlu0 %1490
        %s1493 = sor.u32 256, 48
        %1494 = vbcast.lane.b32.xlu0 %v1468, %s1493
        %v1495 = vpop.permute.xlu0 %1494
        %s1497 = sor.u32 256, 56
        %1498 = vbcast.lane.b32.xlu0 %v1468, %s1497
        %v1499 = vpop.permute.xlu0 %1498
        %s1501 = sor.u32 256, 64
        %1502 = vbcast.lane.b32.xlu0 %v1468, %s1501
        %v1503 = vpop.permute.xlu0 %1502
        %s1505 = sor.u32 256, 72
        %1506 = vbcast.lane.b32.xlu0 %v1468, %s1505
        %v1507 = vpop.permute.xlu0 %1506
        %s1509 = sor.u32 256, 80
        %1510 = vbcast.lane.b32.xlu0 %v1468, %s1509
        %v1511 = vpop.permute.xlu0 %1510
        %s1513 = sor.u32 256, 88
        %1514 = vbcast.lane.b32.xlu0 %v1468, %s1513
        %v1515 = vpop.permute.xlu0 %1514
        %s1517 = sor.u32 256, 96
        %1518 = vbcast.lane.b32.xlu0 %v1468, %s1517
        %v1519 = vpop.permute.xlu0 %1518
        %s1521 = sor.u32 256, 104
        %1522 = vbcast.lane.b32.xlu0 %v1468, %s1521
        %v1523 = vpop.permute.xlu0 %1522
        %s1525 = sor.u32 256, 112
        %1526 = vbcast.lane.b32.xlu0 %v1468, %s1525
        %v1527 = vpop.permute.xlu0 %1526
        %s1529 = sor.u32 256, 120
        %1530 = vbcast.lane.b32.xlu0 %v1468, %s1529
        %v1531 = vpop.permute.xlu0 %1530
        %v1532 = vlaneseq
        %v1533 = vshrl.u32 %v1532, 7
        %v1534 = vsub.s32 1, %v1533
        %v1535 = vrot.slane %v411, %v1534
        %1537 = vbcast.lane.b32.xlu0 %v1535, 256
        %v1538 = vpop.permute.xlu0 %1537
        %s1540 = sor.u32 256, 8
        %1541 = vbcast.lane.b32.xlu0 %v1535, %s1540
        %v1542 = vpop.permute.xlu0 %1541
        %s1544 = sor.u32 256, 16
        %1545 = vbcast.lane.b32.xlu0 %v1535, %s1544
        %v1546 = vpop.permute.xlu0 %1545
        %s1548 = sor.u32 256, 24
        %1549 = vbcast.lane.b32.xlu0 %v1535, %s1548
        %v1550 = vpop.permute.xlu0 %1549
        %s1552 = sor.u32 256, 32
        %1553 = vbcast.lane.b32.xlu0 %v1535, %s1552
        %v1554 = vpop.permute.xlu0 %1553
        %s1556 = sor.u32 256, 40
        %1557 = vbcast.lane.b32.xlu0 %v1535, %s1556
        %v1558 = vpop.permute.xlu0 %1557
        %s1560 = sor.u32 256, 48
        %1561 = vbcast.lane.b32.xlu0 %v1535, %s1560
        %v1562 = vpop.permute.xlu0 %1561
        %s1564 = sor.u32 256, 56
        %1565 = vbcast.lane.b32.xlu0 %v1535, %s1564
        %v1566 = vpop.permute.xlu0 %1565
        %s1568 = sor.u32 256, 64
        %1569 = vbcast.lane.b32.xlu0 %v1535, %s1568
        %v1570 = vpop.permute.xlu0 %1569
        %s1572 = sor.u32 256, 72
        %1573 = vbcast.lane.b32.xlu0 %v1535, %s1572
        %v1574 = vpop.permute.xlu0 %1573
        %s1576 = sor.u32 256, 80
        %1577 = vbcast.lane.b32.xlu0 %v1535, %s1576
        %v1578 = vpop.permute.xlu0 %1577
        %s1580 = sor.u32 256, 88
        %1581 = vbcast.lane.b32.xlu0 %v1535, %s1580
        %v1582 = vpop.permute.xlu0 %1581
        %s1584 = sor.u32 256, 96
        %1585 = vbcast.lane.b32.xlu0 %v1535, %s1584
        %v1586 = vpop.permute.xlu0 %1585
        %s1588 = sor.u32 256, 104
        %1589 = vbcast.lane.b32.xlu0 %v1535, %s1588
        %v1590 = vpop.permute.xlu0 %1589
        %s1592 = sor.u32 256, 112
        %1593 = vbcast.lane.b32.xlu0 %v1535, %s1592
        %v1594 = vpop.permute.xlu0 %1593
        %s1596 = sor.u32 256, 120
        %1597 = vbcast.lane.b32.xlu0 %v1535, %s1596
        %v1598 = vpop.permute.xlu0 %1597
        %v1599 = vlaneseq
        %v1600 = vshrl.u32 %v1599, 7
        %v1601 = vsub.s32 2, %v1600
        %v1602 = vrot.slane %v411, %v1601
        %1604 = vbcast.lane.b32.xlu0 %v1602, 256
        %v1605 = vpop.permute.xlu0 %1604
        %s1607 = sor.u32 256, 8
        %1608 = vbcast.lane.b32.xlu0 %v1602, %s1607
        %v1609 = vpop.permute.xlu0 %1608
        %s1611 = sor.u32 256, 16
        %1612 = vbcast.lane.b32.xlu0 %v1602, %s1611
        %v1613 = vpop.permute.xlu0 %1612
        %s1615 = sor.u32 256, 24
        %1616 = vbcast.lane.b32.xlu0 %v1602, %s1615
        %v1617 = vpop.permute.xlu0 %1616
        %s1619 = sor.u32 256, 32
        %1620 = vbcast.lane.b32.xlu0 %v1602, %s1619
        %v1621 = vpop.permute.xlu0 %1620
        %s1623 = sor.u32 256, 40
        %1624 = vbcast.lane.b32.xlu0 %v1602, %s1623
        %v1625 = vpop.permute.xlu0 %1624
        %s1627 = sor.u32 256, 48
        %1628 = vbcast.lane.b32.xlu0 %v1602, %s1627
        %v1629 = vpop.permute.xlu0 %1628
        %s1631 = sor.u32 256, 56
        %1632 = vbcast.lane.b32.xlu0 %v1602, %s1631
        %v1633 = vpop.permute.xlu0 %1632
        %s1635 = sor.u32 256, 64
        %1636 = vbcast.lane.b32.xlu0 %v1602, %s1635
        %v1637 = vpop.permute.xlu0 %1636
        %s1639 = sor.u32 256, 72
        %1640 = vbcast.lane.b32.xlu0 %v1602, %s1639
        %v1641 = vpop.permute.xlu0 %1640
        %s1643 = sor.u32 256, 80
        %1644 = vbcast.lane.b32.xlu0 %v1602, %s1643
        %v1645 = vpop.permute.xlu0 %1644
        %s1647 = sor.u32 256, 88
        %1648 = vbcast.lane.b32.xlu0 %v1602, %s1647
        %v1649 = vpop.permute.xlu0 %1648
        %s1651 = sor.u32 256, 96
        %1652 = vbcast.lane.b32.xlu0 %v1602, %s1651
        %v1653 = vpop.permute.xlu0 %1652
        %s1655 = sor.u32 256, 104
        %1656 = vbcast.lane.b32.xlu0 %v1602, %s1655
        %v1657 = vpop.permute.xlu0 %1656
        %s1659 = sor.u32 256, 112
        %1660 = vbcast.lane.b32.xlu0 %v1602, %s1659
        %v1661 = vpop.permute.xlu0 %1660
        %s1663 = sor.u32 256, 120
        %1664 = vbcast.lane.b32.xlu0 %v1602, %s1663
        %v1665 = vpop.permute.xlu0 %1664
        %v1666 = vlaneseq
        %v1667 = vshrl.u32 %v1666, 7
        %v1668 = vsub.s32 3, %v1667
        %v1669 = vrot.slane %v411, %v1668
        %1671 = vbcast.lane.b32.xlu0 %v1669, 256
        %v1672 = vpop.permute.xlu0 %1671
        %s1674 = sor.u32 256, 8
        %1675 = vbcast.lane.b32.xlu0 %v1669, %s1674
        %v1676 = vpop.permute.xlu0 %1675
        %s1678 = sor.u32 256, 16
        %1679 = vbcast.lane.b32.xlu0 %v1669, %s1678
        %v1680 = vpop.permute.xlu0 %1679
        %s1682 = sor.u32 256, 24
        %1683 = vbcast.lane.b32.xlu0 %v1669, %s1682
        %v1684 = vpop.permute.xlu0 %1683
        %s1686 = sor.u32 256, 32
        %1687 = vbcast.lane.b32.xlu0 %v1669, %s1686
        %v1688 = vpop.permute.xlu0 %1687
        %s1690 = sor.u32 256, 40
        %1691 = vbcast.lane.b32.xlu0 %v1669, %s1690
        %v1692 = vpop.permute.xlu0 %1691
        %s1694 = sor.u32 256, 48
        %1695 = vbcast.lane.b32.xlu0 %v1669, %s1694
        %v1696 = vpop.permute.xlu0 %1695
        %s1698 = sor.u32 256, 56
        %1699 = vbcast.lane.b32.xlu0 %v1669, %s1698
        %v1700 = vpop.permute.xlu0 %1699
        %s1702 = sor.u32 256, 64
        %1703 = vbcast.lane.b32.xlu0 %v1669, %s1702
        %v1704 = vpop.permute.xlu0 %1703
        %s1706 = sor.u32 256, 72
        %1707 = vbcast.lane.b32.xlu0 %v1669, %s1706
        %v1708 = vpop.permute.xlu0 %1707
        %s1710 = sor.u32 256, 80
        %1711 = vbcast.lane.b32.xlu0 %v1669, %s1710
        %v1712 = vpop.permute.xlu0 %1711
        %s1714 = sor.u32 256, 88
        %1715 = vbcast.lane.b32.xlu0 %v1669, %s1714
        %v1716 = vpop.permute.xlu0 %1715
        %s1718 = sor.u32 256, 96
        %1719 = vbcast.lane.b32.xlu0 %v1669, %s1718
        %v1720 = vpop.permute.xlu0 %1719
        %s1722 = sor.u32 256, 104
        %1723 = vbcast.lane.b32.xlu0 %v1669, %s1722
        %v1724 = vpop.permute.xlu0 %1723
        %s1726 = sor.u32 256, 112
        %1727 = vbcast.lane.b32.xlu0 %v1669, %s1726
        %v1728 = vpop.permute.xlu0 %1727
        %s1730 = sor.u32 256, 120
        %1731 = vbcast.lane.b32.xlu0 %v1669, %s1730
        %v1732 = vpop.permute.xlu0 %1731
        %v1733 = vlaneseq
        %v1734 = vshrl.u32 %v1733, 7
        %v1735 = vsub.s32 4, %v1734
        %v1736 = vrot.slane %v411, %v1735
        %1738 = vbcast.lane.b32.xlu0 %v1736, 256
        %v1739 = vpop.permute.xlu0 %1738
        %s1741 = sor.u32 256, 8
        %1742 = vbcast.lane.b32.xlu0 %v1736, %s1741
        %v1743 = vpop.permute.xlu0 %1742
        %s1745 = sor.u32 256, 16
        %1746 = vbcast.lane.b32.xlu0 %v1736, %s1745
        %v1747 = vpop.permute.xlu0 %1746
        %s1749 = sor.u32 256, 24
        %1750 = vbcast.lane.b32.xlu0 %v1736, %s1749
        %v1751 = vpop.permute.xlu0 %1750
        %s1753 = sor.u32 256, 32
        %1754 = vbcast.lane.b32.xlu0 %v1736, %s1753
        %v1755 = vpop.permute.xlu0 %1754
        %s1757 = sor.u32 256, 40
        %1758 = vbcast.lane.b32.xlu0 %v1736, %s1757
        %v1759 = vpop.permute.xlu0 %1758
        %s1761 = sor.u32 256, 48
        %1762 = vbcast.lane.b32.xlu0 %v1736, %s1761
        %v1763 = vpop.permute.xlu0 %1762
        %s1765 = sor.u32 256, 56
        %1766 = vbcast.lane.b32.xlu0 %v1736, %s1765
        %v1767 = vpop.permute.xlu0 %1766
        %s1769 = sor.u32 256, 64
        %1770 = vbcast.lane.b32.xlu0 %v1736, %s1769
        %v1771 = vpop.permute.xlu0 %1770
        %s1773 = sor.u32 256, 72
        %1774 = vbcast.lane.b32.xlu0 %v1736, %s1773
        %v1775 = vpop.permute.xlu0 %1774
        %s1777 = sor.u32 256, 80
        %1778 = vbcast.lane.b32.xlu0 %v1736, %s1777
        %v1779 = vpop.permute.xlu0 %1778
        %s1781 = sor.u32 256, 88
        %1782 = vbcast.lane.b32.xlu0 %v1736, %s1781
        %v1783 = vpop.permute.xlu0 %1782
        %s1785 = sor.u32 256, 96
        %1786 = vbcast.lane.b32.xlu0 %v1736, %s1785
        %v1787 = vpop.permute.xlu0 %1786
        %s1789 = sor.u32 256, 104
        %1790 = vbcast.lane.b32.xlu0 %v1736, %s1789
        %v1791 = vpop.permute.xlu0 %1790
        %s1793 = sor.u32 256, 112
        %1794 = vbcast.lane.b32.xlu0 %v1736, %s1793
        %v1795 = vpop.permute.xlu0 %1794
        %s1797 = sor.u32 256, 120
        %1798 = vbcast.lane.b32.xlu0 %v1736, %s1797
        %v1799 = vpop.permute.xlu0 %1798
        %v1800 = vlaneseq
        %v1801 = vshrl.u32 %v1800, 7
        %v1802 = vsub.s32 5, %v1801
        %v1803 = vrot.slane %v411, %v1802
        %1805 = vbcast.lane.b32.xlu0 %v1803, 256
        %v1806 = vpop.permute.xlu0 %1805
        %s1808 = sor.u32 256, 8
        %1809 = vbcast.lane.b32.xlu0 %v1803, %s1808
        %v1810 = vpop.permute.xlu0 %1809
        %s1812 = sor.u32 256, 16
        %1813 = vbcast.lane.b32.xlu0 %v1803, %s1812
        %v1814 = vpop.permute.xlu0 %1813
        %s1816 = sor.u32 256, 24
        %1817 = vbcast.lane.b32.xlu0 %v1803, %s1816
        %v1818 = vpop.permute.xlu0 %1817
        %s1820 = sor.u32 256, 32
        %1821 = vbcast.lane.b32.xlu0 %v1803, %s1820
        %v1822 = vpop.permute.xlu0 %1821
        %s1824 = sor.u32 256, 40
        %1825 = vbcast.lane.b32.xlu0 %v1803, %s1824
        %v1826 = vpop.permute.xlu0 %1825
        %s1828 = sor.u32 256, 48
        %1829 = vbcast.lane.b32.xlu0 %v1803, %s1828
        %v1830 = vpop.permute.xlu0 %1829
        %s1832 = sor.u32 256, 56
        %1833 = vbcast.lane.b32.xlu0 %v1803, %s1832
        %v1834 = vpop.permute.xlu0 %1833
        %s1836 = sor.u32 256, 64
        %1837 = vbcast.lane.b32.xlu0 %v1803, %s1836
        %v1838 = vpop.permute.xlu0 %1837
        %s1840 = sor.u32 256, 72
        %1841 = vbcast.lane.b32.xlu0 %v1803, %s1840
        %v1842 = vpop.permute.xlu0 %1841
        %s1844 = sor.u32 256, 80
        %1845 = vbcast.lane.b32.xlu0 %v1803, %s1844
        %v1846 = vpop.permute.xlu0 %1845
        %s1848 = sor.u32 256, 88
        %1849 = vbcast.lane.b32.xlu0 %v1803, %s1848
        %v1850 = vpop.permute.xlu0 %1849
        %s1852 = sor.u32 256, 96
        %1853 = vbcast.lane.b32.xlu0 %v1803, %s1852
        %v1854 = vpop.permute.xlu0 %1853
        %s1856 = sor.u32 256, 104
        %1857 = vbcast.lane.b32.xlu0 %v1803, %s1856
        %v1858 = vpop.permute.xlu0 %1857
        %s1860 = sor.u32 256, 112
        %1861 = vbcast.lane.b32.xlu0 %v1803, %s1860
        %v1862 = vpop.permute.xlu0 %1861
        %s1864 = sor.u32 256, 120
        %1865 = vbcast.lane.b32.xlu0 %v1803, %s1864
        %v1866 = vpop.permute.xlu0 %1865
        %v1867 = vlaneseq
        %v1868 = vshrl.u32 %v1867, 7
        %v1869 = vsub.s32 6, %v1868
        %v1870 = vrot.slane %v411, %v1869
        %1872 = vbcast.lane.b32.xlu0 %v1870, 256
        %v1873 = vpop.permute.xlu0 %1872
        %s1875 = sor.u32 256, 8
        %1876 = vbcast.lane.b32.xlu0 %v1870, %s1875
        %v1877 = vpop.permute.xlu0 %1876
        %s1879 = sor.u32 256, 16
        %1880 = vbcast.lane.b32.xlu0 %v1870, %s1879
        %v1881 = vpop.permute.xlu0 %1880
        %s1883 = sor.u32 256, 24
        %1884 = vbcast.lane.b32.xlu0 %v1870, %s1883
        %v1885 = vpop.permute.xlu0 %1884
        %s1887 = sor.u32 256, 32
        %1888 = vbcast.lane.b32.xlu0 %v1870, %s1887
        %v1889 = vpop.permute.xlu0 %1888
        %s1891 = sor.u32 256, 40
        %1892 = vbcast.lane.b32.xlu0 %v1870, %s1891
        %v1893 = vpop.permute.xlu0 %1892
        %s1895 = sor.u32 256, 48
        %1896 = vbcast.lane.b32.xlu0 %v1870, %s1895
        %v1897 = vpop.permute.xlu0 %1896
        %s1899 = sor.u32 256, 56
        %1900 = vbcast.lane.b32.xlu0 %v1870, %s1899
        %v1901 = vpop.permute.xlu0 %1900
        %s1903 = sor.u32 256, 64
        %1904 = vbcast.lane.b32.xlu0 %v1870, %s1903
        %v1905 = vpop.permute.xlu0 %1904
        %s1907 = sor.u32 256, 72
        %1908 = vbcast.lane.b32.xlu0 %v1870, %s1907
        %v1909 = vpop.permute.xlu0 %1908
        %s1911 = sor.u32 256, 80
        %1912 = vbcast.lane.b32.xlu0 %v1870, %s1911
        %v1913 = vpop.permute.xlu0 %1912
        %s1915 = sor.u32 256, 88
        %1916 = vbcast.lane.b32.xlu0 %v1870, %s1915
        %v1917 = vpop.permute.xlu0 %1916
        %s1919 = sor.u32 256, 96
        %1920 = vbcast.lane.b32.xlu0 %v1870, %s1919
        %v1921 = vpop.permute.xlu0 %1920
        %s1923 = sor.u32 256, 104
        %1924 = vbcast.lane.b32.xlu0 %v1870, %s1923
        %v1925 = vpop.permute.xlu0 %1924
        %s1927 = sor.u32 256, 112
        %1928 = vbcast.lane.b32.xlu0 %v1870, %s1927
        %v1929 = vpop.permute.xlu0 %1928
        %s1931 = sor.u32 256, 120
        %1932 = vbcast.lane.b32.xlu0 %v1870, %s1931
        %v1933 = vpop.permute.xlu0 %1932
        %v1934 = vlaneseq
        %v1935 = vshrl.u32 %v1934, 7
        %v1936 = vsub.s32 0, %v1935
        %v1937 = vrot.slane %v413, %v1936
        %1939 = vbcast.lane.b32.xlu0 %v1937, 256
        %v1940 = vpop.permute.xlu0 %1939
        %s1942 = sor.u32 256, 8
        %1943 = vbcast.lane.b32.xlu0 %v1937, %s1942
        %v1944 = vpop.permute.xlu0 %1943
        %s1946 = sor.u32 256, 16
        %1947 = vbcast.lane.b32.xlu0 %v1937, %s1946
        %v1948 = vpop.permute.xlu0 %1947
        %s1950 = sor.u32 256, 24
        %1951 = vbcast.lane.b32.xlu0 %v1937, %s1950
        %v1952 = vpop.permute.xlu0 %1951
        %s1954 = sor.u32 256, 32
        %1955 = vbcast.lane.b32.xlu0 %v1937, %s1954
        %v1956 = vpop.permute.xlu0 %1955
        %s1958 = sor.u32 256, 40
        %1959 = vbcast.lane.b32.xlu0 %v1937, %s1958
        %v1960 = vpop.permute.xlu0 %1959
        %s1962 = sor.u32 256, 48
        %1963 = vbcast.lane.b32.xlu0 %v1937, %s1962
        %v1964 = vpop.permute.xlu0 %1963
        %s1966 = sor.u32 256, 56
        %1967 = vbcast.lane.b32.xlu0 %v1937, %s1966
        %v1968 = vpop.permute.xlu0 %1967
        %s1970 = sor.u32 256, 64
        %1971 = vbcast.lane.b32.xlu0 %v1937, %s1970
        %v1972 = vpop.permute.xlu0 %1971
        %s1974 = sor.u32 256, 72
        %1975 = vbcast.lane.b32.xlu0 %v1937, %s1974
        %v1976 = vpop.permute.xlu0 %1975
        %s1978 = sor.u32 256, 80
        %1979 = vbcast.lane.b32.xlu0 %v1937, %s1978
        %v1980 = vpop.permute.xlu0 %1979
        %s1982 = sor.u32 256, 88
        %1983 = vbcast.lane.b32.xlu0 %v1937, %s1982
        %v1984 = vpop.permute.xlu0 %1983
        %s1986 = sor.u32 256, 96
        %1987 = vbcast.lane.b32.xlu0 %v1937, %s1986
        %v1988 = vpop.permute.xlu0 %1987
        %s1990 = sor.u32 256, 104
        %1991 = vbcast.lane.b32.xlu0 %v1937, %s1990
        %v1992 = vpop.permute.xlu0 %1991
        %s1994 = sor.u32 256, 112
        %1995 = vbcast.lane.b32.xlu0 %v1937, %s1994
        %v1996 = vpop.permute.xlu0 %1995
        %s1998 = sor.u32 256, 120
        %1999 = vbcast.lane.b32.xlu0 %v1937, %s1998
        %v2000 = vpop.permute.xlu0 %1999
        %v2001 = vlaneseq
        %v2002 = vshrl.u32 %v2001, 7
        %v2003 = vsub.s32 1, %v2002
        %v2004 = vrot.slane %v413, %v2003
        %2006 = vbcast.lane.b32.xlu0 %v2004, 256
        %v2007 = vpop.permute.xlu0 %2006
        %s2009 = sor.u32 256, 8
        %2010 = vbcast.lane.b32.xlu0 %v2004, %s2009
        %v2011 = vpop.permute.xlu0 %2010
        %s2013 = sor.u32 256, 16
        %2014 = vbcast.lane.b32.xlu0 %v2004, %s2013
        %v2015 = vpop.permute.xlu0 %2014
        %s2017 = sor.u32 256, 24
        %2018 = vbcast.lane.b32.xlu0 %v2004, %s2017
        %v2019 = vpop.permute.xlu0 %2018
        %s2021 = sor.u32 256, 32
        %2022 = vbcast.lane.b32.xlu0 %v2004, %s2021
        %v2023 = vpop.permute.xlu0 %2022
        %s2025 = sor.u32 256, 40
        %2026 = vbcast.lane.b32.xlu0 %v2004, %s2025
        %v2027 = vpop.permute.xlu0 %2026
        %s2029 = sor.u32 256, 48
        %2030 = vbcast.lane.b32.xlu0 %v2004, %s2029
        %v2031 = vpop.permute.xlu0 %2030
        %s2033 = sor.u32 256, 56
        %2034 = vbcast.lane.b32.xlu0 %v2004, %s2033
        %v2035 = vpop.permute.xlu0 %2034
        %s2037 = sor.u32 256, 64
        %2038 = vbcast.lane.b32.xlu0 %v2004, %s2037
        %v2039 = vpop.permute.xlu0 %2038
        %s2041 = sor.u32 256, 72
        %2042 = vbcast.lane.b32.xlu0 %v2004, %s2041
        %v2043 = vpop.permute.xlu0 %2042
        %s2045 = sor.u32 256, 80
        %2046 = vbcast.lane.b32.xlu0 %v2004, %s2045
        %v2047 = vpop.permute.xlu0 %2046
        %s2049 = sor.u32 256, 88
        %2050 = vbcast.lane.b32.xlu0 %v2004, %s2049
        %v2051 = vpop.permute.xlu0 %2050
        %s2053 = sor.u32 256, 96
        %2054 = vbcast.lane.b32.xlu0 %v2004, %s2053
        %v2055 = vpop.permute.xlu0 %2054
        %s2057 = sor.u32 256, 104
        %2058 = vbcast.lane.b32.xlu0 %v2004, %s2057
        %v2059 = vpop.permute.xlu0 %2058
        %s2061 = sor.u32 256, 112
        %2062 = vbcast.lane.b32.xlu0 %v2004, %s2061
        %v2063 = vpop.permute.xlu0 %2062
        %s2065 = sor.u32 256, 120
        %2066 = vbcast.lane.b32.xlu0 %v2004, %s2065
        %v2067 = vpop.permute.xlu0 %2066
        %v2068 = vlaneseq
        %v2069 = vshrl.u32 %v2068, 7
        %v2070 = vsub.s32 2, %v2069
        %v2071 = vrot.slane %v413, %v2070
        %2073 = vbcast.lane.b32.xlu0 %v2071, 256
        %v2074 = vpop.permute.xlu0 %2073
        %s2076 = sor.u32 256, 8
        %2077 = vbcast.lane.b32.xlu0 %v2071, %s2076
        %v2078 = vpop.permute.xlu0 %2077
        %s2080 = sor.u32 256, 16
        %2081 = vbcast.lane.b32.xlu0 %v2071, %s2080
        %v2082 = vpop.permute.xlu0 %2081
        %s2084 = sor.u32 256, 24
        %2085 = vbcast.lane.b32.xlu0 %v2071, %s2084
        %v2086 = vpop.permute.xlu0 %2085
        %s2088 = sor.u32 256, 32
        %2089 = vbcast.lane.b32.xlu0 %v2071, %s2088
        %v2090 = vpop.permute.xlu0 %2089
        %s2092 = sor.u32 256, 40
        %2093 = vbcast.lane.b32.xlu0 %v2071, %s2092
        %v2094 = vpop.permute.xlu0 %2093
        %s2096 = sor.u32 256, 48
        %2097 = vbcast.lane.b32.xlu0 %v2071, %s2096
        %v2098 = vpop.permute.xlu0 %2097
        %s2100 = sor.u32 256, 56
        %2101 = vbcast.lane.b32.xlu0 %v2071, %s2100
        %v2102 = vpop.permute.xlu0 %2101
        %s2104 = sor.u32 256, 64
        %2105 = vbcast.lane.b32.xlu0 %v2071, %s2104
        %v2106 = vpop.permute.xlu0 %2105
        %s2108 = sor.u32 256, 72
        %2109 = vbcast.lane.b32.xlu0 %v2071, %s2108
        %v2110 = vpop.permute.xlu0 %2109
        %s2112 = sor.u32 256, 80
        %2113 = vbcast.lane.b32.xlu0 %v2071, %s2112
        %v2114 = vpop.permute.xlu0 %2113
        %s2116 = sor.u32 256, 88
        %2117 = vbcast.lane.b32.xlu0 %v2071, %s2116
        %v2118 = vpop.permute.xlu0 %2117
        %s2120 = sor.u32 256, 96
        %2121 = vbcast.lane.b32.xlu0 %v2071, %s2120
        %v2122 = vpop.permute.xlu0 %2121
        %s2124 = sor.u32 256, 104
        %2125 = vbcast.lane.b32.xlu0 %v2071, %s2124
        %v2126 = vpop.permute.xlu0 %2125
        %s2128 = sor.u32 256, 112
        %2129 = vbcast.lane.b32.xlu0 %v2071, %s2128
        %v2130 = vpop.permute.xlu0 %2129
        %s2132 = sor.u32 256, 120
        %2133 = vbcast.lane.b32.xlu0 %v2071, %s2132
        %v2134 = vpop.permute.xlu0 %2133
        %v2135 = vlaneseq
        %v2136 = vshrl.u32 %v2135, 7
        %v2137 = vsub.s32 3, %v2136
        %v2138 = vrot.slane %v413, %v2137
        %2140 = vbcast.lane.b32.xlu0 %v2138, 256
        %v2141 = vpop.permute.xlu0 %2140
        %s2143 = sor.u32 256, 8
        %2144 = vbcast.lane.b32.xlu0 %v2138, %s2143
        %v2145 = vpop.permute.xlu0 %2144
        %s2147 = sor.u32 256, 16
        %2148 = vbcast.lane.b32.xlu0 %v2138, %s2147
        %v2149 = vpop.permute.xlu0 %2148
        %s2151 = sor.u32 256, 24
        %2152 = vbcast.lane.b32.xlu0 %v2138, %s2151
        %v2153 = vpop.permute.xlu0 %2152
        %s2155 = sor.u32 256, 32
        %2156 = vbcast.lane.b32.xlu0 %v2138, %s2155
        %v2157 = vpop.permute.xlu0 %2156
        %s2159 = sor.u32 256, 40
        %2160 = vbcast.lane.b32.xlu0 %v2138, %s2159
        %v2161 = vpop.permute.xlu0 %2160
        %s2163 = sor.u32 256, 48
        %2164 = vbcast.lane.b32.xlu0 %v2138, %s2163
        %v2165 = vpop.permute.xlu0 %2164
        %s2167 = sor.u32 256, 56
        %2168 = vbcast.lane.b32.xlu0 %v2138, %s2167
        %v2169 = vpop.permute.xlu0 %2168
        %s2171 = sor.u32 256, 64
        %2172 = vbcast.lane.b32.xlu0 %v2138, %s2171
        %v2173 = vpop.permute.xlu0 %2172
        %s2175 = sor.u32 256, 72
        %2176 = vbcast.lane.b32.xlu0 %v2138, %s2175
        %v2177 = vpop.permute.xlu0 %2176
        %s2179 = sor.u32 256, 80
        %2180 = vbcast.lane.b32.xlu0 %v2138, %s2179
        %v2181 = vpop.permute.xlu0 %2180
        %s2183 = sor.u32 256, 88
        %2184 = vbcast.lane.b32.xlu0 %v2138, %s2183
        %v2185 = vpop.permute.xlu0 %2184
        %s2187 = sor.u32 256, 96
        %2188 = vbcast.lane.b32.xlu0 %v2138, %s2187
        %v2189 = vpop.permute.xlu0 %2188
        %s2191 = sor.u32 256, 104
        %2192 = vbcast.lane.b32.xlu0 %v2138, %s2191
        %v2193 = vpop.permute.xlu0 %2192
        %s2195 = sor.u32 256, 112
        %2196 = vbcast.lane.b32.xlu0 %v2138, %s2195
        %v2197 = vpop.permute.xlu0 %2196
        %s2199 = sor.u32 256, 120
        %2200 = vbcast.lane.b32.xlu0 %v2138, %s2199
        %v2201 = vpop.permute.xlu0 %2200
        %v2202 = vlaneseq
        %v2203 = vshrl.u32 %v2202, 7
        %v2204 = vsub.s32 4, %v2203
        %v2205 = vrot.slane %v413, %v2204
        %2207 = vbcast.lane.b32.xlu0 %v2205, 256
        %v2208 = vpop.permute.xlu0 %2207
        %s2210 = sor.u32 256, 8
        %2211 = vbcast.lane.b32.xlu0 %v2205, %s2210
        %v2212 = vpop.permute.xlu0 %2211
        %s2214 = sor.u32 256, 16
        %2215 = vbcast.lane.b32.xlu0 %v2205, %s2214
        %v2216 = vpop.permute.xlu0 %2215
        %s2218 = sor.u32 256, 24
        %2219 = vbcast.lane.b32.xlu0 %v2205, %s2218
        %v2220 = vpop.permute.xlu0 %2219
        %s2222 = sor.u32 256, 32
        %2223 = vbcast.lane.b32.xlu0 %v2205, %s2222
        %v2224 = vpop.permute.xlu0 %2223
        %s2226 = sor.u32 256, 40
        %2227 = vbcast.lane.b32.xlu0 %v2205, %s2226
        %v2228 = vpop.permute.xlu0 %2227
        %s2230 = sor.u32 256, 48
        %2231 = vbcast.lane.b32.xlu0 %v2205, %s2230
        %v2232 = vpop.permute.xlu0 %2231
        %s2234 = sor.u32 256, 56
        %2235 = vbcast.lane.b32.xlu0 %v2205, %s2234
        %v2236 = vpop.permute.xlu0 %2235
        %s2238 = sor.u32 256, 64
        %2239 = vbcast.lane.b32.xlu0 %v2205, %s2238
        %v2240 = vpop.permute.xlu0 %2239
        %s2242 = sor.u32 256, 72
        %2243 = vbcast.lane.b32.xlu0 %v2205, %s2242
        %v2244 = vpop.permute.xlu0 %2243
        %s2246 = sor.u32 256, 80
        %2247 = vbcast.lane.b32.xlu0 %v2205, %s2246
        %v2248 = vpop.permute.xlu0 %2247
        %s2250 = sor.u32 256, 88
        %2251 = vbcast.lane.b32.xlu0 %v2205, %s2250
        %v2252 = vpop.permute.xlu0 %2251
        %s2254 = sor.u32 256, 96
        %2255 = vbcast.lane.b32.xlu0 %v2205, %s2254
        %v2256 = vpop.permute.xlu0 %2255
        %s2258 = sor.u32 256, 104
        %2259 = vbcast.lane.b32.xlu0 %v2205, %s2258
        %v2260 = vpop.permute.xlu0 %2259
        %s2262 = sor.u32 256, 112
        %2263 = vbcast.lane.b32.xlu0 %v2205, %s2262
        %v2264 = vpop.permute.xlu0 %2263
        %s2266 = sor.u32 256, 120
        %2267 = vbcast.lane.b32.xlu0 %v2205, %s2266
        %v2268 = vpop.permute.xlu0 %2267
        %v2269 = vlaneseq
        %v2270 = vshrl.u32 %v2269, 7
        %v2271 = vsub.s32 5, %v2270
        %v2272 = vrot.slane %v413, %v2271
        %2274 = vbcast.lane.b32.xlu0 %v2272, 256
        %v2275 = vpop.permute.xlu0 %2274
        %s2277 = sor.u32 256, 8
        %2278 = vbcast.lane.b32.xlu0 %v2272, %s2277
        %v2279 = vpop.permute.xlu0 %2278
        %s2281 = sor.u32 256, 16
        %2282 = vbcast.lane.b32.xlu0 %v2272, %s2281
        %v2283 = vpop.permute.xlu0 %2282
        %s2285 = sor.u32 256, 24
        %2286 = vbcast.lane.b32.xlu0 %v2272, %s2285
        %v2287 = vpop.permute.xlu0 %2286
        %s2289 = sor.u32 256, 32
        %2290 = vbcast.lane.b32.xlu0 %v2272, %s2289
        %v2291 = vpop.permute.xlu0 %2290
        %s2293 = sor.u32 256, 40
        %2294 = vbcast.lane.b32.xlu0 %v2272, %s2293
        %v2295 = vpop.permute.xlu0 %2294
        %s2297 = sor.u32 256, 48
        %2298 = vbcast.lane.b32.xlu0 %v2272, %s2297
        %v2299 = vpop.permute.xlu0 %2298
        %s2301 = sor.u32 256, 56
        %2302 = vbcast.lane.b32.xlu0 %v2272, %s2301
        %v2303 = vpop.permute.xlu0 %2302
        %s2305 = sor.u32 256, 64
        %2306 = vbcast.lane.b32.xlu0 %v2272, %s2305
        %v2307 = vpop.permute.xlu0 %2306
        %s2309 = sor.u32 256, 72
        %2310 = vbcast.lane.b32.xlu0 %v2272, %s2309
        %v2311 = vpop.permute.xlu0 %2310
        %s2313 = sor.u32 256, 80
        %2314 = vbcast.lane.b32.xlu0 %v2272, %s2313
        %v2315 = vpop.permute.xlu0 %2314
        %s2317 = sor.u32 256, 88
        %2318 = vbcast.lane.b32.xlu0 %v2272, %s2317
        %v2319 = vpop.permute.xlu0 %2318
        %s2321 = sor.u32 256, 96
        %2322 = vbcast.lane.b32.xlu0 %v2272, %s2321
        %v2323 = vpop.permute.xlu0 %2322
        %s2325 = sor.u32 256, 104
        %2326 = vbcast.lane.b32.xlu0 %v2272, %s2325
        %v2327 = vpop.permute.xlu0 %2326
        %s2329 = sor.u32 256, 112
        %2330 = vbcast.lane.b32.xlu0 %v2272, %s2329
        %v2331 = vpop.permute.xlu0 %2330
        %s2333 = sor.u32 256, 120
        %2334 = vbcast.lane.b32.xlu0 %v2272, %s2333
        %v2335 = vpop.permute.xlu0 %2334
        %v2336 = vlaneseq
        %v2337 = vshrl.u32 %v2336, 7
        %v2338 = vsub.s32 6, %v2337
        %v2339 = vrot.slane %v413, %v2338
        %2341 = vbcast.lane.b32.xlu0 %v2339, 256
        %v2342 = vpop.permute.xlu0 %2341
        %s2344 = sor.u32 256, 8
        %2345 = vbcast.lane.b32.xlu0 %v2339, %s2344
        %v2346 = vpop.permute.xlu0 %2345
        %s2348 = sor.u32 256, 16
        %2349 = vbcast.lane.b32.xlu0 %v2339, %s2348
        %v2350 = vpop.permute.xlu0 %2349
        %s2352 = sor.u32 256, 24
        %2353 = vbcast.lane.b32.xlu0 %v2339, %s2352
        %v2354 = vpop.permute.xlu0 %2353
        %s2356 = sor.u32 256, 32
        %2357 = vbcast.lane.b32.xlu0 %v2339, %s2356
        %v2358 = vpop.permute.xlu0 %2357
        %s2360 = sor.u32 256, 40
        %2361 = vbcast.lane.b32.xlu0 %v2339, %s2360
        %v2362 = vpop.permute.xlu0 %2361
        %s2364 = sor.u32 256, 48
        %2365 = vbcast.lane.b32.xlu0 %v2339, %s2364
        %v2366 = vpop.permute.xlu0 %2365
        %s2368 = sor.u32 256, 56
        %2369 = vbcast.lane.b32.xlu0 %v2339, %s2368
        %v2370 = vpop.permute.xlu0 %2369
        %s2372 = sor.u32 256, 64
        %2373 = vbcast.lane.b32.xlu0 %v2339, %s2372
        %v2374 = vpop.permute.xlu0 %2373
        %s2376 = sor.u32 256, 72
        %2377 = vbcast.lane.b32.xlu0 %v2339, %s2376
        %v2378 = vpop.permute.xlu0 %2377
        %s2380 = sor.u32 256, 80
        %2381 = vbcast.lane.b32.xlu0 %v2339, %s2380
        %v2382 = vpop.permute.xlu0 %2381
        %s2384 = sor.u32 256, 88
        %2385 = vbcast.lane.b32.xlu0 %v2339, %s2384
        %v2386 = vpop.permute.xlu0 %2385
        %s2388 = sor.u32 256, 96
        %2389 = vbcast.lane.b32.xlu0 %v2339, %s2388
        %v2390 = vpop.permute.xlu0 %2389
        %s2392 = sor.u32 256, 104
        %2393 = vbcast.lane.b32.xlu0 %v2339, %s2392
        %v2394 = vpop.permute.xlu0 %2393
        %s2396 = sor.u32 256, 112
        %2397 = vbcast.lane.b32.xlu0 %v2339, %s2396
        %v2398 = vpop.permute.xlu0 %2397
        %s2400 = sor.u32 256, 120
        %2401 = vbcast.lane.b32.xlu0 %v2339, %s2400
        %v2402 = vpop.permute.xlu0 %2401
        %v2403 = vsel %vm1352, %v1471, %v1940
        %v2404 = vsel %vm1352, %v1475, %v1944
        %v2405 = vsel %vm1352, %v1479, %v1948
        %v2406 = vsel %vm1352, %v1483, %v1952
        %v2407 = vsel %vm1352, %v1487, %v1956
        %v2408 = vsel %vm1352, %v1491, %v1960
        %v2409 = vsel %vm1352, %v1495, %v1964
        %v2410 = vsel %vm1352, %v1499, %v1968
        %v2411 = vsel %vm1352, %v1503, %v1972
        %v2412 = vsel %vm1352, %v1507, %v1976
        %v2413 = vsel %vm1352, %v1511, %v1980
        %v2414 = vsel %vm1352, %v1515, %v1984
        %v2415 = vsel %vm1352, %v1519, %v1988
        %v2416 = vsel %vm1352, %v1523, %v1992
        %v2417 = vsel %vm1352, %v1527, %v1996
        %v2418 = vsel %vm1352, %v1531, %v2000
        %v2419 = vsel %vm1352, %v1538, %v2007
        %v2420 = vsel %vm1352, %v1542, %v2011
        %v2421 = vsel %vm1352, %v1546, %v2015
        %v2422 = vsel %vm1352, %v1550, %v2019
        %v2423 = vsel %vm1352, %v1554, %v2023
        %v2424 = vsel %vm1352, %v1558, %v2027
        %v2425 = vsel %vm1352, %v1562, %v2031
        %v2426 = vsel %vm1352, %v1566, %v2035
        %v2427 = vsel %vm1352, %v1570, %v2039
        %v2428 = vsel %vm1352, %v1574, %v2043
        %v2429 = vsel %vm1352, %v1578, %v2047
        %v2430 = vsel %vm1352, %v1582, %v2051
        %v2431 = vsel %vm1352, %v1586, %v2055
        %v2432 = vsel %vm1352, %v1590, %v2059
        %v2433 = vsel %vm1352, %v1594, %v2063
        %v2434 = vsel %vm1352, %v1598, %v2067
        %v2435 = vsel %vm1352, %v1605, %v2074
        %v2436 = vsel %vm1352, %v1609, %v2078
        %v2437 = vsel %vm1352, %v1613, %v2082
        %v2438 = vsel %vm1352, %v1617, %v2086
        %v2439 = vsel %vm1352, %v1621, %v2090
        %v2440 = vsel %vm1352, %v1625, %v2094
        %v2441 = vsel %vm1352, %v1629, %v2098
        %v2442 = vsel %vm1352, %v1633, %v2102
        %v2443 = vsel %vm1352, %v1637, %v2106
        %v2444 = vsel %vm1352, %v1641, %v2110
        %v2445 = vsel %vm1352, %v1645, %v2114
        %v2446 = vsel %vm1352, %v1649, %v2118
        %v2447 = vsel %vm1352, %v1653, %v2122
        %v2448 = vsel %vm1352, %v1657, %v2126
        %v2449 = vsel %vm1352, %v1661, %v2130
        %v2450 = vsel %vm1352, %v1665, %v2134
        %v2451 = vsel %vm1352, %v1672, %v2141
        %v2452 = vsel %vm1352, %v1676, %v2145
        %v2453 = vsel %vm1352, %v1680, %v2149
        %v2454 = vsel %vm1352, %v1684, %v2153
        %v2455 = vsel %vm1352, %v1688, %v2157
        %v2456 = vsel %vm1352, %v1692, %v2161
        %v2457 = vsel %vm1352, %v1696, %v2165
        %v2458 = vsel %vm1352, %v1700, %v2169
        %v2459 = vsel %vm1352, %v1704, %v2173
        %v2460 = vsel %vm1352, %v1708, %v2177
        %v2461 = vsel %vm1352, %v1712, %v2181
        %v2462 = vsel %vm1352, %v1716, %v2185
        %v2463 = vsel %vm1352, %v1720, %v2189
        %v2464 = vsel %vm1352, %v1724, %v2193
        %v2465 = vsel %vm1352, %v1728, %v2197
        %v2466 = vsel %vm1352, %v1732, %v2201
        %v2467 = vsel %vm1352, %v1739, %v2208
        %v2468 = vsel %vm1352, %v1743, %v2212
        %v2469 = vsel %vm1352, %v1747, %v2216
        %v2470 = vsel %vm1352, %v1751, %v2220
        %v2471 = vsel %vm1352, %v1755, %v2224
        %v2472 = vsel %vm1352, %v1759, %v2228
        %v2473 = vsel %vm1352, %v1763, %v2232
        %v2474 = vsel %vm1352, %v1767, %v2236
        %v2475 = vsel %vm1352, %v1771, %v2240
        %v2476 = vsel %vm1352, %v1775, %v2244
        %v2477 = vsel %vm1352, %v1779, %v2248
        %v2478 = vsel %vm1352, %v1783, %v2252
        %v2479 = vsel %vm1352, %v1787, %v2256
        %v2480 = vsel %vm1352, %v1791, %v2260
        %v2481 = vsel %vm1352, %v1795, %v2264
        %v2482 = vsel %vm1352, %v1799, %v2268
        %v2483 = vsel %vm1352, %v1806, %v2275
        %v2484 = vsel %vm1352, %v1810, %v2279
        %v2485 = vsel %vm1352, %v1814, %v2283
        %v2486 = vsel %vm1352, %v1818, %v2287
        %v2487 = vsel %vm1352, %v1822, %v2291
        %v2488 = vsel %vm1352, %v1826, %v2295
        %v2489 = vsel %vm1352, %v1830, %v2299
        %v2490 = vsel %vm1352, %v1834, %v2303
        %v2491 = vsel %vm1352, %v1838, %v2307
        %v2492 = vsel %vm1352, %v1842, %v2311
        %v2493 = vsel %vm1352, %v1846, %v2315
        %v2494 = vsel %vm1352, %v1850, %v2319
        %v2495 = vsel %vm1352, %v1854, %v2323
        %v2496 = vsel %vm1352, %v1858, %v2327
        %v2497 = vsel %vm1352, %v1862, %v2331
        %v2498 = vsel %vm1352, %v1866, %v2335
        %v2499 = vsel %vm1352, %v1873, %v2342
        %v2500 = vsel %vm1352, %v1877, %v2346
        %v2501 = vsel %vm1352, %v1881, %v2350
        %v2502 = vsel %vm1352, %v1885, %v2354
        %v2503 = vsel %vm1352, %v1889, %v2358
        %v2504 = vsel %vm1352, %v1893, %v2362
        %v2505 = vsel %vm1352, %v1897, %v2366
        %v2506 = vsel %vm1352, %v1901, %v2370
        %v2507 = vsel %vm1352, %v1905, %v2374
        %v2508 = vsel %vm1352, %v1909, %v2378
        %v2509 = vsel %vm1352, %v1913, %v2382
        %v2510 = vsel %vm1352, %v1917, %v2386
        %v2511 = vsel %vm1352, %v1921, %v2390
        %v2512 = vsel %vm1352, %v1925, %v2394
        %v2513 = vsel %vm1352, %v1929, %v2398
        %v2514 = vsel %vm1352, %v1933, %v2402
        %v2515 = vlaneseq
        %v2516 = vshrl.u32 %v2515, 7
        %v2517 = vsub.s32 7, %v2516
        %v2518 = vrot.slane %v410, %v2517
        %2520 = vbcast.lane.b32.xlu0 %v2518, 256
        %v2521 = vpop.permute.xlu0 %2520
        %s2523 = sor.u32 256, 8
        %2524 = vbcast.lane.b32.xlu0 %v2518, %s2523
        %v2525 = vpop.permute.xlu0 %2524
        %s2527 = sor.u32 256, 16
        %2528 = vbcast.lane.b32.xlu0 %v2518, %s2527
        %v2529 = vpop.permute.xlu0 %2528
        %s2531 = sor.u32 256, 24
        %2532 = vbcast.lane.b32.xlu0 %v2518, %s2531
        %v2533 = vpop.permute.xlu0 %2532
        %s2535 = sor.u32 256, 32
        %2536 = vbcast.lane.b32.xlu0 %v2518, %s2535
        %v2537 = vpop.permute.xlu0 %2536
        %s2539 = sor.u32 256, 40
        %2540 = vbcast.lane.b32.xlu0 %v2518, %s2539
        %v2541 = vpop.permute.xlu0 %2540
        %s2543 = sor.u32 256, 48
        %2544 = vbcast.lane.b32.xlu0 %v2518, %s2543
        %v2545 = vpop.permute.xlu0 %2544
        %s2547 = sor.u32 256, 56
        %2548 = vbcast.lane.b32.xlu0 %v2518, %s2547
        %v2549 = vpop.permute.xlu0 %2548
        %s2551 = sor.u32 256, 64
        %2552 = vbcast.lane.b32.xlu0 %v2518, %s2551
        %v2553 = vpop.permute.xlu0 %2552
        %s2555 = sor.u32 256, 72
        %2556 = vbcast.lane.b32.xlu0 %v2518, %s2555
        %v2557 = vpop.permute.xlu0 %2556
        %s2559 = sor.u32 256, 80
        %2560 = vbcast.lane.b32.xlu0 %v2518, %s2559
        %v2561 = vpop.permute.xlu0 %2560
        %s2563 = sor.u32 256, 88
        %2564 = vbcast.lane.b32.xlu0 %v2518, %s2563
        %v2565 = vpop.permute.xlu0 %2564
        %s2567 = sor.u32 256, 96
        %2568 = vbcast.lane.b32.xlu0 %v2518, %s2567
        %v2569 = vpop.permute.xlu0 %2568
        %s2571 = sor.u32 256, 104
        %2572 = vbcast.lane.b32.xlu0 %v2518, %s2571
        %v2573 = vpop.permute.xlu0 %2572
        %s2575 = sor.u32 256, 112
        %2576 = vbcast.lane.b32.xlu0 %v2518, %s2575
        %v2577 = vpop.permute.xlu0 %2576
        %s2579 = sor.u32 256, 120
        %2580 = vbcast.lane.b32.xlu0 %v2518, %s2579
        %v2581 = vpop.permute.xlu0 %2580
        %v2582 = vsel %vm1352, %v889, %v487
        %v2583 = vsel %vm1352, %v893, %v491
        %v2584 = vsel %vm1352, %v897, %v495
        %v2585 = vsel %vm1352, %v901, %v499
        %v2586 = vsel %vm1352, %v905, %v503
        %v2587 = vsel %vm1352, %v909, %v507
        %v2588 = vsel %vm1352, %v913, %v511
        %v2589 = vsel %vm1352, %v917, %v515
        %v2590 = vsel %vm1352, %v921, %v519
        %v2591 = vsel %vm1352, %v925, %v523
        %v2592 = vsel %vm1352, %v929, %v527
        %v2593 = vsel %vm1352, %v933, %v531
        %v2594 = vsel %vm1352, %v937, %v535
        %v2595 = vsel %vm1352, %v941, %v539
        %v2596 = vsel %vm1352, %v945, %v543
        %v2597 = vsel %vm1352, %v949, %v547
        %v2598 = vsel %vm1352, %v956, %v554
        %v2599 = vsel %vm1352, %v960, %v558
        %v2600 = vsel %vm1352, %v964, %v562
        %v2601 = vsel %vm1352, %v968, %v566
        %v2602 = vsel %vm1352, %v972, %v570
        %v2603 = vsel %vm1352, %v976, %v574
        %v2604 = vsel %vm1352, %v980, %v578
        %v2605 = vsel %vm1352, %v984, %v582
        %v2606 = vsel %vm1352, %v988, %v586
        %v2607 = vsel %vm1352, %v992, %v590
        %v2608 = vsel %vm1352, %v996, %v594
        %v2609 = vsel %vm1352, %v1000, %v598
        %v2610 = vsel %vm1352, %v1004, %v602
        %v2611 = vsel %vm1352, %v1008, %v606
        %v2612 = vsel %vm1352, %v1012, %v610
        %v2613 = vsel %vm1352, %v1016, %v614
        %v2614 = vsel %vm1352, %v1023, %v621
        %v2615 = vsel %vm1352, %v1027, %v625
        %v2616 = vsel %vm1352, %v1031, %v629
        %v2617 = vsel %vm1352, %v1035, %v633
        %v2618 = vsel %vm1352, %v1039, %v637
        %v2619 = vsel %vm1352, %v1043, %v641
        %v2620 = vsel %vm1352, %v1047, %v645
        %v2621 = vsel %vm1352, %v1051, %v649
        %v2622 = vsel %vm1352, %v1055, %v653
        %v2623 = vsel %vm1352, %v1059, %v657
        %v2624 = vsel %vm1352, %v1063, %v661
        %v2625 = vsel %vm1352, %v1067, %v665
        %v2626 = vsel %vm1352, %v1071, %v669
        %v2627 = vsel %vm1352, %v1075, %v673
        %v2628 = vsel %vm1352, %v1079, %v677
        %v2629 = vsel %vm1352, %v1083, %v681
        %v2630 = vsel %vm1352, %v1090, %v688
        %v2631 = vsel %vm1352, %v1094, %v692
        %v2632 = vsel %vm1352, %v1098, %v696
        %v2633 = vsel %vm1352, %v1102, %v700
        %v2634 = vsel %vm1352, %v1106, %v704
        %v2635 = vsel %vm1352, %v1110, %v708
        %v2636 = vsel %vm1352, %v1114, %v712
        %v2637 = vsel %vm1352, %v1118, %v716
        %v2638 = vsel %vm1352, %v1122, %v720
        %v2639 = vsel %vm1352, %v1126, %v724
        %v2640 = vsel %vm1352, %v1130, %v728
        %v2641 = vsel %vm1352, %v1134, %v732
        %v2642 = vsel %vm1352, %v1138, %v736
        %v2643 = vsel %vm1352, %v1142, %v740
        %v2644 = vsel %vm1352, %v1146, %v744
        %v2645 = vsel %vm1352, %v1150, %v748
        %v2646 = vsel %vm1352, %v1157, %v755
        %v2647 = vsel %vm1352, %v1161, %v759
        %v2648 = vsel %vm1352, %v1165, %v763
        %v2649 = vsel %vm1352, %v1169, %v767
        %v2650 = vsel %vm1352, %v1173, %v771
        %v2651 = vsel %vm1352, %v1177, %v775
        %v2652 = vsel %vm1352, %v1181, %v779
        %v2653 = vsel %vm1352, %v1185, %v783
        %v2654 = vsel %vm1352, %v1189, %v787
        %v2655 = vsel %vm1352, %v1193, %v791
        %v2656 = vsel %vm1352, %v1197, %v795
        %v2657 = vsel %vm1352, %v1201, %v799
        %v2658 = vsel %vm1352, %v1205, %v803
        %v2659 = vsel %vm1352, %v1209, %v807
        %v2660 = vsel %vm1352, %v1213, %v811
        %v2661 = vsel %vm1352, %v1217, %v815
        %v2662 = vsel %vm1352, %v1224, %v822
        %v2663 = vsel %vm1352, %v1228, %v826
        %v2664 = vsel %vm1352, %v1232, %v830
        %v2665 = vsel %vm1352, %v1236, %v834
        %v2666 = vsel %vm1352, %v1240, %v838
        %v2667 = vsel %vm1352, %v1244, %v842
        %v2668 = vsel %vm1352, %v1248, %v846
        %v2669 = vsel %vm1352, %v1252, %v850
        %v2670 = vsel %vm1352, %v1256, %v854
        %v2671 = vsel %vm1352, %v1260, %v858
        %v2672 = vsel %vm1352, %v1264, %v862
        %v2673 = vsel %vm1352, %v1268, %v866
        %v2674 = vsel %vm1352, %v1272, %v870
        %v2675 = vsel %vm1352, %v1276, %v874
        %v2676 = vsel %vm1352, %v1280, %v878
        %v2677 = vsel %vm1352, %v1284, %v882
        %v2678 = vsel %vm1352, %v1291, %v2521
        %v2679 = vsel %vm1352, %v1295, %v2525
        %v2680 = vsel %vm1352, %v1299, %v2529
        %v2681 = vsel %vm1352, %v1303, %v2533
        %v2682 = vsel %vm1352, %v1307, %v2537
        %v2683 = vsel %vm1352, %v1311, %v2541
        %v2684 = vsel %vm1352, %v1315, %v2545
        %v2685 = vsel %vm1352, %v1319, %v2549
        %v2686 = vsel %vm1352, %v1323, %v2553
        %v2687 = vsel %vm1352, %v1327, %v2557
        %v2688 = vsel %vm1352, %v1331, %v2561
        %v2689 = vsel %vm1352, %v1335, %v2565
        %v2690 = vsel %vm1352, %v1339, %v2569
        %v2691 = vsel %vm1352, %v1343, %v2573
        %v2692 = vsel %vm1352, %v1347, %v2577
        %v2693 = vsel %vm1352, %v1351, %v2581
        %v2694 = vlaneseq
        %v2695 = vshrl.u32 %v2694, 7
        %v2696 = vsub.s32 7, %v2695
        %v2697 = vrot.slane %v411, %v2696
        %2699 = vbcast.lane.b32.xlu0 %v2697, 256
        %v2700 = vpop.permute.xlu0 %2699
        %s2702 = sor.u32 256, 8
        %2703 = vbcast.lane.b32.xlu0 %v2697, %s2702
        %v2704 = vpop.permute.xlu0 %2703
        %s2706 = sor.u32 256, 16
        %2707 = vbcast.lane.b32.xlu0 %v2697, %s2706
        %v2708 = vpop.permute.xlu0 %2707
        %s2710 = sor.u32 256, 24
        %2711 = vbcast.lane.b32.xlu0 %v2697, %s2710
        %v2712 = vpop.permute.xlu0 %2711
        %s2714 = sor.u32 256, 32
        %2715 = vbcast.lane.b32.xlu0 %v2697, %s2714
        %v2716 = vpop.permute.xlu0 %2715
        %s2718 = sor.u32 256, 40
        %2719 = vbcast.lane.b32.xlu0 %v2697, %s2718
        %v2720 = vpop.permute.xlu0 %2719
        %s2722 = sor.u32 256, 48
        %2723 = vbcast.lane.b32.xlu0 %v2697, %s2722
        %v2724 = vpop.permute.xlu0 %2723
        %s2726 = sor.u32 256, 56
        %2727 = vbcast.lane.b32.xlu0 %v2697, %s2726
        %v2728 = vpop.permute.xlu0 %2727
        %s2730 = sor.u32 256, 64
        %2731 = vbcast.lane.b32.xlu0 %v2697, %s2730
        %v2732 = vpop.permute.xlu0 %2731
        %s2734 = sor.u32 256, 72
        %2735 = vbcast.lane.b32.xlu0 %v2697, %s2734
        %v2736 = vpop.permute.xlu0 %2735
        %s2738 = sor.u32 256, 80
        %2739 = vbcast.lane.b32.xlu0 %v2697, %s2738
        %v2740 = vpop.permute.xlu0 %2739
        %s2742 = sor.u32 256, 88
        %2743 = vbcast.lane.b32.xlu0 %v2697, %s2742
        %v2744 = vpop.permute.xlu0 %2743
        %s2746 = sor.u32 256, 96
        %2747 = vbcast.lane.b32.xlu0 %v2697, %s2746
        %v2748 = vpop.permute.xlu0 %2747
        %s2750 = sor.u32 256, 104
        %2751 = vbcast.lane.b32.xlu0 %v2697, %s2750
        %v2752 = vpop.permute.xlu0 %2751
        %s2754 = sor.u32 256, 112
        %2755 = vbcast.lane.b32.xlu0 %v2697, %s2754
        %v2756 = vpop.permute.xlu0 %2755
        %s2758 = sor.u32 256, 120
        %2759 = vbcast.lane.b32.xlu0 %v2697, %s2758
        %v2760 = vpop.permute.xlu0 %2759
        %v2761 = vsel %vm1352, %v1940, %v1538
        %v2762 = vsel %vm1352, %v1944, %v1542
        %v2763 = vsel %vm1352, %v1948, %v1546
        %v2764 = vsel %vm1352, %v1952, %v1550
        %v2765 = vsel %vm1352, %v1956, %v1554
        %v2766 = vsel %vm1352, %v1960, %v1558
        %v2767 = vsel %vm1352, %v1964, %v1562
        %v2768 = vsel %vm1352, %v1968, %v1566
        %v2769 = vsel %vm1352, %v1972, %v1570
        %v2770 = vsel %vm1352, %v1976, %v1574
        %v2771 = vsel %vm1352, %v1980, %v1578
        %v2772 = vsel %vm1352, %v1984, %v1582
        %v2773 = vsel %vm1352, %v1988, %v1586
        %v2774 = vsel %vm1352, %v1992, %v1590
        %v2775 = vsel %vm1352, %v1996, %v1594
        %v2776 = vsel %vm1352, %v2000, %v1598
        %v2777 = vsel %vm1352, %v2007, %v1605
        %v2778 = vsel %vm1352, %v2011, %v1609
        %v2779 = vsel %vm1352, %v2015, %v1613
        %v2780 = vsel %vm1352, %v2019, %v1617
        %v2781 = vsel %vm1352, %v2023, %v1621
        %v2782 = vsel %vm1352, %v2027, %v1625
        %v2783 = vsel %vm1352, %v2031, %v1629
        %v2784 = vsel %vm1352, %v2035, %v1633
        %v2785 = vsel %vm1352, %v2039, %v1637
        %v2786 = vsel %vm1352, %v2043, %v1641
        %v2787 = vsel %vm1352, %v2047, %v1645
        %v2788 = vsel %vm1352, %v2051, %v1649
        %v2789 = vsel %vm1352, %v2055, %v1653
        %v2790 = vsel %vm1352, %v2059, %v1657
        %v2791 = vsel %vm1352, %v2063, %v1661
        %v2792 = vsel %vm1352, %v2067, %v1665
        %v2793 = vsel %vm1352, %v2074, %v1672
        %v2794 = vsel %vm1352, %v2078, %v1676
        %v2795 = vsel %vm1352, %v2082, %v1680
        %v2796 = vsel %vm1352, %v2086, %v1684
        %v2797 = vsel %vm1352, %v2090, %v1688
        %v2798 = vsel %vm1352, %v2094, %v1692
        %v2799 = vsel %vm1352, %v2098, %v1696
        %v2800 = vsel %vm1352, %v2102, %v1700
        %v2801 = vsel %vm1352, %v2106, %v1704
        %v2802 = vsel %vm1352, %v2110, %v1708
        %v2803 = vsel %vm1352, %v2114, %v1712
        %v2804 = vsel %vm1352, %v2118, %v1716
        %v2805 = vsel %vm1352, %v2122, %v1720
        %v2806 = vsel %vm1352, %v2126, %v1724
        %v2807 = vsel %vm1352, %v2130, %v1728
        %v2808 = vsel %vm1352, %v2134, %v1732
        %v2809 = vsel %vm1352, %v2141, %v1739
        %v2810 = vsel %vm1352, %v2145, %v1743
        %v2811 = vsel %vm1352, %v2149, %v1747
        %v2812 = vsel %vm1352, %v2153, %v1751
        %v2813 = vsel %vm1352, %v2157, %v1755
        %v2814 = vsel %vm1352, %v2161, %v1759
        %v2815 = vsel %vm1352, %v2165, %v1763
        %v2816 = vsel %vm1352, %v2169, %v1767
        %v2817 = vsel %vm1352, %v2173, %v1771
        %v2818 = vsel %vm1352, %v2177, %v1775
        %v2819 = vsel %vm1352, %v2181, %v1779
        %v2820 = vsel %vm1352, %v2185, %v1783
        %v2821 = vsel %vm1352, %v2189, %v1787
        %v2822 = vsel %vm1352, %v2193, %v1791
        %v2823 = vsel %vm1352, %v2197, %v1795
        %v2824 = vsel %vm1352, %v2201, %v1799
        %v2825 = vsel %vm1352, %v2208, %v1806
        %v2826 = vsel %vm1352, %v2212, %v1810
        %v2827 = vsel %vm1352, %v2216, %v1814
        %v2828 = vsel %vm1352, %v2220, %v1818
        %v2829 = vsel %vm1352, %v2224, %v1822
        %v2830 = vsel %vm1352, %v2228, %v1826
        %v2831 = vsel %vm1352, %v2232, %v1830
        %v2832 = vsel %vm1352, %v2236, %v1834
        %v2833 = vsel %vm1352, %v2240, %v1838
        %v2834 = vsel %vm1352, %v2244, %v1842
        %v2835 = vsel %vm1352, %v2248, %v1846
        %v2836 = vsel %vm1352, %v2252, %v1850
        %v2837 = vsel %vm1352, %v2256, %v1854
        %v2838 = vsel %vm1352, %v2260, %v1858
        %v2839 = vsel %vm1352, %v2264, %v1862
        %v2840 = vsel %vm1352, %v2268, %v1866
        %v2841 = vsel %vm1352, %v2275, %v1873
        %v2842 = vsel %vm1352, %v2279, %v1877
        %v2843 = vsel %vm1352, %v2283, %v1881
        %v2844 = vsel %vm1352, %v2287, %v1885
        %v2845 = vsel %vm1352, %v2291, %v1889
        %v2846 = vsel %vm1352, %v2295, %v1893
        %v2847 = vsel %vm1352, %v2299, %v1897
        %v2848 = vsel %vm1352, %v2303, %v1901
        %v2849 = vsel %vm1352, %v2307, %v1905
        %v2850 = vsel %vm1352, %v2311, %v1909
        %v2851 = vsel %vm1352, %v2315, %v1913
        %v2852 = vsel %vm1352, %v2319, %v1917
        %v2853 = vsel %vm1352, %v2323, %v1921
        %v2854 = vsel %vm1352, %v2327, %v1925
        %v2855 = vsel %vm1352, %v2331, %v1929
        %v2856 = vsel %vm1352, %v2335, %v1933
        %v2857 = vsel %vm1352, %v2342, %v2700
        %v2858 = vsel %vm1352, %v2346, %v2704
        %v2859 = vsel %vm1352, %v2350, %v2708
        %v2860 = vsel %vm1352, %v2354, %v2712
        %v2861 = vsel %vm1352, %v2358, %v2716
        %v2862 = vsel %vm1352, %v2362, %v2720
        %v2863 = vsel %vm1352, %v2366, %v2724
        %v2864 = vsel %vm1352, %v2370, %v2728
        %v2865 = vsel %vm1352, %v2374, %v2732
        %v2866 = vsel %vm1352, %v2378, %v2736
        %v2867 = vsel %vm1352, %v2382, %v2740
        %v2868 = vsel %vm1352, %v2386, %v2744
        %v2869 = vsel %vm1352, %v2390, %v2748
        %v2870 = vsel %vm1352, %v2394, %v2752
        %v2871 = vsel %vm1352, %v2398, %v2756
        %v2872 = vsel %vm1352, %v2402, %v2760
        %v2873 = vld [vmem:[%s1] sm:$0x7]
        %v2874 = vld [vmem:[%s2] sm:$0x1]
        %v2875 = vlaneseq
        %v2876 = vshrl.u32 %v2875, 7
        %v2877 = vsub.s32 0, %v2876
        %v2878 = vrot.slane %v2873, %v2877
        %v2879 = vmul.f32 %v1353, %v2878
        %v2880 = vmul.f32 %v1354, %v2878
        %v2881 = vmul.f32 %v1355, %v2878
        %v2882 = vmul.f32 %v1356, %v2878
        %v2883 = vmul.f32 %v1357, %v2878
        %v2884 = vmul.f32 %v1358, %v2878
        %v2885 = vmul.f32 %v1359, %v2878
        %v2886 = vmul.f32 %v1360, %v2878
        %v2887 = vmul.f32 %v1361, %v2878
        %v2888 = vmul.f32 %v1362, %v2878
        %v2889 = vmul.f32 %v1363, %v2878
        %v2890 = vmul.f32 %v1364, %v2878
        %v2891 = vmul.f32 %v1365, %v2878
        %v2892 = vmul.f32 %v1366, %v2878
        %v2893 = vmul.f32 %v1367, %v2878
        %v2894 = vmul.f32 %v1368, %v2878
        %v2895 = vmul.f32 %v1369, %v2878
        %v2896 = vmul.f32 %v1370, %v2878
        %v2897 = vmul.f32 %v1371, %v2878
        %v2898 = vmul.f32 %v1372, %v2878
        %v2899 = vmul.f32 %v1373, %v2878
        %v2900 = vmul.f32 %v1374, %v2878
        %v2901 = vmul.f32 %v1375, %v2878
        %v2902 = vmul.f32 %v1376, %v2878
        %v2903 = vmul.f32 %v1377, %v2878
        %v2904 = vmul.f32 %v1378, %v2878
        %v2905 = vmul.f32 %v1379, %v2878
        %v2906 = vmul.f32 %v1380, %v2878
        %v2907 = vmul.f32 %v1381, %v2878
        %v2908 = vmul.f32 %v1382, %v2878
        %v2909 = vmul.f32 %v1383, %v2878
        %v2910 = vmul.f32 %v1384, %v2878
        %v2911 = vmul.f32 %v1385, %v2878
        %v2912 = vmul.f32 %v1386, %v2878
        %v2913 = vmul.f32 %v1387, %v2878
        %v2914 = vmul.f32 %v1388, %v2878
        %v2915 = vmul.f32 %v1389, %v2878
        %v2916 = vmul.f32 %v1390, %v2878
        %v2917 = vmul.f32 %v1391, %v2878
        %v2918 = vmul.f32 %v1392, %v2878
        %v2919 = vmul.f32 %v1393, %v2878
        %v2920 = vmul.f32 %v1394, %v2878
        %v2921 = vmul.f32 %v1395, %v2878
        %v2922 = vmul.f32 %v1396, %v2878
        %v2923 = vmul.f32 %v1397, %v2878
        %v2924 = vmul.f32 %v1398, %v2878
        %v2925 = vmul.f32 %v1399, %v2878
        %v2926 = vmul.f32 %v1400, %v2878
        %v2927 = vmul.f32 %v1401, %v2878
        %v2928 = vmul.f32 %v1402, %v2878
        %v2929 = vmul.f32 %v1403, %v2878
        %v2930 = vmul.f32 %v1404, %v2878
        %v2931 = vmul.f32 %v1405, %v2878
        %v2932 = vmul.f32 %v1406, %v2878
        %v2933 = vmul.f32 %v1407, %v2878
        %v2934 = vmul.f32 %v1408, %v2878
        %v2935 = vmul.f32 %v1409, %v2878
        %v2936 = vmul.f32 %v1410, %v2878
        %v2937 = vmul.f32 %v1411, %v2878
        %v2938 = vmul.f32 %v1412, %v2878
        %v2939 = vmul.f32 %v1413, %v2878
        %v2940 = vmul.f32 %v1414, %v2878
        %v2941 = vmul.f32 %v1415, %v2878
        %v2942 = vmul.f32 %v1416, %v2878
        %v2943 = vmul.f32 %v1417, %v2878
        %v2944 = vmul.f32 %v1418, %v2878
        %v2945 = vmul.f32 %v1419, %v2878
        %v2946 = vmul.f32 %v1420, %v2878
        %v2947 = vmul.f32 %v1421, %v2878
        %v2948 = vmul.f32 %v1422, %v2878
        %v2949 = vmul.f32 %v1423, %v2878
        %v2950 = vmul.f32 %v1424, %v2878
        %v2951 = vmul.f32 %v1425, %v2878
        %v2952 = vmul.f32 %v1426, %v2878
        %v2953 = vmul.f32 %v1427, %v2878
        %v2954 = vmul.f32 %v1428, %v2878
        %v2955 = vmul.f32 %v1429, %v2878
        %v2956 = vmul.f32 %v1430, %v2878
        %v2957 = vmul.f32 %v1431, %v2878
        %v2958 = vmul.f32 %v1432, %v2878
        %v2959 = vmul.f32 %v1433, %v2878
        %v2960 = vmul.f32 %v1434, %v2878
        %v2961 = vmul.f32 %v1435, %v2878
        %v2962 = vmul.f32 %v1436, %v2878
        %v2963 = vmul.f32 %v1437, %v2878
        %v2964 = vmul.f32 %v1438, %v2878
        %v2965 = vmul.f32 %v1439, %v2878
        %v2966 = vmul.f32 %v1440, %v2878
        %v2967 = vmul.f32 %v1441, %v2878
        %v2968 = vmul.f32 %v1442, %v2878
        %v2969 = vmul.f32 %v1443, %v2878
        %v2970 = vmul.f32 %v1444, %v2878
        %v2971 = vmul.f32 %v1445, %v2878
        %v2972 = vmul.f32 %v1446, %v2878
        %v2973 = vmul.f32 %v1447, %v2878
        %v2974 = vmul.f32 %v1448, %v2878
        %v2975 = vmul.f32 %v1449, %v2878
        %v2976 = vmul.f32 %v1450, %v2878
        %v2977 = vmul.f32 %v1451, %v2878
        %v2978 = vmul.f32 %v1452, %v2878
        %v2979 = vmul.f32 %v1453, %v2878
        %v2980 = vmul.f32 %v1454, %v2878
        %v2981 = vmul.f32 %v1455, %v2878
        %v2982 = vmul.f32 %v1456, %v2878
        %v2983 = vmul.f32 %v1457, %v2878
        %v2984 = vmul.f32 %v1458, %v2878
        %v2985 = vmul.f32 %v1459, %v2878
        %v2986 = vmul.f32 %v1460, %v2878
        %v2987 = vmul.f32 %v1461, %v2878
        %v2988 = vmul.f32 %v1462, %v2878
        %v2989 = vmul.f32 %v1463, %v2878
        %v2990 = vmul.f32 %v1464, %v2878
        %v2991 = vlaneseq
        %v2992 = vshrl.u32 %v2991, 7
        %v2993 = vsub.s32 1, %v2992
        %v2994 = vrot.slane %v2873, %v2993
        %v2995 = vmul.f32 %v2403, %v2994
        %v2996 = vmul.f32 %v2404, %v2994
        %v2997 = vmul.f32 %v2405, %v2994
        %v2998 = vmul.f32 %v2406, %v2994
        %v2999 = vmul.f32 %v2407, %v2994
        %v3000 = vmul.f32 %v2408, %v2994
        %v3001 = vmul.f32 %v2409, %v2994
        %v3002 = vmul.f32 %v2410, %v2994
        %v3003 = vmul.f32 %v2411, %v2994
        %v3004 = vmul.f32 %v2412, %v2994
        %v3005 = vmul.f32 %v2413, %v2994
        %v3006 = vmul.f32 %v2414, %v2994
        %v3007 = vmul.f32 %v2415, %v2994
        %v3008 = vmul.f32 %v2416, %v2994
        %v3009 = vmul.f32 %v2417, %v2994
        %v3010 = vmul.f32 %v2418, %v2994
        %v3011 = vmul.f32 %v2419, %v2994
        %v3012 = vmul.f32 %v2420, %v2994
        %v3013 = vmul.f32 %v2421, %v2994
        %v3014 = vmul.f32 %v2422, %v2994
        %v3015 = vmul.f32 %v2423, %v2994
        %v3016 = vmul.f32 %v2424, %v2994
        %v3017 = vmul.f32 %v2425, %v2994
        %v3018 = vmul.f32 %v2426, %v2994
        %v3019 = vmul.f32 %v2427, %v2994
        %v3020 = vmul.f32 %v2428, %v2994
        %v3021 = vmul.f32 %v2429, %v2994
        %v3022 = vmul.f32 %v2430, %v2994
        %v3023 = vmul.f32 %v2431, %v2994
        %v3024 = vmul.f32 %v2432, %v2994
        %v3025 = vmul.f32 %v2433, %v2994
        %v3026 = vmul.f32 %v2434, %v2994
        %v3027 = vmul.f32 %v2435, %v2994
        %v3028 = vmul.f32 %v2436, %v2994
        %v3029 = vmul.f32 %v2437, %v2994
        %v3030 = vmul.f32 %v2438, %v2994
        %v3031 = vmul.f32 %v2439, %v2994
        %v3032 = vmul.f32 %v2440, %v2994
        %v3033 = vmul.f32 %v2441, %v2994
        %v3034 = vmul.f32 %v2442, %v2994
        %v3035 = vmul.f32 %v2443, %v2994
        %v3036 = vmul.f32 %v2444, %v2994
        %v3037 = vmul.f32 %v2445, %v2994
        %v3038 = vmul.f32 %v2446, %v2994
        %v3039 = vmul.f32 %v2447, %v2994
        %v3040 = vmul.f32 %v2448, %v2994
        %v3041 = vmul.f32 %v2449, %v2994
        %v3042 = vmul.f32 %v2450, %v2994
        %v3043 = vmul.f32 %v2451, %v2994
        %v3044 = vmul.f32 %v2452, %v2994
        %v3045 = vmul.f32 %v2453, %v2994
        %v3046 = vmul.f32 %v2454, %v2994
        %v3047 = vmul.f32 %v2455, %v2994
        %v3048 = vmul.f32 %v2456, %v2994
        %v3049 = vmul.f32 %v2457, %v2994
        %v3050 = vmul.f32 %v2458, %v2994
        %v3051 = vmul.f32 %v2459, %v2994
        %v3052 = vmul.f32 %v2460, %v2994
        %v3053 = vmul.f32 %v2461, %v2994
        %v3054 = vmul.f32 %v2462, %v2994
        %v3055 = vmul.f32 %v2463, %v2994
        %v3056 = vmul.f32 %v2464, %v2994
        %v3057 = vmul.f32 %v2465, %v2994
        %v3058 = vmul.f32 %v2466, %v2994
        %v3059 = vmul.f32 %v2467, %v2994
        %v3060 = vmul.f32 %v2468, %v2994
        %v3061 = vmul.f32 %v2469, %v2994
        %v3062 = vmul.f32 %v2470, %v2994
        %v3063 = vmul.f32 %v2471, %v2994
        %v3064 = vmul.f32 %v2472, %v2994
        %v3065 = vmul.f32 %v2473, %v2994
        %v3066 = vmul.f32 %v2474, %v2994
        %v3067 = vmul.f32 %v2475, %v2994
        %v3068 = vmul.f32 %v2476, %v2994
        %v3069 = vmul.f32 %v2477, %v2994
        %v3070 = vmul.f32 %v2478, %v2994
        %v3071 = vmul.f32 %v2479, %v2994
        %v3072 = vmul.f32 %v2480, %v2994
        %v3073 = vmul.f32 %v2481, %v2994
        %v3074 = vmul.f32 %v2482, %v2994
        %v3075 = vmul.f32 %v2483, %v2994
        %v3076 = vmul.f32 %v2484, %v2994
        %v3077 = vmul.f32 %v2485, %v2994
        %v3078 = vmul.f32 %v2486, %v2994
        %v3079 = vmul.f32 %v2487, %v2994
        %v3080 = vmul.f32 %v2488, %v2994
        %v3081 = vmul.f32 %v2489, %v2994
        %v3082 = vmul.f32 %v2490, %v2994
        %v3083 = vmul.f32 %v2491, %v2994
        %v3084 = vmul.f32 %v2492, %v2994
        %v3085 = vmul.f32 %v2493, %v2994
        %v3086 = vmul.f32 %v2494, %v2994
        %v3087 = vmul.f32 %v2495, %v2994
        %v3088 = vmul.f32 %v2496, %v2994
        %v3089 = vmul.f32 %v2497, %v2994
        %v3090 = vmul.f32 %v2498, %v2994
        %v3091 = vmul.f32 %v2499, %v2994
        %v3092 = vmul.f32 %v2500, %v2994
        %v3093 = vmul.f32 %v2501, %v2994
        %v3094 = vmul.f32 %v2502, %v2994
        %v3095 = vmul.f32 %v2503, %v2994
        %v3096 = vmul.f32 %v2504, %v2994
        %v3097 = vmul.f32 %v2505, %v2994
        %v3098 = vmul.f32 %v2506, %v2994
        %v3099 = vmul.f32 %v2507, %v2994
        %v3100 = vmul.f32 %v2508, %v2994
        %v3101 = vmul.f32 %v2509, %v2994
        %v3102 = vmul.f32 %v2510, %v2994
        %v3103 = vmul.f32 %v2511, %v2994
        %v3104 = vmul.f32 %v2512, %v2994
        %v3105 = vmul.f32 %v2513, %v2994
        %v3106 = vmul.f32 %v2514, %v2994
        %v3107 = vadd.f32 %v2879, %v2995
        %v3108 = vadd.f32 %v2880, %v2996
        %v3109 = vadd.f32 %v2881, %v2997
        %v3110 = vadd.f32 %v2882, %v2998
        %v3111 = vadd.f32 %v2883, %v2999
        %v3112 = vadd.f32 %v2884, %v3000
        %v3113 = vadd.f32 %v2885, %v3001
        %v3114 = vadd.f32 %v2886, %v3002
        %v3115 = vadd.f32 %v2887, %v3003
        %v3116 = vadd.f32 %v2888, %v3004
        %v3117 = vadd.f32 %v2889, %v3005
        %v3118 = vadd.f32 %v2890, %v3006
        %v3119 = vadd.f32 %v2891, %v3007
        %v3120 = vadd.f32 %v2892, %v3008
        %v3121 = vadd.f32 %v2893, %v3009
        %v3122 = vadd.f32 %v2894, %v3010
        %v3123 = vadd.f32 %v2895, %v3011
        %v3124 = vadd.f32 %v2896, %v3012
        %v3125 = vadd.f32 %v2897, %v3013
        %v3126 = vadd.f32 %v2898, %v3014
        %v3127 = vadd.f32 %v2899, %v3015
        %v3128 = vadd.f32 %v2900, %v3016
        %v3129 = vadd.f32 %v2901, %v3017
        %v3130 = vadd.f32 %v2902, %v3018
        %v3131 = vadd.f32 %v2903, %v3019
        %v3132 = vadd.f32 %v2904, %v3020
        %v3133 = vadd.f32 %v2905, %v3021
        %v3134 = vadd.f32 %v2906, %v3022
        %v3135 = vadd.f32 %v2907, %v3023
        %v3136 = vadd.f32 %v2908, %v3024
        %v3137 = vadd.f32 %v2909, %v3025
        %v3138 = vadd.f32 %v2910, %v3026
        %v3139 = vadd.f32 %v2911, %v3027
        %v3140 = vadd.f32 %v2912, %v3028
        %v3141 = vadd.f32 %v2913, %v3029
        %v3142 = vadd.f32 %v2914, %v3030
        %v3143 = vadd.f32 %v2915, %v3031
        %v3144 = vadd.f32 %v2916, %v3032
        %v3145 = vadd.f32 %v2917, %v3033
        %v3146 = vadd.f32 %v2918, %v3034
        %v3147 = vadd.f32 %v2919, %v3035
        %v3148 = vadd.f32 %v2920, %v3036
        %v3149 = vadd.f32 %v2921, %v3037
        %v3150 = vadd.f32 %v2922, %v3038
        %v3151 = vadd.f32 %v2923, %v3039
        %v3152 = vadd.f32 %v2924, %v3040
        %v3153 = vadd.f32 %v2925, %v3041
        %v3154 = vadd.f32 %v2926, %v3042
        %v3155 = vadd.f32 %v2927, %v3043
        %v3156 = vadd.f32 %v2928, %v3044
        %v3157 = vadd.f32 %v2929, %v3045
        %v3158 = vadd.f32 %v2930, %v3046
        %v3159 = vadd.f32 %v2931, %v3047
        %v3160 = vadd.f32 %v2932, %v3048
        %v3161 = vadd.f32 %v2933, %v3049
        %v3162 = vadd.f32 %v2934, %v3050
        %v3163 = vadd.f32 %v2935, %v3051
        %v3164 = vadd.f32 %v2936, %v3052
        %v3165 = vadd.f32 %v2937, %v3053
        %v3166 = vadd.f32 %v2938, %v3054
        %v3167 = vadd.f32 %v2939, %v3055
        %v3168 = vadd.f32 %v2940, %v3056
        %v3169 = vadd.f32 %v2941, %v3057
        %v3170 = vadd.f32 %v2942, %v3058
        %v3171 = vadd.f32 %v2943, %v3059
        %v3172 = vadd.f32 %v2944, %v3060
        %v3173 = vadd.f32 %v2945, %v3061
        %v3174 = vadd.f32 %v2946, %v3062
        %v3175 = vadd.f32 %v2947, %v3063
        %v3176 = vadd.f32 %v2948, %v3064
        %v3177 = vadd.f32 %v2949, %v3065
        %v3178 = vadd.f32 %v2950, %v3066
        %v3179 = vadd.f32 %v2951, %v3067
        %v3180 = vadd.f32 %v2952, %v3068
        %v3181 = vadd.f32 %v2953, %v3069
        %v3182 = vadd.f32 %v2954, %v3070
        %v3183 = vadd.f32 %v2955, %v3071
        %v3184 = vadd.f32 %v2956, %v3072
        %v3185 = vadd.f32 %v2957, %v3073
        %v3186 = vadd.f32 %v2958, %v3074
        %v3187 = vadd.f32 %v2959, %v3075
        %v3188 = vadd.f32 %v2960, %v3076
        %v3189 = vadd.f32 %v2961, %v3077
        %v3190 = vadd.f32 %v2962, %v3078
        %v3191 = vadd.f32 %v2963, %v3079
        %v3192 = vadd.f32 %v2964, %v3080
        %v3193 = vadd.f32 %v2965, %v3081
        %v3194 = vadd.f32 %v2966, %v3082
        %v3195 = vadd.f32 %v2967, %v3083
        %v3196 = vadd.f32 %v2968, %v3084
        %v3197 = vadd.f32 %v2969, %v3085
        %v3198 = vadd.f32 %v2970, %v3086
        %v3199 = vadd.f32 %v2971, %v3087
        %v3200 = vadd.f32 %v2972, %v3088
        %v3201 = vadd.f32 %v2973, %v3089
        %v3202 = vadd.f32 %v2974, %v3090
        %v3203 = vadd.f32 %v2975, %v3091
        %v3204 = vadd.f32 %v2976, %v3092
        %v3205 = vadd.f32 %v2977, %v3093
        %v3206 = vadd.f32 %v2978, %v3094
        %v3207 = vadd.f32 %v2979, %v3095
        %v3208 = vadd.f32 %v2980, %v3096
        %v3209 = vadd.f32 %v2981, %v3097
        %v3210 = vadd.f32 %v2982, %v3098
        %v3211 = vadd.f32 %v2983, %v3099
        %v3212 = vadd.f32 %v2984, %v3100
        %v3213 = vadd.f32 %v2985, %v3101
        %v3214 = vadd.f32 %v2986, %v3102
        %v3215 = vadd.f32 %v2987, %v3103
        %v3216 = vadd.f32 %v2988, %v3104
        %v3217 = vadd.f32 %v2989, %v3105
        %v3218 = vadd.f32 %v2990, %v3106
        %v3219 = vlaneseq
        %v3220 = vshrl.u32 %v3219, 7
        %v3221 = vsub.s32 2, %v3220
        %v3222 = vrot.slane %v2873, %v3221
        %v3223 = vmul.f32 %v2582, %v3222
        %v3224 = vmul.f32 %v2583, %v3222
        %v3225 = vmul.f32 %v2584, %v3222
        %v3226 = vmul.f32 %v2585, %v3222
        %v3227 = vmul.f32 %v2586, %v3222
        %v3228 = vmul.f32 %v2587, %v3222
        %v3229 = vmul.f32 %v2588, %v3222
        %v3230 = vmul.f32 %v2589, %v3222
        %v3231 = vmul.f32 %v2590, %v3222
        %v3232 = vmul.f32 %v2591, %v3222
        %v3233 = vmul.f32 %v2592, %v3222
        %v3234 = vmul.f32 %v2593, %v3222
        %v3235 = vmul.f32 %v2594, %v3222
        %v3236 = vmul.f32 %v2595, %v3222
        %v3237 = vmul.f32 %v2596, %v3222
        %v3238 = vmul.f32 %v2597, %v3222
        %v3239 = vmul.f32 %v2598, %v3222
        %v3240 = vmul.f32 %v2599, %v3222
        %v3241 = vmul.f32 %v2600, %v3222
        %v3242 = vmul.f32 %v2601, %v3222
        %v3243 = vmul.f32 %v2602, %v3222
        %v3244 = vmul.f32 %v2603, %v3222
        %v3245 = vmul.f32 %v2604, %v3222
        %v3246 = vmul.f32 %v2605, %v3222
        %v3247 = vmul.f32 %v2606, %v3222
        %v3248 = vmul.f32 %v2607, %v3222
        %v3249 = vmul.f32 %v2608, %v3222
        %v3250 = vmul.f32 %v2609, %v3222
        %v3251 = vmul.f32 %v2610, %v3222
        %v3252 = vmul.f32 %v2611, %v3222
        %v3253 = vmul.f32 %v2612, %v3222
        %v3254 = vmul.f32 %v2613, %v3222
        %v3255 = vmul.f32 %v2614, %v3222
        %v3256 = vmul.f32 %v2615, %v3222
        %v3257 = vmul.f32 %v2616, %v3222
        %v3258 = vmul.f32 %v2617, %v3222
        %v3259 = vmul.f32 %v2618, %v3222
        %v3260 = vmul.f32 %v2619, %v3222
        %v3261 = vmul.f32 %v2620, %v3222
        %v3262 = vmul.f32 %v2621, %v3222
        %v3263 = vmul.f32 %v2622, %v3222
        %v3264 = vmul.f32 %v2623, %v3222
        %v3265 = vmul.f32 %v2624, %v3222
        %v3266 = vmul.f32 %v2625, %v3222
        %v3267 = vmul.f32 %v2626, %v3222
        %v3268 = vmul.f32 %v2627, %v3222
        %v3269 = vmul.f32 %v2628, %v3222
        %v3270 = vmul.f32 %v2629, %v3222
        %v3271 = vmul.f32 %v2630, %v3222
        %v3272 = vmul.f32 %v2631, %v3222
        %v3273 = vmul.f32 %v2632, %v3222
        %v3274 = vmul.f32 %v2633, %v3222
        %v3275 = vmul.f32 %v2634, %v3222
        %v3276 = vmul.f32 %v2635, %v3222
        %v3277 = vmul.f32 %v2636, %v3222
        %v3278 = vmul.f32 %v2637, %v3222
        %v3279 = vmul.f32 %v2638, %v3222
        %v3280 = vmul.f32 %v2639, %v3222
        %v3281 = vmul.f32 %v2640, %v3222
        %v3282 = vmul.f32 %v2641, %v3222
        %v3283 = vmul.f32 %v2642, %v3222
        %v3284 = vmul.f32 %v2643, %v3222
        %v3285 = vmul.f32 %v2644, %v3222
        %v3286 = vmul.f32 %v2645, %v3222
        %v3287 = vmul.f32 %v2646, %v3222
        %v3288 = vmul.f32 %v2647, %v3222
        %v3289 = vmul.f32 %v2648, %v3222
        %v3290 = vmul.f32 %v2649, %v3222
        %v3291 = vmul.f32 %v2650, %v3222
        %v3292 = vmul.f32 %v2651, %v3222
        %v3293 = vmul.f32 %v2652, %v3222
        %v3294 = vmul.f32 %v2653, %v3222
        %v3295 = vmul.f32 %v2654, %v3222
        %v3296 = vmul.f32 %v2655, %v3222
        %v3297 = vmul.f32 %v2656, %v3222
        %v3298 = vmul.f32 %v2657, %v3222
        %v3299 = vmul.f32 %v2658, %v3222
        %v3300 = vmul.f32 %v2659, %v3222
        %v3301 = vmul.f32 %v2660, %v3222
        %v3302 = vmul.f32 %v2661, %v3222
        %v3303 = vmul.f32 %v2662, %v3222
        %v3304 = vmul.f32 %v2663, %v3222
        %v3305 = vmul.f32 %v2664, %v3222
        %v3306 = vmul.f32 %v2665, %v3222
        %v3307 = vmul.f32 %v2666, %v3222
        %v3308 = vmul.f32 %v2667, %v3222
        %v3309 = vmul.f32 %v2668, %v3222
        %v3310 = vmul.f32 %v2669, %v3222
        %v3311 = vmul.f32 %v2670, %v3222
        %v3312 = vmul.f32 %v2671, %v3222
        %v3313 = vmul.f32 %v2672, %v3222
        %v3314 = vmul.f32 %v2673, %v3222
        %v3315 = vmul.f32 %v2674, %v3222
        %v3316 = vmul.f32 %v2675, %v3222
        %v3317 = vmul.f32 %v2676, %v3222
        %v3318 = vmul.f32 %v2677, %v3222
        %v3319 = vmul.f32 %v2678, %v3222
        %v3320 = vmul.f32 %v2679, %v3222
        %v3321 = vmul.f32 %v2680, %v3222
        %v3322 = vmul.f32 %v2681, %v3222
        %v3323 = vmul.f32 %v2682, %v3222
        %v3324 = vmul.f32 %v2683, %v3222
        %v3325 = vmul.f32 %v2684, %v3222
        %v3326 = vmul.f32 %v2685, %v3222
        %v3327 = vmul.f32 %v2686, %v3222
        %v3328 = vmul.f32 %v2687, %v3222
        %v3329 = vmul.f32 %v2688, %v3222
        %v3330 = vmul.f32 %v2689, %v3222
        %v3331 = vmul.f32 %v2690, %v3222
        %v3332 = vmul.f32 %v2691, %v3222
        %v3333 = vmul.f32 %v2692, %v3222
        %v3334 = vmul.f32 %v2693, %v3222
        %v3335 = vadd.f32 %v3107, %v3223
        %v3336 = vadd.f32 %v3108, %v3224
        %v3337 = vadd.f32 %v3109, %v3225
        %v3338 = vadd.f32 %v3110, %v3226
        %v3339 = vadd.f32 %v3111, %v3227
        %v3340 = vadd.f32 %v3112, %v3228
        %v3341 = vadd.f32 %v3113, %v3229
        %v3342 = vadd.f32 %v3114, %v3230
        %v3343 = vadd.f32 %v3115, %v3231
        %v3344 = vadd.f32 %v3116, %v3232
        %v3345 = vadd.f32 %v3117, %v3233
        %v3346 = vadd.f32 %v3118, %v3234
        %v3347 = vadd.f32 %v3119, %v3235
        %v3348 = vadd.f32 %v3120, %v3236
        %v3349 = vadd.f32 %v3121, %v3237
        %v3350 = vadd.f32 %v3122, %v3238
        %v3351 = vadd.f32 %v3123, %v3239
        %v3352 = vadd.f32 %v3124, %v3240
        %v3353 = vadd.f32 %v3125, %v3241
        %v3354 = vadd.f32 %v3126, %v3242
        %v3355 = vadd.f32 %v3127, %v3243
        %v3356 = vadd.f32 %v3128, %v3244
        %v3357 = vadd.f32 %v3129, %v3245
        %v3358 = vadd.f32 %v3130, %v3246
        %v3359 = vadd.f32 %v3131, %v3247
        %v3360 = vadd.f32 %v3132, %v3248
        %v3361 = vadd.f32 %v3133, %v3249
        %v3362 = vadd.f32 %v3134, %v3250
        %v3363 = vadd.f32 %v3135, %v3251
        %v3364 = vadd.f32 %v3136, %v3252
        %v3365 = vadd.f32 %v3137, %v3253
        %v3366 = vadd.f32 %v3138, %v3254
        %v3367 = vadd.f32 %v3139, %v3255
        %v3368 = vadd.f32 %v3140, %v3256
        %v3369 = vadd.f32 %v3141, %v3257
        %v3370 = vadd.f32 %v3142, %v3258
        %v3371 = vadd.f32 %v3143, %v3259
        %v3372 = vadd.f32 %v3144, %v3260
        %v3373 = vadd.f32 %v3145, %v3261
        %v3374 = vadd.f32 %v3146, %v3262
        %v3375 = vadd.f32 %v3147, %v3263
        %v3376 = vadd.f32 %v3148, %v3264
        %v3377 = vadd.f32 %v3149, %v3265
        %v3378 = vadd.f32 %v3150, %v3266
        %v3379 = vadd.f32 %v3151, %v3267
        %v3380 = vadd.f32 %v3152, %v3268
        %v3381 = vadd.f32 %v3153, %v3269
        %v3382 = vadd.f32 %v3154, %v3270
        %v3383 = vadd.f32 %v3155, %v3271
        %v3384 = vadd.f32 %v3156, %v3272
        %v3385 = vadd.f32 %v3157, %v3273
        %v3386 = vadd.f32 %v3158, %v3274
        %v3387 = vadd.f32 %v3159, %v3275
        %v3388 = vadd.f32 %v3160, %v3276
        %v3389 = vadd.f32 %v3161, %v3277
        %v3390 = vadd.f32 %v3162, %v3278
        %v3391 = vadd.f32 %v3163, %v3279
        %v3392 = vadd.f32 %v3164, %v3280
        %v3393 = vadd.f32 %v3165, %v3281
        %v3394 = vadd.f32 %v3166, %v3282
        %v3395 = vadd.f32 %v3167, %v3283
        %v3396 = vadd.f32 %v3168, %v3284
        %v3397 = vadd.f32 %v3169, %v3285
        %v3398 = vadd.f32 %v3170, %v3286
        %v3399 = vadd.f32 %v3171, %v3287
        %v3400 = vadd.f32 %v3172, %v3288
        %v3401 = vadd.f32 %v3173, %v3289
        %v3402 = vadd.f32 %v3174, %v3290
        %v3403 = vadd.f32 %v3175, %v3291
        %v3404 = vadd.f32 %v3176, %v3292
        %v3405 = vadd.f32 %v3177, %v3293
        %v3406 = vadd.f32 %v3178, %v3294
        %v3407 = vadd.f32 %v3179, %v3295
        %v3408 = vadd.f32 %v3180, %v3296
        %v3409 = vadd.f32 %v3181, %v3297
        %v3410 = vadd.f32 %v3182, %v3298
        %v3411 = vadd.f32 %v3183, %v3299
        %v3412 = vadd.f32 %v3184, %v3300
        %v3413 = vadd.f32 %v3185, %v3301
        %v3414 = vadd.f32 %v3186, %v3302
        %v3415 = vadd.f32 %v3187, %v3303
        %v3416 = vadd.f32 %v3188, %v3304
        %v3417 = vadd.f32 %v3189, %v3305
        %v3418 = vadd.f32 %v3190, %v3306
        %v3419 = vadd.f32 %v3191, %v3307
        %v3420 = vadd.f32 %v3192, %v3308
        %v3421 = vadd.f32 %v3193, %v3309
        %v3422 = vadd.f32 %v3194, %v3310
        %v3423 = vadd.f32 %v3195, %v3311
        %v3424 = vadd.f32 %v3196, %v3312
        %v3425 = vadd.f32 %v3197, %v3313
        %v3426 = vadd.f32 %v3198, %v3314
        %v3427 = vadd.f32 %v3199, %v3315
        %v3428 = vadd.f32 %v3200, %v3316
        %v3429 = vadd.f32 %v3201, %v3317
        %v3430 = vadd.f32 %v3202, %v3318
        %v3431 = vadd.f32 %v3203, %v3319
        %v3432 = vadd.f32 %v3204, %v3320
        %v3433 = vadd.f32 %v3205, %v3321
        %v3434 = vadd.f32 %v3206, %v3322
        %v3435 = vadd.f32 %v3207, %v3323
        %v3436 = vadd.f32 %v3208, %v3324
        %v3437 = vadd.f32 %v3209, %v3325
        %v3438 = vadd.f32 %v3210, %v3326
        %v3439 = vadd.f32 %v3211, %v3327
        %v3440 = vadd.f32 %v3212, %v3328
        %v3441 = vadd.f32 %v3213, %v3329
        %v3442 = vadd.f32 %v3214, %v3330
        %v3443 = vadd.f32 %v3215, %v3331
        %v3444 = vadd.f32 %v3216, %v3332
        %v3445 = vadd.f32 %v3217, %v3333
        %v3446 = vadd.f32 %v3218, %v3334
        %v3448 = vlaneseq
        %v3449 = vshrl.u32 %v3448, 7
        %v3450 = vsub.s32 0, %v3449
        %v3451 = vrot.slane %v2874, %v3450
        %v3453 = vadd.f32 %v3335, %v3451
        %v3454 = vadd.f32 %v3336, %v3451
        %v3455 = vadd.f32 %v3337, %v3451
        %v3456 = vadd.f32 %v3338, %v3451
        %v3457 = vadd.f32 %v3339, %v3451
        %v3458 = vadd.f32 %v3340, %v3451
        %v3459 = vadd.f32 %v3341, %v3451
        %v3460 = vadd.f32 %v3342, %v3451
        %v3461 = vadd.f32 %v3343, %v3451
        %v3462 = vadd.f32 %v3344, %v3451
        %v3463 = vadd.f32 %v3345, %v3451
        %v3464 = vadd.f32 %v3346, %v3451
        %v3465 = vadd.f32 %v3347, %v3451
        %v3466 = vadd.f32 %v3348, %v3451
        %v3467 = vadd.f32 %v3349, %v3451
        %v3468 = vadd.f32 %v3350, %v3451
        %v3469 = vadd.f32 %v3351, %v3451
        %v3470 = vadd.f32 %v3352, %v3451
        %v3471 = vadd.f32 %v3353, %v3451
        %v3472 = vadd.f32 %v3354, %v3451
        %v3473 = vadd.f32 %v3355, %v3451
        %v3474 = vadd.f32 %v3356, %v3451
        %v3475 = vadd.f32 %v3357, %v3451
        %v3476 = vadd.f32 %v3358, %v3451
        %v3477 = vadd.f32 %v3359, %v3451
        %v3478 = vadd.f32 %v3360, %v3451
        %v3479 = vadd.f32 %v3361, %v3451
        %v3480 = vadd.f32 %v3362, %v3451
        %v3481 = vadd.f32 %v3363, %v3451
        %v3482 = vadd.f32 %v3364, %v3451
        %v3483 = vadd.f32 %v3365, %v3451
        %v3484 = vadd.f32 %v3366, %v3451
        %v3485 = vadd.f32 %v3367, %v3451
        %v3486 = vadd.f32 %v3368, %v3451
        %v3487 = vadd.f32 %v3369, %v3451
        %v3488 = vadd.f32 %v3370, %v3451
        %v3489 = vadd.f32 %v3371, %v3451
        %v3490 = vadd.f32 %v3372, %v3451
        %v3491 = vadd.f32 %v3373, %v3451
        %v3492 = vadd.f32 %v3374, %v3451
        %v3493 = vadd.f32 %v3375, %v3451
        %v3494 = vadd.f32 %v3376, %v3451
        %v3495 = vadd.f32 %v3377, %v3451
        %v3496 = vadd.f32 %v3378, %v3451
        %v3497 = vadd.f32 %v3379, %v3451
        %v3498 = vadd.f32 %v3380, %v3451
        %v3499 = vadd.f32 %v3381, %v3451
        %v3500 = vadd.f32 %v3382, %v3451
        %v3501 = vadd.f32 %v3383, %v3451
        %v3502 = vadd.f32 %v3384, %v3451
        %v3503 = vadd.f32 %v3385, %v3451
        %v3504 = vadd.f32 %v3386, %v3451
        %v3505 = vadd.f32 %v3387, %v3451
        %v3506 = vadd.f32 %v3388, %v3451
        %v3507 = vadd.f32 %v3389, %v3451
        %v3508 = vadd.f32 %v3390, %v3451
        %v3509 = vadd.f32 %v3391, %v3451
        %v3510 = vadd.f32 %v3392, %v3451
        %v3511 = vadd.f32 %v3393, %v3451
        %v3512 = vadd.f32 %v3394, %v3451
        %v3513 = vadd.f32 %v3395, %v3451
        %v3514 = vadd.f32 %v3396, %v3451
        %v3515 = vadd.f32 %v3397, %v3451
        %v3516 = vadd.f32 %v3398, %v3451
        %v3517 = vadd.f32 %v3399, %v3451
        %v3518 = vadd.f32 %v3400, %v3451
        %v3519 = vadd.f32 %v3401, %v3451
        %v3520 = vadd.f32 %v3402, %v3451
        %v3521 = vadd.f32 %v3403, %v3451
        %v3522 = vadd.f32 %v3404, %v3451
        %v3523 = vadd.f32 %v3405, %v3451
        %v3524 = vadd.f32 %v3406, %v3451
        %v3525 = vadd.f32 %v3407, %v3451
        %v3526 = vadd.f32 %v3408, %v3451
        %v3527 = vadd.f32 %v3409, %v3451
        %v3528 = vadd.f32 %v3410, %v3451
        %v3529 = vadd.f32 %v3411, %v3451
        %v3530 = vadd.f32 %v3412, %v3451
        %v3531 = vadd.f32 %v3413, %v3451
        %v3532 = vadd.f32 %v3414, %v3451
        %v3533 = vadd.f32 %v3415, %v3451
        %v3534 = vadd.f32 %v3416, %v3451
        %v3535 = vadd.f32 %v3417, %v3451
        %v3536 = vadd.f32 %v3418, %v3451
        %v3537 = vadd.f32 %v3419, %v3451
        %v3538 = vadd.f32 %v3420, %v3451
        %v3539 = vadd.f32 %v3421, %v3451
        %v3540 = vadd.f32 %v3422, %v3451
        %v3541 = vadd.f32 %v3423, %v3451
        %v3542 = vadd.f32 %v3424, %v3451
        %v3543 = vadd.f32 %v3425, %v3451
        %v3544 = vadd.f32 %v3426, %v3451
        %v3545 = vadd.f32 %v3427, %v3451
        %v3546 = vadd.f32 %v3428, %v3451
        %v3547 = vadd.f32 %v3429, %v3451
        %v3548 = vadd.f32 %v3430, %v3451
        %v3549 = vadd.f32 %v3431, %v3451
        %v3550 = vadd.f32 %v3432, %v3451
        %v3551 = vadd.f32 %v3433, %v3451
        %v3552 = vadd.f32 %v3434, %v3451
        %v3553 = vadd.f32 %v3435, %v3451
        %v3554 = vadd.f32 %v3436, %v3451
        %v3555 = vadd.f32 %v3437, %v3451
        %v3556 = vadd.f32 %v3438, %v3451
        %v3557 = vadd.f32 %v3439, %v3451
        %v3558 = vadd.f32 %v3440, %v3451
        %v3559 = vadd.f32 %v3441, %v3451
        %v3560 = vadd.f32 %v3442, %v3451
        %v3561 = vadd.f32 %v3443, %v3451
        %v3562 = vadd.f32 %v3444, %v3451
        %v3563 = vadd.f32 %v3445, %v3451
        %v3564 = vadd.f32 %v3446, %v3451
        %v3565 = vmax.f32 %v3453, 0.0
        %v3566 = vmax.f32 %v3454, 0.0
        %v3567 = vmax.f32 %v3455, 0.0
        %v3568 = vmax.f32 %v3456, 0.0
        %v3569 = vmax.f32 %v3457, 0.0
        %v3570 = vmax.f32 %v3458, 0.0
        %v3571 = vmax.f32 %v3459, 0.0
        %v3572 = vmax.f32 %v3460, 0.0
        %v3573 = vmax.f32 %v3461, 0.0
        %v3574 = vmax.f32 %v3462, 0.0
        %v3575 = vmax.f32 %v3463, 0.0
        %v3576 = vmax.f32 %v3464, 0.0
        %v3577 = vmax.f32 %v3465, 0.0
        %v3578 = vmax.f32 %v3466, 0.0
        %v3579 = vmax.f32 %v3467, 0.0
        %v3580 = vmax.f32 %v3468, 0.0
        %v3581 = vmax.f32 %v3469, 0.0
        %v3582 = vmax.f32 %v3470, 0.0
        %v3583 = vmax.f32 %v3471, 0.0
        %v3584 = vmax.f32 %v3472, 0.0
        %v3585 = vmax.f32 %v3473, 0.0
        %v3586 = vmax.f32 %v3474, 0.0
        %v3587 = vmax.f32 %v3475, 0.0
        %v3588 = vmax.f32 %v3476, 0.0
        %v3589 = vmax.f32 %v3477, 0.0
        %v3590 = vmax.f32 %v3478, 0.0
        %v3591 = vmax.f32 %v3479, 0.0
        %v3592 = vmax.f32 %v3480, 0.0
        %v3593 = vmax.f32 %v3481, 0.0
        %v3594 = vmax.f32 %v3482, 0.0
        %v3595 = vmax.f32 %v3483, 0.0
        %v3596 = vmax.f32 %v3484, 0.0
        %v3597 = vmax.f32 %v3485, 0.0
        %v3598 = vmax.f32 %v3486, 0.0
        %v3599 = vmax.f32 %v3487, 0.0
        %v3600 = vmax.f32 %v3488, 0.0
        %v3601 = vmax.f32 %v3489, 0.0
        %v3602 = vmax.f32 %v3490, 0.0
        %v3603 = vmax.f32 %v3491, 0.0
        %v3604 = vmax.f32 %v3492, 0.0
        %v3605 = vmax.f32 %v3493, 0.0
        %v3606 = vmax.f32 %v3494, 0.0
        %v3607 = vmax.f32 %v3495, 0.0
        %v3608 = vmax.f32 %v3496, 0.0
        %v3609 = vmax.f32 %v3497, 0.0
        %v3610 = vmax.f32 %v3498, 0.0
        %v3611 = vmax.f32 %v3499, 0.0
        %v3612 = vmax.f32 %v3500, 0.0
        %v3613 = vmax.f32 %v3501, 0.0
        %v3614 = vmax.f32 %v3502, 0.0
        %v3615 = vmax.f32 %v3503, 0.0
        %v3616 = vmax.f32 %v3504, 0.0
        %v3617 = vmax.f32 %v3505, 0.0
        %v3618 = vmax.f32 %v3506, 0.0
        %v3619 = vmax.f32 %v3507, 0.0
        %v3620 = vmax.f32 %v3508, 0.0
        %v3621 = vmax.f32 %v3509, 0.0
        %v3622 = vmax.f32 %v3510, 0.0
        %v3623 = vmax.f32 %v3511, 0.0
        %v3624 = vmax.f32 %v3512, 0.0
        %v3625 = vmax.f32 %v3513, 0.0
        %v3626 = vmax.f32 %v3514, 0.0
        %v3627 = vmax.f32 %v3515, 0.0
        %v3628 = vmax.f32 %v3516, 0.0
        %v3629 = vmax.f32 %v3517, 0.0
        %v3630 = vmax.f32 %v3518, 0.0
        %v3631 = vmax.f32 %v3519, 0.0
        %v3632 = vmax.f32 %v3520, 0.0
        %v3633 = vmax.f32 %v3521, 0.0
        %v3634 = vmax.f32 %v3522, 0.0
        %v3635 = vmax.f32 %v3523, 0.0
        %v3636 = vmax.f32 %v3524, 0.0
        %v3637 = vmax.f32 %v3525, 0.0
        %v3638 = vmax.f32 %v3526, 0.0
        %v3639 = vmax.f32 %v3527, 0.0
        %v3640 = vmax.f32 %v3528, 0.0
        %v3641 = vmax.f32 %v3529, 0.0
        %v3642 = vmax.f32 %v3530, 0.0
        %v3643 = vmax.f32 %v3531, 0.0
        %v3644 = vmax.f32 %v3532, 0.0
        %v3645 = vmax.f32 %v3533, 0.0
        %v3646 = vmax.f32 %v3534, 0.0
        %v3647 = vmax.f32 %v3535, 0.0
        %v3648 = vmax.f32 %v3536, 0.0
        %v3649 = vmax.f32 %v3537, 0.0
        %v3650 = vmax.f32 %v3538, 0.0
        %v3651 = vmax.f32 %v3539, 0.0
        %v3652 = vmax.f32 %v3540, 0.0
        %v3653 = vmax.f32 %v3541, 0.0
        %v3654 = vmax.f32 %v3542, 0.0
        %v3655 = vmax.f32 %v3543, 0.0
        %v3656 = vmax.f32 %v3544, 0.0
        %v3657 = vmax.f32 %v3545, 0.0
        %v3658 = vmax.f32 %v3546, 0.0
        %v3659 = vmax.f32 %v3547, 0.0
        %v3660 = vmax.f32 %v3548, 0.0
        %v3661 = vmax.f32 %v3549, 0.0
        %v3662 = vmax.f32 %v3550, 0.0
        %v3663 = vmax.f32 %v3551, 0.0
        %v3664 = vmax.f32 %v3552, 0.0
        %v3665 = vmax.f32 %v3553, 0.0
        %v3666 = vmax.f32 %v3554, 0.0
        %v3667 = vmax.f32 %v3555, 0.0
        %v3668 = vmax.f32 %v3556, 0.0
        %v3669 = vmax.f32 %v3557, 0.0
        %v3670 = vmax.f32 %v3558, 0.0
        %v3671 = vmax.f32 %v3559, 0.0
        %v3672 = vmax.f32 %v3560, 0.0
        %v3673 = vmax.f32 %v3561, 0.0
        %v3674 = vmax.f32 %v3562, 0.0
        %v3675 = vmax.f32 %v3563, 0.0
        %v3676 = vmax.f32 %v3564, 0.0
        %v3677 = vmul.f32 %v2403, %v2878
        %v3678 = vmul.f32 %v2404, %v2878
        %v3679 = vmul.f32 %v2405, %v2878
        %v3680 = vmul.f32 %v2406, %v2878
        %v3681 = vmul.f32 %v2407, %v2878
        %v3682 = vmul.f32 %v2408, %v2878
        %v3683 = vmul.f32 %v2409, %v2878
        %v3684 = vmul.f32 %v2410, %v2878
        %v3685 = vmul.f32 %v2411, %v2878
        %v3686 = vmul.f32 %v2412, %v2878
        %v3687 = vmul.f32 %v2413, %v2878
        %v3688 = vmul.f32 %v2414, %v2878
        %v3689 = vmul.f32 %v2415, %v2878
        %v3690 = vmul.f32 %v2416, %v2878
        %v3691 = vmul.f32 %v2417, %v2878
        %v3692 = vmul.f32 %v2418, %v2878
        %v3693 = vmul.f32 %v2419, %v2878
        %v3694 = vmul.f32 %v2420, %v2878
        %v3695 = vmul.f32 %v2421, %v2878
        %v3696 = vmul.f32 %v2422, %v2878
        %v3697 = vmul.f32 %v2423, %v2878
        %v3698 = vmul.f32 %v2424, %v2878
        %v3699 = vmul.f32 %v2425, %v2878
        %v3700 = vmul.f32 %v2426, %v2878
        %v3701 = vmul.f32 %v2427, %v2878
        %v3702 = vmul.f32 %v2428, %v2878
        %v3703 = vmul.f32 %v2429, %v2878
        %v3704 = vmul.f32 %v2430, %v2878
        %v3705 = vmul.f32 %v2431, %v2878
        %v3706 = vmul.f32 %v2432, %v2878
        %v3707 = vmul.f32 %v2433, %v2878
        %v3708 = vmul.f32 %v2434, %v2878
        %v3709 = vmul.f32 %v2435, %v2878
        %v3710 = vmul.f32 %v2436, %v2878
        %v3711 = vmul.f32 %v2437, %v2878
        %v3712 = vmul.f32 %v2438, %v2878
        %v3713 = vmul.f32 %v2439, %v2878
        %v3714 = vmul.f32 %v2440, %v2878
        %v3715 = vmul.f32 %v2441, %v2878
        %v3716 = vmul.f32 %v2442, %v2878
        %v3717 = vmul.f32 %v2443, %v2878
        %v3718 = vmul.f32 %v2444, %v2878
        %v3719 = vmul.f32 %v2445, %v2878
        %v3720 = vmul.f32 %v2446, %v2878
        %v3721 = vmul.f32 %v2447, %v2878
        %v3722 = vmul.f32 %v2448, %v2878
        %v3723 = vmul.f32 %v2449, %v2878
        %v3724 = vmul.f32 %v2450, %v2878
        %v3725 = vmul.f32 %v2451, %v2878
        %v3726 = vmul.f32 %v2452, %v2878
        %v3727 = vmul.f32 %v2453, %v2878
        %v3728 = vmul.f32 %v2454, %v2878
        %v3729 = vmul.f32 %v2455, %v2878
        %v3730 = vmul.f32 %v2456, %v2878
        %v3731 = vmul.f32 %v2457, %v2878
        %v3732 = vmul.f32 %v2458, %v2878
        %v3733 = vmul.f32 %v2459, %v2878
        %v3734 = vmul.f32 %v2460, %v2878
        %v3735 = vmul.f32 %v2461, %v2878
        %v3736 = vmul.f32 %v2462, %v2878
        %v3737 = vmul.f32 %v2463, %v2878
        %v3738 = vmul.f32 %v2464, %v2878
        %v3739 = vmul.f32 %v2465, %v2878
        %v3740 = vmul.f32 %v2466, %v2878
        %v3741 = vmul.f32 %v2467, %v2878
        %v3742 = vmul.f32 %v2468, %v2878
        %v3743 = vmul.f32 %v2469, %v2878
        %v3744 = vmul.f32 %v2470, %v2878
        %v3745 = vmul.f32 %v2471, %v2878
        %v3746 = vmul.f32 %v2472, %v2878
        %v3747 = vmul.f32 %v2473, %v2878
        %v3748 = vmul.f32 %v2474, %v2878
        %v3749 = vmul.f32 %v2475, %v2878
        %v3750 = vmul.f32 %v2476, %v2878
        %v3751 = vmul.f32 %v2477, %v2878
        %v3752 = vmul.f32 %v2478, %v2878
        %v3753 = vmul.f32 %v2479, %v2878
        %v3754 = vmul.f32 %v2480, %v2878
        %v3755 = vmul.f32 %v2481, %v2878
        %v3756 = vmul.f32 %v2482, %v2878
        %v3757 = vmul.f32 %v2483, %v2878
        %v3758 = vmul.f32 %v2484, %v2878
        %v3759 = vmul.f32 %v2485, %v2878
        %v3760 = vmul.f32 %v2486, %v2878
        %v3761 = vmul.f32 %v2487, %v2878
        %v3762 = vmul.f32 %v2488, %v2878
        %v3763 = vmul.f32 %v2489, %v2878
        %v3764 = vmul.f32 %v2490, %v2878
        %v3765 = vmul.f32 %v2491, %v2878
        %v3766 = vmul.f32 %v2492, %v2878
        %v3767 = vmul.f32 %v2493, %v2878
        %v3768 = vmul.f32 %v2494, %v2878
        %v3769 = vmul.f32 %v2495, %v2878
        %v3770 = vmul.f32 %v2496, %v2878
        %v3771 = vmul.f32 %v2497, %v2878
        %v3772 = vmul.f32 %v2498, %v2878
        %v3773 = vmul.f32 %v2499, %v2878
        %v3774 = vmul.f32 %v2500, %v2878
        %v3775 = vmul.f32 %v2501, %v2878
        %v3776 = vmul.f32 %v2502, %v2878
        %v3777 = vmul.f32 %v2503, %v2878
        %v3778 = vmul.f32 %v2504, %v2878
        %v3779 = vmul.f32 %v2505, %v2878
        %v3780 = vmul.f32 %v2506, %v2878
        %v3781 = vmul.f32 %v2507, %v2878
        %v3782 = vmul.f32 %v2508, %v2878
        %v3783 = vmul.f32 %v2509, %v2878
        %v3784 = vmul.f32 %v2510, %v2878
        %v3785 = vmul.f32 %v2511, %v2878
        %v3786 = vmul.f32 %v2512, %v2878
        %v3787 = vmul.f32 %v2513, %v2878
        %v3788 = vmul.f32 %v2514, %v2878
        %v3789 = vmul.f32 %v2582, %v2994
        %v3790 = vmul.f32 %v2583, %v2994
        %v3791 = vmul.f32 %v2584, %v2994
        %v3792 = vmul.f32 %v2585, %v2994
        %v3793 = vmul.f32 %v2586, %v2994
        %v3794 = vmul.f32 %v2587, %v2994
        %v3795 = vmul.f32 %v2588, %v2994
        %v3796 = vmul.f32 %v2589, %v2994
        %v3797 = vmul.f32 %v2590, %v2994
        %v3798 = vmul.f32 %v2591, %v2994
        %v3799 = vmul.f32 %v2592, %v2994
        %v3800 = vmul.f32 %v2593, %v2994
        %v3801 = vmul.f32 %v2594, %v2994
        %v3802 = vmul.f32 %v2595, %v2994
        %v3803 = vmul.f32 %v2596, %v2994
        %v3804 = vmul.f32 %v2597, %v2994
        %v3805 = vmul.f32 %v2598, %v2994
        %v3806 = vmul.f32 %v2599, %v2994
        %v3807 = vmul.f32 %v2600, %v2994
        %v3808 = vmul.f32 %v2601, %v2994
        %v3809 = vmul.f32 %v2602, %v2994
        %v3810 = vmul.f32 %v2603, %v2994
        %v3811 = vmul.f32 %v2604, %v2994
        %v3812 = vmul.f32 %v2605, %v2994
        %v3813 = vmul.f32 %v2606, %v2994
        %v3814 = vmul.f32 %v2607, %v2994
        %v3815 = vmul.f32 %v2608, %v2994
        %v3816 = vmul.f32 %v2609, %v2994
        %v3817 = vmul.f32 %v2610, %v2994
        %v3818 = vmul.f32 %v2611, %v2994
        %v3819 = vmul.f32 %v2612, %v2994
        %v3820 = vmul.f32 %v2613, %v2994
        %v3821 = vmul.f32 %v2614, %v2994
        %v3822 = vmul.f32 %v2615, %v2994
        %v3823 = vmul.f32 %v2616, %v2994
        %v3824 = vmul.f32 %v2617, %v2994
        %v3825 = vmul.f32 %v2618, %v2994
        %v3826 = vmul.f32 %v2619, %v2994
        %v3827 = vmul.f32 %v2620, %v2994
        %v3828 = vmul.f32 %v2621, %v2994
        %v3829 = vmul.f32 %v2622, %v2994
        %v3830 = vmul.f32 %v2623, %v2994
        %v3831 = vmul.f32 %v2624, %v2994
        %v3832 = vmul.f32 %v2625, %v2994
        %v3833 = vmul.f32 %v2626, %v2994
        %v3834 = vmul.f32 %v2627, %v2994
        %v3835 = vmul.f32 %v2628, %v2994
        %v3836 = vmul.f32 %v2629, %v2994
        %v3837 = vmul.f32 %v2630, %v2994
        %v3838 = vmul.f32 %v2631, %v2994
        %v3839 = vmul.f32 %v2632, %v2994
        %v3840 = vmul.f32 %v2633, %v2994
        %v3841 = vmul.f32 %v2634, %v2994
        %v3842 = vmul.f32 %v2635, %v2994
        %v3843 = vmul.f32 %v2636, %v2994
        %v3844 = vmul.f32 %v2637, %v2994
        %v3845 = vmul.f32 %v2638, %v2994
        %v3846 = vmul.f32 %v2639, %v2994
        %v3847 = vmul.f32 %v2640, %v2994
        %v3848 = vmul.f32 %v2641, %v2994
        %v3849 = vmul.f32 %v2642, %v2994
        %v3850 = vmul.f32 %v2643, %v2994
        %v3851 = vmul.f32 %v2644, %v2994
        %v3852 = vmul.f32 %v2645, %v2994
        %v3853 = vmul.f32 %v2646, %v2994
        %v3854 = vmul.f32 %v2647, %v2994
        %v3855 = vmul.f32 %v2648, %v2994
        %v3856 = vmul.f32 %v2649, %v2994
        %v3857 = vmul.f32 %v2650, %v2994
        %v3858 = vmul.f32 %v2651, %v2994
        %v3859 = vmul.f32 %v2652, %v2994
        %v3860 = vmul.f32 %v2653, %v2994
        %v3861 = vmul.f32 %v2654, %v2994
        %v3862 = vmul.f32 %v2655, %v2994
        %v3863 = vmul.f32 %v2656, %v2994
        %v3864 = vmul.f32 %v2657, %v2994
        %v3865 = vmul.f32 %v2658, %v2994
        %v3866 = vmul.f32 %v2659, %v2994
        %v3867 = vmul.f32 %v2660, %v2994
        %v3868 = vmul.f32 %v2661, %v2994
        %v3869 = vmul.f32 %v2662, %v2994
        %v3870 = vmul.f32 %v2663, %v2994
        %v3871 = vmul.f32 %v2664, %v2994
        %v3872 = vmul.f32 %v2665, %v2994
        %v3873 = vmul.f32 %v2666, %v2994
        %v3874 = vmul.f32 %v2667, %v2994
        %v3875 = vmul.f32 %v2668, %v2994
        %v3876 = vmul.f32 %v2669, %v2994
        %v3877 = vmul.f32 %v2670, %v2994
        %v3878 = vmul.f32 %v2671, %v2994
        %v3879 = vmul.f32 %v2672, %v2994
        %v3880 = vmul.f32 %v2673, %v2994
        %v3881 = vmul.f32 %v2674, %v2994
        %v3882 = vmul.f32 %v2675, %v2994
        %v3883 = vmul.f32 %v2676, %v2994
        %v3884 = vmul.f32 %v2677, %v2994
        %v3885 = vmul.f32 %v2678, %v2994
        %v3886 = vmul.f32 %v2679, %v2994
        %v3887 = vmul.f32 %v2680, %v2994
        %v3888 = vmul.f32 %v2681, %v2994
        %v3889 = vmul.f32 %v2682, %v2994
        %v3890 = vmul.f32 %v2683, %v2994
        %v3891 = vmul.f32 %v2684, %v2994
        %v3892 = vmul.f32 %v2685, %v2994
        %v3893 = vmul.f32 %v2686, %v2994
        %v3894 = vmul.f32 %v2687, %v2994
        %v3895 = vmul.f32 %v2688, %v2994
        %v3896 = vmul.f32 %v2689, %v2994
        %v3897 = vmul.f32 %v2690, %v2994
        %v3898 = vmul.f32 %v2691, %v2994
        %v3899 = vmul.f32 %v2692, %v2994
        %v3900 = vmul.f32 %v2693, %v2994
        %v3901 = vadd.f32 %v3677, %v3789
        %v3902 = vadd.f32 %v3678, %v3790
        %v3903 = vadd.f32 %v3679, %v3791
        %v3904 = vadd.f32 %v3680, %v3792
        %v3905 = vadd.f32 %v3681, %v3793
        %v3906 = vadd.f32 %v3682, %v3794
        %v3907 = vadd.f32 %v3683, %v3795
        %v3908 = vadd.f32 %v3684, %v3796
        %v3909 = vadd.f32 %v3685, %v3797
        %v3910 = vadd.f32 %v3686, %v3798
        %v3911 = vadd.f32 %v3687, %v3799
        %v3912 = vadd.f32 %v3688, %v3800
        %v3913 = vadd.f32 %v3689, %v3801
        %v3914 = vadd.f32 %v3690, %v3802
        %v3915 = vadd.f32 %v3691, %v3803
        %v3916 = vadd.f32 %v3692, %v3804
        %v3917 = vadd.f32 %v3693, %v3805
        %v3918 = vadd.f32 %v3694, %v3806
        %v3919 = vadd.f32 %v3695, %v3807
        %v3920 = vadd.f32 %v3696, %v3808
        %v3921 = vadd.f32 %v3697, %v3809
        %v3922 = vadd.f32 %v3698, %v3810
        %v3923 = vadd.f32 %v3699, %v3811
        %v3924 = vadd.f32 %v3700, %v3812
        %v3925 = vadd.f32 %v3701, %v3813
        %v3926 = vadd.f32 %v3702, %v3814
        %v3927 = vadd.f32 %v3703, %v3815
        %v3928 = vadd.f32 %v3704, %v3816
        %v3929 = vadd.f32 %v3705, %v3817
        %v3930 = vadd.f32 %v3706, %v3818
        %v3931 = vadd.f32 %v3707, %v3819
        %v3932 = vadd.f32 %v3708, %v3820
        %v3933 = vadd.f32 %v3709, %v3821
        %v3934 = vadd.f32 %v3710, %v3822
        %v3935 = vadd.f32 %v3711, %v3823
        %v3936 = vadd.f32 %v3712, %v3824
        %v3937 = vadd.f32 %v3713, %v3825
        %v3938 = vadd.f32 %v3714, %v3826
        %v3939 = vadd.f32 %v3715, %v3827
        %v3940 = vadd.f32 %v3716, %v3828
        %v3941 = vadd.f32 %v3717, %v3829
        %v3942 = vadd.f32 %v3718, %v3830
        %v3943 = vadd.f32 %v3719, %v3831
        %v3944 = vadd.f32 %v3720, %v3832
        %v3945 = vadd.f32 %v3721, %v3833
        %v3946 = vadd.f32 %v3722, %v3834
        %v3947 = vadd.f32 %v3723, %v3835
        %v3948 = vadd.f32 %v3724, %v3836
        %v3949 = vadd.f32 %v3725, %v3837
        %v3950 = vadd.f32 %v3726, %v3838
        %v3951 = vadd.f32 %v3727, %v3839
        %v3952 = vadd.f32 %v3728, %v3840
        %v3953 = vadd.f32 %v3729, %v3841
        %v3954 = vadd.f32 %v3730, %v3842
        %v3955 = vadd.f32 %v3731, %v3843
        %v3956 = vadd.f32 %v3732, %v3844
        %v3957 = vadd.f32 %v3733, %v3845
        %v3958 = vadd.f32 %v3734, %v3846
        %v3959 = vadd.f32 %v3735, %v3847
        %v3960 = vadd.f32 %v3736, %v3848
        %v3961 = vadd.f32 %v3737, %v3849
        %v3962 = vadd.f32 %v3738, %v3850
        %v3963 = vadd.f32 %v3739, %v3851
        %v3964 = vadd.f32 %v3740, %v3852
        %v3965 = vadd.f32 %v3741, %v3853
        %v3966 = vadd.f32 %v3742, %v3854
        %v3967 = vadd.f32 %v3743, %v3855
        %v3968 = vadd.f32 %v3744, %v3856
        %v3969 = vadd.f32 %v3745, %v3857
        %v3970 = vadd.f32 %v3746, %v3858
        %v3971 = vadd.f32 %v3747, %v3859
        %v3972 = vadd.f32 %v3748, %v3860
        %v3973 = vadd.f32 %v3749, %v3861
        %v3974 = vadd.f32 %v3750, %v3862
        %v3975 = vadd.f32 %v3751, %v3863
        %v3976 = vadd.f32 %v3752, %v3864
        %v3977 = vadd.f32 %v3753, %v3865
        %v3978 = vadd.f32 %v3754, %v3866
        %v3979 = vadd.f32 %v3755, %v3867
        %v3980 = vadd.f32 %v3756, %v3868
        %v3981 = vadd.f32 %v3757, %v3869
        %v3982 = vadd.f32 %v3758, %v3870
        %v3983 = vadd.f32 %v3759, %v3871
        %v3984 = vadd.f32 %v3760, %v3872
        %v3985 = vadd.f32 %v3761, %v3873
        %v3986 = vadd.f32 %v3762, %v3874
        %v3987 = vadd.f32 %v3763, %v3875
        %v3988 = vadd.f32 %v3764, %v3876
        %v3989 = vadd.f32 %v3765, %v3877
        %v3990 = vadd.f32 %v3766, %v3878
        %v3991 = vadd.f32 %v3767, %v3879
        %v3992 = vadd.f32 %v3768, %v3880
        %v3993 = vadd.f32 %v3769, %v3881
        %v3994 = vadd.f32 %v3770, %v3882
        %v3995 = vadd.f32 %v3771, %v3883
        %v3996 = vadd.f32 %v3772, %v3884
        %v3997 = vadd.f32 %v3773, %v3885
        %v3998 = vadd.f32 %v3774, %v3886
        %v3999 = vadd.f32 %v3775, %v3887
        %v4000 = vadd.f32 %v3776, %v3888
        %v4001 = vadd.f32 %v3777, %v3889
        %v4002 = vadd.f32 %v3778, %v3890
        %v4003 = vadd.f32 %v3779, %v3891
        %v4004 = vadd.f32 %v3780, %v3892
        %v4005 = vadd.f32 %v3781, %v3893
        %v4006 = vadd.f32 %v3782, %v3894
        %v4007 = vadd.f32 %v3783, %v3895
        %v4008 = vadd.f32 %v3784, %v3896
        %v4009 = vadd.f32 %v3785, %v3897
        %v4010 = vadd.f32 %v3786, %v3898
        %v4011 = vadd.f32 %v3787, %v3899
        %v4012 = vadd.f32 %v3788, %v3900
        %v4013 = vmul.f32 %v2761, %v3222
        %v4014 = vmul.f32 %v2762, %v3222
        %v4015 = vmul.f32 %v2763, %v3222
        %v4016 = vmul.f32 %v2764, %v3222
        %v4017 = vmul.f32 %v2765, %v3222
        %v4018 = vmul.f32 %v2766, %v3222
        %v4019 = vmul.f32 %v2767, %v3222
        %v4020 = vmul.f32 %v2768, %v3222
        %v4021 = vmul.f32 %v2769, %v3222
        %v4022 = vmul.f32 %v2770, %v3222
        %v4023 = vmul.f32 %v2771, %v3222
        %v4024 = vmul.f32 %v2772, %v3222
        %v4025 = vmul.f32 %v2773, %v3222
        %v4026 = vmul.f32 %v2774, %v3222
        %v4027 = vmul.f32 %v2775, %v3222
        %v4028 = vmul.f32 %v2776, %v3222
        %v4029 = vmul.f32 %v2777, %v3222
        %v4030 = vmul.f32 %v2778, %v3222
        %v4031 = vmul.f32 %v2779, %v3222
        %v4032 = vmul.f32 %v2780, %v3222
        %v4033 = vmul.f32 %v2781, %v3222
        %v4034 = vmul.f32 %v2782, %v3222
        %v4035 = vmul.f32 %v2783, %v3222
        %v4036 = vmul.f32 %v2784, %v3222
        %v4037 = vmul.f32 %v2785, %v3222
        %v4038 = vmul.f32 %v2786, %v3222
        %v4039 = vmul.f32 %v2787, %v3222
        %v4040 = vmul.f32 %v2788, %v3222
        %v4041 = vmul.f32 %v2789, %v3222
        %v4042 = vmul.f32 %v2790, %v3222
        %v4043 = vmul.f32 %v2791, %v3222
        %v4044 = vmul.f32 %v2792, %v3222
        %v4045 = vmul.f32 %v2793, %v3222
        %v4046 = vmul.f32 %v2794, %v3222
        %v4047 = vmul.f32 %v2795, %v3222
        %v4048 = vmul.f32 %v2796, %v3222
        %v4049 = vmul.f32 %v2797, %v3222
        %v4050 = vmul.f32 %v2798, %v3222
        %v4051 = vmul.f32 %v2799, %v3222
        %v4052 = vmul.f32 %v2800, %v3222
        %v4053 = vmul.f32 %v2801, %v3222
        %v4054 = vmul.f32 %v2802, %v3222
        %v4055 = vmul.f32 %v2803, %v3222
        %v4056 = vmul.f32 %v2804, %v3222
        %v4057 = vmul.f32 %v2805, %v3222
        %v4058 = vmul.f32 %v2806, %v3222
        %v4059 = vmul.f32 %v2807, %v3222
        %v4060 = vmul.f32 %v2808, %v3222
        %v4061 = vmul.f32 %v2809, %v3222
        %v4062 = vmul.f32 %v2810, %v3222
        %v4063 = vmul.f32 %v2811, %v3222
        %v4064 = vmul.f32 %v2812, %v3222
        %v4065 = vmul.f32 %v2813, %v3222
        %v4066 = vmul.f32 %v2814, %v3222
        %v4067 = vmul.f32 %v2815, %v3222
        %v4068 = vmul.f32 %v2816, %v3222
        %v4069 = vmul.f32 %v2817, %v3222
        %v4070 = vmul.f32 %v2818, %v3222
        %v4071 = vmul.f32 %v2819, %v3222
        %v4072 = vmul.f32 %v2820, %v3222
        %v4073 = vmul.f32 %v2821, %v3222
        %v4074 = vmul.f32 %v2822, %v3222
        %v4075 = vmul.f32 %v2823, %v3222
        %v4076 = vmul.f32 %v2824, %v3222
        %v4077 = vmul.f32 %v2825, %v3222
        %v4078 = vmul.f32 %v2826, %v3222
        %v4079 = vmul.f32 %v2827, %v3222
        %v4080 = vmul.f32 %v2828, %v3222
        %v4081 = vmul.f32 %v2829, %v3222
        %v4082 = vmul.f32 %v2830, %v3222
        %v4083 = vmul.f32 %v2831, %v3222
        %v4084 = vmul.f32 %v2832, %v3222
        %v4085 = vmul.f32 %v2833, %v3222
        %v4086 = vmul.f32 %v2834, %v3222
        %v4087 = vmul.f32 %v2835, %v3222
        %v4088 = vmul.f32 %v2836, %v3222
        %v4089 = vmul.f32 %v2837, %v3222
        %v4090 = vmul.f32 %v2838, %v3222
        %v4091 = vmul.f32 %v2839, %v3222
        %v4092 = vmul.f32 %v2840, %v3222
        %v4093 = vmul.f32 %v2841, %v3222
        %v4094 = vmul.f32 %v2842, %v3222
        %v4095 = vmul.f32 %v2843, %v3222
        %v4096 = vmul.f32 %v2844, %v3222
        %v4097 = vmul.f32 %v2845, %v3222
        %v4098 = vmul.f32 %v2846, %v3222
        %v4099 = vmul.f32 %v2847, %v3222
        %v4100 = vmul.f32 %v2848, %v3222
        %v4101 = vmul.f32 %v2849, %v3222
        %v4102 = vmul.f32 %v2850, %v3222
        %v4103 = vmul.f32 %v2851, %v3222
        %v4104 = vmul.f32 %v2852, %v3222
        %v4105 = vmul.f32 %v2853, %v3222
        %v4106 = vmul.f32 %v2854, %v3222
        %v4107 = vmul.f32 %v2855, %v3222
        %v4108 = vmul.f32 %v2856, %v3222
        %v4109 = vmul.f32 %v2857, %v3222
        %v4110 = vmul.f32 %v2858, %v3222
        %v4111 = vmul.f32 %v2859, %v3222
        %v4112 = vmul.f32 %v2860, %v3222
        %v4113 = vmul.f32 %v2861, %v3222
        %v4114 = vmul.f32 %v2862, %v3222
        %v4115 = vmul.f32 %v2863, %v3222
        %v4116 = vmul.f32 %v2864, %v3222
        %v4117 = vmul.f32 %v2865, %v3222
        %v4118 = vmul.f32 %v2866, %v3222
        %v4119 = vmul.f32 %v2867, %v3222
        %v4120 = vmul.f32 %v2868, %v3222
        %v4121 = vmul.f32 %v2869, %v3222
        %v4122 = vmul.f32 %v2870, %v3222
        %v4123 = vmul.f32 %v2871, %v3222
        %v4124 = vmul.f32 %v2872, %v3222
        %v4125 = vadd.f32 %v3901, %v4013
        %v4126 = vadd.f32 %v3902, %v4014
        %v4127 = vadd.f32 %v3903, %v4015
        %v4128 = vadd.f32 %v3904, %v4016
        %v4129 = vadd.f32 %v3905, %v4017
        %v4130 = vadd.f32 %v3906, %v4018
        %v4131 = vadd.f32 %v3907, %v4019
        %v4132 = vadd.f32 %v3908, %v4020
        %v4133 = vadd.f32 %v3909, %v4021
        %v4134 = vadd.f32 %v3910, %v4022
        %v4135 = vadd.f32 %v3911, %v4023
        %v4136 = vadd.f32 %v3912, %v4024
        %v4137 = vadd.f32 %v3913, %v4025
        %v4138 = vadd.f32 %v3914, %v4026
        %v4139 = vadd.f32 %v3915, %v4027
        %v4140 = vadd.f32 %v3916, %v4028
        %v4141 = vadd.f32 %v3917, %v4029
        %v4142 = vadd.f32 %v3918, %v4030
        %v4143 = vadd.f32 %v3919, %v4031
        %v4144 = vadd.f32 %v3920, %v4032
        %v4145 = vadd.f32 %v3921, %v4033
        %v4146 = vadd.f32 %v3922, %v4034
        %v4147 = vadd.f32 %v3923, %v4035
        %v4148 = vadd.f32 %v3924, %v4036
        %v4149 = vadd.f32 %v3925, %v4037
        %v4150 = vadd.f32 %v3926, %v4038
        %v4151 = vadd.f32 %v3927, %v4039
        %v4152 = vadd.f32 %v3928, %v4040
        %v4153 = vadd.f32 %v3929, %v4041
        %v4154 = vadd.f32 %v3930, %v4042
        %v4155 = vadd.f32 %v3931, %v4043
        %v4156 = vadd.f32 %v3932, %v4044
        %v4157 = vadd.f32 %v3933, %v4045
        %v4158 = vadd.f32 %v3934, %v4046
        %v4159 = vadd.f32 %v3935, %v4047
        %v4160 = vadd.f32 %v3936, %v4048
        %v4161 = vadd.f32 %v3937, %v4049
        %v4162 = vadd.f32 %v3938, %v4050
        %v4163 = vadd.f32 %v3939, %v4051
        %v4164 = vadd.f32 %v3940, %v4052
        %v4165 = vadd.f32 %v3941, %v4053
        %v4166 = vadd.f32 %v3942, %v4054
        %v4167 = vadd.f32 %v3943, %v4055
        %v4168 = vadd.f32 %v3944, %v4056
        %v4169 = vadd.f32 %v3945, %v4057
        %v4170 = vadd.f32 %v3946, %v4058
        %v4171 = vadd.f32 %v3947, %v4059
        %v4172 = vadd.f32 %v3948, %v4060
        %v4173 = vadd.f32 %v3949, %v4061
        %v4174 = vadd.f32 %v3950, %v4062
        %v4175 = vadd.f32 %v3951, %v4063
        %v4176 = vadd.f32 %v3952, %v4064
        %v4177 = vadd.f32 %v3953, %v4065
        %v4178 = vadd.f32 %v3954, %v4066
        %v4179 = vadd.f32 %v3955, %v4067
        %v4180 = vadd.f32 %v3956, %v4068
        %v4181 = vadd.f32 %v3957, %v4069
        %v4182 = vadd.f32 %v3958, %v4070
        %v4183 = vadd.f32 %v3959, %v4071
        %v4184 = vadd.f32 %v3960, %v4072
        %v4185 = vadd.f32 %v3961, %v4073
        %v4186 = vadd.f32 %v3962, %v4074
        %v4187 = vadd.f32 %v3963, %v4075
        %v4188 = vadd.f32 %v3964, %v4076
        %v4189 = vadd.f32 %v3965, %v4077
        %v4190 = vadd.f32 %v3966, %v4078
        %v4191 = vadd.f32 %v3967, %v4079
        %v4192 = vadd.f32 %v3968, %v4080
        %v4193 = vadd.f32 %v3969, %v4081
        %v4194 = vadd.f32 %v3970, %v4082
        %v4195 = vadd.f32 %v3971, %v4083
        %v4196 = vadd.f32 %v3972, %v4084
        %v4197 = vadd.f32 %v3973, %v4085
        %v4198 = vadd.f32 %v3974, %v4086
        %v4199 = vadd.f32 %v3975, %v4087
        %v4200 = vadd.f32 %v3976, %v4088
        %v4201 = vadd.f32 %v3977, %v4089
        %v4202 = vadd.f32 %v3978, %v4090
        %v4203 = vadd.f32 %v3979, %v4091
        %v4204 = vadd.f32 %v3980, %v4092
        %v4205 = vadd.f32 %v3981, %v4093
        %v4206 = vadd.f32 %v3982, %v4094
        %v4207 = vadd.f32 %v3983, %v4095
        %v4208 = vadd.f32 %v3984, %v4096
        %v4209 = vadd.f32 %v3985, %v4097
        %v4210 = vadd.f32 %v3986, %v4098
        %v4211 = vadd.f32 %v3987, %v4099
        %v4212 = vadd.f32 %v3988, %v4100
        %v4213 = vadd.f32 %v3989, %v4101
        %v4214 = vadd.f32 %v3990, %v4102
        %v4215 = vadd.f32 %v3991, %v4103
        %v4216 = vadd.f32 %v3992, %v4104
        %v4217 = vadd.f32 %v3993, %v4105
        %v4218 = vadd.f32 %v3994, %v4106
        %v4219 = vadd.f32 %v3995, %v4107
        %v4220 = vadd.f32 %v3996, %v4108
        %v4221 = vadd.f32 %v3997, %v4109
        %v4222 = vadd.f32 %v3998, %v4110
        %v4223 = vadd.f32 %v3999, %v4111
        %v4224 = vadd.f32 %v4000, %v4112
        %v4225 = vadd.f32 %v4001, %v4113
        %v4226 = vadd.f32 %v4002, %v4114
        %v4227 = vadd.f32 %v4003, %v4115
        %v4228 = vadd.f32 %v4004, %v4116
        %v4229 = vadd.f32 %v4005, %v4117
        %v4230 = vadd.f32 %v4006, %v4118
        %v4231 = vadd.f32 %v4007, %v4119
        %v4232 = vadd.f32 %v4008, %v4120
        %v4233 = vadd.f32 %v4009, %v4121
        %v4234 = vadd.f32 %v4010, %v4122
        %v4235 = vadd.f32 %v4011, %v4123
        %v4236 = vadd.f32 %v4012, %v4124
        %v4237 = vadd.f32 %v4125, %v3451
        %v4238 = vadd.f32 %v4126, %v3451
        %v4239 = vadd.f32 %v4127, %v3451
        %v4240 = vadd.f32 %v4128, %v3451
        %v4241 = vadd.f32 %v4129, %v3451
        %v4242 = vadd.f32 %v4130, %v3451
        %v4243 = vadd.f32 %v4131, %v3451
        %v4244 = vadd.f32 %v4132, %v3451
        %v4245 = vadd.f32 %v4133, %v3451
        %v4246 = vadd.f32 %v4134, %v3451
        %v4247 = vadd.f32 %v4135, %v3451
        %v4248 = vadd.f32 %v4136, %v3451
        %v4249 = vadd.f32 %v4137, %v3451
        %v4250 = vadd.f32 %v4138, %v3451
        %v4251 = vadd.f32 %v4139, %v3451
        %v4252 = vadd.f32 %v4140, %v3451
        %v4253 = vadd.f32 %v4141, %v3451
        %v4254 = vadd.f32 %v4142, %v3451
        %v4255 = vadd.f32 %v4143, %v3451
        %v4256 = vadd.f32 %v4144, %v3451
        %v4257 = vadd.f32 %v4145, %v3451
        %v4258 = vadd.f32 %v4146, %v3451
        %v4259 = vadd.f32 %v4147, %v3451
        %v4260 = vadd.f32 %v4148, %v3451
        %v4261 = vadd.f32 %v4149, %v3451
        %v4262 = vadd.f32 %v4150, %v3451
        %v4263 = vadd.f32 %v4151, %v3451
        %v4264 = vadd.f32 %v4152, %v3451
        %v4265 = vadd.f32 %v4153, %v3451
        %v4266 = vadd.f32 %v4154, %v3451
        %v4267 = vadd.f32 %v4155, %v3451
        %v4268 = vadd.f32 %v4156, %v3451
        %v4269 = vadd.f32 %v4157, %v3451
        %v4270 = vadd.f32 %v4158, %v3451
        %v4271 = vadd.f32 %v4159, %v3451
        %v4272 = vadd.f32 %v4160, %v3451
        %v4273 = vadd.f32 %v4161, %v3451
        %v4274 = vadd.f32 %v4162, %v3451
        %v4275 = vadd.f32 %v4163, %v3451
        %v4276 = vadd.f32 %v4164, %v3451
        %v4277 = vadd.f32 %v4165, %v3451
        %v4278 = vadd.f32 %v4166, %v3451
        %v4279 = vadd.f32 %v4167, %v3451
        %v4280 = vadd.f32 %v4168, %v3451
        %v4281 = vadd.f32 %v4169, %v3451
        %v4282 = vadd.f32 %v4170, %v3451
        %v4283 = vadd.f32 %v4171, %v3451
        %v4284 = vadd.f32 %v4172, %v3451
        %v4285 = vadd.f32 %v4173, %v3451
        %v4286 = vadd.f32 %v4174, %v3451
        %v4287 = vadd.f32 %v4175, %v3451
        %v4288 = vadd.f32 %v4176, %v3451
        %v4289 = vadd.f32 %v4177, %v3451
        %v4290 = vadd.f32 %v4178, %v3451
        %v4291 = vadd.f32 %v4179, %v3451
        %v4292 = vadd.f32 %v4180, %v3451
        %v4293 = vadd.f32 %v4181, %v3451
        %v4294 = vadd.f32 %v4182, %v3451
        %v4295 = vadd.f32 %v4183, %v3451
        %v4296 = vadd.f32 %v4184, %v3451
        %v4297 = vadd.f32 %v4185, %v3451
        %v4298 = vadd.f32 %v4186, %v3451
        %v4299 = vadd.f32 %v4187, %v3451
        %v4300 = vadd.f32 %v4188, %v3451
        %v4301 = vadd.f32 %v4189, %v3451
        %v4302 = vadd.f32 %v4190, %v3451
        %v4303 = vadd.f32 %v4191, %v3451
        %v4304 = vadd.f32 %v4192, %v3451
        %v4305 = vadd.f32 %v4193, %v3451
        %v4306 = vadd.f32 %v4194, %v3451
        %v4307 = vadd.f32 %v4195, %v3451
        %v4308 = vadd.f32 %v4196, %v3451
        %v4309 = vadd.f32 %v4197, %v3451
        %v4310 = vadd.f32 %v4198, %v3451
        %v4311 = vadd.f32 %v4199, %v3451
        %v4312 = vadd.f32 %v4200, %v3451
        %v4313 = vadd.f32 %v4201, %v3451
        %v4314 = vadd.f32 %v4202, %v3451
        %v4315 = vadd.f32 %v4203, %v3451
        %v4316 = vadd.f32 %v4204, %v3451
        %v4317 = vadd.f32 %v4205, %v3451
        %v4318 = vadd.f32 %v4206, %v3451
        %v4319 = vadd.f32 %v4207, %v3451
        %v4320 = vadd.f32 %v4208, %v3451
        %v4321 = vadd.f32 %v4209, %v3451
        %v4322 = vadd.f32 %v4210, %v3451
        %v4323 = vadd.f32 %v4211, %v3451
        %v4324 = vadd.f32 %v4212, %v3451
        %v4325 = vadd.f32 %v4213, %v3451
        %v4326 = vadd.f32 %v4214, %v3451
        %v4327 = vadd.f32 %v4215, %v3451
        %v4328 = vadd.f32 %v4216, %v3451
        %v4329 = vadd.f32 %v4217, %v3451
        %v4330 = vadd.f32 %v4218, %v3451
        %v4331 = vadd.f32 %v4219, %v3451
        %v4332 = vadd.f32 %v4220, %v3451
        %v4333 = vadd.f32 %v4221, %v3451
        %v4334 = vadd.f32 %v4222, %v3451
        %v4335 = vadd.f32 %v4223, %v3451
        %v4336 = vadd.f32 %v4224, %v3451
        %v4337 = vadd.f32 %v4225, %v3451
        %v4338 = vadd.f32 %v4226, %v3451
        %v4339 = vadd.f32 %v4227, %v3451
        %v4340 = vadd.f32 %v4228, %v3451
        %v4341 = vadd.f32 %v4229, %v3451
        %v4342 = vadd.f32 %v4230, %v3451
        %v4343 = vadd.f32 %v4231, %v3451
        %v4344 = vadd.f32 %v4232, %v3451
        %v4345 = vadd.f32 %v4233, %v3451
        %v4346 = vadd.f32 %v4234, %v3451
        %v4347 = vadd.f32 %v4235, %v3451
        %v4348 = vadd.f32 %v4236, %v3451
        %v4349 = vmax.f32 %v4237, 0.0
        %v4350 = vmax.f32 %v4238, 0.0
        %v4351 = vmax.f32 %v4239, 0.0
        %v4352 = vmax.f32 %v4240, 0.0
        %v4353 = vmax.f32 %v4241, 0.0
        %v4354 = vmax.f32 %v4242, 0.0
        %v4355 = vmax.f32 %v4243, 0.0
        %v4356 = vmax.f32 %v4244, 0.0
        %v4357 = vmax.f32 %v4245, 0.0
        %v4358 = vmax.f32 %v4246, 0.0
        %v4359 = vmax.f32 %v4247, 0.0
        %v4360 = vmax.f32 %v4248, 0.0
        %v4361 = vmax.f32 %v4249, 0.0
        %v4362 = vmax.f32 %v4250, 0.0
        %v4363 = vmax.f32 %v4251, 0.0
        %v4364 = vmax.f32 %v4252, 0.0
        %v4365 = vmax.f32 %v4253, 0.0
        %v4366 = vmax.f32 %v4254, 0.0
        %v4367 = vmax.f32 %v4255, 0.0
        %v4368 = vmax.f32 %v4256, 0.0
        %v4369 = vmax.f32 %v4257, 0.0
        %v4370 = vmax.f32 %v4258, 0.0
        %v4371 = vmax.f32 %v4259, 0.0
        %v4372 = vmax.f32 %v4260, 0.0
        %v4373 = vmax.f32 %v4261, 0.0
        %v4374 = vmax.f32 %v4262, 0.0
        %v4375 = vmax.f32 %v4263, 0.0
        %v4376 = vmax.f32 %v4264, 0.0
        %v4377 = vmax.f32 %v4265, 0.0
        %v4378 = vmax.f32 %v4266, 0.0
        %v4379 = vmax.f32 %v4267, 0.0
        %v4380 = vmax.f32 %v4268, 0.0
        %v4381 = vmax.f32 %v4269, 0.0
        %v4382 = vmax.f32 %v4270, 0.0
        %v4383 = vmax.f32 %v4271, 0.0
        %v4384 = vmax.f32 %v4272, 0.0
        %v4385 = vmax.f32 %v4273, 0.0
        %v4386 = vmax.f32 %v4274, 0.0
        %v4387 = vmax.f32 %v4275, 0.0
        %v4388 = vmax.f32 %v4276, 0.0
        %v4389 = vmax.f32 %v4277, 0.0
        %v4390 = vmax.f32 %v4278, 0.0
        %v4391 = vmax.f32 %v4279, 0.0
        %v4392 = vmax.f32 %v4280, 0.0
        %v4393 = vmax.f32 %v4281, 0.0
        %v4394 = vmax.f32 %v4282, 0.0
        %v4395 = vmax.f32 %v4283, 0.0
        %v4396 = vmax.f32 %v4284, 0.0
        %v4397 = vmax.f32 %v4285, 0.0
        %v4398 = vmax.f32 %v4286, 0.0
        %v4399 = vmax.f32 %v4287, 0.0
        %v4400 = vmax.f32 %v4288, 0.0
        %v4401 = vmax.f32 %v4289, 0.0
        %v4402 = vmax.f32 %v4290, 0.0
        %v4403 = vmax.f32 %v4291, 0.0
        %v4404 = vmax.f32 %v4292, 0.0
        %v4405 = vmax.f32 %v4293, 0.0
        %v4406 = vmax.f32 %v4294, 0.0
        %v4407 = vmax.f32 %v4295, 0.0
        %v4408 = vmax.f32 %v4296, 0.0
        %v4409 = vmax.f32 %v4297, 0.0
        %v4410 = vmax.f32 %v4298, 0.0
        %v4411 = vmax.f32 %v4299, 0.0
        %v4412 = vmax.f32 %v4300, 0.0
        %v4413 = vmax.f32 %v4301, 0.0
        %v4414 = vmax.f32 %v4302, 0.0
        %v4415 = vmax.f32 %v4303, 0.0
        %v4416 = vmax.f32 %v4304, 0.0
        %v4417 = vmax.f32 %v4305, 0.0
        %v4418 = vmax.f32 %v4306, 0.0
        %v4419 = vmax.f32 %v4307, 0.0
        %v4420 = vmax.f32 %v4308, 0.0
        %v4421 = vmax.f32 %v4309, 0.0
        %v4422 = vmax.f32 %v4310, 0.0
        %v4423 = vmax.f32 %v4311, 0.0
        %v4424 = vmax.f32 %v4312, 0.0
        %v4425 = vmax.f32 %v4313, 0.0
        %v4426 = vmax.f32 %v4314, 0.0
        %v4427 = vmax.f32 %v4315, 0.0
        %v4428 = vmax.f32 %v4316, 0.0
        %v4429 = vmax.f32 %v4317, 0.0
        %v4430 = vmax.f32 %v4318, 0.0
        %v4431 = vmax.f32 %v4319, 0.0
        %v4432 = vmax.f32 %v4320, 0.0
        %v4433 = vmax.f32 %v4321, 0.0
        %v4434 = vmax.f32 %v4322, 0.0
        %v4435 = vmax.f32 %v4323, 0.0
        %v4436 = vmax.f32 %v4324, 0.0
        %v4437 = vmax.f32 %v4325, 0.0
        %v4438 = vmax.f32 %v4326, 0.0
        %v4439 = vmax.f32 %v4327, 0.0
        %v4440 = vmax.f32 %v4328, 0.0
        %v4441 = vmax.f32 %v4329, 0.0
        %v4442 = vmax.f32 %v4330, 0.0
        %v4443 = vmax.f32 %v4331, 0.0
        %v4444 = vmax.f32 %v4332, 0.0
        %v4445 = vmax.f32 %v4333, 0.0
        %v4446 = vmax.f32 %v4334, 0.0
        %v4447 = vmax.f32 %v4335, 0.0
        %v4448 = vmax.f32 %v4336, 0.0
        %v4449 = vmax.f32 %v4337, 0.0
        %v4450 = vmax.f32 %v4338, 0.0
        %v4451 = vmax.f32 %v4339, 0.0
        %v4452 = vmax.f32 %v4340, 0.0
        %v4453 = vmax.f32 %v4341, 0.0
        %v4454 = vmax.f32 %v4342, 0.0
        %v4455 = vmax.f32 %v4343, 0.0
        %v4456 = vmax.f32 %v4344, 0.0
        %v4457 = vmax.f32 %v4345, 0.0
        %v4458 = vmax.f32 %v4346, 0.0
        %v4459 = vmax.f32 %v4347, 0.0
        %v4460 = vmax.f32 %v4348, 0.0
        %v4461 = vmax.f32 %v3565, %v4349
        %v4462 = vmax.f32 %v3566, %v4350
        %v4463 = vmax.f32 %v3567, %v4351
        %v4464 = vmax.f32 %v3568, %v4352
        %v4465 = vmax.f32 %v3569, %v4353
        %v4466 = vmax.f32 %v3570, %v4354
        %v4467 = vmax.f32 %v3571, %v4355
        %v4468 = vmax.f32 %v3572, %v4356
        %v4469 = vmax.f32 %v3573, %v4357
        %v4470 = vmax.f32 %v3574, %v4358
        %v4471 = vmax.f32 %v3575, %v4359
        %v4472 = vmax.f32 %v3576, %v4360
        %v4473 = vmax.f32 %v3577, %v4361
        %v4474 = vmax.f32 %v3578, %v4362
        %v4475 = vmax.f32 %v3579, %v4363
        %v4476 = vmax.f32 %v3580, %v4364
        %v4477 = vmax.f32 %v3581, %v4365
        %v4478 = vmax.f32 %v3582, %v4366
        %v4479 = vmax.f32 %v3583, %v4367
        %v4480 = vmax.f32 %v3584, %v4368
        %v4481 = vmax.f32 %v3585, %v4369
        %v4482 = vmax.f32 %v3586, %v4370
        %v4483 = vmax.f32 %v3587, %v4371
        %v4484 = vmax.f32 %v3588, %v4372
        %v4485 = vmax.f32 %v3589, %v4373
        %v4486 = vmax.f32 %v3590, %v4374
        %v4487 = vmax.f32 %v3591, %v4375
        %v4488 = vmax.f32 %v3592, %v4376
        %v4489 = vmax.f32 %v3593, %v4377
        %v4490 = vmax.f32 %v3594, %v4378
        %v4491 = vmax.f32 %v3595, %v4379
        %v4492 = vmax.f32 %v3596, %v4380
        %v4493 = vmax.f32 %v3597, %v4381
        %v4494 = vmax.f32 %v3598, %v4382
        %v4495 = vmax.f32 %v3599, %v4383
        %v4496 = vmax.f32 %v3600, %v4384
        %v4497 = vmax.f32 %v3601, %v4385
        %v4498 = vmax.f32 %v3602, %v4386
        %v4499 = vmax.f32 %v3603, %v4387
        %v4500 = vmax.f32 %v3604, %v4388
        %v4501 = vmax.f32 %v3605, %v4389
        %v4502 = vmax.f32 %v3606, %v4390
        %v4503 = vmax.f32 %v3607, %v4391
        %v4504 = vmax.f32 %v3608, %v4392
        %v4505 = vmax.f32 %v3609, %v4393
        %v4506 = vmax.f32 %v3610, %v4394
        %v4507 = vmax.f32 %v3611, %v4395
        %v4508 = vmax.f32 %v3612, %v4396
        %v4509 = vmax.f32 %v3613, %v4397
        %v4510 = vmax.f32 %v3614, %v4398
        %v4511 = vmax.f32 %v3615, %v4399
        %v4512 = vmax.f32 %v3616, %v4400
        %v4513 = vmax.f32 %v3617, %v4401
        %v4514 = vmax.f32 %v3618, %v4402
        %v4515 = vmax.f32 %v3619, %v4403
        %v4516 = vmax.f32 %v3620, %v4404
        %v4517 = vmax.f32 %v3621, %v4405
        %v4518 = vmax.f32 %v3622, %v4406
        %v4519 = vmax.f32 %v3623, %v4407
        %v4520 = vmax.f32 %v3624, %v4408
        %v4521 = vmax.f32 %v3625, %v4409
        %v4522 = vmax.f32 %v3626, %v4410
        %v4523 = vmax.f32 %v3627, %v4411
        %v4524 = vmax.f32 %v3628, %v4412
        %v4525 = vmax.f32 %v3629, %v4413
        %v4526 = vmax.f32 %v3630, %v4414
        %v4527 = vmax.f32 %v3631, %v4415
        %v4528 = vmax.f32 %v3632, %v4416
        %v4529 = vmax.f32 %v3633, %v4417
        %v4530 = vmax.f32 %v3634, %v4418
        %v4531 = vmax.f32 %v3635, %v4419
        %v4532 = vmax.f32 %v3636, %v4420
        %v4533 = vmax.f32 %v3637, %v4421
        %v4534 = vmax.f32 %v3638, %v4422
        %v4535 = vmax.f32 %v3639, %v4423
        %v4536 = vmax.f32 %v3640, %v4424
        %v4537 = vmax.f32 %v3641, %v4425
        %v4538 = vmax.f32 %v3642, %v4426
        %v4539 = vmax.f32 %v3643, %v4427
        %v4540 = vmax.f32 %v3644, %v4428
        %v4541 = vmax.f32 %v3645, %v4429
        %v4542 = vmax.f32 %v3646, %v4430
        %v4543 = vmax.f32 %v3647, %v4431
        %v4544 = vmax.f32 %v3648, %v4432
        %v4545 = vmax.f32 %v3649, %v4433
        %v4546 = vmax.f32 %v3650, %v4434
        %v4547 = vmax.f32 %v3651, %v4435
        %v4548 = vmax.f32 %v3652, %v4436
        %v4549 = vmax.f32 %v3653, %v4437
        %v4550 = vmax.f32 %v3654, %v4438
        %v4551 = vmax.f32 %v3655, %v4439
        %v4552 = vmax.f32 %v3656, %v4440
        %v4553 = vmax.f32 %v3657, %v4441
        %v4554 = vmax.f32 %v3658, %v4442
        %v4555 = vmax.f32 %v3659, %v4443
        %v4556 = vmax.f32 %v3660, %v4444
        %v4557 = vmax.f32 %v3661, %v4445
        %v4558 = vmax.f32 %v3662, %v4446
        %v4559 = vmax.f32 %v3663, %v4447
        %v4560 = vmax.f32 %v3664, %v4448
        %v4561 = vmax.f32 %v3665, %v4449
        %v4562 = vmax.f32 %v3666, %v4450
        %v4563 = vmax.f32 %v3667, %v4451
        %v4564 = vmax.f32 %v3668, %v4452
        %v4565 = vmax.f32 %v3669, %v4453
        %v4566 = vmax.f32 %v3670, %v4454
        %v4567 = vmax.f32 %v3671, %v4455
        %v4568 = vmax.f32 %v3672, %v4456
        %v4569 = vmax.f32 %v3673, %v4457
        %v4570 = vmax.f32 %v3674, %v4458
        %v4571 = vmax.f32 %v3675, %v4459
        %v4572 = vmax.f32 %v3676, %v4460
        %v4573 = vpack.c.bf16 %v4462, %v4461
        %v4574 = vpack.c.bf16 %v4464, %v4463
        %v4575 = vpack.c.bf16 %v4466, %v4465
        %v4576 = vpack.c.bf16 %v4468, %v4467
        %v4577 = vpack.c.bf16 %v4470, %v4469
        %v4578 = vpack.c.bf16 %v4472, %v4471
        %v4579 = vpack.c.bf16 %v4474, %v4473
        %v4580 = vpack.c.bf16 %v4476, %v4475
        %v4581 = vpack.c.bf16 %v4478, %v4477
        %v4582 = vpack.c.bf16 %v4480, %v4479
        %v4583 = vpack.c.bf16 %v4482, %v4481
        %v4584 = vpack.c.bf16 %v4484, %v4483
        %v4585 = vpack.c.bf16 %v4486, %v4485
        %v4586 = vpack.c.bf16 %v4488, %v4487
        %v4587 = vpack.c.bf16 %v4490, %v4489
        %v4588 = vpack.c.bf16 %v4492, %v4491
        %v4589 = vpack.c.bf16 %v4494, %v4493
        %v4590 = vpack.c.bf16 %v4496, %v4495
        %v4591 = vpack.c.bf16 %v4498, %v4497
        %v4592 = vpack.c.bf16 %v4500, %v4499
        %v4593 = vpack.c.bf16 %v4502, %v4501
        %v4594 = vpack.c.bf16 %v4504, %v4503
        %v4595 = vpack.c.bf16 %v4506, %v4505
        %v4596 = vpack.c.bf16 %v4508, %v4507
        %v4597 = vpack.c.bf16 %v4510, %v4509
        %v4598 = vpack.c.bf16 %v4512, %v4511
        %v4599 = vpack.c.bf16 %v4514, %v4513
        %v4600 = vpack.c.bf16 %v4516, %v4515
        %v4601 = vpack.c.bf16 %v4518, %v4517
        %v4602 = vpack.c.bf16 %v4520, %v4519
        %v4603 = vpack.c.bf16 %v4522, %v4521
        %v4604 = vpack.c.bf16 %v4524, %v4523
        %v4605 = vpack.c.bf16 %v4526, %v4525
        %v4606 = vpack.c.bf16 %v4528, %v4527
        %v4607 = vpack.c.bf16 %v4530, %v4529
        %v4608 = vpack.c.bf16 %v4532, %v4531
        %v4609 = vpack.c.bf16 %v4534, %v4533
        %v4610 = vpack.c.bf16 %v4536, %v4535
        %v4611 = vpack.c.bf16 %v4538, %v4537
        %v4612 = vpack.c.bf16 %v4540, %v4539
        %v4613 = vpack.c.bf16 %v4542, %v4541
        %v4614 = vpack.c.bf16 %v4544, %v4543
        %v4615 = vpack.c.bf16 %v4546, %v4545
        %v4616 = vpack.c.bf16 %v4548, %v4547
        %v4617 = vpack.c.bf16 %v4550, %v4549
        %v4618 = vpack.c.bf16 %v4552, %v4551
        %v4619 = vpack.c.bf16 %v4554, %v4553
        %v4620 = vpack.c.bf16 %v4556, %v4555
        %v4621 = vpack.c.bf16 %v4558, %v4557
        %v4622 = vpack.c.bf16 %v4560, %v4559
        %v4623 = vpack.c.bf16 %v4562, %v4561
        %v4624 = vpack.c.bf16 %v4564, %v4563
        %v4625 = vpack.c.bf16 %v4566, %v4565
        %v4626 = vpack.c.bf16 %v4568, %v4567
        %v4627 = vpack.c.bf16 %v4570, %v4569
        %v4628 = vpack.c.bf16 %v4572, %v4571
        %v4629 = vld [vmem:[%s3] sm:$0xf]
        %v4630 = vld [vmem:[%s3 + $0x4] sm:$0xf]
        %v4631 = vld [vmem:[%s3 + $0x8] sm:$0xf]
        %v4632 = vld [vmem:[%s3 + $0xc] sm:$0xf]
        %v4633 = vld [vmem:[%s3 + $0x10] sm:$0xf]
        %v4634 = vld [vmem:[%s3 + $0x14] sm:$0xf]
        %v4635 = vld [vmem:[%s3 + $0x18] sm:$0xf]
        %v4636 = vld [vmem:[%s3 + $0x1c] sm:$0xf]
        %v4637 = vld [vmem:[%s3 + $0x20] sm:$0xf]
        %v4638 = vld [vmem:[%s3 + $0x24] sm:$0xf]
        %v4639 = vld [vmem:[%s3 + $0x28] sm:$0xf]
        %v4640 = vld [vmem:[%s3 + $0x2c] sm:$0xf]
        %v4641 = vld [vmem:[%s3 + $0x30] sm:$0xf]
        %v4642 = vld [vmem:[%s3 + $0x34] sm:$0xf]
        %v4643 = vld [vmem:[%s3 + $0x38] sm:$0xf]
        %v4644 = vld [vmem:[%s3 + $0x3c] sm:$0xf]
        %v4645 = vld [vmem:[%s4] sm:$0xf]
        %v4646 = vld [vmem:[%s4 + $0x4] sm:$0xf]
        %v4647 = vld [vmem:[%s4 + $0x8] sm:$0xf]
        %v4648 = vld [vmem:[%s4 + $0xc] sm:$0xf]
        %v4649 = vld [vmem:[%s4 + $0x10] sm:$0xf]
        %v4650 = vld [vmem:[%s4 + $0x14] sm:$0xf]
        %v4651 = vld [vmem:[%s4 + $0x18] sm:$0xf]
        %v4652 = vld [vmem:[%s4 + $0x1c] sm:$0xf]
        %v4653 = vld [vmem:[%s4 + $0x20] sm:$0xf]
        %v4654 = vld [vmem:[%s4 + $0x24] sm:$0xf]
        %v4655 = vld [vmem:[%s4 + $0x28] sm:$0xf]
        %v4656 = vld [vmem:[%s4 + $0x2c] sm:$0xf]
        %v4657 = vld [vmem:[%s4 + $0x30] sm:$0xf]
        %v4658 = vld [vmem:[%s4 + $0x34] sm:$0xf]
        %v4659 = vld [vmem:[%s4 + $0x38] sm:$0xf]
        %v4660 = vld [vmem:[%s4 + $0x3c] sm:$0xf]
        %v4677 = vunpack.c.l.b16 %v4645
        %v4678 = vunpack.c.l.b16 %v4646
        %v4679 = vunpack.c.l.b16 %v4647
        %v4680 = vunpack.c.l.b16 %v4648
        %v4681 = vunpack.c.l.b16 %v4649
        %v4682 = vunpack.c.l.b16 %v4650
        %v4683 = vunpack.c.l.b16 %v4651
        %v4684 = vunpack.c.l.b16 %v4652
        %v4685 = vunpack.c.l.b16 %v4653
        %v4686 = vunpack.c.l.b16 %v4654
        %v4687 = vunpack.c.l.b16 %v4655
        %v4688 = vunpack.c.l.b16 %v4656
        %v4689 = vunpack.c.l.b16 %v4657
        %v4690 = vunpack.c.l.b16 %v4658
        %v4691 = vunpack.c.l.b16 %v4659
        %v4692 = vunpack.c.l.b16 %v4660
        %v4693 = vpack.c.b16 %v4678, %v4677
        %v4694 = vpack.c.b16 %v4680, %v4679
        %v4695 = vpack.c.b16 %v4682, %v4681
        %v4696 = vpack.c.b16 %v4684, %v4683
        %v4697 = vpack.c.b16 %v4686, %v4685
        %v4698 = vpack.c.b16 %v4688, %v4687
        %v4699 = vpack.c.b16 %v4690, %v4689
        %v4700 = vpack.c.b16 %v4692, %v4691
        %4709 = vmatprep.subr.bf16.mxu0 0
        %4710 = vmatpush1.bf16.msra.mxu0 %v4693
        %4711 = vmatprep.subr.bf16.mxu0 0
        %4712 = vmatpush1.bf16.msra.mxu0 %v4694
        %4713 = vmatprep.subr.bf16.mxu0 0
        %4714 = vmatpush1.bf16.msra.mxu0 %v4695
        %4715 = vmatprep.subr.bf16.mxu0 0
        %4716 = vmatpush1.bf16.msra.mxu0 %v4696
        %4717 = vmatprep.subr.bf16.mxu0 0
        %4718 = vmatpush1.bf16.msra.mxu0 %v4697
        %4719 = vmatprep.subr.bf16.mxu0 0
        %4720 = vmatpush1.bf16.msra.mxu0 %v4698
        %4721 = vmatprep.subr.bf16.mxu0 0
        %4722 = vmatpush1.bf16.msra.mxu0 %v4699
        %4723 = vmatprep.subr.bf16.mxu0 0
        %4724 = vmatpush1.bf16.msra.mxu0 %v4700
        %4725 = vmatprep.subr.bf16.mxu0 0
        %4726 = vmatpush1.bf16.msra.mxu0 0
        %4727 = vmatprep.subr.bf16.mxu0 0
        %4728 = vmatpush1.bf16.msra.mxu0 0
        %4729 = vmatprep.subr.bf16.mxu0 0
        %4730 = vmatpush1.bf16.msra.mxu0 0
        %4731 = vmatprep.subr.bf16.mxu0 0
        %4732 = vmatpush1.bf16.msra.mxu0 0
        %4733 = vmatprep.subr.bf16.mxu0 0
        %4734 = vmatpush1.bf16.msra.mxu0 0
        %4735 = vmatprep.subr.bf16.mxu0 0
        %4736 = vmatpush1.bf16.msra.mxu0 0
        %4737 = vmatprep.subr.bf16.mxu0 0
        %4738 = vmatpush1.bf16.msra.mxu0 0
        %4739 = vmatprep.subr.bf16.mxu0 0
        %4740 = vmatpush1.bf16.msra.mxu0 0
        %4741 = vmatprep.mubr.bf16.mxu0 0
        %4742 = vmatmul.mubr.bf16.gmra.mrb[0].mxu0 %v4581
        %v4743 = vpop.f32.mrb[0].mxu0
        %v4744 = vadd.f32 0.0, %v4743
        %v4745 = vpop.f32.mrb[0].mxu0
        %v4746 = vpop.f32.mrb[0].mxu0
        %v4747 = vadd.f32 0.0, %v4746
        %v4748 = vpop.f32.mrb[0].mxu0
        %4749 = vmatprep.mubr.bf16.mxu0 0
        %4750 = vmatmul.mubr.bf16.gmra.mrb[0].mxu0 %v4582
        %v4751 = vpop.f32.mrb[0].mxu0
        %v4752 = vadd.f32 0.0, %v4751
        %v4753 = vpop.f32.mrb[0].mxu0
        %v4754 = vpop.f32.mrb[0].mxu0
        %v4755 = vadd.f32 0.0, %v4754
        %v4756 = vpop.f32.mrb[0].mxu0
        %4757 = vmatprep.mubr.bf16.mxu0 0
        %4758 = vmatmul.mubr.bf16.gmra.mrb[0].mxu0 %v4583
        %v4759 = vpop.f32.mrb[0].mxu0
        %v4760 = vadd.f32 0.0, %v4759
        %v4761 = vpop.f32.mrb[0].mxu0
        %v4762 = vpop.f32.mrb[0].mxu0
        %v4763 = vadd.f32 0.0, %v4762
        %v4764 = vpop.f32.mrb[0].mxu0
        %4765 = vmatprep.mubr.bf16.mxu0 0
        %4766 = vmatmul.mubr.bf16.gmra.mrb[0].mxu0 %v4584
        %v4767 = vpop.f32.mrb[0].mxu0
        %v4768 = vadd.f32 0.0, %v4767
        %v4769 = vpop.f32.mrb[0].mxu0
        %v4770 = vpop.f32.mrb[0].mxu0
        %v4771 = vadd.f32 0.0, %v4770
        %v4772 = vpop.f32.mrb[0].mxu0
        %4773 = vmatprep.mubr.bf16.mxu0 0
        %4774 = vmatmul.mubr.bf16.gmra.mrb[0].mxu0 %v4585
        %v4775 = vpop.f32.mrb[0].mxu0
        %v4776 = vadd.f32 0.0, %v4775
        %v4777 = vpop.f32.mrb[0].mxu0
        %v4778 = vpop.f32.mrb[0].mxu0
        %v4779 = vadd.f32 0.0, %v4778
        %v4780 = vpop.f32.mrb[0].mxu0
        %4781 = vmatprep.mubr.bf16.mxu0 0
        %4782 = vmatmul.mubr.bf16.gmra.mrb[0].mxu0 %v4586
        %v4783 = vpop.f32.mrb[0].mxu0
        %v4784 = vadd.f32 0.0, %v4783
        %v4785 = vpop.f32.mrb[0].mxu0
        %v4786 = vpop.f32.mrb[0].mxu0
        %v4787 = vadd.f32 0.0, %v4786
        %v4788 = vpop.f32.mrb[0].mxu0
        %4789 = vmatprep.mubr.bf16.mxu0 0
        %4790 = vmatmul.mubr.bf16.gmra.mrb[0].mxu0 %v4587
        %v4791 = vpop.f32.mrb[0].mxu0
        %v4792 = vadd.f32 0.0, %v4791
        %v4793 = vpop.f32.mrb[0].mxu0
        %v4794 = vpop.f32.mrb[0].mxu0
        %v4795 = vadd.f32 0.0, %v4794
        %v4796 = vpop.f32.mrb[0].mxu0
        %4797 = vmatprep.mubr.bf16.mxu0 0
        %4798 = vmatmul.mubr.bf16.gmra.mrb[0].mxu0 %v4588
        %v4799 = vpop.f32.mrb[0].mxu0
        %v4800 = vadd.f32 0.0, %v4799
        %v4801 = vpop.f32.mrb[0].mxu0
        %v4802 = vpop.f32.mrb[0].mxu0
        %v4803 = vadd.f32 0.0, %v4802
        %v4804 = vpop.f32.mrb[0].mxu0
        %4805 = vdwg.mxu0
        %4806 = vmatprep.subr.bf16.mxu0 0
        %4807 = vmatpush1.bf16.msra.mxu0 %v4693
        %4808 = vmatprep.subr.bf16.mxu0 0
        %4809 = vmatpush1.bf16.msra.mxu0 %v4694
        %4810 = vmatprep.subr.bf16.mxu0 0
        %4811 = vmatpush1.bf16.msra.mxu0 %v4695
        %4812 = vmatprep.subr.bf16.mxu0 0
        %4813 = vmatpush1.bf16.msra.mxu0 %v4696
        %4814 = vmatprep.subr.bf16.mxu0 0
        %4815 = vmatpush1.bf16.msra.mxu0 %v4697
        %4816 = vmatprep.subr.bf16.mxu0 0
        %4817 = vmatpush1.bf16.msra.mxu0 %v4698
        %4818 = vmatprep.subr.bf16.mxu0 0
        %4819 = vmatpush1.bf16.msra.mxu0 %v4699
        %4820 = vmatprep.subr.bf16.mxu0 0
        %4821 = vmatpush1.bf16.msra.mxu0 %v4700
        %4822 = vmatprep.subr.bf16.mxu0 0
        %4823 = vmatpush1.bf16.msra.mxu0 0
        %4824 = vmatprep.subr.bf16.mxu0 0
        %4825 = vmatpush1.bf16.msra.mxu0 0
        %4826 = vmatprep.subr.bf16.mxu0 0
        %4827 = vmatpush1.bf16.msra.mxu0 0
        %4828 = vmatprep.subr.bf16.mxu0 0
        %4829 = vmatpush1.bf16.msra.mxu0 0
        %4830 = vmatprep.subr.bf16.mxu0 0
        %4831 = vmatpush1.bf16.msra.mxu0 0
        %4832 = vmatprep.subr.bf16.mxu0 0
        %4833 = vmatpush1.bf16.msra.mxu0 0
        %4834 = vmatprep.subr.bf16.mxu0 0
        %4835 = vmatpush1.bf16.msra.mxu0 0
        %4836 = vmatprep.subr.bf16.mxu0 0
        %4837 = vmatpush1.bf16.msra.mxu0 0
        %4838 = vmatprep.mubr.bf16.mxu0 0
        %4839 = vmatmul.mubr.bf16.gmra.mrb[0].mxu0 %v4589
        %v4840 = vpop.f32.mrb[0].mxu0
        %v4841 = vadd.f32 0.0, %v4840
        %v4842 = vpop.f32.mrb[0].mxu0
        %v4843 = vpop.f32.mrb[0].mxu0
        %v4844 = vadd.f32 0.0, %v4843
        %v4845 = vpop.f32.mrb[0].mxu0
        %4846 = vmatprep.mubr.bf16.mxu0 0
        %4847 = vmatmul.mubr.bf16.gmra.mrb[0].mxu0 %v4590
        %v4848 = vpop.f32.mrb[0].mxu0
        %v4849 = vadd.f32 0.0, %v4848
        %v4850 = vpop.f32.mrb[0].mxu0
        %v4851 = vpop.f32.mrb[0].mxu0
        %v4852 = vadd.f32 0.0, %v4851
        %v4853 = vpop.f32.mrb[0].mxu0
        %4854 = vmatprep.mubr.bf16.mxu0 0
        %4855 = vmatmul.mubr.bf16.gmra.mrb[0].mxu0 %v4591
        %v4856 = vpop.f32.mrb[0].mxu0
        %v4857 = vadd.f32 0.0, %v4856
        %v4858 = vpop.f32.mrb[0].mxu0
        %v4859 = vpop.f32.mrb[0].mxu0
        %v4860 = vadd.f32 0.0, %v4859
        %v4861 = vpop.f32.mrb[0].mxu0
        %4862 = vmatprep.mubr.bf16.mxu0 0
        %4863 = vmatmul.mubr.bf16.gmra.mrb[0].mxu0 %v4592
        %v4864 = vpop.f32.mrb[0].mxu0
        %v4865 = vadd.f32 0.0, %v4864
        %v4866 = vpop.f32.mrb[0].mxu0
        %v4867 = vpop.f32.mrb[0].mxu0
        %v4868 = vadd.f32 0.0, %v4867
        %v4869 = vpop.f32.mrb[0].mxu0
        %4870 = vmatprep.mubr.bf16.mxu0 0
        %4871 = vmatmul.mubr.bf16.gmra.mrb[0].mxu0 %v4593
        %v4872 = vpop.f32.mrb[0].mxu0
        %v4873 = vadd.f32 0.0, %v4872
        %v4874 = vpop.f32.mrb[0].mxu0
        %v4875 = vpop.f32.mrb[0].mxu0
        %v4876 = vadd.f32 0.0, %v4875
        %v4877 = vpop.f32.mrb[0].mxu0
        %4878 = vmatprep.mubr.bf16.mxu0 0
        %4879 = vmatmul.mubr.bf16.gmra.mrb[0].mxu0 %v4594
        %v4880 = vpop.f32.mrb[0].mxu0
        %v4881 = vadd.f32 0.0, %v4880
        %v4882 = vpop.f32.mrb[0].mxu0
        %v4883 = vpop.f32.mrb[0].mxu0
        %v4884 = vadd.f32 0.0, %v4883
        %v4885 = vpop.f32.mrb[0].mxu0
        %4886 = vmatprep.mubr.bf16.mxu0 0
        %4887 = vmatmul.mubr.bf16.gmra.mrb[0].mxu0 %v4595
        %v4888 = vpop.f32.mrb[0].mxu0
        %v4889 = vadd.f32 0.0, %v4888
        %v4890 = vpop.f32.mrb[0].mxu0
        %v4891 = vpop.f32.mrb[0].mxu0
        %v4892 = vadd.f32 0.0, %v4891
        %v4893 = vpop.f32.mrb[0].mxu0
        %4894 = vmatprep.mubr.bf16.mxu0 0
        %4895 = vmatmul.mubr.bf16.gmra.mrb[0].mxu0 %v4596
        %v4896 = vpop.f32.mrb[0].mxu0
        %v4897 = vadd.f32 0.0, %v4896
        %v4898 = vpop.f32.mrb[0].mxu0
        %v4899 = vpop.f32.mrb[0].mxu0
        %v4900 = vadd.f32 0.0, %v4899
        %v4901 = vpop.f32.mrb[0].mxu0
        %4902 = vdwg.mxu0
        %4903 = vmatprep.subr.bf16.mxu0 0
        %4904 = vmatpush1.bf16.msra.mxu0 %v4693
        %4905 = vmatprep.subr.bf16.mxu0 0
        %4906 = vmatpush1.bf16.msra.mxu0 %v4694
        %4907 = vmatprep.subr.bf16.mxu0 0
        %4908 = vmatpush1.bf16.msra.mxu0 %v4695
        %4909 = vmatprep.subr.bf16.mxu0 0
        %4910 = vmatpush1.bf16.msra.mxu0 %v4696
        %4911 = vmatprep.subr.bf16.mxu0 0
        %4912 = vmatpush1.bf16.msra.mxu0 %v4697
        %4913 = vmatprep.subr.bf16.mxu0 0
        %4914 = vmatpush1.bf16.msra.mxu0 %v4698
        %4915 = vmatprep.subr.bf16.mxu0 0
        %4916 = vmatpush1.bf16.msra.mxu0 %v4699
        %4917 = vmatprep.subr.bf16.mxu0 0
        %4918 = vmatpush1.bf16.msra.mxu0 %v4700
        %4919 = vmatprep.subr.bf16.mxu0 0
        %4920 = vmatpush1.bf16.msra.mxu0 0
        %4921 = vmatprep.subr.bf16.mxu0 0
        %4922 = vmatpush1.bf16.msra.mxu0 0
        %4923 = vmatprep.subr.bf16.mxu0 0
        %4924 = vmatpush1.bf16.msra.mxu0 0
        %4925 = vmatprep.subr.bf16.mxu0 0
        %4926 = vmatpush1.bf16.msra.mxu0 0
        %4927 = vmatprep.subr.bf16.mxu0 0
        %4928 = vmatpush1.bf16.msra.mxu0 0
        %4929 = vmatprep.subr.bf16.mxu0 0
        %4930 = vmatpush1.bf16.msra.mxu0 0
        %4931 = vmatprep.subr.bf16.mxu0 0
        %4932 = vmatpush1.bf16.msra.mxu0 0
        %4933 = vmatprep.subr.bf16.mxu0 0
        %4934 = vmatpush1.bf16.msra.mxu0 0
        %4935 = vmatprep.mubr.bf16.mxu0 0
        %4936 = vmatmul.mubr.bf16.gmra.mrb[0].mxu0 %v4597
        %v4937 = vpop.f32.mrb[0].mxu0
        %v4938 = vadd.f32 0.0, %v4937
        %v4939 = vpop.f32.mrb[0].mxu0
        %v4940 = vpop.f32.mrb[0].mxu0
        %v4941 = vadd.f32 0.0, %v4940
        %v4942 = vpop.f32.mrb[0].mxu0
        %4943 = vmatprep.mubr.bf16.mxu0 0
        %4944 = vmatmul.mubr.bf16.gmra.mrb[0].mxu0 %v4598
        %v4945 = vpop.f32.mrb[0].mxu0
        %v4946 = vadd.f32 0.0, %v4945
        %v4947 = vpop.f32.mrb[0].mxu0
        %v4948 = vpop.f32.mrb[0].mxu0
        %v4949 = vadd.f32 0.0, %v4948
        %v4950 = vpop.f32.mrb[0].mxu0
        %4951 = vmatprep.mubr.bf16.mxu0 0
        %4952 = vmatmul.mubr.bf16.gmra.mrb[0].mxu0 %v4599
        %v4953 = vpop.f32.mrb[0].mxu0
        %v4954 = vadd.f32 0.0, %v4953
        %v4955 = vpop.f32.mrb[0].mxu0
        %v4956 = vpop.f32.mrb[0].mxu0
        %v4957 = vadd.f32 0.0, %v4956
        %v4958 = vpop.f32.mrb[0].mxu0
        %4959 = vmatprep.mubr.bf16.mxu0 0
        %4960 = vmatmul.mubr.bf16.gmra.mrb[0].mxu0 %v4600
        %v4961 = vpop.f32.mrb[0].mxu0
        %v4962 = vadd.f32 0.0, %v4961
        %v4963 = vpop.f32.mrb[0].mxu0
        %v4964 = vpop.f32.mrb[0].mxu0
        %v4965 = vadd.f32 0.0, %v4964
        %v4966 = vpop.f32.mrb[0].mxu0
        %4967 = vmatprep.mubr.bf16.mxu0 0
        %4968 = vmatmul.mubr.bf16.gmra.mrb[0].mxu0 %v4601
        %v4969 = vpop.f32.mrb[0].mxu0
        %v4970 = vadd.f32 0.0, %v4969
        %v4971 = vpop.f32.mrb[0].mxu0
        %v4972 = vpop.f32.mrb[0].mxu0
        %v4973 = vadd.f32 0.0, %v4972
        %v4974 = vpop.f32.mrb[0].mxu0
        %4975 = vmatprep.mubr.bf16.mxu0 0
        %4976 = vmatmul.mubr.bf16.gmra.mrb[0].mxu0 %v4602
        %v4977 = vpop.f32.mrb[0].mxu0
        %v4978 = vadd.f32 0.0, %v4977
        %v4979 = vpop.f32.mrb[0].mxu0
        %v4980 = vpop.f32.mrb[0].mxu0
        %v4981 = vadd.f32 0.0, %v4980
        %v4982 = vpop.f32.mrb[0].mxu0
        %4983 = vmatprep.mubr.bf16.mxu0 0
        %4984 = vmatmul.mubr.bf16.gmra.mrb[0].mxu0 %v4603
        %v4985 = vpop.f32.mrb[0].mxu0
        %v4986 = vadd.f32 0.0, %v4985
        %v4987 = vpop.f32.mrb[0].mxu0
        %v4988 = vpop.f32.mrb[0].mxu0
        %v4989 = vadd.f32 0.0, %v4988
        %v4990 = vpop.f32.mrb[0].mxu0
        %4991 = vmatprep.mubr.bf16.mxu0 0
        %4992 = vmatmul.mubr.bf16.gmra.mrb[0].mxu0 %v4604
        %v4993 = vpop.f32.mrb[0].mxu0
        %v4994 = vadd.f32 0.0, %v4993
        %v4995 = vpop.f32.mrb[0].mxu0
        %v4996 = vpop.f32.mrb[0].mxu0
        %v4997 = vadd.f32 0.0, %v4996
        %v4998 = vpop.f32.mrb[0].mxu0
        %4999 = vdwg.mxu0
        %5000 = vmatprep.subr.bf16.mxu0 0
        %5001 = vmatpush1.bf16.msra.mxu0 %v4693
        %5002 = vmatprep.subr.bf16.mxu0 0
        %5003 = vmatpush1.bf16.msra.mxu0 %v4694
        %5004 = vmatprep.subr.bf16.mxu0 0
        %5005 = vmatpush1.bf16.msra.mxu0 %v4695
        %5006 = vmatprep.subr.bf16.mxu0 0
        %5007 = vmatpush1.bf16.msra.mxu0 %v4696
        %5008 = vmatprep.subr.bf16.mxu0 0
        %5009 = vmatpush1.bf16.msra.mxu0 %v4697
        %5010 = vmatprep.subr.bf16.mxu0 0
        %5011 = vmatpush1.bf16.msra.mxu0 %v4698
        %5012 = vmatprep.subr.bf16.mxu0 0
        %5013 = vmatpush1.bf16.msra.mxu0 %v4699
        %5014 = vmatprep.subr.bf16.mxu0 0
        %5015 = vmatpush1.bf16.msra.mxu0 %v4700
        %5016 = vmatprep.subr.bf16.mxu0 0
        %5017 = vmatpush1.bf16.msra.mxu0 0
        %5018 = vmatprep.subr.bf16.mxu0 0
        %5019 = vmatpush1.bf16.msra.mxu0 0
        %5020 = vmatprep.subr.bf16.mxu0 0
        %5021 = vmatpush1.bf16.msra.mxu0 0
        %5022 = vmatprep.subr.bf16.mxu0 0
        %5023 = vmatpush1.bf16.msra.mxu0 0
        %5024 = vmatprep.subr.bf16.mxu0 0
        %5025 = vmatpush1.bf16.msra.mxu0 0
        %5026 = vmatprep.subr.bf16.mxu0 0
        %5027 = vmatpush1.bf16.msra.mxu0 0
        %5028 = vmatprep.subr.bf16.mxu0 0
        %5029 = vmatpush1.bf16.msra.mxu0 0
        %5030 = vmatprep.subr.bf16.mxu0 0
        %5031 = vmatpush1.bf16.msra.mxu0 0
        %5032 = vmatprep.mubr.bf16.mxu0 0
        %5033 = vmatmul.mubr.bf16.gmra.mrb[0].mxu0 %v4605
        %v5034 = vpop.f32.mrb[0].mxu0
        %v5035 = vadd.f32 0.0, %v5034
        %v5036 = vpop.f32.mrb[0].mxu0
        %v5037 = vpop.f32.mrb[0].mxu0
        %v5038 = vadd.f32 0.0, %v5037
        %v5039 = vpop.f32.mrb[0].mxu0
        %5040 = vmatprep.mubr.bf16.mxu0 0
        %5041 = vmatmul.mubr.bf16.gmra.mrb[0].mxu0 %v4606
        %v5042 = vpop.f32.mrb[0].mxu0
        %v5043 = vadd.f32 0.0, %v5042
        %v5044 = vpop.f32.mrb[0].mxu0
        %v5045 = vpop.f32.mrb[0].mxu0
        %v5046 = vadd.f32 0.0, %v5045
        %v5047 = vpop.f32.mrb[0].mxu0
        %5048 = vmatprep.mubr.bf16.mxu0 0
        %5049 = vmatmul.mubr.bf16.gmra.mrb[0].mxu0 %v4607
        %v5050 = vpop.f32.mrb[0].mxu0
        %v5051 = vadd.f32 0.0, %v5050
        %v5052 = vpop.f32.mrb[0].mxu0
        %v5053 = vpop.f32.mrb[0].mxu0
        %v5054 = vadd.f32 0.0, %v5053
        %v5055 = vpop.f32.mrb[0].mxu0
        %5056 = vmatprep.mubr.bf16.mxu0 0
        %5057 = vmatmul.mubr.bf16.gmra.mrb[0].mxu0 %v4608
        %v5058 = vpop.f32.mrb[0].mxu0
        %v5059 = vadd.f32 0.0, %v5058
        %v5060 = vpop.f32.mrb[0].mxu0
        %v5061 = vpop.f32.mrb[0].mxu0
        %v5062 = vadd.f32 0.0, %v5061
        %v5063 = vpop.f32.mrb[0].mxu0
        %5064 = vmatprep.mubr.bf16.mxu0 0
        %5065 = vmatmul.mubr.bf16.gmra.mrb[0].mxu0 %v4609
        %v5066 = vpop.f32.mrb[0].mxu0
        %v5067 = vadd.f32 0.0, %v5066
        %v5068 = vpop.f32.mrb[0].mxu0
        %v5069 = vpop.f32.mrb[0].mxu0
        %v5070 = vadd.f32 0.0, %v5069
        %v5071 = vpop.f32.mrb[0].mxu0
        %5072 = vmatprep.mubr.bf16.mxu0 0
        %5073 = vmatmul.mubr.bf16.gmra.mrb[0].mxu0 %v4610
        %v5074 = vpop.f32.mrb[0].mxu0
        %v5075 = vadd.f32 0.0, %v5074
        %v5076 = vpop.f32.mrb[0].mxu0
        %v5077 = vpop.f32.mrb[0].mxu0
        %v5078 = vadd.f32 0.0, %v5077
        %v5079 = vpop.f32.mrb[0].mxu0
        %5080 = vmatprep.mubr.bf16.mxu0 0
        %5081 = vmatmul.mubr.bf16.gmra.mrb[0].mxu0 %v4611
        %v5082 = vpop.f32.mrb[0].mxu0
        %v5083 = vadd.f32 0.0, %v5082
        %v5084 = vpop.f32.mrb[0].mxu0
        %v5085 = vpop.f32.mrb[0].mxu0
        %v5086 = vadd.f32 0.0, %v5085
        %v5087 = vpop.f32.mrb[0].mxu0
        %5088 = vmatprep.mubr.bf16.mxu0 0
        %5089 = vmatmul.mubr.bf16.gmra.mrb[0].mxu0 %v4612
        %v5090 = vpop.f32.mrb[0].mxu0
        %v5091 = vadd.f32 0.0, %v5090
        %v5092 = vpop.f32.mrb[0].mxu0
        %v5093 = vpop.f32.mrb[0].mxu0
        %v5094 = vadd.f32 0.0, %v5093
        %v5095 = vpop.f32.mrb[0].mxu0
        %5096 = vdwg.mxu0
        %5097 = vmatprep.subr.bf16.mxu0 0
        %5098 = vmatpush1.bf16.msra.mxu0 %v4693
        %5099 = vmatprep.subr.bf16.mxu0 0
        %5100 = vmatpush1.bf16.msra.mxu0 %v4694
        %5101 = vmatprep.subr.bf16.mxu0 0
        %5102 = vmatpush1.bf16.msra.mxu0 %v4695
        %5103 = vmatprep.subr.bf16.mxu0 0
        %5104 = vmatpush1.bf16.msra.mxu0 %v4696
        %5105 = vmatprep.subr.bf16.mxu0 0
        %5106 = vmatpush1.bf16.msra.mxu0 %v4697
        %5107 = vmatprep.subr.bf16.mxu0 0
        %5108 = vmatpush1.bf16.msra.mxu0 %v4698
        %5109 = vmatprep.subr.bf16.mxu0 0
        %5110 = vmatpush1.bf16.msra.mxu0 %v4699
        %5111 = vmatprep.subr.bf16.mxu0 0
        %5112 = vmatpush1.bf16.msra.mxu0 %v4700
        %5113 = vmatprep.subr.bf16.mxu0 0
        %5114 = vmatpush1.bf16.msra.mxu0 0
        %5115 = vmatprep.subr.bf16.mxu0 0
        %5116 = vmatpush1.bf16.msra.mxu0 0
        %5117 = vmatprep.subr.bf16.mxu0 0
        %5118 = vmatpush1.bf16.msra.mxu0 0
        %5119 = vmatprep.subr.bf16.mxu0 0
        %5120 = vmatpush1.bf16.msra.mxu0 0
        %5121 = vmatprep.subr.bf16.mxu0 0
        %5122 = vmatpush1.bf16.msra.mxu0 0
        %5123 = vmatprep.subr.bf16.mxu0 0
        %5124 = vmatpush1.bf16.msra.mxu0 0
        %5125 = vmatprep.subr.bf16.mxu0 0
        %5126 = vmatpush1.bf16.msra.mxu0 0
        %5127 = vmatprep.subr.bf16.mxu0 0
        %5128 = vmatpush1.bf16.msra.mxu0 0
        %5129 = vmatprep.mubr.bf16.mxu0 0
        %5130 = vmatmul.mubr.bf16.gmra.mrb[0].mxu0 %v4613
        %v5131 = vpop.f32.mrb[0].mxu0
        %v5132 = vadd.f32 0.0, %v5131
        %v5133 = vpop.f32.mrb[0].mxu0
        %v5134 = vpop.f32.mrb[0].mxu0
        %v5135 = vadd.f32 0.0, %v5134
        %v5136 = vpop.f32.mrb[0].mxu0
        %5137 = vmatprep.mubr.bf16.mxu0 0
        %5138 = vmatmul.mubr.bf16.gmra.mrb[0].mxu0 %v4614
        %v5139 = vpop.f32.mrb[0].mxu0
        %v5140 = vadd.f32 0.0, %v5139
        %v5141 = vpop.f32.mrb[0].mxu0
        %v5142 = vpop.f32.mrb[0].mxu0
        %v5143 = vadd.f32 0.0, %v5142
        %v5144 = vpop.f32.mrb[0].mxu0
        %5145 = vmatprep.mubr.bf16.mxu0 0
        %5146 = vmatmul.mubr.bf16.gmra.mrb[0].mxu0 %v4615
        %v5147 = vpop.f32.mrb[0].mxu0
        %v5148 = vadd.f32 0.0, %v5147
        %v5149 = vpop.f32.mrb[0].mxu0
        %v5150 = vpop.f32.mrb[0].mxu0
        %v5151 = vadd.f32 0.0, %v5150
        %v5152 = vpop.f32.mrb[0].mxu0
        %5153 = vmatprep.mubr.bf16.mxu0 0
        %5154 = vmatmul.mubr.bf16.gmra.mrb[0].mxu0 %v4616
        %v5155 = vpop.f32.mrb[0].mxu0
        %v5156 = vadd.f32 0.0, %v5155
        %v5157 = vpop.f32.mrb[0].mxu0
        %v5158 = vpop.f32.mrb[0].mxu0
        %v5159 = vadd.f32 0.0, %v5158
        %v5160 = vpop.f32.mrb[0].mxu0
        %5161 = vmatprep.mubr.bf16.mxu0 0
        %5162 = vmatmul.mubr.bf16.gmra.mrb[0].mxu0 %v4617
        %v5163 = vpop.f32.mrb[0].mxu0
        %v5164 = vadd.f32 0.0, %v5163
        %v5165 = vpop.f32.mrb[0].mxu0
        %v5166 = vpop.f32.mrb[0].mxu0
        %v5167 = vadd.f32 0.0, %v5166
        %v5168 = vpop.f32.mrb[0].mxu0
        %5169 = vmatprep.mubr.bf16.mxu0 0
        %5170 = vmatmul.mubr.bf16.gmra.mrb[0].mxu0 %v4618
        %v5171 = vpop.f32.mrb[0].mxu0
        %v5172 = vadd.f32 0.0, %v5171
        %v5173 = vpop.f32.mrb[0].mxu0
        %v5174 = vpop.f32.mrb[0].mxu0
        %v5175 = vadd.f32 0.0, %v5174
        %v5176 = vpop.f32.mrb[0].mxu0
        %5177 = vmatprep.mubr.bf16.mxu0 0
        %5178 = vmatmul.mubr.bf16.gmra.mrb[0].mxu0 %v4619
        %v5179 = vpop.f32.mrb[0].mxu0
        %v5180 = vadd.f32 0.0, %v5179
        %v5181 = vpop.f32.mrb[0].mxu0
        %v5182 = vpop.f32.mrb[0].mxu0
        %v5183 = vadd.f32 0.0, %v5182
        %v5184 = vpop.f32.mrb[0].mxu0
        %5185 = vmatprep.mubr.bf16.mxu0 0
        %5186 = vmatmul.mubr.bf16.gmra.mrb[0].mxu0 %v4620
        %v5187 = vpop.f32.mrb[0].mxu0
        %v5188 = vadd.f32 0.0, %v5187
        %v5189 = vpop.f32.mrb[0].mxu0
        %v5190 = vpop.f32.mrb[0].mxu0
        %v5191 = vadd.f32 0.0, %v5190
        %v5192 = vpop.f32.mrb[0].mxu0
        %5193 = vdwg.mxu0
        %5194 = vmatprep.subr.bf16.mxu0 0
        %5195 = vmatpush1.bf16.msra.mxu0 %v4693
        %5196 = vmatprep.subr.bf16.mxu0 0
        %5197 = vmatpush1.bf16.msra.mxu0 %v4694
        %5198 = vmatprep.subr.bf16.mxu0 0
        %5199 = vmatpush1.bf16.msra.mxu0 %v4695
        %5200 = vmatprep.subr.bf16.mxu0 0
        %5201 = vmatpush1.bf16.msra.mxu0 %v4696
        %5202 = vmatprep.subr.bf16.mxu0 0
        %5203 = vmatpush1.bf16.msra.mxu0 %v4697
        %5204 = vmatprep.subr.bf16.mxu0 0
        %5205 = vmatpush1.bf16.msra.mxu0 %v4698
        %5206 = vmatprep.subr.bf16.mxu0 0
        %5207 = vmatpush1.bf16.msra.mxu0 %v4699
        %5208 = vmatprep.subr.bf16.mxu0 0
        %5209 = vmatpush1.bf16.msra.mxu0 %v4700
        %5210 = vmatprep.subr.bf16.mxu0 0
        %5211 = vmatpush1.bf16.msra.mxu0 0
        %5212 = vmatprep.subr.bf16.mxu0 0
        %5213 = vmatpush1.bf16.msra.mxu0 0
        %5214 = vmatprep.subr.bf16.mxu0 0
        %5215 = vmatpush1.bf16.msra.mxu0 0
        %5216 = vmatprep.subr.bf16.mxu0 0
        %5217 = vmatpush1.bf16.msra.mxu0 0
        %5218 = vmatprep.subr.bf16.mxu0 0
        %5219 = vmatpush1.bf16.msra.mxu0 0
        %5220 = vmatprep.subr.bf16.mxu0 0
        %5221 = vmatpush1.bf16.msra.mxu0 0
        %5222 = vmatprep.subr.bf16.mxu0 0
        %5223 = vmatpush1.bf16.msra.mxu0 0
        %5224 = vmatprep.subr.bf16.mxu0 0
        %5225 = vmatpush1.bf16.msra.mxu0 0
        %5226 = vmatprep.mubr.bf16.mxu0 0
        %5227 = vmatmul.mubr.bf16.gmra.mrb[0].mxu0 %v4621
        %v5228 = vpop.f32.mrb[0].mxu0
        %v5229 = vadd.f32 0.0, %v5228
        %v5230 = vpop.f32.mrb[0].mxu0
        %v5231 = vpop.f32.mrb[0].mxu0
        %v5232 = vadd.f32 0.0, %v5231
        %v5233 = vpop.f32.mrb[0].mxu0
        %5234 = vmatprep.mubr.bf16.mxu0 0
        %5235 = vmatmul.mubr.bf16.gmra.mrb[0].mxu0 %v4622
        %v5236 = vpop.f32.mrb[0].mxu0
        %v5237 = vadd.f32 0.0, %v5236
        %v5238 = vpop.f32.mrb[0].mxu0
        %v5239 = vpop.f32.mrb[0].mxu0
        %v5240 = vadd.f32 0.0, %v5239
        %v5241 = vpop.f32.mrb[0].mxu0
        %5242 = vmatprep.mubr.bf16.mxu0 0
        %5243 = vmatmul.mubr.bf16.gmra.mrb[0].mxu0 %v4623
        %v5244 = vpop.f32.mrb[0].mxu0
        %v5245 = vadd.f32 0.0, %v5244
        %v5246 = vpop.f32.mrb[0].mxu0
        %v5247 = vpop.f32.mrb[0].mxu0
        %v5248 = vadd.f32 0.0, %v5247
        %v5249 = vpop.f32.mrb[0].mxu0
        %5250 = vmatprep.mubr.bf16.mxu0 0
        %5251 = vmatmul.mubr.bf16.gmra.mrb[0].mxu0 %v4624
        %v5252 = vpop.f32.mrb[0].mxu0
        %v5253 = vadd.f32 0.0, %v5252
        %v5254 = vpop.f32.mrb[0].mxu0
        %v5255 = vpop.f32.mrb[0].mxu0
        %v5256 = vadd.f32 0.0, %v5255
        %v5257 = vpop.f32.mrb[0].mxu0
        %5258 = vmatprep.mubr.bf16.mxu0 0
        %5259 = vmatmul.mubr.bf16.gmra.mrb[0].mxu0 %v4625
        %v5260 = vpop.f32.mrb[0].mxu0
        %v5261 = vadd.f32 0.0, %v5260
        %v5262 = vpop.f32.mrb[0].mxu0
        %v5263 = vpop.f32.mrb[0].mxu0
        %v5264 = vadd.f32 0.0, %v5263
        %v5265 = vpop.f32.mrb[0].mxu0
        %5266 = vmatprep.mubr.bf16.mxu0 0
        %5267 = vmatmul.mubr.bf16.gmra.mrb[0].mxu0 %v4626
        %v5268 = vpop.f32.mrb[0].mxu0
        %v5269 = vadd.f32 0.0, %v5268
        %v5270 = vpop.f32.mrb[0].mxu0
        %v5271 = vpop.f32.mrb[0].mxu0
        %v5272 = vadd.f32 0.0, %v5271
        %v5273 = vpop.f32.mrb[0].mxu0
        %5274 = vmatprep.mubr.bf16.mxu0 0
        %5275 = vmatmul.mubr.bf16.gmra.mrb[0].mxu0 %v4627
        %v5276 = vpop.f32.mrb[0].mxu0
        %v5277 = vadd.f32 0.0, %v5276
        %v5278 = vpop.f32.mrb[0].mxu0
        %v5279 = vpop.f32.mrb[0].mxu0
        %v5280 = vadd.f32 0.0, %v5279
        %v5281 = vpop.f32.mrb[0].mxu0
        %5282 = vmatprep.mubr.bf16.mxu0 0
        %5283 = vmatmul.mubr.bf16.gmra.mrb[0].mxu0 %v4628
        %v5284 = vpop.f32.mrb[0].mxu0
        %v5285 = vadd.f32 0.0, %v5284
        %v5286 = vpop.f32.mrb[0].mxu0
        %v5287 = vpop.f32.mrb[0].mxu0
        %v5288 = vadd.f32 0.0, %v5287
        %v5289 = vpop.f32.mrb[0].mxu0
        %5290 = vdwg.mxu0
        %v5307 = vunpack.c.l.b16 %v4629
        %v5308 = vunpack.c.l.b16 %v4630
        %v5309 = vunpack.c.l.b16 %v4631
        %v5310 = vunpack.c.l.b16 %v4632
        %v5311 = vunpack.c.l.b16 %v4633
        %v5312 = vunpack.c.l.b16 %v4634
        %v5313 = vunpack.c.l.b16 %v4635
        %v5314 = vunpack.c.l.b16 %v4636
        %v5315 = vunpack.c.l.b16 %v4637
        %v5316 = vunpack.c.l.b16 %v4638
        %v5317 = vunpack.c.l.b16 %v4639
        %v5318 = vunpack.c.l.b16 %v4640
        %v5319 = vunpack.c.l.b16 %v4641
        %v5320 = vunpack.c.l.b16 %v4642
        %v5321 = vunpack.c.l.b16 %v4643
        %v5322 = vunpack.c.l.b16 %v4644
        %v5323 = vpack.c.b16 %v5308, %v5307
        %v5324 = vpack.c.b16 %v5310, %v5309
        %v5325 = vpack.c.b16 %v5312, %v5311
        %v5326 = vpack.c.b16 %v5314, %v5313
        %v5327 = vpack.c.b16 %v5316, %v5315
        %v5328 = vpack.c.b16 %v5318, %v5317
        %v5329 = vpack.c.b16 %v5320, %v5319
        %v5330 = vpack.c.b16 %v5322, %v5321
        %5339 = vmatprep.subr.bf16.mxu0 0
        %5340 = vmatpush1.bf16.msra.mxu0 %v5323
        %5341 = vmatprep.subr.bf16.mxu0 0
        %5342 = vmatpush1.bf16.msra.mxu0 %v5324
        %5343 = vmatprep.subr.bf16.mxu0 0
        %5344 = vmatpush1.bf16.msra.mxu0 %v5325
        %5345 = vmatprep.subr.bf16.mxu0 0
        %5346 = vmatpush1.bf16.msra.mxu0 %v5326
        %5347 = vmatprep.subr.bf16.mxu0 0
        %5348 = vmatpush1.bf16.msra.mxu0 %v5327
        %5349 = vmatprep.subr.bf16.mxu0 0
        %5350 = vmatpush1.bf16.msra.mxu0 %v5328
        %5351 = vmatprep.subr.bf16.mxu0 0
        %5352 = vmatpush1.bf16.msra.mxu0 %v5329
        %5353 = vmatprep.subr.bf16.mxu0 0
        %5354 = vmatpush1.bf16.msra.mxu0 %v5330
        %5355 = vmatprep.subr.bf16.mxu0 0
        %5356 = vmatpush1.bf16.msra.mxu0 0
        %5357 = vmatprep.subr.bf16.mxu0 0
        %5358 = vmatpush1.bf16.msra.mxu0 0
        %5359 = vmatprep.subr.bf16.mxu0 0
        %5360 = vmatpush1.bf16.msra.mxu0 0
        %5361 = vmatprep.subr.bf16.mxu0 0
        %5362 = vmatpush1.bf16.msra.mxu0 0
        %5363 = vmatprep.subr.bf16.mxu0 0
        %5364 = vmatpush1.bf16.msra.mxu0 0
        %5365 = vmatprep.subr.bf16.mxu0 0
        %5366 = vmatpush1.bf16.msra.mxu0 0
        %5367 = vmatprep.subr.bf16.mxu0 0
        %5368 = vmatpush1.bf16.msra.mxu0 0
        %5369 = vmatprep.subr.bf16.mxu0 0
        %5370 = vmatpush1.bf16.msra.mxu0 0
        %5371 = vmatprep.mubr.bf16.mxu0 0
        %5372 = vmatmul.mubr.bf16.gmra.mrb[0].mxu0 %v4573
        %v5373 = vpop.f32.mrb[0].mxu0
        %v5374 = vadd.f32 %v4744, %v5373
        %v5375 = vpop.f32.mrb[0].mxu0
        %v5376 = vpop.f32.mrb[0].mxu0
        %v5377 = vadd.f32 %v4747, %v5376
        %v5378 = vpop.f32.mrb[0].mxu0
        %5379 = vmatprep.mubr.bf16.mxu0 0
        %5380 = vmatmul.mubr.bf16.gmra.mrb[0].mxu0 %v4574
        %v5381 = vpop.f32.mrb[0].mxu0
        %v5382 = vadd.f32 %v4752, %v5381
        %v5383 = vpop.f32.mrb[0].mxu0
        %v5384 = vpop.f32.mrb[0].mxu0
        %v5385 = vadd.f32 %v4755, %v5384
        %v5386 = vpop.f32.mrb[0].mxu0
        %5387 = vmatprep.mubr.bf16.mxu0 0
        %5388 = vmatmul.mubr.bf16.gmra.mrb[0].mxu0 %v4575
        %v5389 = vpop.f32.mrb[0].mxu0
        %v5390 = vadd.f32 %v4760, %v5389
        %v5391 = vpop.f32.mrb[0].mxu0
        %v5392 = vpop.f32.mrb[0].mxu0
        %v5393 = vadd.f32 %v4763, %v5392
        %v5394 = vpop.f32.mrb[0].mxu0
        %5395 = vmatprep.mubr.bf16.mxu0 0
        %5396 = vmatmul.mubr.bf16.gmra.mrb[0].mxu0 %v4576
        %v5397 = vpop.f32.mrb[0].mxu0
        %v5398 = vadd.f32 %v4768, %v5397
        %v5399 = vpop.f32.mrb[0].mxu0
        %v5400 = vpop.f32.mrb[0].mxu0
        %v5401 = vadd.f32 %v4771, %v5400
        %v5402 = vpop.f32.mrb[0].mxu0
        %5403 = vmatprep.mubr.bf16.mxu0 0
        %5404 = vmatmul.mubr.bf16.gmra.mrb[0].mxu0 %v4577
        %v5405 = vpop.f32.mrb[0].mxu0
        %v5406 = vadd.f32 %v4776, %v5405
        %v5407 = vpop.f32.mrb[0].mxu0
        %v5408 = vpop.f32.mrb[0].mxu0
        %v5409 = vadd.f32 %v4779, %v5408
        %v5410 = vpop.f32.mrb[0].mxu0
        %5411 = vmatprep.mubr.bf16.mxu0 0
        %5412 = vmatmul.mubr.bf16.gmra.mrb[0].mxu0 %v4578
        %v5413 = vpop.f32.mrb[0].mxu0
        %v5414 = vadd.f32 %v4784, %v5413
        %v5415 = vpop.f32.mrb[0].mxu0
        %v5416 = vpop.f32.mrb[0].mxu0
        %v5417 = vadd.f32 %v4787, %v5416
        %v5418 = vpop.f32.mrb[0].mxu0
        %5419 = vmatprep.mubr.bf16.mxu0 0
        %5420 = vmatmul.mubr.bf16.gmra.mrb[0].mxu0 %v4579
        %v5421 = vpop.f32.mrb[0].mxu0
        %v5422 = vadd.f32 %v4792, %v5421
        %v5423 = vpop.f32.mrb[0].mxu0
        %v5424 = vpop.f32.mrb[0].mxu0
        %v5425 = vadd.f32 %v4795, %v5424
        %v5426 = vpop.f32.mrb[0].mxu0
        %5427 = vmatprep.mubr.bf16.mxu0 0
        %5428 = vmatmul.mubr.bf16.gmra.mrb[0].mxu0 %v4580
        %v5429 = vpop.f32.mrb[0].mxu0
        %v5430 = vadd.f32 %v4800, %v5429
        %v5431 = vpop.f32.mrb[0].mxu0
        %v5432 = vpop.f32.mrb[0].mxu0
        %v5433 = vadd.f32 %v4803, %v5432
        %v5434 = vpop.f32.mrb[0].mxu0
        %5435 = vdwg.mxu0
        %5436 = vmatprep.subr.bf16.mxu0 0
        %5437 = vmatpush1.bf16.msra.mxu0 %v5323
        %5438 = vmatprep.subr.bf16.mxu0 0
        %5439 = vmatpush1.bf16.msra.mxu0 %v5324
        %5440 = vmatprep.subr.bf16.mxu0 0
        %5441 = vmatpush1.bf16.msra.mxu0 %v5325
        %5442 = vmatprep.subr.bf16.mxu0 0
        %5443 = vmatpush1.bf16.msra.mxu0 %v5326
        %5444 = vmatprep.subr.bf16.mxu0 0
        %5445 = vmatpush1.bf16.msra.mxu0 %v5327
        %5446 = vmatprep.subr.bf16.mxu0 0
        %5447 = vmatpush1.bf16.msra.mxu0 %v5328
        %5448 = vmatprep.subr.bf16.mxu0 0
        %5449 = vmatpush1.bf16.msra.mxu0 %v5329
        %5450 = vmatprep.subr.bf16.mxu0 0
        %5451 = vmatpush1.bf16.msra.mxu0 %v5330
        %5452 = vmatprep.subr.bf16.mxu0 0
        %5453 = vmatpush1.bf16.msra.mxu0 0
        %5454 = vmatprep.subr.bf16.mxu0 0
        %5455 = vmatpush1.bf16.msra.mxu0 0
        %5456 = vmatprep.subr.bf16.mxu0 0
        %5457 = vmatpush1.bf16.msra.mxu0 0
        %5458 = vmatprep.subr.bf16.mxu0 0
        %5459 = vmatpush1.bf16.msra.mxu0 0
        %5460 = vmatprep.subr.bf16.mxu0 0
        %5461 = vmatpush1.bf16.msra.mxu0 0
        %5462 = vmatprep.subr.bf16.mxu0 0
        %5463 = vmatpush1.bf16.msra.mxu0 0
        %5464 = vmatprep.subr.bf16.mxu0 0
        %5465 = vmatpush1.bf16.msra.mxu0 0
        %5466 = vmatprep.subr.bf16.mxu0 0
        %5467 = vmatpush1.bf16.msra.mxu0 0
        %5468 = vmatprep.mubr.bf16.mxu0 0
        %5469 = vmatmul.mubr.bf16.gmra.mrb[0].mxu0 %v4581
        %v5470 = vpop.f32.mrb[0].mxu0
        %v5471 = vadd.f32 %v4841, %v5470
        %v5472 = vpop.f32.mrb[0].mxu0
        %v5473 = vpop.f32.mrb[0].mxu0
        %v5474 = vadd.f32 %v4844, %v5473
        %v5475 = vpop.f32.mrb[0].mxu0
        %5476 = vmatprep.mubr.bf16.mxu0 0
        %5477 = vmatmul.mubr.bf16.gmra.mrb[0].mxu0 %v4582
        %v5478 = vpop.f32.mrb[0].mxu0
        %v5479 = vadd.f32 %v4849, %v5478
        %v5480 = vpop.f32.mrb[0].mxu0
        %v5481 = vpop.f32.mrb[0].mxu0
        %v5482 = vadd.f32 %v4852, %v5481
        %v5483 = vpop.f32.mrb[0].mxu0
        %5484 = vmatprep.mubr.bf16.mxu0 0
        %5485 = vmatmul.mubr.bf16.gmra.mrb[0].mxu0 %v4583
        %v5486 = vpop.f32.mrb[0].mxu0
        %v5487 = vadd.f32 %v4857, %v5486
        %v5488 = vpop.f32.mrb[0].mxu0
        %v5489 = vpop.f32.mrb[0].mxu0
        %v5490 = vadd.f32 %v4860, %v5489
        %v5491 = vpop.f32.mrb[0].mxu0
        %5492 = vmatprep.mubr.bf16.mxu0 0
        %5493 = vmatmul.mubr.bf16.gmra.mrb[0].mxu0 %v4584
        %v5494 = vpop.f32.mrb[0].mxu0
        %v5495 = vadd.f32 %v4865, %v5494
        %v5496 = vpop.f32.mrb[0].mxu0
        %v5497 = vpop.f32.mrb[0].mxu0
        %v5498 = vadd.f32 %v4868, %v5497
        %v5499 = vpop.f32.mrb[0].mxu0
        %5500 = vmatprep.mubr.bf16.mxu0 0
        %5501 = vmatmul.mubr.bf16.gmra.mrb[0].mxu0 %v4585
        %v5502 = vpop.f32.mrb[0].mxu0
        %v5503 = vadd.f32 %v4873, %v5502
        %v5504 = vpop.f32.mrb[0].mxu0
        %v5505 = vpop.f32.mrb[0].mxu0
        %v5506 = vadd.f32 %v4876, %v5505
        %v5507 = vpop.f32.mrb[0].mxu0
        %5508 = vmatprep.mubr.bf16.mxu0 0
        %5509 = vmatmul.mubr.bf16.gmra.mrb[0].mxu0 %v4586
        %v5510 = vpop.f32.mrb[0].mxu0
        %v5511 = vadd.f32 %v4881, %v5510
        %v5512 = vpop.f32.mrb[0].mxu0
        %v5513 = vpop.f32.mrb[0].mxu0
        %v5514 = vadd.f32 %v4884, %v5513
        %v5515 = vpop.f32.mrb[0].mxu0
        %5516 = vmatprep.mubr.bf16.mxu0 0
        %5517 = vmatmul.mubr.bf16.gmra.mrb[0].mxu0 %v4587
        %v5518 = vpop.f32.mrb[0].mxu0
        %v5519 = vadd.f32 %v4889, %v5518
        %v5520 = vpop.f32.mrb[0].mxu0
        %v5521 = vpop.f32.mrb[0].mxu0
        %v5522 = vadd.f32 %v4892, %v5521
        %v5523 = vpop.f32.mrb[0].mxu0
        %5524 = vmatprep.mubr.bf16.mxu0 0
        %5525 = vmatmul.mubr.bf16.gmra.mrb[0].mxu0 %v4588
        %v5526 = vpop.f32.mrb[0].mxu0
        %v5527 = vadd.f32 %v4897, %v5526
        %v5528 = vpop.f32.mrb[0].mxu0
        %v5529 = vpop.f32.mrb[0].mxu0
        %v5530 = vadd.f32 %v4900, %v5529
        %v5531 = vpop.f32.mrb[0].mxu0
        %5532 = vdwg.mxu0
        %5533 = vmatprep.subr.bf16.mxu0 0
        %5534 = vmatpush1.bf16.msra.mxu0 %v5323
        %5535 = vmatprep.subr.bf16.mxu0 0
        %5536 = vmatpush1.bf16.msra.mxu0 %v5324
        %5537 = vmatprep.subr.bf16.mxu0 0
        %5538 = vmatpush1.bf16.msra.mxu0 %v5325
        %5539 = vmatprep.subr.bf16.mxu0 0
        %5540 = vmatpush1.bf16.msra.mxu0 %v5326
        %5541 = vmatprep.subr.bf16.mxu0 0
        %5542 = vmatpush1.bf16.msra.mxu0 %v5327
        %5543 = vmatprep.subr.bf16.mxu0 0
        %5544 = vmatpush1.bf16.msra.mxu0 %v5328
        %5545 = vmatprep.subr.bf16.mxu0 0
        %5546 = vmatpush1.bf16.msra.mxu0 %v5329
        %5547 = vmatprep.subr.bf16.mxu0 0
        %5548 = vmatpush1.bf16.msra.mxu0 %v5330
        %5549 = vmatprep.subr.bf16.mxu0 0
        %5550 = vmatpush1.bf16.msra.mxu0 0
        %5551 = vmatprep.subr.bf16.mxu0 0
        %5552 = vmatpush1.bf16.msra.mxu0 0
        %5553 = vmatprep.subr.bf16.mxu0 0
        %5554 = vmatpush1.bf16.msra.mxu0 0
        %5555 = vmatprep.subr.bf16.mxu0 0
        %5556 = vmatpush1.bf16.msra.mxu0 0
        %5557 = vmatprep.subr.bf16.mxu0 0
        %5558 = vmatpush1.bf16.msra.mxu0 0
        %5559 = vmatprep.subr.bf16.mxu0 0
        %5560 = vmatpush1.bf16.msra.mxu0 0
        %5561 = vmatprep.subr.bf16.mxu0 0
        %5562 = vmatpush1.bf16.msra.mxu0 0
        %5563 = vmatprep.subr.bf16.mxu0 0
        %5564 = vmatpush1.bf16.msra.mxu0 0
        %5565 = vmatprep.mubr.bf16.mxu0 0
        %5566 = vmatmul.mubr.bf16.gmra.mrb[0].mxu0 %v4589
        %v5567 = vpop.f32.mrb[0].mxu0
        %v5568 = vadd.f32 %v4938, %v5567
        %v5569 = vpop.f32.mrb[0].mxu0
        %v5570 = vpop.f32.mrb[0].mxu0
        %v5571 = vadd.f32 %v4941, %v5570
        %v5572 = vpop.f32.mrb[0].mxu0
        %5573 = vmatprep.mubr.bf16.mxu0 0
        %5574 = vmatmul.mubr.bf16.gmra.mrb[0].mxu0 %v4590
        %v5575 = vpop.f32.mrb[0].mxu0
        %v5576 = vadd.f32 %v4946, %v5575
        %v5577 = vpop.f32.mrb[0].mxu0
        %v5578 = vpop.f32.mrb[0].mxu0
        %v5579 = vadd.f32 %v4949, %v5578
        %v5580 = vpop.f32.mrb[0].mxu0
        %5581 = vmatprep.mubr.bf16.mxu0 0
        %5582 = vmatmul.mubr.bf16.gmra.mrb[0].mxu0 %v4591
        %v5583 = vpop.f32.mrb[0].mxu0
        %v5584 = vadd.f32 %v4954, %v5583
        %v5585 = vpop.f32.mrb[0].mxu0
        %v5586 = vpop.f32.mrb[0].mxu0
        %v5587 = vadd.f32 %v4957, %v5586
        %v5588 = vpop.f32.mrb[0].mxu0
        %5589 = vmatprep.mubr.bf16.mxu0 0
        %5590 = vmatmul.mubr.bf16.gmra.mrb[0].mxu0 %v4592
        %v5591 = vpop.f32.mrb[0].mxu0
        %v5592 = vadd.f32 %v4962, %v5591
        %v5593 = vpop.f32.mrb[0].mxu0
        %v5594 = vpop.f32.mrb[0].mxu0
        %v5595 = vadd.f32 %v4965, %v5594
        %v5596 = vpop.f32.mrb[0].mxu0
        %5597 = vmatprep.mubr.bf16.mxu0 0
        %5598 = vmatmul.mubr.bf16.gmra.mrb[0].mxu0 %v4593
        %v5599 = vpop.f32.mrb[0].mxu0
        %v5600 = vadd.f32 %v4970, %v5599
        %v5601 = vpop.f32.mrb[0].mxu0
        %v5602 = vpop.f32.mrb[0].mxu0
        %v5603 = vadd.f32 %v4973, %v5602
        %v5604 = vpop.f32.mrb[0].mxu0
        %5605 = vmatprep.mubr.bf16.mxu0 0
        %5606 = vmatmul.mubr.bf16.gmra.mrb[0].mxu0 %v4594
        %v5607 = vpop.f32.mrb[0].mxu0
        %v5608 = vadd.f32 %v4978, %v5607
        %v5609 = vpop.f32.mrb[0].mxu0
        %v5610 = vpop.f32.mrb[0].mxu0
        %v5611 = vadd.f32 %v4981, %v5610
        %v5612 = vpop.f32.mrb[0].mxu0
        %5613 = vmatprep.mubr.bf16.mxu0 0
        %5614 = vmatmul.mubr.bf16.gmra.mrb[0].mxu0 %v4595
        %v5615 = vpop.f32.mrb[0].mxu0
        %v5616 = vadd.f32 %v4986, %v5615
        %v5617 = vpop.f32.mrb[0].mxu0
        %v5618 = vpop.f32.mrb[0].mxu0
        %v5619 = vadd.f32 %v4989, %v5618
        %v5620 = vpop.f32.mrb[0].mxu0
        %5621 = vmatprep.mubr.bf16.mxu0 0
        %5622 = vmatmul.mubr.bf16.gmra.mrb[0].mxu0 %v4596
        %v5623 = vpop.f32.mrb[0].mxu0
        %v5624 = vadd.f32 %v4994, %v5623
        %v5625 = vpop.f32.mrb[0].mxu0
        %v5626 = vpop.f32.mrb[0].mxu0
        %v5627 = vadd.f32 %v4997, %v5626
        %v5628 = vpop.f32.mrb[0].mxu0
        %5629 = vdwg.mxu0
        %5630 = vmatprep.subr.bf16.mxu0 0
        %5631 = vmatpush1.bf16.msra.mxu0 %v5323
        %5632 = vmatprep.subr.bf16.mxu0 0
        %5633 = vmatpush1.bf16.msra.mxu0 %v5324
        %5634 = vmatprep.subr.bf16.mxu0 0
        %5635 = vmatpush1.bf16.msra.mxu0 %v5325
        %5636 = vmatprep.subr.bf16.mxu0 0
        %5637 = vmatpush1.bf16.msra.mxu0 %v5326
        %5638 = vmatprep.subr.bf16.mxu0 0
        %5639 = vmatpush1.bf16.msra.mxu0 %v5327
        %5640 = vmatprep.subr.bf16.mxu0 0
        %5641 = vmatpush1.bf16.msra.mxu0 %v5328
        %5642 = vmatprep.subr.bf16.mxu0 0
        %5643 = vmatpush1.bf16.msra.mxu0 %v5329
        %5644 = vmatprep.subr.bf16.mxu0 0
        %5645 = vmatpush1.bf16.msra.mxu0 %v5330
        %5646 = vmatprep.subr.bf16.mxu0 0
        %5647 = vmatpush1.bf16.msra.mxu0 0
        %5648 = vmatprep.subr.bf16.mxu0 0
        %5649 = vmatpush1.bf16.msra.mxu0 0
        %5650 = vmatprep.subr.bf16.mxu0 0
        %5651 = vmatpush1.bf16.msra.mxu0 0
        %5652 = vmatprep.subr.bf16.mxu0 0
        %5653 = vmatpush1.bf16.msra.mxu0 0
        %5654 = vmatprep.subr.bf16.mxu0 0
        %5655 = vmatpush1.bf16.msra.mxu0 0
        %5656 = vmatprep.subr.bf16.mxu0 0
        %5657 = vmatpush1.bf16.msra.mxu0 0
        %5658 = vmatprep.subr.bf16.mxu0 0
        %5659 = vmatpush1.bf16.msra.mxu0 0
        %5660 = vmatprep.subr.bf16.mxu0 0
        %5661 = vmatpush1.bf16.msra.mxu0 0
        %5662 = vmatprep.mubr.bf16.mxu0 0
        %5663 = vmatmul.mubr.bf16.gmra.mrb[0].mxu0 %v4597
        %v5664 = vpop.f32.mrb[0].mxu0
        %v5665 = vadd.f32 %v5035, %v5664
        %v5666 = vpop.f32.mrb[0].mxu0
        %v5667 = vpop.f32.mrb[0].mxu0
        %v5668 = vadd.f32 %v5038, %v5667
        %v5669 = vpop.f32.mrb[0].mxu0
        %5670 = vmatprep.mubr.bf16.mxu0 0
        %5671 = vmatmul.mubr.bf16.gmra.mrb[0].mxu0 %v4598
        %v5672 = vpop.f32.mrb[0].mxu0
        %v5673 = vadd.f32 %v5043, %v5672
        %v5674 = vpop.f32.mrb[0].mxu0
        %v5675 = vpop.f32.mrb[0].mxu0
        %v5676 = vadd.f32 %v5046, %v5675
        %v5677 = vpop.f32.mrb[0].mxu0
        %5678 = vmatprep.mubr.bf16.mxu0 0
        %5679 = vmatmul.mubr.bf16.gmra.mrb[0].mxu0 %v4599
        %v5680 = vpop.f32.mrb[0].mxu0
        %v5681 = vadd.f32 %v5051, %v5680
        %v5682 = vpop.f32.mrb[0].mxu0
        %v5683 = vpop.f32.mrb[0].mxu0
        %v5684 = vadd.f32 %v5054, %v5683
        %v5685 = vpop.f32.mrb[0].mxu0
        %5686 = vmatprep.mubr.bf16.mxu0 0
        %5687 = vmatmul.mubr.bf16.gmra.mrb[0].mxu0 %v4600
        %v5688 = vpop.f32.mrb[0].mxu0
        %v5689 = vadd.f32 %v5059, %v5688
        %v5690 = vpop.f32.mrb[0].mxu0
        %v5691 = vpop.f32.mrb[0].mxu0
        %v5692 = vadd.f32 %v5062, %v5691
        %v5693 = vpop.f32.mrb[0].mxu0
        %5694 = vmatprep.mubr.bf16.mxu0 0
        %5695 = vmatmul.mubr.bf16.gmra.mrb[0].mxu0 %v4601
        %v5696 = vpop.f32.mrb[0].mxu0
        %v5697 = vadd.f32 %v5067, %v5696
        %v5698 = vpop.f32.mrb[0].mxu0
        %v5699 = vpop.f32.mrb[0].mxu0
        %v5700 = vadd.f32 %v5070, %v5699
        %v5701 = vpop.f32.mrb[0].mxu0
        %5702 = vmatprep.mubr.bf16.mxu0 0
        %5703 = vmatmul.mubr.bf16.gmra.mrb[0].mxu0 %v4602
        %v5704 = vpop.f32.mrb[0].mxu0
        %v5705 = vadd.f32 %v5075, %v5704
        %v5706 = vpop.f32.mrb[0].mxu0
        %v5707 = vpop.f32.mrb[0].mxu0
        %v5708 = vadd.f32 %v5078, %v5707
        %v5709 = vpop.f32.mrb[0].mxu0
        %5710 = vmatprep.mubr.bf16.mxu0 0
        %5711 = vmatmul.mubr.bf16.gmra.mrb[0].mxu0 %v4603
        %v5712 = vpop.f32.mrb[0].mxu0
        %v5713 = vadd.f32 %v5083, %v5712
        %v5714 = vpop.f32.mrb[0].mxu0
        %v5715 = vpop.f32.mrb[0].mxu0
        %v5716 = vadd.f32 %v5086, %v5715
        %v5717 = vpop.f32.mrb[0].mxu0
        %5718 = vmatprep.mubr.bf16.mxu0 0
        %5719 = vmatmul.mubr.bf16.gmra.mrb[0].mxu0 %v4604
        %v5720 = vpop.f32.mrb[0].mxu0
        %v5721 = vadd.f32 %v5091, %v5720
        %v5722 = vpop.f32.mrb[0].mxu0
        %v5723 = vpop.f32.mrb[0].mxu0
        %v5724 = vadd.f32 %v5094, %v5723
        %v5725 = vpop.f32.mrb[0].mxu0
        %5726 = vdwg.mxu0
        %5727 = vmatprep.subr.bf16.mxu0 0
        %5728 = vmatpush1.bf16.msra.mxu0 %v5323
        %5729 = vmatprep.subr.bf16.mxu0 0
        %5730 = vmatpush1.bf16.msra.mxu0 %v5324
        %5731 = vmatprep.subr.bf16.mxu0 0
        %5732 = vmatpush1.bf16.msra.mxu0 %v5325
        %5733 = vmatprep.subr.bf16.mxu0 0
        %5734 = vmatpush1.bf16.msra.mxu0 %v5326
        %5735 = vmatprep.subr.bf16.mxu0 0
        %5736 = vmatpush1.bf16.msra.mxu0 %v5327
        %5737 = vmatprep.subr.bf16.mxu0 0
        %5738 = vmatpush1.bf16.msra.mxu0 %v5328
        %5739 = vmatprep.subr.bf16.mxu0 0
        %5740 = vmatpush1.bf16.msra.mxu0 %v5329
        %5741 = vmatprep.subr.bf16.mxu0 0
        %5742 = vmatpush1.bf16.msra.mxu0 %v5330
        %5743 = vmatprep.subr.bf16.mxu0 0
        %5744 = vmatpush1.bf16.msra.mxu0 0
        %5745 = vmatprep.subr.bf16.mxu0 0
        %5746 = vmatpush1.bf16.msra.mxu0 0
        %5747 = vmatprep.subr.bf16.mxu0 0
        %5748 = vmatpush1.bf16.msra.mxu0 0
        %5749 = vmatprep.subr.bf16.mxu0 0
        %5750 = vmatpush1.bf16.msra.mxu0 0
        %5751 = vmatprep.subr.bf16.mxu0 0
        %5752 = vmatpush1.bf16.msra.mxu0 0
        %5753 = vmatprep.subr.bf16.mxu0 0
        %5754 = vmatpush1.bf16.msra.mxu0 0
        %5755 = vmatprep.subr.bf16.mxu0 0
        %5756 = vmatpush1.bf16.msra.mxu0 0
        %5757 = vmatprep.subr.bf16.mxu0 0
        %5758 = vmatpush1.bf16.msra.mxu0 0
        %5759 = vmatprep.mubr.bf16.mxu0 0
        %5760 = vmatmul.mubr.bf16.gmra.mrb[0].mxu0 %v4605
        %v5761 = vpop.f32.mrb[0].mxu0
        %v5762 = vadd.f32 %v5132, %v5761
        %v5763 = vpop.f32.mrb[0].mxu0
        %v5764 = vpop.f32.mrb[0].mxu0
        %v5765 = vadd.f32 %v5135, %v5764
        %v5766 = vpop.f32.mrb[0].mxu0
        %5767 = vmatprep.mubr.bf16.mxu0 0
        %5768 = vmatmul.mubr.bf16.gmra.mrb[0].mxu0 %v4606
        %v5769 = vpop.f32.mrb[0].mxu0
        %v5770 = vadd.f32 %v5140, %v5769
        %v5771 = vpop.f32.mrb[0].mxu0
        %v5772 = vpop.f32.mrb[0].mxu0
        %v5773 = vadd.f32 %v5143, %v5772
        %v5774 = vpop.f32.mrb[0].mxu0
        %5775 = vmatprep.mubr.bf16.mxu0 0
        %5776 = vmatmul.mubr.bf16.gmra.mrb[0].mxu0 %v4607
        %v5777 = vpop.f32.mrb[0].mxu0
        %v5778 = vadd.f32 %v5148, %v5777
        %v5779 = vpop.f32.mrb[0].mxu0
        %v5780 = vpop.f32.mrb[0].mxu0
        %v5781 = vadd.f32 %v5151, %v5780
        %v5782 = vpop.f32.mrb[0].mxu0
        %5783 = vmatprep.mubr.bf16.mxu0 0
        %5784 = vmatmul.mubr.bf16.gmra.mrb[0].mxu0 %v4608
        %v5785 = vpop.f32.mrb[0].mxu0
        %v5786 = vadd.f32 %v5156, %v5785
        %v5787 = vpop.f32.mrb[0].mxu0
        %v5788 = vpop.f32.mrb[0].mxu0
        %v5789 = vadd.f32 %v5159, %v5788
        %v5790 = vpop.f32.mrb[0].mxu0
        %5791 = vmatprep.mubr.bf16.mxu0 0
        %5792 = vmatmul.mubr.bf16.gmra.mrb[0].mxu0 %v4609
        %v5793 = vpop.f32.mrb[0].mxu0
        %v5794 = vadd.f32 %v5164, %v5793
        %v5795 = vpop.f32.mrb[0].mxu0
        %v5796 = vpop.f32.mrb[0].mxu0
        %v5797 = vadd.f32 %v5167, %v5796
        %v5798 = vpop.f32.mrb[0].mxu0
        %5799 = vmatprep.mubr.bf16.mxu0 0
        %5800 = vmatmul.mubr.bf16.gmra.mrb[0].mxu0 %v4610
        %v5801 = vpop.f32.mrb[0].mxu0
        %v5802 = vadd.f32 %v5172, %v5801
        %v5803 = vpop.f32.mrb[0].mxu0
        %v5804 = vpop.f32.mrb[0].mxu0
        %v5805 = vadd.f32 %v5175, %v5804
        %v5806 = vpop.f32.mrb[0].mxu0
        %5807 = vmatprep.mubr.bf16.mxu0 0
        %5808 = vmatmul.mubr.bf16.gmra.mrb[0].mxu0 %v4611
        %v5809 = vpop.f32.mrb[0].mxu0
        %v5810 = vadd.f32 %v5180, %v5809
        %v5811 = vpop.f32.mrb[0].mxu0
        %v5812 = vpop.f32.mrb[0].mxu0
        %v5813 = vadd.f32 %v5183, %v5812
        %v5814 = vpop.f32.mrb[0].mxu0
        %5815 = vmatprep.mubr.bf16.mxu0 0
        %5816 = vmatmul.mubr.bf16.gmra.mrb[0].mxu0 %v4612
        %v5817 = vpop.f32.mrb[0].mxu0
        %v5818 = vadd.f32 %v5188, %v5817
        %v5819 = vpop.f32.mrb[0].mxu0
        %v5820 = vpop.f32.mrb[0].mxu0
        %v5821 = vadd.f32 %v5191, %v5820
        %v5822 = vpop.f32.mrb[0].mxu0
        %5823 = vdwg.mxu0
        %5824 = vmatprep.subr.bf16.mxu0 0
        %5825 = vmatpush1.bf16.msra.mxu0 %v5323
        %5826 = vmatprep.subr.bf16.mxu0 0
        %5827 = vmatpush1.bf16.msra.mxu0 %v5324
        %5828 = vmatprep.subr.bf16.mxu0 0
        %5829 = vmatpush1.bf16.msra.mxu0 %v5325
        %5830 = vmatprep.subr.bf16.mxu0 0
        %5831 = vmatpush1.bf16.msra.mxu0 %v5326
        %5832 = vmatprep.subr.bf16.mxu0 0
        %5833 = vmatpush1.bf16.msra.mxu0 %v5327
        %5834 = vmatprep.subr.bf16.mxu0 0
        %5835 = vmatpush1.bf16.msra.mxu0 %v5328
        %5836 = vmatprep.subr.bf16.mxu0 0
        %5837 = vmatpush1.bf16.msra.mxu0 %v5329
        %5838 = vmatprep.subr.bf16.mxu0 0
        %5839 = vmatpush1.bf16.msra.mxu0 %v5330
        %5840 = vmatprep.subr.bf16.mxu0 0
        %5841 = vmatpush1.bf16.msra.mxu0 0
        %5842 = vmatprep.subr.bf16.mxu0 0
        %5843 = vmatpush1.bf16.msra.mxu0 0
        %5844 = vmatprep.subr.bf16.mxu0 0
        %5845 = vmatpush1.bf16.msra.mxu0 0
        %5846 = vmatprep.subr.bf16.mxu0 0
        %5847 = vmatpush1.bf16.msra.mxu0 0
        %5848 = vmatprep.subr.bf16.mxu0 0
        %5849 = vmatpush1.bf16.msra.mxu0 0
        %5850 = vmatprep.subr.bf16.mxu0 0
        %5851 = vmatpush1.bf16.msra.mxu0 0
        %5852 = vmatprep.subr.bf16.mxu0 0
        %5853 = vmatpush1.bf16.msra.mxu0 0
        %5854 = vmatprep.subr.bf16.mxu0 0
        %5855 = vmatpush1.bf16.msra.mxu0 0
        %5856 = vmatprep.mubr.bf16.mxu0 0
        %5857 = vmatmul.mubr.bf16.gmra.mrb[0].mxu0 %v4613
        %v5858 = vpop.f32.mrb[0].mxu0
        %v5859 = vadd.f32 %v5229, %v5858
        %v5860 = vpop.f32.mrb[0].mxu0
        %v5861 = vpop.f32.mrb[0].mxu0
        %v5862 = vadd.f32 %v5232, %v5861
        %v5863 = vpop.f32.mrb[0].mxu0
        %5864 = vmatprep.mubr.bf16.mxu0 0
        %5865 = vmatmul.mubr.bf16.gmra.mrb[0].mxu0 %v4614
        %v5866 = vpop.f32.mrb[0].mxu0
        %v5867 = vadd.f32 %v5237, %v5866
        %v5868 = vpop.f32.mrb[0].mxu0
        %v5869 = vpop.f32.mrb[0].mxu0
        %v5870 = vadd.f32 %v5240, %v5869
        %v5871 = vpop.f32.mrb[0].mxu0
        %5872 = vmatprep.mubr.bf16.mxu0 0
        %5873 = vmatmul.mubr.bf16.gmra.mrb[0].mxu0 %v4615
        %v5874 = vpop.f32.mrb[0].mxu0
        %v5875 = vadd.f32 %v5245, %v5874
        %v5876 = vpop.f32.mrb[0].mxu0
        %v5877 = vpop.f32.mrb[0].mxu0
        %v5878 = vadd.f32 %v5248, %v5877
        %v5879 = vpop.f32.mrb[0].mxu0
        %5880 = vmatprep.mubr.bf16.mxu0 0
        %5881 = vmatmul.mubr.bf16.gmra.mrb[0].mxu0 %v4616
        %v5882 = vpop.f32.mrb[0].mxu0
        %v5883 = vadd.f32 %v5253, %v5882
        %v5884 = vpop.f32.mrb[0].mxu0
        %v5885 = vpop.f32.mrb[0].mxu0
        %v5886 = vadd.f32 %v5256, %v5885
        %v5887 = vpop.f32.mrb[0].mxu0
        %5888 = vmatprep.mubr.bf16.mxu0 0
        %5889 = vmatmul.mubr.bf16.gmra.mrb[0].mxu0 %v4617
        %v5890 = vpop.f32.mrb[0].mxu0
        %v5891 = vadd.f32 %v5261, %v5890
        %v5892 = vpop.f32.mrb[0].mxu0
        %v5893 = vpop.f32.mrb[0].mxu0
        %v5894 = vadd.f32 %v5264, %v5893
        %v5895 = vpop.f32.mrb[0].mxu0
        %5896 = vmatprep.mubr.bf16.mxu0 0
        %5897 = vmatmul.mubr.bf16.gmra.mrb[0].mxu0 %v4618
        %v5898 = vpop.f32.mrb[0].mxu0
        %v5899 = vadd.f32 %v5269, %v5898
        %v5900 = vpop.f32.mrb[0].mxu0
        %v5901 = vpop.f32.mrb[0].mxu0
        %v5902 = vadd.f32 %v5272, %v5901
        %v5903 = vpop.f32.mrb[0].mxu0
        %5904 = vmatprep.mubr.bf16.mxu0 0
        %5905 = vmatmul.mubr.bf16.gmra.mrb[0].mxu0 %v4619
        %v5906 = vpop.f32.mrb[0].mxu0
        %v5907 = vadd.f32 %v5277, %v5906
        %v5908 = vpop.f32.mrb[0].mxu0
        %v5909 = vpop.f32.mrb[0].mxu0
        %v5910 = vadd.f32 %v5280, %v5909
        %v5911 = vpop.f32.mrb[0].mxu0
        %5912 = vmatprep.mubr.bf16.mxu0 0
        %5913 = vmatmul.mubr.bf16.gmra.mrb[0].mxu0 %v4620
        %v5914 = vpop.f32.mrb[0].mxu0
        %v5915 = vadd.f32 %v5285, %v5914
        %v5916 = vpop.f32.mrb[0].mxu0
        %v5917 = vpop.f32.mrb[0].mxu0
        %v5918 = vadd.f32 %v5288, %v5917
        %v5919 = vpop.f32.mrb[0].mxu0
        %5920 = vdwg.mxu0
        %v5921 = vld [vmem:[%s5] sm:$0x1]
        %v5923 = vlaneseq
        %v5924 = vshrl.u32 %v5923, 7
        %v5925 = vsub.s32 0, %v5924
        %v5926 = vrot.slane %v5921, %v5925
        %v5928 = vadd.f32 %v5374, %v5926
        %v5929 = vadd.f32 %v5377, %v5926
        %v5930 = vadd.f32 %v5382, %v5926
        %v5931 = vadd.f32 %v5385, %v5926
        %v5932 = vadd.f32 %v5390, %v5926
        %v5933 = vadd.f32 %v5393, %v5926
        %v5934 = vadd.f32 %v5398, %v5926
        %v5935 = vadd.f32 %v5401, %v5926
        %v5936 = vadd.f32 %v5406, %v5926
        %v5937 = vadd.f32 %v5409, %v5926
        %v5938 = vadd.f32 %v5414, %v5926
        %v5939 = vadd.f32 %v5417, %v5926
        %v5940 = vadd.f32 %v5422, %v5926
        %v5941 = vadd.f32 %v5425, %v5926
        %v5942 = vadd.f32 %v5430, %v5926
        %v5943 = vadd.f32 %v5433, %v5926
        %v5944 = vadd.f32 %v5471, %v5926
        %v5945 = vadd.f32 %v5474, %v5926
        %v5946 = vadd.f32 %v5479, %v5926
        %v5947 = vadd.f32 %v5482, %v5926
        %v5948 = vadd.f32 %v5487, %v5926
        %v5949 = vadd.f32 %v5490, %v5926
        %v5950 = vadd.f32 %v5495, %v5926
        %v5951 = vadd.f32 %v5498, %v5926
        %v5952 = vadd.f32 %v5503, %v5926
        %v5953 = vadd.f32 %v5506, %v5926
        %v5954 = vadd.f32 %v5511, %v5926
        %v5955 = vadd.f32 %v5514, %v5926
        %v5956 = vadd.f32 %v5519, %v5926
        %v5957 = vadd.f32 %v5522, %v5926
        %v5958 = vadd.f32 %v5527, %v5926
        %v5959 = vadd.f32 %v5530, %v5926
        %v5960 = vadd.f32 %v5568, %v5926
        %v5961 = vadd.f32 %v5571, %v5926
        %v5962 = vadd.f32 %v5576, %v5926
        %v5963 = vadd.f32 %v5579, %v5926
        %v5964 = vadd.f32 %v5584, %v5926
        %v5965 = vadd.f32 %v5587, %v5926
        %v5966 = vadd.f32 %v5592, %v5926
        %v5967 = vadd.f32 %v5595, %v5926
        %v5968 = vadd.f32 %v5600, %v5926
        %v5969 = vadd.f32 %v5603, %v5926
        %v5970 = vadd.f32 %v5608, %v5926
        %v5971 = vadd.f32 %v5611, %v5926
        %v5972 = vadd.f32 %v5616, %v5926
        %v5973 = vadd.f32 %v5619, %v5926
        %v5974 = vadd.f32 %v5624, %v5926
        %v5975 = vadd.f32 %v5627, %v5926
        %v5976 = vadd.f32 %v5665, %v5926
        %v5977 = vadd.f32 %v5668, %v5926
        %v5978 = vadd.f32 %v5673, %v5926
        %v5979 = vadd.f32 %v5676, %v5926
        %v5980 = vadd.f32 %v5681, %v5926
        %v5981 = vadd.f32 %v5684, %v5926
        %v5982 = vadd.f32 %v5689, %v5926
        %v5983 = vadd.f32 %v5692, %v5926
        %v5984 = vadd.f32 %v5697, %v5926
        %v5985 = vadd.f32 %v5700, %v5926
        %v5986 = vadd.f32 %v5705, %v5926
        %v5987 = vadd.f32 %v5708, %v5926
        %v5988 = vadd.f32 %v5713, %v5926
        %v5989 = vadd.f32 %v5716, %v5926
        %v5990 = vadd.f32 %v5721, %v5926
        %v5991 = vadd.f32 %v5724, %v5926
        %v5992 = vadd.f32 %v5762, %v5926
        %v5993 = vadd.f32 %v5765, %v5926
        %v5994 = vadd.f32 %v5770, %v5926
        %v5995 = vadd.f32 %v5773, %v5926
        %v5996 = vadd.f32 %v5778, %v5926
        %v5997 = vadd.f32 %v5781, %v5926
        %v5998 = vadd.f32 %v5786, %v5926
        %v5999 = vadd.f32 %v5789, %v5926
        %v6000 = vadd.f32 %v5794, %v5926
        %v6001 = vadd.f32 %v5797, %v5926
        %v6002 = vadd.f32 %v5802, %v5926
        %v6003 = vadd.f32 %v5805, %v5926
        %v6004 = vadd.f32 %v5810, %v5926
        %v6005 = vadd.f32 %v5813, %v5926
        %v6006 = vadd.f32 %v5818, %v5926
        %v6007 = vadd.f32 %v5821, %v5926
        %v6008 = vadd.f32 %v5859, %v5926
        %v6009 = vadd.f32 %v5862, %v5926
        %v6010 = vadd.f32 %v5867, %v5926
        %v6011 = vadd.f32 %v5870, %v5926
        %v6012 = vadd.f32 %v5875, %v5926
        %v6013 = vadd.f32 %v5878, %v5926
        %v6014 = vadd.f32 %v5883, %v5926
        %v6015 = vadd.f32 %v5886, %v5926
        %v6016 = vadd.f32 %v5891, %v5926
        %v6017 = vadd.f32 %v5894, %v5926
        %v6018 = vadd.f32 %v5899, %v5926
        %v6019 = vadd.f32 %v5902, %v5926
        %v6020 = vadd.f32 %v5907, %v5926
        %v6021 = vadd.f32 %v5910, %v5926
        %v6022 = vadd.f32 %v5915, %v5926
        %v6023 = vadd.f32 %v5918, %v5926
        %v6024 = vmax.f32 %v5928, 0.0
        %v6025 = vmax.f32 %v5929, 0.0
        %v6026 = vmax.f32 %v5930, 0.0
        %v6027 = vmax.f32 %v5931, 0.0
        %v6028 = vmax.f32 %v5932, 0.0
        %v6029 = vmax.f32 %v5933, 0.0
        %v6030 = vmax.f32 %v5934, 0.0
        %v6031 = vmax.f32 %v5935, 0.0
        %v6032 = vmax.f32 %v5936, 0.0
        %v6033 = vmax.f32 %v5937, 0.0
        %v6034 = vmax.f32 %v5938, 0.0
        %v6035 = vmax.f32 %v5939, 0.0
        %v6036 = vmax.f32 %v5940, 0.0
        %v6037 = vmax.f32 %v5941, 0.0
        %v6038 = vmax.f32 %v5942, 0.0
        %v6039 = vmax.f32 %v5943, 0.0
        %v6040 = vmax.f32 %v5944, 0.0
        %v6041 = vmax.f32 %v5945, 0.0
        %v6042 = vmax.f32 %v5946, 0.0
        %v6043 = vmax.f32 %v5947, 0.0
        %v6044 = vmax.f32 %v5948, 0.0
        %v6045 = vmax.f32 %v5949, 0.0
        %v6046 = vmax.f32 %v5950, 0.0
        %v6047 = vmax.f32 %v5951, 0.0
        %v6048 = vmax.f32 %v5952, 0.0
        %v6049 = vmax.f32 %v5953, 0.0
        %v6050 = vmax.f32 %v5954, 0.0
        %v6051 = vmax.f32 %v5955, 0.0
        %v6052 = vmax.f32 %v5956, 0.0
        %v6053 = vmax.f32 %v5957, 0.0
        %v6054 = vmax.f32 %v5958, 0.0
        %v6055 = vmax.f32 %v5959, 0.0
        %v6056 = vmax.f32 %v5960, 0.0
        %v6057 = vmax.f32 %v5961, 0.0
        %v6058 = vmax.f32 %v5962, 0.0
        %v6059 = vmax.f32 %v5963, 0.0
        %v6060 = vmax.f32 %v5964, 0.0
        %v6061 = vmax.f32 %v5965, 0.0
        %v6062 = vmax.f32 %v5966, 0.0
        %v6063 = vmax.f32 %v5967, 0.0
        %v6064 = vmax.f32 %v5968, 0.0
        %v6065 = vmax.f32 %v5969, 0.0
        %v6066 = vmax.f32 %v5970, 0.0
        %v6067 = vmax.f32 %v5971, 0.0
        %v6068 = vmax.f32 %v5972, 0.0
        %v6069 = vmax.f32 %v5973, 0.0
        %v6070 = vmax.f32 %v5974, 0.0
        %v6071 = vmax.f32 %v5975, 0.0
        %v6072 = vmax.f32 %v5976, 0.0
        %v6073 = vmax.f32 %v5977, 0.0
        %v6074 = vmax.f32 %v5978, 0.0
        %v6075 = vmax.f32 %v5979, 0.0
        %v6076 = vmax.f32 %v5980, 0.0
        %v6077 = vmax.f32 %v5981, 0.0
        %v6078 = vmax.f32 %v5982, 0.0
        %v6079 = vmax.f32 %v5983, 0.0
        %v6080 = vmax.f32 %v5984, 0.0
        %v6081 = vmax.f32 %v5985, 0.0
        %v6082 = vmax.f32 %v5986, 0.0
        %v6083 = vmax.f32 %v5987, 0.0
        %v6084 = vmax.f32 %v5988, 0.0
        %v6085 = vmax.f32 %v5989, 0.0
        %v6086 = vmax.f32 %v5990, 0.0
        %v6087 = vmax.f32 %v5991, 0.0
        %v6088 = vmax.f32 %v5992, 0.0
        %v6089 = vmax.f32 %v5993, 0.0
        %v6090 = vmax.f32 %v5994, 0.0
        %v6091 = vmax.f32 %v5995, 0.0
        %v6092 = vmax.f32 %v5996, 0.0
        %v6093 = vmax.f32 %v5997, 0.0
        %v6094 = vmax.f32 %v5998, 0.0
        %v6095 = vmax.f32 %v5999, 0.0
        %v6096 = vmax.f32 %v6000, 0.0
        %v6097 = vmax.f32 %v6001, 0.0
        %v6098 = vmax.f32 %v6002, 0.0
        %v6099 = vmax.f32 %v6003, 0.0
        %v6100 = vmax.f32 %v6004, 0.0
        %v6101 = vmax.f32 %v6005, 0.0
        %v6102 = vmax.f32 %v6006, 0.0
        %v6103 = vmax.f32 %v6007, 0.0
        %v6104 = vmax.f32 %v6008, 0.0
        %v6105 = vmax.f32 %v6009, 0.0
        %v6106 = vmax.f32 %v6010, 0.0
        %v6107 = vmax.f32 %v6011, 0.0
        %v6108 = vmax.f32 %v6012, 0.0
        %v6109 = vmax.f32 %v6013, 0.0
        %v6110 = vmax.f32 %v6014, 0.0
        %v6111 = vmax.f32 %v6015, 0.0
        %v6112 = vmax.f32 %v6016, 0.0
        %v6113 = vmax.f32 %v6017, 0.0
        %v6114 = vmax.f32 %v6018, 0.0
        %v6115 = vmax.f32 %v6019, 0.0
        %v6116 = vmax.f32 %v6020, 0.0
        %v6117 = vmax.f32 %v6021, 0.0
        %v6118 = vmax.f32 %v6022, 0.0
        %v6119 = vmax.f32 %v6023, 0.0
        %6216 = vrot.lane.b32.xlu0 %v6024, 96
        %v6217 = vpop.permute.xlu0 %6216
        %6218 = vrot.lane.b32.xlu0 %v6025, 96
        %v6219 = vpop.permute.xlu0 %6218
        %6220 = vrot.lane.b32.xlu0 %v6026, 96
        %v6221 = vpop.permute.xlu0 %6220
        %6222 = vrot.lane.b32.xlu0 %v6027, 96
        %v6223 = vpop.permute.xlu0 %6222
        %6224 = vrot.lane.b32.xlu0 %v6028, 96
        %v6225 = vpop.permute.xlu0 %6224
        %6226 = vrot.lane.b32.xlu0 %v6029, 96
        %v6227 = vpop.permute.xlu0 %6226
        %6228 = vrot.lane.b32.xlu0 %v6030, 96
        %v6229 = vpop.permute.xlu0 %6228
        %6230 = vrot.lane.b32.xlu0 %v6031, 96
        %v6231 = vpop.permute.xlu0 %6230
        %6232 = vrot.lane.b32.xlu0 %v6032, 96
        %v6233 = vpop.permute.xlu0 %6232
        %6234 = vrot.lane.b32.xlu0 %v6033, 96
        %v6235 = vpop.permute.xlu0 %6234
        %6236 = vrot.lane.b32.xlu0 %v6034, 96
        %v6237 = vpop.permute.xlu0 %6236
        %6238 = vrot.lane.b32.xlu0 %v6035, 96
        %v6239 = vpop.permute.xlu0 %6238
        %6240 = vrot.lane.b32.xlu0 %v6036, 96
        %v6241 = vpop.permute.xlu0 %6240
        %6242 = vrot.lane.b32.xlu0 %v6037, 96
        %v6243 = vpop.permute.xlu0 %6242
        %6244 = vrot.lane.b32.xlu0 %v6038, 96
        %v6245 = vpop.permute.xlu0 %6244
        %6246 = vrot.lane.b32.xlu0 %v6039, 96
        %v6247 = vpop.permute.xlu0 %6246
        %6248 = vrot.lane.b32.xlu0 %v6040, 96
        %v6249 = vpop.permute.xlu0 %6248
        %6250 = vrot.lane.b32.xlu0 %v6041, 96
        %v6251 = vpop.permute.xlu0 %6250
        %6252 = vrot.lane.b32.xlu0 %v6042, 96
        %v6253 = vpop.permute.xlu0 %6252
        %6254 = vrot.lane.b32.xlu0 %v6043, 96
        %v6255 = vpop.permute.xlu0 %6254
        %6256 = vrot.lane.b32.xlu0 %v6044, 96
        %v6257 = vpop.permute.xlu0 %6256
        %6258 = vrot.lane.b32.xlu0 %v6045, 96
        %v6259 = vpop.permute.xlu0 %6258
        %6260 = vrot.lane.b32.xlu0 %v6046, 96
        %v6261 = vpop.permute.xlu0 %6260
        %6262 = vrot.lane.b32.xlu0 %v6047, 96
        %v6263 = vpop.permute.xlu0 %6262
        %6264 = vrot.lane.b32.xlu0 %v6048, 96
        %v6265 = vpop.permute.xlu0 %6264
        %6266 = vrot.lane.b32.xlu0 %v6049, 96
        %v6267 = vpop.permute.xlu0 %6266
        %6268 = vrot.lane.b32.xlu0 %v6050, 96
        %v6269 = vpop.permute.xlu0 %6268
        %6270 = vrot.lane.b32.xlu0 %v6051, 96
        %v6271 = vpop.permute.xlu0 %6270
        %6272 = vrot.lane.b32.xlu0 %v6052, 96
        %v6273 = vpop.permute.xlu0 %6272
        %6274 = vrot.lane.b32.xlu0 %v6053, 96
        %v6275 = vpop.permute.xlu0 %6274
        %6276 = vrot.lane.b32.xlu0 %v6054, 96
        %v6277 = vpop.permute.xlu0 %6276
        %6278 = vrot.lane.b32.xlu0 %v6055, 96
        %v6279 = vpop.permute.xlu0 %6278
        %6280 = vrot.lane.b32.xlu0 %v6056, 96
        %v6281 = vpop.permute.xlu0 %6280
        %6282 = vrot.lane.b32.xlu0 %v6057, 96
        %v6283 = vpop.permute.xlu0 %6282
        %6284 = vrot.lane.b32.xlu0 %v6058, 96
        %v6285 = vpop.permute.xlu0 %6284
        %6286 = vrot.lane.b32.xlu0 %v6059, 96
        %v6287 = vpop.permute.xlu0 %6286
        %6288 = vrot.lane.b32.xlu0 %v6060, 96
        %v6289 = vpop.permute.xlu0 %6288
        %6290 = vrot.lane.b32.xlu0 %v6061, 96
        %v6291 = vpop.permute.xlu0 %6290
        %6292 = vrot.lane.b32.xlu0 %v6062, 96
        %v6293 = vpop.permute.xlu0 %6292
        %6294 = vrot.lane.b32.xlu0 %v6063, 96
        %v6295 = vpop.permute.xlu0 %6294
        %6296 = vrot.lane.b32.xlu0 %v6064, 96
        %v6297 = vpop.permute.xlu0 %6296
        %6298 = vrot.lane.b32.xlu0 %v6065, 96
        %v6299 = vpop.permute.xlu0 %6298
        %6300 = vrot.lane.b32.xlu0 %v6066, 96
        %v6301 = vpop.permute.xlu0 %6300
        %6302 = vrot.lane.b32.xlu0 %v6067, 96
        %v6303 = vpop.permute.xlu0 %6302
        %6304 = vrot.lane.b32.xlu0 %v6068, 96
        %v6305 = vpop.permute.xlu0 %6304
        %6306 = vrot.lane.b32.xlu0 %v6069, 96
        %v6307 = vpop.permute.xlu0 %6306
        %6308 = vrot.lane.b32.xlu0 %v6070, 96
        %v6309 = vpop.permute.xlu0 %6308
        %6310 = vrot.lane.b32.xlu0 %v6071, 96
        %v6311 = vpop.permute.xlu0 %6310
        %6312 = vrot.lane.b32.xlu0 %v6072, 96
        %v6313 = vpop.permute.xlu0 %6312
        %6314 = vrot.lane.b32.xlu0 %v6073, 96
        %v6315 = vpop.permute.xlu0 %6314
        %6316 = vrot.lane.b32.xlu0 %v6074, 96
        %v6317 = vpop.permute.xlu0 %6316
        %6318 = vrot.lane.b32.xlu0 %v6075, 96
        %v6319 = vpop.permute.xlu0 %6318
        %6320 = vrot.lane.b32.xlu0 %v6076, 96
        %v6321 = vpop.permute.xlu0 %6320
        %6322 = vrot.lane.b32.xlu0 %v6077, 96
        %v6323 = vpop.permute.xlu0 %6322
        %6324 = vrot.lane.b32.xlu0 %v6078, 96
        %v6325 = vpop.permute.xlu0 %6324
        %6326 = vrot.lane.b32.xlu0 %v6079, 96
        %v6327 = vpop.permute.xlu0 %6326
        %6328 = vrot.lane.b32.xlu0 %v6080, 96
        %v6329 = vpop.permute.xlu0 %6328
        %6330 = vrot.lane.b32.xlu0 %v6081, 96
        %v6331 = vpop.permute.xlu0 %6330
        %6332 = vrot.lane.b32.xlu0 %v6082, 96
        %v6333 = vpop.permute.xlu0 %6332
        %6334 = vrot.lane.b32.xlu0 %v6083, 96
        %v6335 = vpop.permute.xlu0 %6334
        %6336 = vrot.lane.b32.xlu0 %v6084, 96
        %v6337 = vpop.permute.xlu0 %6336
        %6338 = vrot.lane.b32.xlu0 %v6085, 96
        %v6339 = vpop.permute.xlu0 %6338
        %6340 = vrot.lane.b32.xlu0 %v6086, 96
        %v6341 = vpop.permute.xlu0 %6340
        %6342 = vrot.lane.b32.xlu0 %v6087, 96
        %v6343 = vpop.permute.xlu0 %6342
        %6344 = vrot.lane.b32.xlu0 %v6088, 96
        %v6345 = vpop.permute.xlu0 %6344
        %6346 = vrot.lane.b32.xlu0 %v6089, 96
        %v6347 = vpop.permute.xlu0 %6346
        %6348 = vrot.lane.b32.xlu0 %v6090, 96
        %v6349 = vpop.permute.xlu0 %6348
        %6350 = vrot.lane.b32.xlu0 %v6091, 96
        %v6351 = vpop.permute.xlu0 %6350
        %6352 = vrot.lane.b32.xlu0 %v6092, 96
        %v6353 = vpop.permute.xlu0 %6352
        %6354 = vrot.lane.b32.xlu0 %v6093, 96
        %v6355 = vpop.permute.xlu0 %6354
        %6356 = vrot.lane.b32.xlu0 %v6094, 96
        %v6357 = vpop.permute.xlu0 %6356
        %6358 = vrot.lane.b32.xlu0 %v6095, 96
        %v6359 = vpop.permute.xlu0 %6358
        %6360 = vrot.lane.b32.xlu0 %v6096, 96
        %v6361 = vpop.permute.xlu0 %6360
        %6362 = vrot.lane.b32.xlu0 %v6097, 96
        %v6363 = vpop.permute.xlu0 %6362
        %6364 = vrot.lane.b32.xlu0 %v6098, 96
        %v6365 = vpop.permute.xlu0 %6364
        %6366 = vrot.lane.b32.xlu0 %v6099, 96
        %v6367 = vpop.permute.xlu0 %6366
        %6368 = vrot.lane.b32.xlu0 %v6100, 96
        %v6369 = vpop.permute.xlu0 %6368
        %6370 = vrot.lane.b32.xlu0 %v6101, 96
        %v6371 = vpop.permute.xlu0 %6370
        %6372 = vrot.lane.b32.xlu0 %v6102, 96
        %v6373 = vpop.permute.xlu0 %6372
        %6374 = vrot.lane.b32.xlu0 %v6103, 96
        %v6375 = vpop.permute.xlu0 %6374
        %6376 = vrot.lane.b32.xlu0 %v6104, 96
        %v6377 = vpop.permute.xlu0 %6376
        %6378 = vrot.lane.b32.xlu0 %v6105, 96
        %v6379 = vpop.permute.xlu0 %6378
        %6380 = vrot.lane.b32.xlu0 %v6106, 96
        %v6381 = vpop.permute.xlu0 %6380
        %6382 = vrot.lane.b32.xlu0 %v6107, 96
        %v6383 = vpop.permute.xlu0 %6382
        %6384 = vrot.lane.b32.xlu0 %v6108, 96
        %v6385 = vpop.permute.xlu0 %6384
        %6386 = vrot.lane.b32.xlu0 %v6109, 96
        %v6387 = vpop.permute.xlu0 %6386
        %6388 = vrot.lane.b32.xlu0 %v6110, 96
        %v6389 = vpop.permute.xlu0 %6388
        %6390 = vrot.lane.b32.xlu0 %v6111, 96
        %v6391 = vpop.permute.xlu0 %6390
        %6392 = vrot.lane.b32.xlu0 %v6112, 96
        %v6393 = vpop.permute.xlu0 %6392
        %6394 = vrot.lane.b32.xlu0 %v6113, 96
        %v6395 = vpop.permute.xlu0 %6394
        %6396 = vrot.lane.b32.xlu0 %v6114, 96
        %v6397 = vpop.permute.xlu0 %6396
        %6398 = vrot.lane.b32.xlu0 %v6115, 96
        %v6399 = vpop.permute.xlu0 %6398
        %6400 = vrot.lane.b32.xlu0 %v6116, 96
        %v6401 = vpop.permute.xlu0 %6400
        %6402 = vrot.lane.b32.xlu0 %v6117, 96
        %v6403 = vpop.permute.xlu0 %6402
        %6404 = vrot.lane.b32.xlu0 %v6118, 96
        %v6405 = vpop.permute.xlu0 %6404
        %6406 = vrot.lane.b32.xlu0 %v6119, 96
        %v6407 = vpop.permute.xlu0 %6406
        %v6504 = vmax.f32 %v6024, %v6217
        %v6505 = vmax.f32 %v6025, %v6219
        %v6506 = vmax.f32 %v6026, %v6221
        %v6507 = vmax.f32 %v6027, %v6223
        %v6508 = vmax.f32 %v6028, %v6225
        %v6509 = vmax.f32 %v6029, %v6227
        %v6510 = vmax.f32 %v6030, %v6229
        %v6511 = vmax.f32 %v6031, %v6231
        %v6512 = vmax.f32 %v6032, %v6233
        %v6513 = vmax.f32 %v6033, %v6235
        %v6514 = vmax.f32 %v6034, %v6237
        %v6515 = vmax.f32 %v6035, %v6239
        %v6516 = vmax.f32 %v6036, %v6241
        %v6517 = vmax.f32 %v6037, %v6243
        %v6518 = vmax.f32 %v6038, %v6245
        %v6519 = vmax.f32 %v6039, %v6247
        %v6520 = vmax.f32 %v6040, %v6249
        %v6521 = vmax.f32 %v6041, %v6251
        %v6522 = vmax.f32 %v6042, %v6253
        %v6523 = vmax.f32 %v6043, %v6255
        %v6524 = vmax.f32 %v6044, %v6257
        %v6525 = vmax.f32 %v6045, %v6259
        %v6526 = vmax.f32 %v6046, %v6261
        %v6527 = vmax.f32 %v6047, %v6263
        %v6528 = vmax.f32 %v6048, %v6265
        %v6529 = vmax.f32 %v6049, %v6267
        %v6530 = vmax.f32 %v6050, %v6269
        %v6531 = vmax.f32 %v6051, %v6271
        %v6532 = vmax.f32 %v6052, %v6273
        %v6533 = vmax.f32 %v6053, %v6275
        %v6534 = vmax.f32 %v6054, %v6277
        %v6535 = vmax.f32 %v6055, %v6279
        %v6536 = vmax.f32 %v6056, %v6281
        %v6537 = vmax.f32 %v6057, %v6283
        %v6538 = vmax.f32 %v6058, %v6285
        %v6539 = vmax.f32 %v6059, %v6287
        %v6540 = vmax.f32 %v6060, %v6289
        %v6541 = vmax.f32 %v6061, %v6291
        %v6542 = vmax.f32 %v6062, %v6293
        %v6543 = vmax.f32 %v6063, %v6295
        %v6544 = vmax.f32 %v6064, %v6297
        %v6545 = vmax.f32 %v6065, %v6299
        %v6546 = vmax.f32 %v6066, %v6301
        %v6547 = vmax.f32 %v6067, %v6303
        %v6548 = vmax.f32 %v6068, %v6305
        %v6549 = vmax.f32 %v6069, %v6307
        %v6550 = vmax.f32 %v6070, %v6309
        %v6551 = vmax.f32 %v6071, %v6311
        %v6552 = vmax.f32 %v6072, %v6313
        %v6553 = vmax.f32 %v6073, %v6315
        %v6554 = vmax.f32 %v6074, %v6317
        %v6555 = vmax.f32 %v6075, %v6319
        %v6556 = vmax.f32 %v6076, %v6321
        %v6557 = vmax.f32 %v6077, %v6323
        %v6558 = vmax.f32 %v6078, %v6325
        %v6559 = vmax.f32 %v6079, %v6327
        %v6560 = vmax.f32 %v6080, %v6329
        %v6561 = vmax.f32 %v6081, %v6331
        %v6562 = vmax.f32 %v6082, %v6333
        %v6563 = vmax.f32 %v6083, %v6335
        %v6564 = vmax.f32 %v6084, %v6337
        %v6565 = vmax.f32 %v6085, %v6339
        %v6566 = vmax.f32 %v6086, %v6341
        %v6567 = vmax.f32 %v6087, %v6343
        %v6568 = vmax.f32 %v6088, %v6345
        %v6569 = vmax.f32 %v6089, %v6347
        %v6570 = vmax.f32 %v6090, %v6349
        %v6571 = vmax.f32 %v6091, %v6351
        %v6572 = vmax.f32 %v6092, %v6353
        %v6573 = vmax.f32 %v6093, %v6355
        %v6574 = vmax.f32 %v6094, %v6357
        %v6575 = vmax.f32 %v6095, %v6359
        %v6576 = vmax.f32 %v6096, %v6361
        %v6577 = vmax.f32 %v6097, %v6363
        %v6578 = vmax.f32 %v6098, %v6365
        %v6579 = vmax.f32 %v6099, %v6367
        %v6580 = vmax.f32 %v6100, %v6369
        %v6581 = vmax.f32 %v6101, %v6371
        %v6582 = vmax.f32 %v6102, %v6373
        %v6583 = vmax.f32 %v6103, %v6375
        %v6584 = vmax.f32 %v6104, %v6377
        %v6585 = vmax.f32 %v6105, %v6379
        %v6586 = vmax.f32 %v6106, %v6381
        %v6587 = vmax.f32 %v6107, %v6383
        %v6588 = vmax.f32 %v6108, %v6385
        %v6589 = vmax.f32 %v6109, %v6387
        %v6590 = vmax.f32 %v6110, %v6389
        %v6591 = vmax.f32 %v6111, %v6391
        %v6592 = vmax.f32 %v6112, %v6393
        %v6593 = vmax.f32 %v6113, %v6395
        %v6594 = vmax.f32 %v6114, %v6397
        %v6595 = vmax.f32 %v6115, %v6399
        %v6596 = vmax.f32 %v6116, %v6401
        %v6597 = vmax.f32 %v6117, %v6403
        %v6598 = vmax.f32 %v6118, %v6405
        %v6599 = vmax.f32 %v6119, %v6407
        %v6600 = vpack.c.bf16 %v6505, %v6504
        %v6601 = vpack.c.bf16 %v6507, %v6506
        %v6602 = vpack.c.bf16 %v6509, %v6508
        %v6603 = vpack.c.bf16 %v6511, %v6510
        %v6604 = vpack.c.bf16 %v6513, %v6512
        %v6605 = vpack.c.bf16 %v6515, %v6514
        %v6606 = vpack.c.bf16 %v6517, %v6516
        %v6607 = vpack.c.bf16 %v6519, %v6518
        %v6608 = vpack.c.bf16 %v6521, %v6520
        %v6609 = vpack.c.bf16 %v6523, %v6522
        %v6610 = vpack.c.bf16 %v6525, %v6524
        %v6611 = vpack.c.bf16 %v6527, %v6526
        %v6612 = vpack.c.bf16 %v6529, %v6528
        %v6613 = vpack.c.bf16 %v6531, %v6530
        %v6614 = vpack.c.bf16 %v6533, %v6532
        %v6615 = vpack.c.bf16 %v6535, %v6534
        %v6616 = vpack.c.bf16 %v6537, %v6536
        %v6617 = vpack.c.bf16 %v6539, %v6538
        %v6618 = vpack.c.bf16 %v6541, %v6540
        %v6619 = vpack.c.bf16 %v6543, %v6542
        %v6620 = vpack.c.bf16 %v6545, %v6544
        %v6621 = vpack.c.bf16 %v6547, %v6546
        %v6622 = vpack.c.bf16 %v6549, %v6548
        %v6623 = vpack.c.bf16 %v6551, %v6550
        %v6624 = vpack.c.bf16 %v6553, %v6552
        %v6625 = vpack.c.bf16 %v6555, %v6554
        %v6626 = vpack.c.bf16 %v6557, %v6556
        %v6627 = vpack.c.bf16 %v6559, %v6558
        %v6628 = vpack.c.bf16 %v6561, %v6560
        %v6629 = vpack.c.bf16 %v6563, %v6562
        %v6630 = vpack.c.bf16 %v6565, %v6564
        %v6631 = vpack.c.bf16 %v6567, %v6566
        %v6632 = vpack.c.bf16 %v6569, %v6568
        %v6633 = vpack.c.bf16 %v6571, %v6570
        %v6634 = vpack.c.bf16 %v6573, %v6572
        %v6635 = vpack.c.bf16 %v6575, %v6574
        %v6636 = vpack.c.bf16 %v6577, %v6576
        %v6637 = vpack.c.bf16 %v6579, %v6578
        %v6638 = vpack.c.bf16 %v6581, %v6580
        %v6639 = vpack.c.bf16 %v6583, %v6582
        %v6640 = vpack.c.bf16 %v6585, %v6584
        %v6641 = vpack.c.bf16 %v6587, %v6586
        %v6642 = vpack.c.bf16 %v6589, %v6588
        %v6643 = vpack.c.bf16 %v6591, %v6590
        %v6644 = vpack.c.bf16 %v6593, %v6592
        %v6645 = vpack.c.bf16 %v6595, %v6594
        %v6646 = vpack.c.bf16 %v6597, %v6596
        %v6647 = vpack.c.bf16 %v6599, %v6598
        %v6648 = vld [vmem:[%s6] sm:$0xf]
        %v6649 = vld [vmem:[%s6 + $0x4] sm:$0xf]
        %v6650 = vld [vmem:[%s6 + $0x8] sm:$0xf]
        %v6651 = vld [vmem:[%s6 + $0xc] sm:$0xf]
        %v6652 = vld [vmem:[%s6 + $0x10] sm:$0xf]
        %v6653 = vld [vmem:[%s6 + $0x14] sm:$0xf]
        %v6654 = vld [vmem:[%s6 + $0x18] sm:$0xf]
        %v6655 = vld [vmem:[%s6 + $0x1c] sm:$0xf]
        %v6656 = vld [vmem:[%s6 + $0x20] sm:$0xf]
        %v6657 = vld [vmem:[%s6 + $0x24] sm:$0xf]
        %v6658 = vld [vmem:[%s6 + $0x28] sm:$0xf]
        %v6659 = vld [vmem:[%s6 + $0x2c] sm:$0xf]
        %v6660 = vld [vmem:[%s6 + $0x30] sm:$0xf]
        %v6661 = vld [vmem:[%s6 + $0x34] sm:$0xf]
        %v6662 = vld [vmem:[%s6 + $0x38] sm:$0xf]
        %v6663 = vld [vmem:[%s6 + $0x3c] sm:$0xf]
        %v6664 = vld [vmem:[%s6 + $0x40] sm:$0xf]
        %v6665 = vld [vmem:[%s6 + $0x44] sm:$0xf]
        %v6666 = vld [vmem:[%s6 + $0x48] sm:$0xf]
        %v6667 = vld [vmem:[%s6 + $0x4c] sm:$0xf]
        %v6668 = vld [vmem:[%s6 + $0x50] sm:$0xf]
        %v6669 = vld [vmem:[%s6 + $0x54] sm:$0xf]
        %v6670 = vld [vmem:[%s6 + $0x58] sm:$0xf]
        %v6671 = vld [vmem:[%s6 + $0x5c] sm:$0xf]
        %v6676 = vunpack.c.l.b16 %v6648
        %v6677 = vunpack.c.l.b16 %v6649
        %v6678 = vunpack.c.l.b16 %v6650
        %v6679 = vunpack.c.l.b16 %v6651
        %v6680 = vpack.c.b16 %v6677, %v6676
        %v6681 = vpack.c.b16 %v6679, %v6678
        %vm6684 = vcmask 261120
        %v6686 = vsel %vm6684, %v6600, 0
        %v6689 = vsel %vm6684, %v6601, 0
        %v6692 = vsel %vm6684, %v6602, 0
        %v6695 = vsel %vm6684, %v6603, 0
        %v6698 = vsel %vm6684, %v6604, 0
        %v6701 = vsel %vm6684, %v6605, 0
        %v6704 = vsel %vm6684, %v6606, 0
        %v6707 = vsel %vm6684, %v6607, 0
        %6709 = vmatprep.subr.bf16.mxu0 0
        %6710 = vmatpush1.bf16.msra.mxu0 %v6680
        %6711 = vmatprep.subr.bf16.mxu0 0
        %6712 = vmatpush1.bf16.msra.mxu0 %v6681
        %6713 = vmatprep.subr.bf16.mxu0 0
        %6714 = vmatpush1.bf16.msra.mxu0 0
        %6715 = vmatprep.subr.bf16.mxu0 0
        %6716 = vmatpush1.bf16.msra.mxu0 0
        %6717 = vmatprep.subr.bf16.mxu0 0
        %6718 = vmatpush1.bf16.msra.mxu0 0
        %6719 = vmatprep.subr.bf16.mxu0 0
        %6720 = vmatpush1.bf16.msra.mxu0 0
        %6721 = vmatprep.subr.bf16.mxu0 0
        %6722 = vmatpush1.bf16.msra.mxu0 0
        %6723 = vmatprep.subr.bf16.mxu0 0
        %6724 = vmatpush1.bf16.msra.mxu0 0
        %6725 = vmatprep.subr.bf16.mxu0 0
        %6726 = vmatpush1.bf16.msra.mxu0 0
        %6727 = vmatprep.subr.bf16.mxu0 0
        %6728 = vmatpush1.bf16.msra.mxu0 0
        %6729 = vmatprep.subr.bf16.mxu0 0
        %6730 = vmatpush1.bf16.msra.mxu0 0
        %6731 = vmatprep.subr.bf16.mxu0 0
        %6732 = vmatpush1.bf16.msra.mxu0 0
        %6733 = vmatprep.subr.bf16.mxu0 0
        %6734 = vmatpush1.bf16.msra.mxu0 0
        %6735 = vmatprep.subr.bf16.mxu0 0
        %6736 = vmatpush1.bf16.msra.mxu0 0
        %6737 = vmatprep.subr.bf16.mxu0 0
        %6738 = vmatpush1.bf16.msra.mxu0 0
        %6739 = vmatprep.subr.bf16.mxu0 0
        %6740 = vmatpush1.bf16.msra.mxu0 0
        %6741 = vmatprep.mubr.bf16.mxu0 0
        %6742 = vmatmul.mubr.bf16.gmra.mrb[0].mxu0 %v6686
        %v6743 = vpop.f32.mrb[0].mxu0
        %v6744 = vadd.f32 0.0, %v6743
        %v6745 = vpop.f32.mrb[0].mxu0
        %v6746 = vpop.f32.mrb[0].mxu0
        %v6747 = vadd.f32 0.0, %v6746
        %v6748 = vpop.f32.mrb[0].mxu0
        %6749 = vmatprep.mubr.bf16.mxu0 0
        %6750 = vmatmul.mubr.bf16.gmra.mrb[0].mxu0 %v6689
        %v6751 = vpop.f32.mrb[0].mxu0
        %v6752 = vadd.f32 0.0, %v6751
        %v6753 = vpop.f32.mrb[0].mxu0
        %v6754 = vpop.f32.mrb[0].mxu0
        %v6755 = vadd.f32 0.0, %v6754
        %v6756 = vpop.f32.mrb[0].mxu0
        %6757 = vmatprep.mubr.bf16.mxu0 0
        %6758 = vmatmul.mubr.bf16.gmra.mrb[0].mxu0 %v6692
        %v6759 = vpop.f32.mrb[0].mxu0
        %v6760 = vadd.f32 0.0, %v6759
        %v6761 = vpop.f32.mrb[0].mxu0
        %v6762 = vpop.f32.mrb[0].mxu0
        %v6763 = vadd.f32 0.0, %v6762
        %v6764 = vpop.f32.mrb[0].mxu0
        %6765 = vmatprep.mubr.bf16.mxu0 0
        %6766 = vmatmul.mubr.bf16.gmra.mrb[0].mxu0 %v6695
        %v6767 = vpop.f32.mrb[0].mxu0
        %v6768 = vadd.f32 0.0, %v6767
        %v6769 = vpop.f32.mrb[0].mxu0
        %v6770 = vpop.f32.mrb[0].mxu0
        %v6771 = vadd.f32 0.0, %v6770
        %v6772 = vpop.f32.mrb[0].mxu0
        %6773 = vmatprep.mubr.bf16.mxu0 0
        %6774 = vmatmul.mubr.bf16.gmra.mrb[0].mxu0 %v6698
        %v6775 = vpop.f32.mrb[0].mxu0
        %v6776 = vadd.f32 0.0, %v6775
        %v6777 = vpop.f32.mrb[0].mxu0
        %v6778 = vpop.f32.mrb[0].mxu0
        %v6779 = vadd.f32 0.0, %v6778
        %v6780 = vpop.f32.mrb[0].mxu0
        %6781 = vmatprep.mubr.bf16.mxu0 0
        %6782 = vmatmul.mubr.bf16.gmra.mrb[0].mxu0 %v6701
        %v6783 = vpop.f32.mrb[0].mxu0
        %v6784 = vadd.f32 0.0, %v6783
        %v6785 = vpop.f32.mrb[0].mxu0
        %v6786 = vpop.f32.mrb[0].mxu0
        %v6787 = vadd.f32 0.0, %v6786
        %v6788 = vpop.f32.mrb[0].mxu0
        %6789 = vmatprep.mubr.bf16.mxu0 0
        %6790 = vmatmul.mubr.bf16.gmra.mrb[0].mxu0 %v6704
        %v6791 = vpop.f32.mrb[0].mxu0
        %v6792 = vadd.f32 0.0, %v6791
        %v6793 = vpop.f32.mrb[0].mxu0
        %v6794 = vpop.f32.mrb[0].mxu0
        %v6795 = vadd.f32 0.0, %v6794
        %v6796 = vpop.f32.mrb[0].mxu0
        %6797 = vmatprep.mubr.bf16.mxu0 0
        %6798 = vmatmul.mubr.bf16.gmra.mrb[0].mxu0 %v6707
        %v6799 = vpop.f32.mrb[0].mxu0
        %v6800 = vadd.f32 0.0, %v6799
        %v6801 = vpop.f32.mrb[0].mxu0
        %v6802 = vpop.f32.mrb[0].mxu0
        %v6803 = vadd.f32 0.0, %v6802
        %v6804 = vpop.f32.mrb[0].mxu0
        %6805 = vdwg.mxu0
        %v6810 = vunpack.c.l.b16 %v6652
        %v6811 = vunpack.c.l.b16 %v6653
        %v6812 = vunpack.c.l.b16 %v6654
        %v6813 = vunpack.c.l.b16 %v6655
        %v6814 = vpack.c.b16 %v6811, %v6810
        %v6815 = vpack.c.b16 %v6813, %v6812
        %v6819 = vsel %vm6684, %v6608, 0
        %v6822 = vsel %vm6684, %v6609, 0
        %v6825 = vsel %vm6684, %v6610, 0
        %v6828 = vsel %vm6684, %v6611, 0
        %v6831 = vsel %vm6684, %v6612, 0
        %v6834 = vsel %vm6684, %v6613, 0
        %v6837 = vsel %vm6684, %v6614, 0
        %v6840 = vsel %vm6684, %v6615, 0
        %6842 = vmatprep.subr.bf16.mxu0 0
        %6843 = vmatpush1.bf16.msra.mxu0 %v6814
        %6844 = vmatprep.subr.bf16.mxu0 0
        %6845 = vmatpush1.bf16.msra.mxu0 %v6815
        %6846 = vmatprep.subr.bf16.mxu0 0
        %6847 = vmatpush1.bf16.msra.mxu0 0
        %6848 = vmatprep.subr.bf16.mxu0 0
        %6849 = vmatpush1.bf16.msra.mxu0 0
        %6850 = vmatprep.subr.bf16.mxu0 0
        %6851 = vmatpush1.bf16.msra.mxu0 0
        %6852 = vmatprep.subr.bf16.mxu0 0
        %6853 = vmatpush1.bf16.msra.mxu0 0
        %6854 = vmatprep.subr.bf16.mxu0 0
        %6855 = vmatpush1.bf16.msra.mxu0 0
        %6856 = vmatprep.subr.bf16.mxu0 0
        %6857 = vmatpush1.bf16.msra.mxu0 0
        %6858 = vmatprep.subr.bf16.mxu0 0
        %6859 = vmatpush1.bf16.msra.mxu0 0
        %6860 = vmatprep.subr.bf16.mxu0 0
        %6861 = vmatpush1.bf16.msra.mxu0 0
        %6862 = vmatprep.subr.bf16.mxu0 0
        %6863 = vmatpush1.bf16.msra.mxu0 0
        %6864 = vmatprep.subr.bf16.mxu0 0
        %6865 = vmatpush1.bf16.msra.mxu0 0
        %6866 = vmatprep.subr.bf16.mxu0 0
        %6867 = vmatpush1.bf16.msra.mxu0 0
        %6868 = vmatprep.subr.bf16.mxu0 0
        %6869 = vmatpush1.bf16.msra.mxu0 0
        %6870 = vmatprep.subr.bf16.mxu0 0
        %6871 = vmatpush1.bf16.msra.mxu0 0
        %6872 = vmatprep.subr.bf16.mxu0 0
        %6873 = vmatpush1.bf16.msra.mxu0 0
        %6874 = vmatprep.mubr.bf16.mxu0 0
        %6875 = vmatmul.mubr.bf16.gmra.mrb[0].mxu0 %v6819
        %v6876 = vpop.f32.mrb[0].mxu0
        %v6877 = vadd.f32 0.0, %v6876
        %v6878 = vpop.f32.mrb[0].mxu0
        %v6879 = vpop.f32.mrb[0].mxu0
        %v6880 = vadd.f32 0.0, %v6879
        %v6881 = vpop.f32.mrb[0].mxu0
        %6882 = vmatprep.mubr.bf16.mxu0 0
        %6883 = vmatmul.mubr.bf16.gmra.mrb[0].mxu0 %v6822
        %v6884 = vpop.f32.mrb[0].mxu0
        %v6885 = vadd.f32 0.0, %v6884
        %v6886 = vpop.f32.mrb[0].mxu0
        %v6887 = vpop.f32.mrb[0].mxu0
        %v6888 = vadd.f32 0.0, %v6887
        %v6889 = vpop.f32.mrb[0].mxu0
        %6890 = vmatprep.mubr.bf16.mxu0 0
        %6891 = vmatmul.mubr.bf16.gmra.mrb[0].mxu0 %v6825
        %v6892 = vpop.f32.mrb[0].mxu0
        %v6893 = vadd.f32 0.0, %v6892
        %v6894 = vpop.f32.mrb[0].mxu0
        %v6895 = vpop.f32.mrb[0].mxu0
        %v6896 = vadd.f32 0.0, %v6895
        %v6897 = vpop.f32.mrb[0].mxu0
        %6898 = vmatprep.mubr.bf16.mxu0 0
        %6899 = vmatmul.mubr.bf16.gmra.mrb[0].mxu0 %v6828
        %v6900 = vpop.f32.mrb[0].mxu0
        %v6901 = vadd.f32 0.0, %v6900
        %v6902 = vpop.f32.mrb[0].mxu0
        %v6903 = vpop.f32.mrb[0].mxu0
        %v6904 = vadd.f32 0.0, %v6903
        %v6905 = vpop.f32.mrb[0].mxu0
        %6906 = vmatprep.mubr.bf16.mxu0 0
        %6907 = vmatmul.mubr.bf16.gmra.mrb[0].mxu0 %v6831
        %v6908 = vpop.f32.mrb[0].mxu0
        %v6909 = vadd.f32 0.0, %v6908
        %v6910 = vpop.f32.mrb[0].mxu0
        %v6911 = vpop.f32.mrb[0].mxu0
        %v6912 = vadd.f32 0.0, %v6911
        %v6913 = vpop.f32.mrb[0].mxu0
        %6914 = vmatprep.mubr.bf16.mxu0 0
        %6915 = vmatmul.mubr.bf16.gmra.mrb[0].mxu0 %v6834
        %v6916 = vpop.f32.mrb[0].mxu0
        %v6917 = vadd.f32 0.0, %v6916
        %v6918 = vpop.f32.mrb[0].mxu0
        %v6919 = vpop.f32.mrb[0].mxu0
        %v6920 = vadd.f32 0.0, %v6919
        %v6921 = vpop.f32.mrb[0].mxu0
        %6922 = vmatprep.mubr.bf16.mxu0 0
        %6923 = vmatmul.mubr.bf16.gmra.mrb[0].mxu0 %v6837
        %v6924 = vpop.f32.mrb[0].mxu0
        %v6925 = vadd.f32 0.0, %v6924
        %v6926 = vpop.f32.mrb[0].mxu0
        %v6927 = vpop.f32.mrb[0].mxu0
        %v6928 = vadd.f32 0.0, %v6927
        %v6929 = vpop.f32.mrb[0].mxu0
        %6930 = vmatprep.mubr.bf16.mxu0 0
        %6931 = vmatmul.mubr.bf16.gmra.mrb[0].mxu0 %v6840
        %v6932 = vpop.f32.mrb[0].mxu0
        %v6933 = vadd.f32 0.0, %v6932
        %v6934 = vpop.f32.mrb[0].mxu0
        %v6935 = vpop.f32.mrb[0].mxu0
        %v6936 = vadd.f32 0.0, %v6935
        %v6937 = vpop.f32.mrb[0].mxu0
        %6938 = vdwg.mxu0
        %v6943 = vunpack.c.l.b16 %v6656
        %v6944 = vunpack.c.l.b16 %v6657
        %v6945 = vunpack.c.l.b16 %v6658
        %v6946 = vunpack.c.l.b16 %v6659
        %v6947 = vpack.c.b16 %v6944, %v6943
        %v6948 = vpack.c.b16 %v6946, %v6945
        %v6952 = vsel %vm6684, %v6616, 0
        %v6955 = vsel %vm6684, %v6617, 0
        %v6958 = vsel %vm6684, %v6618, 0
        %v6961 = vsel %vm6684, %v6619, 0
        %v6964 = vsel %vm6684, %v6620, 0
        %v6967 = vsel %vm6684, %v6621, 0
        %v6970 = vsel %vm6684, %v6622, 0
        %v6973 = vsel %vm6684, %v6623, 0
        %6975 = vmatprep.subr.bf16.mxu0 0
        %6976 = vmatpush1.bf16.msra.mxu0 %v6947
        %6977 = vmatprep.subr.bf16.mxu0 0
        %6978 = vmatpush1.bf16.msra.mxu0 %v6948
        %6979 = vmatprep.subr.bf16.mxu0 0
        %6980 = vmatpush1.bf16.msra.mxu0 0
        %6981 = vmatprep.subr.bf16.mxu0 0
        %6982 = vmatpush1.bf16.msra.mxu0 0
        %6983 = vmatprep.subr.bf16.mxu0 0
        %6984 = vmatpush1.bf16.msra.mxu0 0
        %6985 = vmatprep.subr.bf16.mxu0 0
        %6986 = vmatpush1.bf16.msra.mxu0 0
        %6987 = vmatprep.subr.bf16.mxu0 0
        %6988 = vmatpush1.bf16.msra.mxu0 0
        %6989 = vmatprep.subr.bf16.mxu0 0
        %6990 = vmatpush1.bf16.msra.mxu0 0
        %6991 = vmatprep.subr.bf16.mxu0 0
        %6992 = vmatpush1.bf16.msra.mxu0 0
        %6993 = vmatprep.subr.bf16.mxu0 0
        %6994 = vmatpush1.bf16.msra.mxu0 0
        %6995 = vmatprep.subr.bf16.mxu0 0
        %6996 = vmatpush1.bf16.msra.mxu0 0
        %6997 = vmatprep.subr.bf16.mxu0 0
        %6998 = vmatpush1.bf16.msra.mxu0 0
        %6999 = vmatprep.subr.bf16.mxu0 0
        %7000 = vmatpush1.bf16.msra.mxu0 0
        %7001 = vmatprep.subr.bf16.mxu0 0
        %7002 = vmatpush1.bf16.msra.mxu0 0
        %7003 = vmatprep.subr.bf16.mxu0 0
        %7004 = vmatpush1.bf16.msra.mxu0 0
        %7005 = vmatprep.subr.bf16.mxu0 0
        %7006 = vmatpush1.bf16.msra.mxu0 0
        %7007 = vmatprep.mubr.bf16.mxu0 0
        %7008 = vmatmul.mubr.bf16.gmra.mrb[0].mxu0 %v6952
        %v7009 = vpop.f32.mrb[0].mxu0
        %v7010 = vadd.f32 0.0, %v7009
        %v7011 = vpop.f32.mrb[0].mxu0
        %v7012 = vpop.f32.mrb[0].mxu0
        %v7013 = vadd.f32 0.0, %v7012
        %v7014 = vpop.f32.mrb[0].mxu0
        %7015 = vmatprep.mubr.bf16.mxu0 0
        %7016 = vmatmul.mubr.bf16.gmra.mrb[0].mxu0 %v6955
        %v7017 = vpop.f32.mrb[0].mxu0
        %v7018 = vadd.f32 0.0, %v7017
        %v7019 = vpop.f32.mrb[0].mxu0
        %v7020 = vpop.f32.mrb[0].mxu0
        %v7021 = vadd.f32 0.0, %v7020
        %v7022 = vpop.f32.mrb[0].mxu0
        %7023 = vmatprep.mubr.bf16.mxu0 0
        %7024 = vmatmul.mubr.bf16.gmra.mrb[0].mxu0 %v6958
        %v7025 = vpop.f32.mrb[0].mxu0
        %v7026 = vadd.f32 0.0, %v7025
        %v7027 = vpop.f32.mrb[0].mxu0
        %v7028 = vpop.f32.mrb[0].mxu0
        %v7029 = vadd.f32 0.0, %v7028
        %v7030 = vpop.f32.mrb[0].mxu0
        %7031 = vmatprep.mubr.bf16.mxu0 0
        %7032 = vmatmul.mubr.bf16.gmra.mrb[0].mxu0 %v6961
        %v7033 = vpop.f32.mrb[0].mxu0
        %v7034 = vadd.f32 0.0, %v7033
        %v7035 = vpop.f32.mrb[0].mxu0
        %v7036 = vpop.f32.mrb[0].mxu0
        %v7037 = vadd.f32 0.0, %v7036
        %v7038 = vpop.f32.mrb[0].mxu0
        %7039 = vmatprep.mubr.bf16.mxu0 0
        %7040 = vmatmul.mubr.bf16.gmra.mrb[0].mxu0 %v6964
        %v7041 = vpop.f32.mrb[0].mxu0
        %v7042 = vadd.f32 0.0, %v7041
        %v7043 = vpop.f32.mrb[0].mxu0
        %v7044 = vpop.f32.mrb[0].mxu0
        %v7045 = vadd.f32 0.0, %v7044
        %v7046 = vpop.f32.mrb[0].mxu0
        %7047 = vmatprep.mubr.bf16.mxu0 0
        %7048 = vmatmul.mubr.bf16.gmra.mrb[0].mxu0 %v6967
        %v7049 = vpop.f32.mrb[0].mxu0
        %v7050 = vadd.f32 0.0, %v7049
        %v7051 = vpop.f32.mrb[0].mxu0
        %v7052 = vpop.f32.mrb[0].mxu0
        %v7053 = vadd.f32 0.0, %v7052
        %v7054 = vpop.f32.mrb[0].mxu0
        %7055 = vmatprep.mubr.bf16.mxu0 0
        %7056 = vmatmul.mubr.bf16.gmra.mrb[0].mxu0 %v6970
        %v7057 = vpop.f32.mrb[0].mxu0
        %v7058 = vadd.f32 0.0, %v7057
        %v7059 = vpop.f32.mrb[0].mxu0
        %v7060 = vpop.f32.mrb[0].mxu0
        %v7061 = vadd.f32 0.0, %v7060
        %v7062 = vpop.f32.mrb[0].mxu0
        %7063 = vmatprep.mubr.bf16.mxu0 0
        %7064 = vmatmul.mubr.bf16.gmra.mrb[0].mxu0 %v6973
        %v7065 = vpop.f32.mrb[0].mxu0
        %v7066 = vadd.f32 0.0, %v7065
        %v7067 = vpop.f32.mrb[0].mxu0
        %v7068 = vpop.f32.mrb[0].mxu0
        %v7069 = vadd.f32 0.0, %v7068
        %v7070 = vpop.f32.mrb[0].mxu0
        %7071 = vdwg.mxu0
        %v7076 = vunpack.c.l.b16 %v6660
        %v7077 = vunpack.c.l.b16 %v6661
        %v7078 = vunpack.c.l.b16 %v6662
        %v7079 = vunpack.c.l.b16 %v6663
        %v7080 = vpack.c.b16 %v7077, %v7076
        %v7081 = vpack.c.b16 %v7079, %v7078
        %v7085 = vsel %vm6684, %v6624, 0
        %v7088 = vsel %vm6684, %v6625, 0
        %v7091 = vsel %vm6684, %v6626, 0
        %v7094 = vsel %vm6684, %v6627, 0
        %v7097 = vsel %vm6684, %v6628, 0
        %v7100 = vsel %vm6684, %v6629, 0
        %v7103 = vsel %vm6684, %v6630, 0
        %v7106 = vsel %vm6684, %v6631, 0
        %7108 = vmatprep.subr.bf16.mxu0 0
        %7109 = vmatpush1.bf16.msra.mxu0 %v7080
        %7110 = vmatprep.subr.bf16.mxu0 0
        %7111 = vmatpush1.bf16.msra.mxu0 %v7081
        %7112 = vmatprep.subr.bf16.mxu0 0
        %7113 = vmatpush1.bf16.msra.mxu0 0
        %7114 = vmatprep.subr.bf16.mxu0 0
        %7115 = vmatpush1.bf16.msra.mxu0 0
        %7116 = vmatprep.subr.bf16.mxu0 0
        %7117 = vmatpush1.bf16.msra.mxu0 0
        %7118 = vmatprep.subr.bf16.mxu0 0
        %7119 = vmatpush1.bf16.msra.mxu0 0
        %7120 = vmatprep.subr.bf16.mxu0 0
        %7121 = vmatpush1.bf16.msra.mxu0 0
        %7122 = vmatprep.subr.bf16.mxu0 0
        %7123 = vmatpush1.bf16.msra.mxu0 0
        %7124 = vmatprep.subr.bf16.mxu0 0
        %7125 = vmatpush1.bf16.msra.mxu0 0
        %7126 = vmatprep.subr.bf16.mxu0 0
        %7127 = vmatpush1.bf16.msra.mxu0 0
        %7128 = vmatprep.subr.bf16.mxu0 0
        %7129 = vmatpush1.bf16.msra.mxu0 0
        %7130 = vmatprep.subr.bf16.mxu0 0
        %7131 = vmatpush1.bf16.msra.mxu0 0
        %7132 = vmatprep.subr.bf16.mxu0 0
        %7133 = vmatpush1.bf16.msra.mxu0 0
        %7134 = vmatprep.subr.bf16.mxu0 0
        %7135 = vmatpush1.bf16.msra.mxu0 0
        %7136 = vmatprep.subr.bf16.mxu0 0
        %7137 = vmatpush1.bf16.msra.mxu0 0
        %7138 = vmatprep.subr.bf16.mxu0 0
        %7139 = vmatpush1.bf16.msra.mxu0 0
        %7140 = vmatprep.mubr.bf16.mxu0 0
        %7141 = vmatmul.mubr.bf16.gmra.mrb[0].mxu0 %v7085
        %v7142 = vpop.f32.mrb[0].mxu0
        %v7143 = vadd.f32 0.0, %v7142
        %v7144 = vpop.f32.mrb[0].mxu0
        %v7145 = vpop.f32.mrb[0].mxu0
        %v7146 = vadd.f32 0.0, %v7145
        %v7147 = vpop.f32.mrb[0].mxu0
        %7148 = vmatprep.mubr.bf16.mxu0 0
        %7149 = vmatmul.mubr.bf16.gmra.mrb[0].mxu0 %v7088
        %v7150 = vpop.f32.mrb[0].mxu0
        %v7151 = vadd.f32 0.0, %v7150
        %v7152 = vpop.f32.mrb[0].mxu0
        %v7153 = vpop.f32.mrb[0].mxu0
        %v7154 = vadd.f32 0.0, %v7153
        %v7155 = vpop.f32.mrb[0].mxu0
        %7156 = vmatprep.mubr.bf16.mxu0 0
        %7157 = vmatmul.mubr.bf16.gmra.mrb[0].mxu0 %v7091
        %v7158 = vpop.f32.mrb[0].mxu0
        %v7159 = vadd.f32 0.0, %v7158
        %v7160 = vpop.f32.mrb[0].mxu0
        %v7161 = vpop.f32.mrb[0].mxu0
        %v7162 = vadd.f32 0.0, %v7161
        %v7163 = vpop.f32.mrb[0].mxu0
        %7164 = vmatprep.mubr.bf16.mxu0 0
        %7165 = vmatmul.mubr.bf16.gmra.mrb[0].mxu0 %v7094
        %v7166 = vpop.f32.mrb[0].mxu0
        %v7167 = vadd.f32 0.0, %v7166
        %v7168 = vpop.f32.mrb[0].mxu0
        %v7169 = vpop.f32.mrb[0].mxu0
        %v7170 = vadd.f32 0.0, %v7169
        %v7171 = vpop.f32.mrb[0].mxu0
        %7172 = vmatprep.mubr.bf16.mxu0 0
        %7173 = vmatmul.mubr.bf16.gmra.mrb[0].mxu0 %v7097
        %v7174 = vpop.f32.mrb[0].mxu0
        %v7175 = vadd.f32 0.0, %v7174
        %v7176 = vpop.f32.mrb[0].mxu0
        %v7177 = vpop.f32.mrb[0].mxu0
        %v7178 = vadd.f32 0.0, %v7177
        %v7179 = vpop.f32.mrb[0].mxu0
        %7180 = vmatprep.mubr.bf16.mxu0 0
        %7181 = vmatmul.mubr.bf16.gmra.mrb[0].mxu0 %v7100
        %v7182 = vpop.f32.mrb[0].mxu0
        %v7183 = vadd.f32 0.0, %v7182
        %v7184 = vpop.f32.mrb[0].mxu0
        %v7185 = vpop.f32.mrb[0].mxu0
        %v7186 = vadd.f32 0.0, %v7185
        %v7187 = vpop.f32.mrb[0].mxu0
        %7188 = vmatprep.mubr.bf16.mxu0 0
        %7189 = vmatmul.mubr.bf16.gmra.mrb[0].mxu0 %v7103
        %v7190 = vpop.f32.mrb[0].mxu0
        %v7191 = vadd.f32 0.0, %v7190
        %v7192 = vpop.f32.mrb[0].mxu0
        %v7193 = vpop.f32.mrb[0].mxu0
        %v7194 = vadd.f32 0.0, %v7193
        %v7195 = vpop.f32.mrb[0].mxu0
        %7196 = vmatprep.mubr.bf16.mxu0 0
        %7197 = vmatmul.mubr.bf16.gmra.mrb[0].mxu0 %v7106
        %v7198 = vpop.f32.mrb[0].mxu0
        %v7199 = vadd.f32 0.0, %v7198
        %v7200 = vpop.f32.mrb[0].mxu0
        %v7201 = vpop.f32.mrb[0].mxu0
        %v7202 = vadd.f32 0.0, %v7201
        %v7203 = vpop.f32.mrb[0].mxu0
        %7204 = vdwg.mxu0
        %v7209 = vunpack.c.l.b16 %v6664
        %v7210 = vunpack.c.l.b16 %v6665
        %v7211 = vunpack.c.l.b16 %v6666
        %v7212 = vunpack.c.l.b16 %v6667
        %v7213 = vpack.c.b16 %v7210, %v7209
        %v7214 = vpack.c.b16 %v7212, %v7211
        %v7218 = vsel %vm6684, %v6632, 0
        %v7221 = vsel %vm6684, %v6633, 0
        %v7224 = vsel %vm6684, %v6634, 0
        %v7227 = vsel %vm6684, %v6635, 0
        %v7230 = vsel %vm6684, %v6636, 0
        %v7233 = vsel %vm6684, %v6637, 0
        %v7236 = vsel %vm6684, %v6638, 0
        %v7239 = vsel %vm6684, %v6639, 0
        %7241 = vmatprep.subr.bf16.mxu0 0
        %7242 = vmatpush1.bf16.msra.mxu0 %v7213
        %7243 = vmatprep.subr.bf16.mxu0 0
        %7244 = vmatpush1.bf16.msra.mxu0 %v7214
        %7245 = vmatprep.subr.bf16.mxu0 0
        %7246 = vmatpush1.bf16.msra.mxu0 0
        %7247 = vmatprep.subr.bf16.mxu0 0
        %7248 = vmatpush1.bf16.msra.mxu0 0
        %7249 = vmatprep.subr.bf16.mxu0 0
        %7250 = vmatpush1.bf16.msra.mxu0 0
        %7251 = vmatprep.subr.bf16.mxu0 0
        %7252 = vmatpush1.bf16.msra.mxu0 0
        %7253 = vmatprep.subr.bf16.mxu0 0
        %7254 = vmatpush1.bf16.msra.mxu0 0
        %7255 = vmatprep.subr.bf16.mxu0 0
        %7256 = vmatpush1.bf16.msra.mxu0 0
        %7257 = vmatprep.subr.bf16.mxu0 0
        %7258 = vmatpush1.bf16.msra.mxu0 0
        %7259 = vmatprep.subr.bf16.mxu0 0
        %7260 = vmatpush1.bf16.msra.mxu0 0
        %7261 = vmatprep.subr.bf16.mxu0 0
        %7262 = vmatpush1.bf16.msra.mxu0 0
        %7263 = vmatprep.subr.bf16.mxu0 0
        %7264 = vmatpush1.bf16.msra.mxu0 0
        %7265 = vmatprep.subr.bf16.mxu0 0
        %7266 = vmatpush1.bf16.msra.mxu0 0
        %7267 = vmatprep.subr.bf16.mxu0 0
        %7268 = vmatpush1.bf16.msra.mxu0 0
        %7269 = vmatprep.subr.bf16.mxu0 0
        %7270 = vmatpush1.bf16.msra.mxu0 0
        %7271 = vmatprep.subr.bf16.mxu0 0
        %7272 = vmatpush1.bf16.msra.mxu0 0
        %7273 = vmatprep.mubr.bf16.mxu0 0
        %7274 = vmatmul.mubr.bf16.gmra.mrb[0].mxu0 %v7218
        %v7275 = vpop.f32.mrb[0].mxu0
        %v7276 = vadd.f32 0.0, %v7275
        %v7277 = vpop.f32.mrb[0].mxu0
        %v7278 = vpop.f32.mrb[0].mxu0
        %v7279 = vadd.f32 0.0, %v7278
        %v7280 = vpop.f32.mrb[0].mxu0
        %7281 = vmatprep.mubr.bf16.mxu0 0
        %7282 = vmatmul.mubr.bf16.gmra.mrb[0].mxu0 %v7221
        %v7283 = vpop.f32.mrb[0].mxu0
        %v7284 = vadd.f32 0.0, %v7283
        %v7285 = vpop.f32.mrb[0].mxu0
        %v7286 = vpop.f32.mrb[0].mxu0
        %v7287 = vadd.f32 0.0, %v7286
        %v7288 = vpop.f32.mrb[0].mxu0
        %7289 = vmatprep.mubr.bf16.mxu0 0
        %7290 = vmatmul.mubr.bf16.gmra.mrb[0].mxu0 %v7224
        %v7291 = vpop.f32.mrb[0].mxu0
        %v7292 = vadd.f32 0.0, %v7291
        %v7293 = vpop.f32.mrb[0].mxu0
        %v7294 = vpop.f32.mrb[0].mxu0
        %v7295 = vadd.f32 0.0, %v7294
        %v7296 = vpop.f32.mrb[0].mxu0
        %7297 = vmatprep.mubr.bf16.mxu0 0
        %7298 = vmatmul.mubr.bf16.gmra.mrb[0].mxu0 %v7227
        %v7299 = vpop.f32.mrb[0].mxu0
        %v7300 = vadd.f32 0.0, %v7299
        %v7301 = vpop.f32.mrb[0].mxu0
        %v7302 = vpop.f32.mrb[0].mxu0
        %v7303 = vadd.f32 0.0, %v7302
        %v7304 = vpop.f32.mrb[0].mxu0
        %7305 = vmatprep.mubr.bf16.mxu0 0
        %7306 = vmatmul.mubr.bf16.gmra.mrb[0].mxu0 %v7230
        %v7307 = vpop.f32.mrb[0].mxu0
        %v7308 = vadd.f32 0.0, %v7307
        %v7309 = vpop.f32.mrb[0].mxu0
        %v7310 = vpop.f32.mrb[0].mxu0
        %v7311 = vadd.f32 0.0, %v7310
        %v7312 = vpop.f32.mrb[0].mxu0
        %7313 = vmatprep.mubr.bf16.mxu0 0
        %7314 = vmatmul.mubr.bf16.gmra.mrb[0].mxu0 %v7233
        %v7315 = vpop.f32.mrb[0].mxu0
        %v7316 = vadd.f32 0.0, %v7315
        %v7317 = vpop.f32.mrb[0].mxu0
        %v7318 = vpop.f32.mrb[0].mxu0
        %v7319 = vadd.f32 0.0, %v7318
        %v7320 = vpop.f32.mrb[0].mxu0
        %7321 = vmatprep.mubr.bf16.mxu0 0
        %7322 = vmatmul.mubr.bf16.gmra.mrb[0].mxu0 %v7236
        %v7323 = vpop.f32.mrb[0].mxu0
        %v7324 = vadd.f32 0.0, %v7323
        %v7325 = vpop.f32.mrb[0].mxu0
        %v7326 = vpop.f32.mrb[0].mxu0
        %v7327 = vadd.f32 0.0, %v7326
        %v7328 = vpop.f32.mrb[0].mxu0
        %7329 = vmatprep.mubr.bf16.mxu0 0
        %7330 = vmatmul.mubr.bf16.gmra.mrb[0].mxu0 %v7239
        %v7331 = vpop.f32.mrb[0].mxu0
        %v7332 = vadd.f32 0.0, %v7331
        %v7333 = vpop.f32.mrb[0].mxu0
        %v7334 = vpop.f32.mrb[0].mxu0
        %v7335 = vadd.f32 0.0, %v7334
        %v7336 = vpop.f32.mrb[0].mxu0
        %7337 = vdwg.mxu0
        %v7342 = vunpack.c.l.b16 %v6668
        %v7343 = vunpack.c.l.b16 %v6669
        %v7344 = vunpack.c.l.b16 %v6670
        %v7345 = vunpack.c.l.b16 %v6671
        %v7346 = vpack.c.b16 %v7343, %v7342
        %v7347 = vpack.c.b16 %v7345, %v7344
        %v7351 = vsel %vm6684, %v6640, 0
        %v7354 = vsel %vm6684, %v6641, 0
        %v7357 = vsel %vm6684, %v6642, 0
        %v7360 = vsel %vm6684, %v6643, 0
        %v7363 = vsel %vm6684, %v6644, 0
        %v7366 = vsel %vm6684, %v6645, 0
        %v7369 = vsel %vm6684, %v6646, 0
        %v7372 = vsel %vm6684, %v6647, 0
        %7374 = vmatprep.subr.bf16.mxu0 0
        %7375 = vmatpush1.bf16.msra.mxu0 %v7346
        %7376 = vmatprep.subr.bf16.mxu0 0
        %7377 = vmatpush1.bf16.msra.mxu0 %v7347
        %7378 = vmatprep.subr.bf16.mxu0 0
        %7379 = vmatpush1.bf16.msra.mxu0 0
        %7380 = vmatprep.subr.bf16.mxu0 0
        %7381 = vmatpush1.bf16.msra.mxu0 0
        %7382 = vmatprep.subr.bf16.mxu0 0
        %7383 = vmatpush1.bf16.msra.mxu0 0
        %7384 = vmatprep.subr.bf16.mxu0 0
        %7385 = vmatpush1.bf16.msra.mxu0 0
        %7386 = vmatprep.subr.bf16.mxu0 0
        %7387 = vmatpush1.bf16.msra.mxu0 0
        %7388 = vmatprep.subr.bf16.mxu0 0
        %7389 = vmatpush1.bf16.msra.mxu0 0
        %7390 = vmatprep.subr.bf16.mxu0 0
        %7391 = vmatpush1.bf16.msra.mxu0 0
        %7392 = vmatprep.subr.bf16.mxu0 0
        %7393 = vmatpush1.bf16.msra.mxu0 0
        %7394 = vmatprep.subr.bf16.mxu0 0
        %7395 = vmatpush1.bf16.msra.mxu0 0
        %7396 = vmatprep.subr.bf16.mxu0 0
        %7397 = vmatpush1.bf16.msra.mxu0 0
        %7398 = vmatprep.subr.bf16.mxu0 0
        %7399 = vmatpush1.bf16.msra.mxu0 0
        %7400 = vmatprep.subr.bf16.mxu0 0
        %7401 = vmatpush1.bf16.msra.mxu0 0
        %7402 = vmatprep.subr.bf16.mxu0 0
        %7403 = vmatpush1.bf16.msra.mxu0 0
        %7404 = vmatprep.subr.bf16.mxu0 0
        %7405 = vmatpush1.bf16.msra.mxu0 0
        %7406 = vmatprep.mubr.bf16.mxu0 0
        %7407 = vmatmul.mubr.bf16.gmra.mrb[0].mxu0 %v7351
        %v7408 = vpop.f32.mrb[0].mxu0
        %v7409 = vadd.f32 0.0, %v7408
        %v7410 = vpop.f32.mrb[0].mxu0
        %v7411 = vpop.f32.mrb[0].mxu0
        %v7412 = vadd.f32 0.0, %v7411
        %v7413 = vpop.f32.mrb[0].mxu0
        %7414 = vmatprep.mubr.bf16.mxu0 0
        %7415 = vmatmul.mubr.bf16.gmra.mrb[0].mxu0 %v7354
        %v7416 = vpop.f32.mrb[0].mxu0
        %v7417 = vadd.f32 0.0, %v7416
        %v7418 = vpop.f32.mrb[0].mxu0
        %v7419 = vpop.f32.mrb[0].mxu0
        %v7420 = vadd.f32 0.0, %v7419
        %v7421 = vpop.f32.mrb[0].mxu0
        %7422 = vmatprep.mubr.bf16.mxu0 0
        %7423 = vmatmul.mubr.bf16.gmra.mrb[0].mxu0 %v7357
        %v7424 = vpop.f32.mrb[0].mxu0
        %v7425 = vadd.f32 0.0, %v7424
        %v7426 = vpop.f32.mrb[0].mxu0
        %v7427 = vpop.f32.mrb[0].mxu0
        %v7428 = vadd.f32 0.0, %v7427
        %v7429 = vpop.f32.mrb[0].mxu0
        %7430 = vmatprep.mubr.bf16.mxu0 0
        %7431 = vmatmul.mubr.bf16.gmra.mrb[0].mxu0 %v7360
        %v7432 = vpop.f32.mrb[0].mxu0
        %v7433 = vadd.f32 0.0, %v7432
        %v7434 = vpop.f32.mrb[0].mxu0
        %v7435 = vpop.f32.mrb[0].mxu0
        %v7436 = vadd.f32 0.0, %v7435
        %v7437 = vpop.f32.mrb[0].mxu0
        %7438 = vmatprep.mubr.bf16.mxu0 0
        %7439 = vmatmul.mubr.bf16.gmra.mrb[0].mxu0 %v7363
        %v7440 = vpop.f32.mrb[0].mxu0
        %v7441 = vadd.f32 0.0, %v7440
        %v7442 = vpop.f32.mrb[0].mxu0
        %v7443 = vpop.f32.mrb[0].mxu0
        %v7444 = vadd.f32 0.0, %v7443
        %v7445 = vpop.f32.mrb[0].mxu0
        %7446 = vmatprep.mubr.bf16.mxu0 0
        %7447 = vmatmul.mubr.bf16.gmra.mrb[0].mxu0 %v7366
        %v7448 = vpop.f32.mrb[0].mxu0
        %v7449 = vadd.f32 0.0, %v7448
        %v7450 = vpop.f32.mrb[0].mxu0
        %v7451 = vpop.f32.mrb[0].mxu0
        %v7452 = vadd.f32 0.0, %v7451
        %v7453 = vpop.f32.mrb[0].mxu0
        %7454 = vmatprep.mubr.bf16.mxu0 0
        %7455 = vmatmul.mubr.bf16.gmra.mrb[0].mxu0 %v7369
        %v7456 = vpop.f32.mrb[0].mxu0
        %v7457 = vadd.f32 0.0, %v7456
        %v7458 = vpop.f32.mrb[0].mxu0
        %v7459 = vpop.f32.mrb[0].mxu0
        %v7460 = vadd.f32 0.0, %v7459
        %v7461 = vpop.f32.mrb[0].mxu0
        %7462 = vmatprep.mubr.bf16.mxu0 0
        %7463 = vmatmul.mubr.bf16.gmra.mrb[0].mxu0 %v7372
        %v7464 = vpop.f32.mrb[0].mxu0
        %v7465 = vadd.f32 0.0, %v7464
        %v7466 = vpop.f32.mrb[0].mxu0
        %v7467 = vpop.f32.mrb[0].mxu0
        %v7468 = vadd.f32 0.0, %v7467
        %v7469 = vpop.f32.mrb[0].mxu0
        %7470 = vdwg.mxu0
        %v7471 = vsel %vm1352, %v6744, 0.0
        %v7472 = vsel %vm1352, %v6877, 0.0
        %v7473 = vadd.f32 %v7471, %v7472
        %v7474 = vsel %vm1352, %v7010, 0.0
        %v7475 = vadd.f32 %v7473, %v7474
        %v7476 = vsel %vm1352, %v7143, 0.0
        %v7477 = vadd.f32 %v7475, %v7476
        %v7478 = vsel %vm1352, %v7276, 0.0
        %v7479 = vadd.f32 %v7477, %v7478
        %v7480 = vsel %vm1352, %v7409, 0.0
        %v7481 = vadd.f32 %v7479, %v7480
        %v7482 = vsel %vm1352, %v6747, 0.0
        %v7483 = vsel %vm1352, %v6880, 0.0
        %v7484 = vadd.f32 %v7482, %v7483
        %v7485 = vsel %vm1352, %v7013, 0.0
        %v7486 = vadd.f32 %v7484, %v7485
        %v7487 = vsel %vm1352, %v7146, 0.0
        %v7488 = vadd.f32 %v7486, %v7487
        %v7489 = vsel %vm1352, %v7279, 0.0
        %v7490 = vadd.f32 %v7488, %v7489
        %v7491 = vsel %vm1352, %v7412, 0.0
        %v7492 = vadd.f32 %v7490, %v7491
        %v7493 = vsel %vm1352, %v6752, 0.0
        %v7494 = vsel %vm1352, %v6885, 0.0
        %v7495 = vadd.f32 %v7493, %v7494
        %v7496 = vsel %vm1352, %v7018, 0.0
        %v7497 = vadd.f32 %v7495, %v7496
        %v7498 = vsel %vm1352, %v7151, 0.0
        %v7499 = vadd.f32 %v7497, %v7498
        %v7500 = vsel %vm1352, %v7284, 0.0
        %v7501 = vadd.f32 %v7499, %v7500
        %v7502 = vsel %vm1352, %v7417, 0.0
        %v7503 = vadd.f32 %v7501, %v7502
        %v7504 = vsel %vm1352, %v6755, 0.0
        %v7505 = vsel %vm1352, %v6888, 0.0
        %v7506 = vadd.f32 %v7504, %v7505
        %v7507 = vsel %vm1352, %v7021, 0.0
        %v7508 = vadd.f32 %v7506, %v7507
        %v7509 = vsel %vm1352, %v7154, 0.0
        %v7510 = vadd.f32 %v7508, %v7509
        %v7511 = vsel %vm1352, %v7287, 0.0
        %v7512 = vadd.f32 %v7510, %v7511
        %v7513 = vsel %vm1352, %v7420, 0.0
        %v7514 = vadd.f32 %v7512, %v7513
        %v7515 = vsel %vm1352, %v6760, 0.0
        %v7516 = vsel %vm1352, %v6893, 0.0
        %v7517 = vadd.f32 %v7515, %v7516
        %v7518 = vsel %vm1352, %v7026, 0.0
        %v7519 = vadd.f32 %v7517, %v7518
        %v7520 = vsel %vm1352, %v7159, 0.0
        %v7521 = vadd.f32 %v7519, %v7520
        %v7522 = vsel %vm1352, %v7292, 0.0
        %v7523 = vadd.f32 %v7521, %v7522
        %v7524 = vsel %vm1352, %v7425, 0.0
        %v7525 = vadd.f32 %v7523, %v7524
        %v7526 = vsel %vm1352, %v6763, 0.0
        %v7527 = vsel %vm1352, %v6896, 0.0
        %v7528 = vadd.f32 %v7526, %v7527
        %v7529 = vsel %vm1352, %v7029, 0.0
        %v7530 = vadd.f32 %v7528, %v7529
        %v7531 = vsel %vm1352, %v7162, 0.0
        %v7532 = vadd.f32 %v7530, %v7531
        %v7533 = vsel %vm1352, %v7295, 0.0
        %v7534 = vadd.f32 %v7532, %v7533
        %v7535 = vsel %vm1352, %v7428, 0.0
        %v7536 = vadd.f32 %v7534, %v7535
        %v7537 = vsel %vm1352, %v6768, 0.0
        %v7538 = vsel %vm1352, %v6901, 0.0
        %v7539 = vadd.f32 %v7537, %v7538
        %v7540 = vsel %vm1352, %v7034, 0.0
        %v7541 = vadd.f32 %v7539, %v7540
        %v7542 = vsel %vm1352, %v7167, 0.0
        %v7543 = vadd.f32 %v7541, %v7542
        %v7544 = vsel %vm1352, %v7300, 0.0
        %v7545 = vadd.f32 %v7543, %v7544
        %v7546 = vsel %vm1352, %v7433, 0.0
        %v7547 = vadd.f32 %v7545, %v7546
        %v7548 = vsel %vm1352, %v6771, 0.0
        %v7549 = vsel %vm1352, %v6904, 0.0
        %v7550 = vadd.f32 %v7548, %v7549
        %v7551 = vsel %vm1352, %v7037, 0.0
        %v7552 = vadd.f32 %v7550, %v7551
        %v7553 = vsel %vm1352, %v7170, 0.0
        %v7554 = vadd.f32 %v7552, %v7553
        %v7555 = vsel %vm1352, %v7303, 0.0
        %v7556 = vadd.f32 %v7554, %v7555
        %v7557 = vsel %vm1352, %v7436, 0.0
        %v7558 = vadd.f32 %v7556, %v7557
        %v7559 = vsel %vm1352, %v6776, 0.0
        %v7560 = vsel %vm1352, %v6909, 0.0
        %v7561 = vadd.f32 %v7559, %v7560
        %v7562 = vsel %vm1352, %v7042, 0.0
        %v7563 = vadd.f32 %v7561, %v7562
        %v7564 = vsel %vm1352, %v7175, 0.0
        %v7565 = vadd.f32 %v7563, %v7564
        %v7566 = vsel %vm1352, %v7308, 0.0
        %v7567 = vadd.f32 %v7565, %v7566
        %v7568 = vsel %vm1352, %v7441, 0.0
        %v7569 = vadd.f32 %v7567, %v7568
        %v7570 = vsel %vm1352, %v6779, 0.0
        %v7571 = vsel %vm1352, %v6912, 0.0
        %v7572 = vadd.f32 %v7570, %v7571
        %v7573 = vsel %vm1352, %v7045, 0.0
        %v7574 = vadd.f32 %v7572, %v7573
        %v7575 = vsel %vm1352, %v7178, 0.0
        %v7576 = vadd.f32 %v7574, %v7575
        %v7577 = vsel %vm1352, %v7311, 0.0
        %v7578 = vadd.f32 %v7576, %v7577
        %v7579 = vsel %vm1352, %v7444, 0.0
        %v7580 = vadd.f32 %v7578, %v7579
        %v7581 = vsel %vm1352, %v6784, 0.0
        %v7582 = vsel %vm1352, %v6917, 0.0
        %v7583 = vadd.f32 %v7581, %v7582
        %v7584 = vsel %vm1352, %v7050, 0.0
        %v7585 = vadd.f32 %v7583, %v7584
        %v7586 = vsel %vm1352, %v7183, 0.0
        %v7587 = vadd.f32 %v7585, %v7586
        %v7588 = vsel %vm1352, %v7316, 0.0
        %v7589 = vadd.f32 %v7587, %v7588
        %v7590 = vsel %vm1352, %v7449, 0.0
        %v7591 = vadd.f32 %v7589, %v7590
        %v7592 = vsel %vm1352, %v6787, 0.0
        %v7593 = vsel %vm1352, %v6920, 0.0
        %v7594 = vadd.f32 %v7592, %v7593
        %v7595 = vsel %vm1352, %v7053, 0.0
        %v7596 = vadd.f32 %v7594, %v7595
        %v7597 = vsel %vm1352, %v7186, 0.0
        %v7598 = vadd.f32 %v7596, %v7597
        %v7599 = vsel %vm1352, %v7319, 0.0
        %v7600 = vadd.f32 %v7598, %v7599
        %v7601 = vsel %vm1352, %v7452, 0.0
        %v7602 = vadd.f32 %v7600, %v7601
        %v7603 = vsel %vm1352, %v6792, 0.0
        %v7604 = vsel %vm1352, %v6925, 0.0
        %v7605 = vadd.f32 %v7603, %v7604
        %v7606 = vsel %vm1352, %v7058, 0.0
        %v7607 = vadd.f32 %v7605, %v7606
        %v7608 = vsel %vm1352, %v7191, 0.0
        %v7609 = vadd.f32 %v7607, %v7608
        %v7610 = vsel %vm1352, %v7324, 0.0
        %v7611 = vadd.f32 %v7609, %v7610
        %v7612 = vsel %vm1352, %v7457, 0.0
        %v7613 = vadd.f32 %v7611, %v7612
        %v7614 = vsel %vm1352, %v6795, 0.0
        %v7615 = vsel %vm1352, %v6928, 0.0
        %v7616 = vadd.f32 %v7614, %v7615
        %v7617 = vsel %vm1352, %v7061, 0.0
        %v7618 = vadd.f32 %v7616, %v7617
        %v7619 = vsel %vm1352, %v7194, 0.0
        %v7620 = vadd.f32 %v7618, %v7619
        %v7621 = vsel %vm1352, %v7327, 0.0
        %v7622 = vadd.f32 %v7620, %v7621
        %v7623 = vsel %vm1352, %v7460, 0.0
        %v7624 = vadd.f32 %v7622, %v7623
        %v7625 = vsel %vm1352, %v6800, 0.0
        %v7626 = vsel %vm1352, %v6933, 0.0
        %v7627 = vadd.f32 %v7625, %v7626
        %v7628 = vsel %vm1352, %v7066, 0.0
        %v7629 = vadd.f32 %v7627, %v7628
        %v7630 = vsel %vm1352, %v7199, 0.0
        %v7631 = vadd.f32 %v7629, %v7630
        %v7632 = vsel %vm1352, %v7332, 0.0
        %v7633 = vadd.f32 %v7631, %v7632
        %v7634 = vsel %vm1352, %v7465, 0.0
        %v7635 = vadd.f32 %v7633, %v7634
        %v7636 = vsel %vm1352, %v6803, 0.0
        %v7637 = vsel %vm1352, %v6936, 0.0
        %v7638 = vadd.f32 %v7636, %v7637
        %v7639 = vsel %vm1352, %v7069, 0.0
        %v7640 = vadd.f32 %v7638, %v7639
        %v7641 = vsel %vm1352, %v7202, 0.0
        %v7642 = vadd.f32 %v7640, %v7641
        %v7643 = vsel %vm1352, %v7335, 0.0
        %v7644 = vadd.f32 %v7642, %v7643
        %v7645 = vsel %vm1352, %v7468, 0.0
        %v7646 = vadd.f32 %v7644, %v7645
        %v7647 = vld [vmem:[%s7] sm:$0x1]
        %v7649 = vlaneseq
        %v7650 = vshrl.u32 %v7649, 7
        %v7651 = vsub.s32 0, %v7650
        %v7652 = vrot.slane %v7647, %v7651
        %v7654 = vadd.f32 %v7481, %v7652
        %v7655 = vadd.f32 %v7492, %v7652
        %v7656 = vadd.f32 %v7503, %v7652
        %v7657 = vadd.f32 %v7514, %v7652
        %v7658 = vadd.f32 %v7525, %v7652
        %v7659 = vadd.f32 %v7536, %v7652
        %v7660 = vadd.f32 %v7547, %v7652
        %v7661 = vadd.f32 %v7558, %v7652
        %v7662 = vadd.f32 %v7569, %v7652
        %v7663 = vadd.f32 %v7580, %v7652
        %v7664 = vadd.f32 %v7591, %v7652
        %v7665 = vadd.f32 %v7602, %v7652
        %v7666 = vadd.f32 %v7613, %v7652
        %v7667 = vadd.f32 %v7624, %v7652
        %v7668 = vadd.f32 %v7635, %v7652
        %v7669 = vadd.f32 %v7646, %v7652
        %v7670 = vmax.f32 %v7654, 0.0
        %v7671 = vmax.f32 %v7655, 0.0
        %v7672 = vmax.f32 %v7656, 0.0
        %v7673 = vmax.f32 %v7657, 0.0
        %v7674 = vmax.f32 %v7658, 0.0
        %v7675 = vmax.f32 %v7659, 0.0
        %v7676 = vmax.f32 %v7660, 0.0
        %v7677 = vmax.f32 %v7661, 0.0
        %v7678 = vmax.f32 %v7662, 0.0
        %v7679 = vmax.f32 %v7663, 0.0
        %v7680 = vmax.f32 %v7664, 0.0
        %v7681 = vmax.f32 %v7665, 0.0
        %v7682 = vmax.f32 %v7666, 0.0
        %v7683 = vmax.f32 %v7667, 0.0
        %v7684 = vmax.f32 %v7668, 0.0
        %v7685 = vmax.f32 %v7669, 0.0
        %v7686 = vld [vmem:[%s8] sm:$0xff]
        %v7687 = vld [vmem:[%s8 + $0x8] sm:$0xff]
        %v7688 = vld [vmem:[%s8 + $0x10] sm:$0xff]
        %v7689 = vld [vmem:[%s8 + $0x18] sm:$0xff]
        %v7690 = vld [vmem:[%s8 + $0x20] sm:$0xff]
        %v7691 = vld [vmem:[%s8 + $0x28] sm:$0xff]
        %v7692 = vld [vmem:[%s8 + $0x30] sm:$0xff]
        %v7693 = vld [vmem:[%s8 + $0x38] sm:$0xff]
        %v7694 = vld [vmem:[#allocation2] sm:$0x1]
        %v7696 = vlaneseq
        %v7697 = vshrl.u32 %v7696, 7
        %v7698 = vsub.s32 0, %v7697
        %v7699 = vrot.slane %v7694, %v7698
        %v7702 = vsel %vm1352, %v7670, 0
        %v7705 = vsel %vm1352, %v7671, 0
        %v7708 = vsel %vm1352, %v7672, 0
        %v7711 = vsel %vm1352, %v7673, 0
        %v7714 = vsel %vm1352, %v7674, 0
        %v7717 = vsel %vm1352, %v7675, 0
        %v7720 = vsel %vm1352, %v7676, 0
        %v7723 = vsel %vm1352, %v7677, 0
        %v7726 = vsel %vm1352, %v7678, 0
        %v7729 = vsel %vm1352, %v7679, 0
        %v7732 = vsel %vm1352, %v7680, 0
        %v7735 = vsel %vm1352, %v7681, 0
        %v7738 = vsel %vm1352, %v7682, 0
        %v7741 = vsel %vm1352, %v7683, 0
        %v7744 = vsel %vm1352, %v7684, 0
        %v7747 = vsel %vm1352, %v7685, 0
        %7749 = vmatprep.subr.mxu0 0.0
        %7750 = vmatpush1.msra.mxu0 %v7686
        %7751 = vmatprep.subr.mxu0 0.0
        %7752 = vmatpush1.msra.mxu0 %v7687
        %7753 = vmatprep.subr.mxu0 0.0
        %7754 = vmatpush1.msra.mxu0 %v7688
        %7755 = vmatprep.subr.mxu0 0.0
        %7756 = vmatpush1.msra.mxu0 %v7689
        %7757 = vmatprep.subr.mxu0 0.0
        %7758 = vmatpush1.msra.mxu0 %v7690
        %7759 = vmatprep.subr.mxu0 0.0
        %7760 = vmatpush1.msra.mxu0 %v7691
        %7761 = vmatprep.subr.mxu0 0.0
        %7762 = vmatpush1.msra.mxu0 %v7692
        %7763 = vmatprep.subr.mxu0 0.0
        %7764 = vmatpush1.msra.mxu0 %v7693
        %7765 = vmatprep.subr.mxu0 0.0
        %7766 = vmatpush1.msra.mxu0 0.0
        %7767 = vmatprep.subr.mxu0 0.0
        %7768 = vmatpush1.msra.mxu0 0.0
        %7769 = vmatprep.subr.mxu0 0.0
        %7770 = vmatpush1.msra.mxu0 0.0
        %7771 = vmatprep.subr.mxu0 0.0
        %7772 = vmatpush1.msra.mxu0 0.0
        %7773 = vmatprep.subr.mxu0 0.0
        %7774 = vmatpush1.msra.mxu0 0.0
        %7775 = vmatprep.subr.mxu0 0.0
        %7776 = vmatpush1.msra.mxu0 0.0
        %7777 = vmatprep.subr.mxu0 0.0
        %7778 = vmatpush1.msra.mxu0 0.0
        %7779 = vmatprep.subr.mxu0 0.0
        %7780 = vmatpush1.msra.mxu0 0.0
        %7781 = vmatprep.subr.mxu0 0.0
        %7782 = vmatpush1.msra.mxu0 0.0
        %7783 = vmatprep.subr.mxu0 0.0
        %7784 = vmatpush1.msra.mxu0 0.0
        %7785 = vmatprep.subr.mxu0 0.0
        %7786 = vmatpush1.msra.mxu0 0.0
        %7787 = vmatprep.subr.mxu0 0.0
        %7788 = vmatpush1.msra.mxu0 0.0
        %7789 = vmatprep.subr.mxu0 0.0
        %7790 = vmatpush1.msra.mxu0 0.0
        %7791 = vmatprep.subr.mxu0 0.0
        %7792 = vmatpush1.msra.mxu0 0.0
        %7793 = vmatprep.subr.mxu0 0.0
        %7794 = vmatpush1.msra.mxu0 0.0
        %7795 = vmatprep.subr.mxu0 0.0
        %7796 = vmatpush1.msra.mxu0 0.0
        %7797 = vmatprep.subr.mxu0 0.0
        %7798 = vmatpush1.msra.mxu0 0.0
        %7799 = vmatprep.subr.mxu0 0.0
        %7800 = vmatpush1.msra.mxu0 0.0
        %7801 = vmatprep.subr.mxu0 0.0
        %7802 = vmatpush1.msra.mxu0 0.0
        %7803 = vmatprep.subr.mxu0 0.0
        %7804 = vmatpush1.msra.mxu0 0.0
        %7805 = vmatprep.subr.mxu0 0.0
        %7806 = vmatpush1.msra.mxu0 0.0
        %7807 = vmatprep.subr.mxu0 0.0
        %7808 = vmatpush1.msra.mxu0 0.0
        %7809 = vmatprep.subr.mxu0 0.0
        %7810 = vmatpush1.msra.mxu0 0.0
        %7811 = vmatprep.subr.mxu0 0.0
        %7812 = vmatpush1.msra.mxu0 0.0
        %7813 = vmatprep.mubr.f32.mxu0 0.0
        %7814 = vmatmul.mubr.f32.gmra.mrb[0].mxu0 %v7702
        %v7815 = vpop.f32.mrb[0].mxu0
        %v7816 = vadd.f32 %v7699, %v7815
        %v7817 = vpop.f32.mrb[0].mxu0
        %7818 = vmatprep.mubr.f32.mxu0 0.0
        %7819 = vmatmul.mubr.f32.gmra.mrb[0].mxu0 %v7705
        %v7820 = vpop.f32.mrb[0].mxu0
        %v7821 = vadd.f32 %v7699, %v7820
        %v7822 = vpop.f32.mrb[0].mxu0
        %7823 = vmatprep.mubr.f32.mxu0 0.0
        %7824 = vmatmul.mubr.f32.gmra.mrb[0].mxu0 %v7708
        %v7825 = vpop.f32.mrb[0].mxu0
        %v7826 = vadd.f32 %v7699, %v7825
        %v7827 = vpop.f32.mrb[0].mxu0
        %7828 = vmatprep.mubr.f32.mxu0 0.0
        %7829 = vmatmul.mubr.f32.gmra.mrb[0].mxu0 %v7711
        %v7830 = vpop.f32.mrb[0].mxu0
        %v7831 = vadd.f32 %v7699, %v7830
        %v7832 = vpop.f32.mrb[0].mxu0
        %7833 = vmatprep.mubr.f32.mxu0 0.0
        %7834 = vmatmul.mubr.f32.gmra.mrb[0].mxu0 %v7714
        %v7835 = vpop.f32.mrb[0].mxu0
        %v7836 = vadd.f32 %v7699, %v7835
        %v7837 = vpop.f32.mrb[0].mxu0
        %7838 = vmatprep.mubr.f32.mxu0 0.0
        %7839 = vmatmul.mubr.f32.gmra.mrb[0].mxu0 %v7717
        %v7840 = vpop.f32.mrb[0].mxu0
        %v7841 = vadd.f32 %v7699, %v7840
        %v7842 = vpop.f32.mrb[0].mxu0
        %7843 = vmatprep.mubr.f32.mxu0 0.0
        %7844 = vmatmul.mubr.f32.gmra.mrb[0].mxu0 %v7720
        %v7845 = vpop.f32.mrb[0].mxu0
        %v7846 = vadd.f32 %v7699, %v7845
        %v7847 = vpop.f32.mrb[0].mxu0
        %7848 = vmatprep.mubr.f32.mxu0 0.0
        %7849 = vmatmul.mubr.f32.gmra.mrb[0].mxu0 %v7723
        %v7850 = vpop.f32.mrb[0].mxu0
        %v7851 = vadd.f32 %v7699, %v7850
        %v7852 = vpop.f32.mrb[0].mxu0
        %7853 = vmatprep.mubr.f32.mxu0 0.0
        %7854 = vmatmul.mubr.f32.gmra.mrb[0].mxu0 %v7726
        %v7855 = vpop.f32.mrb[0].mxu0
        %v7856 = vadd.f32 %v7699, %v7855
        %v7857 = vpop.f32.mrb[0].mxu0
        %7858 = vmatprep.mubr.f32.mxu0 0.0
        %7859 = vmatmul.mubr.f32.gmra.mrb[0].mxu0 %v7729
        %v7860 = vpop.f32.mrb[0].mxu0
        %v7861 = vadd.f32 %v7699, %v7860
        %v7862 = vpop.f32.mrb[0].mxu0
        %7863 = vmatprep.mubr.f32.mxu0 0.0
        %7864 = vmatmul.mubr.f32.gmra.mrb[0].mxu0 %v7732
        %v7865 = vpop.f32.mrb[0].mxu0
        %v7866 = vadd.f32 %v7699, %v7865
        %v7867 = vpop.f32.mrb[0].mxu0
        %7868 = vmatprep.mubr.f32.mxu0 0.0
        %7869 = vmatmul.mubr.f32.gmra.mrb[0].mxu0 %v7735
        %v7870 = vpop.f32.mrb[0].mxu0
        %v7871 = vadd.f32 %v7699, %v7870
        %v7872 = vpop.f32.mrb[0].mxu0
        %7873 = vmatprep.mubr.f32.mxu0 0.0
        %7874 = vmatmul.mubr.f32.gmra.mrb[0].mxu0 %v7738
        %v7875 = vpop.f32.mrb[0].mxu0
        %v7876 = vadd.f32 %v7699, %v7875
        %v7877 = vpop.f32.mrb[0].mxu0
        %7878 = vmatprep.mubr.f32.mxu0 0.0
        %7879 = vmatmul.mubr.f32.gmra.mrb[0].mxu0 %v7741
        %v7880 = vpop.f32.mrb[0].mxu0
        %v7881 = vadd.f32 %v7699, %v7880
        %v7882 = vpop.f32.mrb[0].mxu0
        %7883 = vmatprep.mubr.f32.mxu0 0.0
        %7884 = vmatmul.mubr.f32.gmra.mrb[0].mxu0 %v7744
        %v7885 = vpop.f32.mrb[0].mxu0
        %v7886 = vadd.f32 %v7699, %v7885
        %v7887 = vpop.f32.mrb[0].mxu0
        %7888 = vmatprep.mubr.f32.mxu0 0.0
        %7889 = vmatmul.mubr.f32.gmra.mrb[0].mxu0 %v7747
        %v7890 = vpop.f32.mrb[0].mxu0
        %v7891 = vadd.f32 %v7699, %v7890
        %v7892 = vpop.f32.mrb[0].mxu0
        %7893 = vdwg.mxu0
        %v7894 = vsub.f32 0.0, %v7816
        %v7895 = vsub.f32 0.0, %v7821
        %v7896 = vsub.f32 0.0, %v7826
        %v7897 = vsub.f32 0.0, %v7831
        %v7898 = vsub.f32 0.0, %v7836
        %v7899 = vsub.f32 0.0, %v7841
        %v7900 = vsub.f32 0.0, %v7846
        %v7901 = vsub.f32 0.0, %v7851
        %v7902 = vsub.f32 0.0, %v7856
        %v7903 = vsub.f32 0.0, %v7861
        %v7904 = vsub.f32 0.0, %v7866
        %v7905 = vsub.f32 0.0, %v7871
        %v7906 = vsub.f32 0.0, %v7876
        %v7907 = vsub.f32 0.0, %v7881
        %v7908 = vsub.f32 0.0, %v7886
        %v7909 = vsub.f32 0.0, %v7891
        %v7910 = vmul.f32 %v7894, 1.442695
        %v7911 = vpow.pop %v7910
        %v7912 = vmul.f32 %v7895, 1.442695
        %v7913 = vpow.pop %v7912
        %v7914 = vmul.f32 %v7896, 1.442695
        %v7915 = vpow.pop %v7914
        %v7916 = vmul.f32 %v7897, 1.442695
        %v7917 = vpow.pop %v7916
        %v7918 = vmul.f32 %v7898, 1.442695
        %v7919 = vpow.pop %v7918
        %v7920 = vmul.f32 %v7899, 1.442695
        %v7921 = vpow.pop %v7920
        %v7922 = vmul.f32 %v7900, 1.442695
        %v7923 = vpow.pop %v7922
        %v7924 = vmul.f32 %v7901, 1.442695
        %v7925 = vpow.pop %v7924
        %v7926 = vmul.f32 %v7902, 1.442695
        %v7927 = vpow.pop %v7926
        %v7928 = vmul.f32 %v7903, 1.442695
        %v7929 = vpow.pop %v7928
        %v7930 = vmul.f32 %v7904, 1.442695
        %v7931 = vpow.pop %v7930
        %v7932 = vmul.f32 %v7905, 1.442695
        %v7933 = vpow.pop %v7932
        %v7934 = vmul.f32 %v7906, 1.442695
        %v7935 = vpow.pop %v7934
        %v7936 = vmul.f32 %v7907, 1.442695
        %v7937 = vpow.pop %v7936
        %v7938 = vmul.f32 %v7908, 1.442695
        %v7939 = vpow.pop %v7938
        %v7940 = vmul.f32 %v7909, 1.442695
        %v7941 = vpow.pop %v7940
        %v7942 = vadd.f32 %v7911, 1.0
        %v7943 = vadd.f32 %v7913, 1.0
        %v7944 = vadd.f32 %v7915, 1.0
        %v7945 = vadd.f32 %v7917, 1.0
        %v7946 = vadd.f32 %v7919, 1.0
        %v7947 = vadd.f32 %v7921, 1.0
        %v7948 = vadd.f32 %v7923, 1.0
        %v7949 = vadd.f32 %v7925, 1.0
        %v7950 = vadd.f32 %v7927, 1.0
        %v7951 = vadd.f32 %v7929, 1.0
        %v7952 = vadd.f32 %v7931, 1.0
        %v7953 = vadd.f32 %v7933, 1.0
        %v7954 = vadd.f32 %v7935, 1.0
        %v7955 = vadd.f32 %v7937, 1.0
        %v7956 = vadd.f32 %v7939, 1.0
        %v7957 = vadd.f32 %v7941, 1.0
        %v7958 = vrcp.pop %v7942
        %v7959 = vmul.f32 1.0, %v7958
        %v7960 = vrcp.pop %v7943
        %v7961 = vmul.f32 1.0, %v7960
        %v7962 = vrcp.pop %v7944
        %v7963 = vmul.f32 1.0, %v7962
        %v7964 = vrcp.pop %v7945
        %v7965 = vmul.f32 1.0, %v7964
        %v7966 = vrcp.pop %v7946
        %v7967 = vmul.f32 1.0, %v7966
        %v7968 = vrcp.pop %v7947
        %v7969 = vmul.f32 1.0, %v7968
        %v7970 = vrcp.pop %v7948
        %v7971 = vmul.f32 1.0, %v7970
        %v7972 = vrcp.pop %v7949
        %v7973 = vmul.f32 1.0, %v7972
        %v7974 = vrcp.pop %v7950
        %v7975 = vmul.f32 1.0, %v7974
        %v7976 = vrcp.pop %v7951
        %v7977 = vmul.f32 1.0, %v7976
        %v7978 = vrcp.pop %v7952
        %v7979 = vmul.f32 1.0, %v7978
        %v7980 = vrcp.pop %v7953
        %v7981 = vmul.f32 1.0, %v7980
        %v7982 = vrcp.pop %v7954
        %v7983 = vmul.f32 1.0, %v7982
        %v7984 = vrcp.pop %v7955
        %v7985 = vmul.f32 1.0, %v7984
        %v7986 = vrcp.pop %v7956
        %v7987 = vmul.f32 1.0, %v7986
        %v7988 = vrcp.pop %v7957
        %v7989 = vmul.f32 1.0, %v7988
        %vm7990 = vcmask 7168
        %7991 = vst.msk [vmem:[%s407] sm:$0xff] %vm7990, %v7959
        %7992 = vst.msk [vmem:[%s407 + $0x8] sm:$0xff] %vm7990, %v7961
        %7993 = vst.msk [vmem:[%s407 + $0x10] sm:$0xff] %vm7990, %v7963
        %7994 = vst.msk [vmem:[%s407 + $0x18] sm:$0xff] %vm7990, %v7965
        %7995 = vst.msk [vmem:[%s407 + $0x20] sm:$0xff] %vm7990, %v7967
        %7996 = vst.msk [vmem:[%s407 + $0x28] sm:$0xff] %vm7990, %v7969
        %7997 = vst.msk [vmem:[%s407 + $0x30] sm:$0xff] %vm7990, %v7971
        %7998 = vst.msk [vmem:[%s407 + $0x38] sm:$0xff] %vm7990, %v7973
        %7999 = vst.msk [vmem:[%s407 + $0x40] sm:$0xff] %vm7990, %v7975
        %8000 = vst.msk [vmem:[%s407 + $0x48] sm:$0xff] %vm7990, %v7977
        %8001 = vst.msk [vmem:[%s407 + $0x50] sm:$0xff] %vm7990, %v7979
        %8002 = vst.msk [vmem:[%s407 + $0x58] sm:$0xff] %vm7990, %v7981
        %8003 = vst.msk [vmem:[%s407 + $0x60] sm:$0xff] %vm7990, %v7983
        %8004 = vst.msk [vmem:[%s407 + $0x68] sm:$0xff] %vm7990, %v7985
        %8005 = vst.msk [vmem:[%s407 + $0x70] sm:$0xff] %vm7990, %v7987
        %8006 = vst.msk [vmem:[%s407 + $0x78] sm:$0xff] %vm7990, %v7989
        %s8007 = smul.u32 16, %s23
        %p8008 = scmp.lt.s32.totalorder %s8007, 31
        %s8009 = scalar_select %p8008, %s8007, 31
        %s8010 = smul.addr %s8009, 8
        %s8011 = scalar_lea.vmem %s10, %s8010
        // Predicated region
        $region99: #{cnn_forward.1} parent=93 // pred_check
          %p8012 = pneg %p256
        $region100: #{cnn_forward.1} parent=93 // pred_check_branch
          %8014 = sbr.rel (%p8012) target = $region102
        $region101: #{cnn_forward.1} parent=93 // pred_region
          %s8015 = smul.u32 16, %s23
        $region102: #{cnn_forward.1} parent=93 // pred_fallthru
          _
      $region94: #{cnn_forward.1} parent=5 // pred_fallthru
        _
      %p8016 = scmp.le.s32.totalorder 2, %s18
      // Predicated region
      $region103: #{cnn_forward.1} parent=5 // pred_check
        %p8017 = pneg %p8016
      $region104: #{cnn_forward.1} parent=5 // pred_check_branch
        %8019 = sbr.rel (%p8017) target = $region106
      $region105: #{cnn_forward.1} parent=5 // pred_region
        %s8020 = ssub.s32 %s18, 2
        // Predicated region
        $region107: #{cnn_forward.1} parent=105 // pred_check
          %p8021 = pneg %p262
        $region108: #{cnn_forward.1} parent=105 // pred_check_branch
          %8023 = sbr.rel (%p8021) target = $region110
        $region109: #{cnn_forward.1} parent=105 // pred_region
          %s8024 = smul.u32 16, %s24
          %p8025 = scmp.lt.s32.totalorder %s8024, 31
          %s8026 = scalar_select %p8025, %s8024, 31
          %s8027 = smul.addr %s8026, 8
          %s8028 = scalar_lea.vmem %s10, %s8027
        $region110: #{cnn_forward.1} parent=105 // pred_fallthru
          _
      $region106: #{cnn_forward.1} parent=5 // pred_fallthru
        _
    $region6: #{cnn_forward.1} parent=1 // loop_footer
      %s22 = sadd.s32 1, %s18
    $region7: #{cnn_forward.1} parent=1 // loop_footer_branch
      %17 = sbr.rel target = $region3
    $region8: #{cnn_forward.1} parent=1 // loop_exit
      _

</llo_original>
